<compile_context>
chip_gen: v5e
topology: v5e:2x2
jax: 0.10.0
libtpu: 0.0.40
codegen_flags: <defaults>
</compile_context>

<pallas_src>
import numpy as np
import jax
import jax.numpy as jnp
from jax.experimental import pallas as pl
from jax.experimental.pallas import tpu as pltpu

K, S, P = 4, 2, 1
NEG_SLOPE = 0.2
BN_EPS = 1e-5


# ----------------------------- host-side helpers -----------------------------

def im2col_nhwc(x):
    """x: (N, H, W, C) -> patches (N*Ho*Wo, K*K*C), feature order (kh, kw, cin)."""
    n, h, w, c = x.shape
    xp = jnp.pad(x, ((0, 0), (P, P), (P, P), (0, 0)))
    ho = (h + 2 * P - K) // S + 1
    wo = (w + 2 * P - K) // S + 1
    cols = []
    for kh in range(K):
        for kw in range(K):
            cols.append(xp[:, kh:kh + ho * S:S, kw:kw + wo * S:S, :])
    patches = jnp.stack(cols, axis=3)                         # (N,Ho,Wo,K*K,C)
    return patches.reshape(n * ho * wo, K * K * c), n, ho, wo


def weight_to_matrix(w_oihw):
    """(Cout, Cin, kh, kw) -> (kh*kw*Cin, Cout); rows grouped per tap t=kh*K+kw."""
    cout, cin, kh, kw = w_oihw.shape
    return jnp.transpose(w_oihw, (2, 3, 1, 0)).reshape(kh * kw * cin, cout)


def prepare_discriminator(params, batch, img_hw):
    """One-time parameter / constant preparation (hoisted out of the hot path).

    Returns (consts, dims): consts is the tuple of device arrays fed to the
    fused kernel, dims holds the static geometry the kernel is built for.
    """
    n = batch
    h0 = (img_hw + 2 * P - K) // S + 1        # 16 -> 8
    h1 = (h0 + 2 * P - K) // S + 1            #  8 -> 4
    h2 = (h1 + 2 * P - K) // S + 1            #  4 -> 2
    # The fused final-layer reduction assumes the last conv's 4x4 kernel covers
    # its whole padded input, i.e. a 16x16 network input with this config.
    assert h2 + 2 * P == K, "fused kernel is specialized to 16x16 inputs"

    (w0, b0), (w1, _), (w2, _), (w3, _) = params
    c0, c1, c2 = w0.shape[0], w1.shape[0], w2.shape[0]        # 64, 128, 256

    # GEMM-ready weights (tap-major rows) -- hoisted, computed once.
    W0 = weight_to_matrix(w0)                                 # (16*img_ch, 64)
    B0 = b0.reshape(1, c0)                                    # (1, 64)
    W1 = weight_to_matrix(w1)                                 # (16*64, 128)
    W2 = weight_to_matrix(w2)                                 # (16*128, 256)
    W3 = jnp.transpose(w3[0], (1, 2, 0)).reshape(K * K, c2)   # (16, 256)
    W3 = jnp.tile(W3, (n, 1))                                 # (N*16, 256)

    # Slab geometry: padded-flat rows per layer input and usable slab length.
    hp1, hp2, hp3 = h0 + 2 * P, h1 + 2 * P, h2 + 2 * P        # 10, 6, 4
    r1 = n * hp1 * hp1                                        # 200
    r2 = n * hp2 * hp2                                        # 72
    f1 = r1 - ((K - 1) * hp1 + (K - 1))                       # 167
    f2 = r2 - ((K - 1) * hp2 + (K - 1))                       # 51

    # T0: compact layer-0 output rows (n,h,w) -> zero-padded flat layer-1 input.
    T0 = np.zeros((r1, n * h0 * h0), np.float32)
    for b in range(n):
        for y in range(h0):
            for x in range(h0):
                T0[b * hp1 * hp1 + (y + 1) * hp1 + (x + 1),
                   (b * h0 + y) * h0 + x] = 1.0

    def slab_constants(hp_in, ho, hp_out, f):
        """valid-position mask (f,1) + slab -> next-padded scatter (n*hp_out^2, f)."""
        m = np.zeros((f, 1), np.float32)
        t = np.zeros((n * hp_out * hp_out, f), np.float32)
        for b in range(n):
            for y in range(ho):
                for x in range(ho):
                    p = b * hp_in * hp_in + 2 * y * hp_in + 2 * x
                    m[p, 0] = 1.0
                    t[b * hp_out * hp_out + (y + 1) * hp_out + (x + 1), p] = 1.0
        return m, t

    M1, T1 = slab_constants(hp1, h1, hp2, f1)                 # (167,1), (72,167)
    M2, T2 = slab_constants(hp2, h2, hp3, f2)                 # (51,1),  (32,51)

    # Final-layer per-image group-sum matrix (N, N*16).
    G3 = np.zeros((n, n * K * K), np.float32)
    for b in range(n):
        G3[b, b * K * K:(b + 1) * K * K] = 1.0

    consts = (W0, B0, jnp.asarray(T0), W1, jnp.asarray(M1), jnp.asarray(T1),
              W2, jnp.asarray(M2), jnp.asarray(T2), W3, jnp.asarray(G3))
    dims = dict(n=n, h0=h0, h1=h1, h2=h2, hp1=hp1, hp2=hp2,
                f1=f1, f2=f2, c0=c0, c1=c1, c2=c2)
    return consts, dims


# ------------------------------- fused kernel --------------------------------

def make_fused_kernel(dims):
    hp1, hp2 = dims["hp1"], dims["hp2"]
    f1, f2 = dims["f1"], dims["f2"]
    c0, c1, c2 = dims["c0"], dims["c1"], dims["c2"]
    mo1 = float(dims["n"] * dims["h1"] * dims["h1"])   # rows in layer-1 BN stats
    mo2 = float(dims["n"] * dims["h2"] * dims["h2"])   # rows in layer-2 BN stats

    def lrelu(v):
        return jnp.where(v > 0, v, NEG_SLOPE * v)

    def kernel(p0_ref, w0_ref, b0_ref, t0_ref,
               w1_ref, m1_ref, t1_ref,
               w2_ref, m2_ref, t2_ref,
               w3_ref, g3_ref,
               out_ref, pad1_ref, pad2_ref):
        # ---- L0: Conv(img_ch->64) + bias + LeakyReLU (one GEMM on im2col patches).
        h = jnp.dot(p0_ref[...], w0_ref[...], preferred_element_type=jnp.float32)
        h = lrelu(h + b0_ref[...])
        # Scatter (with zero padding) into the layer-1 padded-flat layout; the
        # intermediate never leaves VMEM.
        pad1_ref[...] = jnp.dot(t0_ref[...], h, preferred_element_type=jnp.float32)

        # ---- L1: Conv(64->128, no bias) + BatchNorm(batch stats) + LeakyReLU.
        # 16 contiguously-shifted slab GEMMs (one per tap) -- no strided gathers.
        acc = jnp.zeros((f1, c1), jnp.float32)
        for kh in range(K):
            for kw in range(K):
                t = kh * K + kw
                d = kh * hp1 + kw
                acc = acc + jnp.dot(pad1_ref[d:d + f1, :],
                                    w1_ref[t * c0:(t + 1) * c0, :],
                                    preferred_element_type=jnp.float32)
        m = m1_ref[...]                                         # 1 at valid rows
        mean = jnp.sum(acc * m, axis=0, keepdims=True) * (1.0 / mo1)
        diff = acc - mean
        var = jnp.sum(diff * diff * m, axis=0, keepdims=True) * (1.0 / mo1)
        y = lrelu(diff * jax.lax.rsqrt(var + BN_EPS))
        # Stride-2 down-select + zero-pad for layer 2 as one 0/1 scatter matmul.
        pad2_ref[...] = jnp.dot(t1_ref[...], y, preferred_element_type=jnp.float32)

        # ---- L2: Conv(128->256, no bias) + BatchNorm + LeakyReLU.
        acc = jnp.zeros((f2, c2), jnp.float32)
        for kh in range(K):
            for kw in range(K):
                t = kh * K + kw
                d = kh * hp2 + kw
                acc = acc + jnp.dot(pad2_ref[d:d + f2, :],
                                    w2_ref[t * c1:(t + 1) * c1, :],
                                    preferred_element_type=jnp.float32)
        m = m2_ref[...]
        mean = jnp.sum(acc * m, axis=0, keepdims=True) * (1.0 / mo2)
        diff = acc - mean
        var = jnp.sum(diff * diff * m, axis=0, keepdims=True) * (1.0 / mo2)
        y = lrelu(diff * jax.lax.rsqrt(var + BN_EPS))
        pad3 = jnp.dot(t2_ref[...], y, preferred_element_type=jnp.float32)  # (N*16, 256)

        # ---- L3: Conv(256->1). Its 4x4 kernel covers the whole padded 4x4
        # input, so it is a plain weighted sum: VPU multiply + reductions
        # (no Cout-padding to 128, no wasted MXU pass, no post-kernel slice).
        s = jnp.sum(pad3 * w3_ref[...], axis=1, keepdims=True)  # (N*16, 1)
        out_ref[...] = jnp.dot(g3_ref[...], s, preferred_element_type=jnp.float32)

    return kernel


def make_forward(dims):
    kernel = make_fused_kernel(dims)
    n = dims["n"]
    vmem = pl.BlockSpec(memory_space=pltpu.MemorySpace.VMEM)

    def forward(x_nchw, consts):
        x = jnp.transpose(x_nchw, (0, 2, 3, 1))          # NCHW -> NHWC
        patches0, _, _, _ = im2col_nhwc(x)               # (N*8*8, 16*img_ch)
        out = pl.pallas_call(
            kernel,
            out_shape=jax.ShapeDtypeStruct((n, 1), jnp.float32),
            in_specs=[vmem] * (1 + len(consts)),
            out_specs=vmem,
            scratch_shapes=[
                pltpu.VMEM((n * dims["hp1"] * dims["hp1"], dims["c0"]), jnp.float32),
                pltpu.VMEM((n * dims["hp2"] * dims["hp2"], dims["c1"]), jnp.float32),
            ],
        )(patches0, *consts)
        return out.reshape(n, 1, 1, 1)                   # NCHW (N, 1, 1, 1)

    return jax.jit(forward)


# ----------------------------- reference (JAX) --------------------------------

def patchgan_forward_ref(x_nchw, params):
    x = jnp.transpose(x_nchw, (0, 2, 3, 1))
    for i, (w_oihw, bias) in enumerate(params):
        patches, n, ho, wo = im2col_nhwc(x)
        w_mat = weight_to_matrix(w_oihw)
        out = patches @ w_mat
        if i == 0:
            out = out + bias[None, :]
        if 0 < i < len(params) - 1:
            mean = jnp.mean(out, axis=0, keepdims=True)
            var = jnp.mean((out - mean) ** 2, axis=0, keepdims=True)
            out = (out - mean) / jnp.sqrt(var + BN_EPS)
        if i < len(params) - 1:
            out = jnp.where(out > 0, out, NEG_SLOPE * out)
        x = out.reshape(n, ho, wo, out.shape[-1])
    return jnp.transpose(x, (0, 3, 1, 2))


# ---------------------------------- main ---------------------------------------

if __name__ == "__main__":
    img_channels = 4
    conv_channels = [64, 128, 256]
    layers_dim = [img_channels] + conv_channels + [1]

    key = jax.random.PRNGKey(0)
    params = []
    for i in range(len(layers_dim) - 1):
        cin, cout = layers_dim[i], layers_dim[i + 1]
        key, wk, bk = jax.random.split(key, 3)
        fan_in = cin * K * K
        w = jax.random.normal(wk, (cout, cin, K, K), jnp.float32) / jnp.sqrt(fan_in)
        b = (jax.random.normal(bk, (cout,), jnp.float32) * 0.01) if i == 0 else None
        params.append((w, b))

    batch, img_hw = 2, 16
    key, xk = jax.random.split(key)
    x = jax.random.normal(xk, (batch, img_channels, img_hw, img_hw), jnp.float32)

    # One-time prep (weights reshaped / stacked, scatter + mask constants built).
    consts, dims = prepare_discriminator(params, batch, img_hw)
    forward = make_forward(dims)

    y = forward(x, consts)
    y = jax.block_until_ready(y)

    y_ref = patchgan_forward_ref(x, params)
    assert y.shape == (batch, 1, 1, 1), y.shape
    assert jnp.allclose(y, y_ref, atol=1e-4, rtol=1e-4), (y, y_ref)

    print("KERNEL_OK")
</pallas_src>

<mosaic_0001>
module attributes {stable_mosaic.version = 11 : i64} {
  func.func @kernel(%arg0: memref<128x64xf32, #tpu.memory_space<vmem>>, %arg1: memref<64x64xf32, #tpu.memory_space<vmem>>, %arg2: memref<1x64xf32, #tpu.memory_space<vmem>>, %arg3: memref<200x128xf32, #tpu.memory_space<vmem>>, %arg4: memref<1024x128xf32, #tpu.memory_space<vmem>>, %arg5: memref<167x1xf32, #tpu.memory_space<vmem>>, %arg6: memref<72x167xf32, #tpu.memory_space<vmem>>, %arg7: memref<2048x256xf32, #tpu.memory_space<vmem>>, %arg8: memref<51x1xf32, #tpu.memory_space<vmem>>, %arg9: memref<32x51xf32, #tpu.memory_space<vmem>>, %arg10: memref<32x256xf32, #tpu.memory_space<vmem>>, %arg11: memref<2x32xf32, #tpu.memory_space<vmem>>, %arg12: memref<2x1xf32, #tpu.memory_space<vmem>>, %arg13: memref<200x64xf32, #tpu.memory_space<vmem>>, %arg14: memref<72x128xf32, #tpu.memory_space<vmem>>) attributes {dimension_semantics = [], scalar_prefetch = 0 : i64, scratch_operands = 2 : i64, tpu.core_type = #tpu.core_type<tc>} {
    %c0 = arith.constant 0 : index
    %c0_0 = arith.constant 0 : index
    %0 = vector.load %arg0[%c0, %c0_0] : memref<128x64xf32, #tpu.memory_space<vmem>>, vector<128x64xf32>
    %c0_1 = arith.constant 0 : index
    %c0_2 = arith.constant 0 : index
    %1 = vector.load %arg1[%c0_1, %c0_2] : memref<64x64xf32, #tpu.memory_space<vmem>>, vector<64x64xf32>
    %cst = arith.constant dense<0.000000e+00> : vector<128x64xf32>
    %2 = tpu.matmul %0, %1, %cst {dimension_numbers = #tpu.dot_dimension_numbers<[1], [0], [0], [1], [0, 0, 1, 1], [], []>} : vector<128x64xf32>, vector<64x64xf32>, vector<128x64xf32> -> vector<128x64xf32>
    %c0_3 = arith.constant 0 : index
    %c0_4 = arith.constant 0 : index
    %3 = vector.load %arg2[%c0_3, %c0_4] : memref<1x64xf32, #tpu.memory_space<vmem>>, vector<1x64xf32>
    %4 = vector.broadcast %3 : vector<1x64xf32> to vector<128x64xf32>
    %5 = arith.addf %2, %4 : vector<128x64xf32>
    %cst_5 = arith.constant 0.000000e+00 : f32
    %6 = vector.broadcast %cst_5 : f32 to vector<128x64xf32>
    %7 = arith.cmpf ogt, %5, %6 : vector<128x64xf32>
    %cst_6 = arith.constant 2.000000e-01 : f32
    %8 = vector.broadcast %cst_6 : f32 to vector<128x64xf32>
    %9 = arith.mulf %8, %5 : vector<128x64xf32>
    %10 = arith.select %7, %5, %9 : vector<128x64xi1>, vector<128x64xf32>
    %c0_7 = arith.constant 0 : index
    %c0_8 = arith.constant 0 : index
    %11 = vector.load %arg3[%c0_7, %c0_8] : memref<200x128xf32, #tpu.memory_space<vmem>>, vector<200x128xf32>
    %cst_9 = arith.constant dense<0.000000e+00> : vector<200x64xf32>
    %12 = tpu.matmul %11, %10, %cst_9 {dimension_numbers = #tpu.dot_dimension_numbers<[1], [0], [0], [1], [0, 0, 1, 1], [], []>} : vector<200x128xf32>, vector<128x64xf32>, vector<200x64xf32> -> vector<200x64xf32>
    %c0_10 = arith.constant 0 : index
    %c0_11 = arith.constant 0 : index
    %13 = vector.load %arg13[%c0_10, %c0_11] : memref<200x64xf32, #tpu.memory_space<vmem>>, vector<200x64xf32>
    tpu.vector_store %arg13[%c0_10, %c0_11], %12 {strides = array<i32>} : memref<200x64xf32, #tpu.memory_space<vmem>>, vector<200x64xf32>,
    %cst_12 = arith.constant 0.000000e+00 : f32
    %14 = vector.broadcast %cst_12 : f32 to vector<167x128xf32>
    %c0_13 = arith.constant 0 : index
    %c0_14 = arith.constant 0 : index
    %15 = vector.load %arg13[%c0_13, %c0_14] : memref<200x64xf32, #tpu.memory_space<vmem>>, vector<167x64xf32>
    %c0_15 = arith.constant 0 : index
    %c0_16 = arith.constant 0 : index
    %16 = vector.load %arg4[%c0_15, %c0_16] : memref<1024x128xf32, #tpu.memory_space<vmem>>, vector<64x128xf32>
    %cst_17 = arith.constant dense<0.000000e+00> : vector<167x128xf32>
    %17 = tpu.matmul %15, %16, %cst_17 {dimension_numbers = #tpu.dot_dimension_numbers<[1], [0], [0], [1], [0, 0, 1, 1], [], []>} : vector<167x64xf32>, vector<64x128xf32>, vector<167x128xf32> -> vector<167x128xf32>
    %18 = arith.addf %14, %17 : vector<167x128xf32>
    %c1 = arith.constant 1 : index
    %c0_18 = arith.constant 0 : index
    %19 = vector.load %arg13[%c1, %c0_18] : memref<200x64xf32, #tpu.memory_space<vmem>>, vector<167x64xf32>
    %c64 = arith.constant 64 : index
    %c0_19 = arith.constant 0 : index
    %20 = vector.load %arg4[%c64, %c0_19] : memref<1024x128xf32, #tpu.memory_space<vmem>>, vector<64x128xf32>
    %cst_20 = arith.constant dense<0.000000e+00> : vector<167x128xf32>
    %21 = tpu.matmul %19, %20, %cst_20 {dimension_numbers = #tpu.dot_dimension_numbers<[1], [0], [0], [1], [0, 0, 1, 1], [], []>} : vector<167x64xf32>, vector<64x128xf32>, vector<167x128xf32> -> vector<167x128xf32>
    %22 = arith.addf %18, %21 : vector<167x128xf32>
    %c2 = arith.constant 2 : index
    %c0_21 = arith.constant 0 : index
    %23 = vector.load %arg13[%c2, %c0_21] : memref<200x64xf32, #tpu.memory_space<vmem>>, vector<167x64xf32>
    %c128 = arith.constant 128 : index
    %c0_22 = arith.constant 0 : index
    %24 = vector.load %arg4[%c128, %c0_22] : memref<1024x128xf32, #tpu.memory_space<vmem>>, vector<64x128xf32>
    %cst_23 = arith.constant dense<0.000000e+00> : vector<167x128xf32>
    %25 = tpu.matmul %23, %24, %cst_23 {dimension_numbers = #tpu.dot_dimension_numbers<[1], [0], [0], [1], [0, 0, 1, 1], [], []>} : vector<167x64xf32>, vector<64x128xf32>, vector<167x128xf32> -> vector<167x128xf32>
    %26 = arith.addf %22, %25 : vector<167x128xf32>
    %c3 = arith.constant 3 : index
    %c0_24 = arith.constant 0 : index
    %27 = vector.load %arg13[%c3, %c0_24] : memref<200x64xf32, #tpu.memory_space<vmem>>, vector<167x64xf32>
    %c192 = arith.constant 192 : index
    %c0_25 = arith.constant 0 : index
    %28 = vector.load %arg4[%c192, %c0_25] : memref<1024x128xf32, #tpu.memory_space<vmem>>, vector<64x128xf32>
    %cst_26 = arith.constant dense<0.000000e+00> : vector<167x128xf32>
    %29 = tpu.matmul %27, %28, %cst_26 {dimension_numbers = #tpu.dot_dimension_numbers<[1], [0], [0], [1], [0, 0, 1, 1], [], []>} : vector<167x64xf32>, vector<64x128xf32>, vector<167x128xf32> -> vector<167x128xf32>
    %30 = arith.addf %26, %29 : vector<167x128xf32>
    %c10 = arith.constant 10 : index
    %c0_27 = arith.constant 0 : index
    %31 = vector.load %arg13[%c10, %c0_27] : memref<200x64xf32, #tpu.memory_space<vmem>>, vector<167x64xf32>
    %c256 = arith.constant 256 : index
    %c0_28 = arith.constant 0 : index
    %32 = vector.load %arg4[%c256, %c0_28] : memref<1024x128xf32, #tpu.memory_space<vmem>>, vector<64x128xf32>
    %cst_29 = arith.constant dense<0.000000e+00> : vector<167x128xf32>
    %33 = tpu.matmul %31, %32, %cst_29 {dimension_numbers = #tpu.dot_dimension_numbers<[1], [0], [0], [1], [0, 0, 1, 1], [], []>} : vector<167x64xf32>, vector<64x128xf32>, vector<167x128xf32> -> vector<167x128xf32>
    %34 = arith.addf %30, %33 : vector<167x128xf32>
    %c11 = arith.constant 11 : index
    %c0_30 = arith.constant 0 : index
    %35 = vector.load %arg13[%c11, %c0_30] : memref<200x64xf32, #tpu.memory_space<vmem>>, vector<167x64xf32>
    %c320 = arith.constant 320 : index
    %c0_31 = arith.constant 0 : index
    %36 = vector.load %arg4[%c320, %c0_31] : memref<1024x128xf32, #tpu.memory_space<vmem>>, vector<64x128xf32>
    %cst_32 = arith.constant dense<0.000000e+00> : vector<167x128xf32>
    %37 = tpu.matmul %35, %36, %cst_32 {dimension_numbers = #tpu.dot_dimension_numbers<[1], [0], [0], [1], [0, 0, 1, 1], [], []>} : vector<167x64xf32>, vector<64x128xf32>, vector<167x128xf32> -> vector<167x128xf32>
    %38 = arith.addf %34, %37 : vector<167x128xf32>
    %c12 = arith.constant 12 : index
    %c0_33 = arith.constant 0 : index
    %39 = vector.load %arg13[%c12, %c0_33] : memref<200x64xf32, #tpu.memory_space<vmem>>, vector<167x64xf32>
    %c384 = arith.constant 384 : index
    %c0_34 = arith.constant 0 : index
    %40 = vector.load %arg4[%c384, %c0_34] : memref<1024x128xf32, #tpu.memory_space<vmem>>, vector<64x128xf32>
    %cst_35 = arith.constant dense<0.000000e+00> : vector<167x128xf32>
    %41 = tpu.matmul %39, %40, %cst_35 {dimension_numbers = #tpu.dot_dimension_numbers<[1], [0], [0], [1], [0, 0, 1, 1], [], []>} : vector<167x64xf32>, vector<64x128xf32>, vector<167x128xf32> -> vector<167x128xf32>
    %42 = arith.addf %38, %41 : vector<167x128xf32>
    %c13 = arith.constant 13 : index
    %c0_36 = arith.constant 0 : index
    %43 = vector.load %arg13[%c13, %c0_36] : memref<200x64xf32, #tpu.memory_space<vmem>>, vector<167x64xf32>
    %c448 = arith.constant 448 : index
    %c0_37 = arith.constant 0 : index
    %44 = vector.load %arg4[%c448, %c0_37] : memref<1024x128xf32, #tpu.memory_space<vmem>>, vector<64x128xf32>
    %cst_38 = arith.constant dense<0.000000e+00> : vector<167x128xf32>
    %45 = tpu.matmul %43, %44, %cst_38 {dimension_numbers = #tpu.dot_dimension_numbers<[1], [0], [0], [1], [0, 0, 1, 1], [], []>} : vector<167x64xf32>, vector<64x128xf32>, vector<167x128xf32> -> vector<167x128xf32>
    %46 = arith.addf %42, %45 : vector<167x128xf32>
    %c20 = arith.constant 20 : index
    %c0_39 = arith.constant 0 : index
    %47 = vector.load %arg13[%c20, %c0_39] : memref<200x64xf32, #tpu.memory_space<vmem>>, vector<167x64xf32>
    %c512 = arith.constant 512 : index
    %c0_40 = arith.constant 0 : index
    %48 = vector.load %arg4[%c512, %c0_40] : memref<1024x128xf32, #tpu.memory_space<vmem>>, vector<64x128xf32>
    %cst_41 = arith.constant dense<0.000000e+00> : vector<167x128xf32>
    %49 = tpu.matmul %47, %48, %cst_41 {dimension_numbers = #tpu.dot_dimension_numbers<[1], [0], [0], [1], [0, 0, 1, 1], [], []>} : vector<167x64xf32>, vector<64x128xf32>, vector<167x128xf32> -> vector<167x128xf32>
    %50 = arith.addf %46, %49 : vector<167x128xf32>
    %c21 = arith.constant 21 : index
    %c0_42 = arith.constant 0 : index
    %51 = vector.load %arg13[%c21, %c0_42] : memref<200x64xf32, #tpu.memory_space<vmem>>, vector<167x64xf32>
    %c576 = arith.constant 576 : index
    %c0_43 = arith.constant 0 : index
    %52 = vector.load %arg4[%c576, %c0_43] : memref<1024x128xf32, #tpu.memory_space<vmem>>, vector<64x128xf32>
    %cst_44 = arith.constant dense<0.000000e+00> : vector<167x128xf32>
    %53 = tpu.matmul %51, %52, %cst_44 {dimension_numbers = #tpu.dot_dimension_numbers<[1], [0], [0], [1], [0, 0, 1, 1], [], []>} : vector<167x64xf32>, vector<64x128xf32>, vector<167x128xf32> -> vector<167x128xf32>
    %54 = arith.addf %50, %53 : vector<167x128xf32>
    %c22 = arith.constant 22 : index
    %c0_45 = arith.constant 0 : index
    %55 = vector.load %arg13[%c22, %c0_45] : memref<200x64xf32, #tpu.memory_space<vmem>>, vector<167x64xf32>
    %c640 = arith.constant 640 : index
    %c0_46 = arith.constant 0 : index
    %56 = vector.load %arg4[%c640, %c0_46] : memref<1024x128xf32, #tpu.memory_space<vmem>>, vector<64x128xf32>
    %cst_47 = arith.constant dense<0.000000e+00> : vector<167x128xf32>
    %57 = tpu.matmul %55, %56, %cst_47 {dimension_numbers = #tpu.dot_dimension_numbers<[1], [0], [0], [1], [0, 0, 1, 1], [], []>} : vector<167x64xf32>, vector<64x128xf32>, vector<167x128xf32> -> vector<167x128xf32>
    %58 = arith.addf %54, %57 : vector<167x128xf32>
    %c23 = arith.constant 23 : index
    %c0_48 = arith.constant 0 : index
    %59 = vector.load %arg13[%c23, %c0_48] : memref<200x64xf32, #tpu.memory_space<vmem>>, vector<167x64xf32>
    %c704 = arith.constant 704 : index
    %c0_49 = arith.constant 0 : index
    %60 = vector.load %arg4[%c704, %c0_49] : memref<1024x128xf32, #tpu.memory_space<vmem>>, vector<64x128xf32>
    %cst_50 = arith.constant dense<0.000000e+00> : vector<167x128xf32>
    %61 = tpu.matmul %59, %60, %cst_50 {dimension_numbers = #tpu.dot_dimension_numbers<[1], [0], [0], [1], [0, 0, 1, 1], [], []>} : vector<167x64xf32>, vector<64x128xf32>, vector<167x128xf32> -> vector<167x128xf32>
    %62 = arith.addf %58, %61 : vector<167x128xf32>
    %c30 = arith.constant 30 : index
    %c0_51 = arith.constant 0 : index
    %63 = vector.load %arg13[%c30, %c0_51] : memref<200x64xf32, #tpu.memory_space<vmem>>, vector<167x64xf32>
    %c768 = arith.constant 768 : index
    %c0_52 = arith.constant 0 : index
    %64 = vector.load %arg4[%c768, %c0_52] : memref<1024x128xf32, #tpu.memory_space<vmem>>, vector<64x128xf32>
    %cst_53 = arith.constant dense<0.000000e+00> : vector<167x128xf32>
    %65 = tpu.matmul %63, %64, %cst_53 {dimension_numbers = #tpu.dot_dimension_numbers<[1], [0], [0], [1], [0, 0, 1, 1], [], []>} : vector<167x64xf32>, vector<64x128xf32>, vector<167x128xf32> -> vector<167x128xf32>
    %66 = arith.addf %62, %65 : vector<167x128xf32>
    %c31 = arith.constant 31 : index
    %c0_54 = arith.constant 0 : index
    %67 = vector.load %arg13[%c31, %c0_54] : memref<200x64xf32, #tpu.memory_space<vmem>>, vector<167x64xf32>
    %c832 = arith.constant 832 : index
    %c0_55 = arith.constant 0 : index
    %68 = vector.load %arg4[%c832, %c0_55] : memref<1024x128xf32, #tpu.memory_space<vmem>>, vector<64x128xf32>
    %cst_56 = arith.constant dense<0.000000e+00> : vector<167x128xf32>
    %69 = tpu.matmul %67, %68, %cst_56 {dimension_numbers = #tpu.dot_dimension_numbers<[1], [0], [0], [1], [0, 0, 1, 1], [], []>} : vector<167x64xf32>, vector<64x128xf32>, vector<167x128xf32> -> vector<167x128xf32>
    %70 = arith.addf %66, %69 : vector<167x128xf32>
    %c32 = arith.constant 32 : index
    %c0_57 = arith.constant 0 : index
    %71 = vector.load %arg13[%c32, %c0_57] : memref<200x64xf32, #tpu.memory_space<vmem>>, vector<167x64xf32>
    %c896 = arith.constant 896 : index
    %c0_58 = arith.constant 0 : index
    %72 = vector.load %arg4[%c896, %c0_58] : memref<1024x128xf32, #tpu.memory_space<vmem>>, vector<64x128xf32>
    %cst_59 = arith.constant dense<0.000000e+00> : vector<167x128xf32>
    %73 = tpu.matmul %71, %72, %cst_59 {dimension_numbers = #tpu.dot_dimension_numbers<[1], [0], [0], [1], [0, 0, 1, 1], [], []>} : vector<167x64xf32>, vector<64x128xf32>, vector<167x128xf32> -> vector<167x128xf32>
    %74 = arith.addf %70, %73 : vector<167x128xf32>
    %c33 = arith.constant 33 : index
    %c0_60 = arith.constant 0 : index
    %75 = vector.load %arg13[%c33, %c0_60] : memref<200x64xf32, #tpu.memory_space<vmem>>, vector<167x64xf32>
    %c960 = arith.constant 960 : index
    %c0_61 = arith.constant 0 : index
    %76 = vector.load %arg4[%c960, %c0_61] : memref<1024x128xf32, #tpu.memory_space<vmem>>, vector<64x128xf32>
    %cst_62 = arith.constant dense<0.000000e+00> : vector<167x128xf32>
    %77 = tpu.matmul %75, %76, %cst_62 {dimension_numbers = #tpu.dot_dimension_numbers<[1], [0], [0], [1], [0, 0, 1, 1], [], []>} : vector<167x64xf32>, vector<64x128xf32>, vector<167x128xf32> -> vector<167x128xf32>
    %78 = arith.addf %74, %77 : vector<167x128xf32>
    %c0_63 = arith.constant 0 : index
    %c0_64 = arith.constant 0 : index
    %79 = vector.load %arg5[%c0_63, %c0_64] : memref<167x1xf32, #tpu.memory_space<vmem>>, vector<167x1xf32>
    %80 = vector.broadcast %79 : vector<167x1xf32> to vector<167x128xf32>
    %81 = arith.mulf %78, %80 : vector<167x128xf32>
    %cst_65 = arith.constant dense<0.000000e+00> : vector<128xf32>
    %82 = vector.multi_reduction <add>, %81, %cst_65 [0] : vector<167x128xf32> to vector<128xf32>
    %83 = vector.shape_cast %82 : vector<128xf32> to vector<1x128xf32>
    %cst_66 = arith.constant 3.125000e-02 : f32
    %84 = vector.broadcast %cst_66 : f32 to vector<1x128xf32>
    %85 = arith.mulf %83, %84 : vector<1x128xf32>
    %86 = vector.broadcast %85 : vector<1x128xf32> to vector<167x128xf32>
    %87 = arith.subf %78, %86 : vector<167x128xf32>
    %88 = arith.mulf %87, %87 : vector<167x128xf32>
    %89 = vector.broadcast %79 : vector<167x1xf32> to vector<167x128xf32>
    %90 = arith.mulf %88, %89 : vector<167x128xf32>
    %cst_67 = arith.constant dense<0.000000e+00> : vector<128xf32>
    %91 = vector.multi_reduction <add>, %90, %cst_67 [0] : vector<167x128xf32> to vector<128xf32>
    %92 = vector.shape_cast %91 : vector<128xf32> to vector<1x128xf32>
    %cst_68 = arith.constant 3.125000e-02 : f32
    %93 = vector.broadcast %cst_68 : f32 to vector<1x128xf32>
    %94 = arith.mulf %92, %93 : vector<1x128xf32>
    %cst_69 = arith.constant 9.99999974E-6 : f32
    %95 = vector.broadcast %cst_69 : f32 to vector<1x128xf32>
    %96 = arith.addf %94, %95 : vector<1x128xf32>
    %97 = math.rsqrt %96 : vector<1x128xf32>
    %98 = vector.broadcast %97 : vector<1x128xf32> to vector<167x128xf32>
    %99 = arith.mulf %87, %98 : vector<167x128xf32>
    %cst_70 = arith.constant 0.000000e+00 : f32
    %100 = vector.broadcast %cst_70 : f32 to vector<167x128xf32>
    %101 = arith.cmpf ogt, %99, %100 : vector<167x128xf32>
    %cst_71 = arith.constant 2.000000e-01 : f32
    %102 = vector.broadcast %cst_71 : f32 to vector<167x128xf32>
    %103 = arith.mulf %102, %99 : vector<167x128xf32>
    %104 = arith.select %101, %99, %103 : vector<167x128xi1>, vector<167x128xf32>
    %c0_72 = arith.constant 0 : index
    %c0_73 = arith.constant 0 : index
    %105 = vector.load %arg6[%c0_72, %c0_73] : memref<72x167xf32, #tpu.memory_space<vmem>>, vector<72x167xf32>
    %cst_74 = arith.constant dense<0.000000e+00> : vector<72x128xf32>
    %106 = tpu.matmul %105, %104, %cst_74 {dimension_numbers = #tpu.dot_dimension_numbers<[1], [0], [0], [1], [0, 0, 1, 1], [], []>} : vector<72x167xf32>, vector<167x128xf32>, vector<72x128xf32> -> vector<72x128xf32>
    %c0_75 = arith.constant 0 : index
    %c0_76 = arith.constant 0 : index
    %107 = vector.load %arg14[%c0_75, %c0_76] : memref<72x128xf32, #tpu.memory_space<vmem>>, vector<72x128xf32>
    tpu.vector_store %arg14[%c0_75, %c0_76], %106 {strides = array<i32>} : memref<72x128xf32, #tpu.memory_space<vmem>>, vector<72x128xf32>,
    %cst_77 = arith.constant 0.000000e+00 : f32
    %108 = vector.broadcast %cst_77 : f32 to vector<51x256xf32>
    %c0_78 = arith.constant 0 : index
    %c0_79 = arith.constant 0 : index
    %109 = vector.load %arg14[%c0_78, %c0_79] : memref<72x128xf32, #tpu.memory_space<vmem>>, vector<51x128xf32>
    %c0_80 = arith.constant 0 : index
    %c0_81 = arith.constant 0 : index
    %110 = vector.load %arg7[%c0_80, %c0_81] : memref<2048x256xf32, #tpu.memory_space<vmem>>, vector<128x256xf32>
    %cst_82 = arith.constant dense<0.000000e+00> : vector<51x256xf32>
    %111 = tpu.matmul %109, %110, %cst_82 {dimension_numbers = #tpu.dot_dimension_numbers<[1], [0], [0], [1], [0, 0, 1, 1], [], []>} : vector<51x128xf32>, vector<128x256xf32>, vector<51x256xf32> -> vector<51x256xf32>
    %112 = arith.addf %108, %111 : vector<51x256xf32>
    %c1_83 = arith.constant 1 : index
    %c0_84 = arith.constant 0 : index
    %113 = vector.load %arg14[%c1_83, %c0_84] : memref<72x128xf32, #tpu.memory_space<vmem>>, vector<51x128xf32>
    %c128_85 = arith.constant 128 : index
    %c0_86 = arith.constant 0 : index
    %114 = vector.load %arg7[%c128_85, %c0_86] : memref<2048x256xf32, #tpu.memory_space<vmem>>, vector<128x256xf32>
    %cst_87 = arith.constant dense<0.000000e+00> : vector<51x256xf32>
    %115 = tpu.matmul %113, %114, %cst_87 {dimension_numbers = #tpu.dot_dimension_numbers<[1], [0], [0], [1], [0, 0, 1, 1], [], []>} : vector<51x128xf32>, vector<128x256xf32>, vector<51x256xf32> -> vector<51x256xf32>
    %116 = arith.addf %112, %115 : vector<51x256xf32>
    %c2_88 = arith.constant 2 : index
    %c0_89 = arith.constant 0 : index
    %117 = vector.load %arg14[%c2_88, %c0_89] : memref<72x128xf32, #tpu.memory_space<vmem>>, vector<51x128xf32>
    %c256_90 = arith.constant 256 : index
    %c0_91 = arith.constant 0 : index
    %118 = vector.load %arg7[%c256_90, %c0_91] : memref<2048x256xf32, #tpu.memory_space<vmem>>, vector<128x256xf32>
    %cst_92 = arith.constant dense<0.000000e+00> : vector<51x256xf32>
    %119 = tpu.matmul %117, %118, %cst_92 {dimension_numbers = #tpu.dot_dimension_numbers<[1], [0], [0], [1], [0, 0, 1, 1], [], []>} : vector<51x128xf32>, vector<128x256xf32>, vector<51x256xf32> -> vector<51x256xf32>
    %120 = arith.addf %116, %119 : vector<51x256xf32>
    %c3_93 = arith.constant 3 : index
    %c0_94 = arith.constant 0 : index
    %121 = vector.load %arg14[%c3_93, %c0_94] : memref<72x128xf32, #tpu.memory_space<vmem>>, vector<51x128xf32>
    %c384_95 = arith.constant 384 : index
    %c0_96 = arith.constant 0 : index
    %122 = vector.load %arg7[%c384_95, %c0_96] : memref<2048x256xf32, #tpu.memory_space<vmem>>, vector<128x256xf32>
    %cst_97 = arith.constant dense<0.000000e+00> : vector<51x256xf32>
    %123 = tpu.matmul %121, %122, %cst_97 {dimension_numbers = #tpu.dot_dimension_numbers<[1], [0], [0], [1], [0, 0, 1, 1], [], []>} : vector<51x128xf32>, vector<128x256xf32>, vector<51x256xf32> -> vector<51x256xf32>
    %124 = arith.addf %120, %123 : vector<51x256xf32>
    %c6 = arith.constant 6 : index
    %c0_98 = arith.constant 0 : index
    %125 = vector.load %arg14[%c6, %c0_98] : memref<72x128xf32, #tpu.memory_space<vmem>>, vector<51x128xf32>
    %c512_99 = arith.constant 512 : index
    %c0_100 = arith.constant 0 : index
    %126 = vector.load %arg7[%c512_99, %c0_100] : memref<2048x256xf32, #tpu.memory_space<vmem>>, vector<128x256xf32>
    %cst_101 = arith.constant dense<0.000000e+00> : vector<51x256xf32>
    %127 = tpu.matmul %125, %126, %cst_101 {dimension_numbers = #tpu.dot_dimension_numbers<[1], [0], [0], [1], [0, 0, 1, 1], [], []>} : vector<51x128xf32>, vector<128x256xf32>, vector<51x256xf32> -> vector<51x256xf32>
    %128 = arith.addf %124, %127 : vector<51x256xf32>
    %c7 = arith.constant 7 : index
    %c0_102 = arith.constant 0 : index
    %129 = vector.load %arg14[%c7, %c0_102] : memref<72x128xf32, #tpu.memory_space<vmem>>, vector<51x128xf32>
    %c640_103 = arith.constant 640 : index
    %c0_104 = arith.constant 0 : index
    %130 = vector.load %arg7[%c640_103, %c0_104] : memref<2048x256xf32, #tpu.memory_space<vmem>>, vector<128x256xf32>
    %cst_105 = arith.constant dense<0.000000e+00> : vector<51x256xf32>
    %131 = tpu.matmul %129, %130, %cst_105 {dimension_numbers = #tpu.dot_dimension_numbers<[1], [0], [0], [1], [0, 0, 1, 1], [], []>} : vector<51x128xf32>, vector<128x256xf32>, vector<51x256xf32> -> vector<51x256xf32>
    %132 = arith.addf %128, %131 : vector<51x256xf32>
    %c8 = arith.constant 8 : index
    %c0_106 = arith.constant 0 : index
    %133 = vector.load %arg14[%c8, %c0_106] : memref<72x128xf32, #tpu.memory_space<vmem>>, vector<51x128xf32>
    %c768_107 = arith.constant 768 : index
    %c0_108 = arith.constant 0 : index
    %134 = vector.load %arg7[%c768_107, %c0_108] : memref<2048x256xf32, #tpu.memory_space<vmem>>, vector<128x256xf32>
    %cst_109 = arith.constant dense<0.000000e+00> : vector<51x256xf32>
    %135 = tpu.matmul %133, %134, %cst_109 {dimension_numbers = #tpu.dot_dimension_numbers<[1], [0], [0], [1], [0, 0, 1, 1], [], []>} : vector<51x128xf32>, vector<128x256xf32>, vector<51x256xf32> -> vector<51x256xf32>
    %136 = arith.addf %132, %135 : vector<51x256xf32>
    %c9 = arith.constant 9 : index
    %c0_110 = arith.constant 0 : index
    %137 = vector.load %arg14[%c9, %c0_110] : memref<72x128xf32, #tpu.memory_space<vmem>>, vector<51x128xf32>
    %c896_111 = arith.constant 896 : index
    %c0_112 = arith.constant 0 : index
    %138 = vector.load %arg7[%c896_111, %c0_112] : memref<2048x256xf32, #tpu.memory_space<vmem>>, vector<128x256xf32>
    %cst_113 = arith.constant dense<0.000000e+00> : vector<51x256xf32>
    %139 = tpu.matmul %137, %138, %cst_113 {dimension_numbers = #tpu.dot_dimension_numbers<[1], [0], [0], [1], [0, 0, 1, 1], [], []>} : vector<51x128xf32>, vector<128x256xf32>, vector<51x256xf32> -> vector<51x256xf32>
    %140 = arith.addf %136, %139 : vector<51x256xf32>
    %c12_114 = arith.constant 12 : index
    %c0_115 = arith.constant 0 : index
    %141 = vector.load %arg14[%c12_114, %c0_115] : memref<72x128xf32, #tpu.memory_space<vmem>>, vector<51x128xf32>
    %c1024 = arith.constant 1024 : index
    %c0_116 = arith.constant 0 : index
    %142 = vector.load %arg7[%c1024, %c0_116] : memref<2048x256xf32, #tpu.memory_space<vmem>>, vector<128x256xf32>
    %cst_117 = arith.constant dense<0.000000e+00> : vector<51x256xf32>
    %143 = tpu.matmul %141, %142, %cst_117 {dimension_numbers = #tpu.dot_dimension_numbers<[1], [0], [0], [1], [0, 0, 1, 1], [], []>} : vector<51x128xf32>, vector<128x256xf32>, vector<51x256xf32> -> vector<51x256xf32>
    %144 = arith.addf %140, %143 : vector<51x256xf32>
    %c13_118 = arith.constant 13 : index
    %c0_119 = arith.constant 0 : index
    %145 = vector.load %arg14[%c13_118, %c0_119] : memref<72x128xf32, #tpu.memory_space<vmem>>, vector<51x128xf32>
    %c1152 = arith.constant 1152 : index
    %c0_120 = arith.constant 0 : index
    %146 = vector.load %arg7[%c1152, %c0_120] : memref<2048x256xf32, #tpu.memory_space<vmem>>, vector<128x256xf32>
    %cst_121 = arith.constant dense<0.000000e+00> : vector<51x256xf32>
    %147 = tpu.matmul %145, %146, %cst_121 {dimension_numbers = #tpu.dot_dimension_numbers<[1], [0], [0], [1], [0, 0, 1, 1], [], []>} : vector<51x128xf32>, vector<128x256xf32>, vector<51x256xf32> -> vector<51x256xf32>
    %148 = arith.addf %144, %147 : vector<51x256xf32>
    %c14 = arith.constant 14 : index
    %c0_122 = arith.constant 0 : index
    %149 = vector.load %arg14[%c14, %c0_122] : memref<72x128xf32, #tpu.memory_space<vmem>>, vector<51x128xf32>
    %c1280 = arith.constant 1280 : index
    %c0_123 = arith.constant 0 : index
    %150 = vector.load %arg7[%c1280, %c0_123] : memref<2048x256xf32, #tpu.memory_space<vmem>>, vector<128x256xf32>
    %cst_124 = arith.constant dense<0.000000e+00> : vector<51x256xf32>
    %151 = tpu.matmul %149, %150, %cst_124 {dimension_numbers = #tpu.dot_dimension_numbers<[1], [0], [0], [1], [0, 0, 1, 1], [], []>} : vector<51x128xf32>, vector<128x256xf32>, vector<51x256xf32> -> vector<51x256xf32>
    %152 = arith.addf %148, %151 : vector<51x256xf32>
    %c15 = arith.constant 15 : index
    %c0_125 = arith.constant 0 : index
    %153 = vector.load %arg14[%c15, %c0_125] : memref<72x128xf32, #tpu.memory_space<vmem>>, vector<51x128xf32>
    %c1408 = arith.constant 1408 : index
    %c0_126 = arith.constant 0 : index
    %154 = vector.load %arg7[%c1408, %c0_126] : memref<2048x256xf32, #tpu.memory_space<vmem>>, vector<128x256xf32>
    %cst_127 = arith.constant dense<0.000000e+00> : vector<51x256xf32>
    %155 = tpu.matmul %153, %154, %cst_127 {dimension_numbers = #tpu.dot_dimension_numbers<[1], [0], [0], [1], [0, 0, 1, 1], [], []>} : vector<51x128xf32>, vector<128x256xf32>, vector<51x256xf32> -> vector<51x256xf32>
    %156 = arith.addf %152, %155 : vector<51x256xf32>
    %c18 = arith.constant 18 : index
    %c0_128 = arith.constant 0 : index
    %157 = vector.load %arg14[%c18, %c0_128] : memref<72x128xf32, #tpu.memory_space<vmem>>, vector<51x128xf32>
    %c1536 = arith.constant 1536 : index
    %c0_129 = arith.constant 0 : index
    %158 = vector.load %arg7[%c1536, %c0_129] : memref<2048x256xf32, #tpu.memory_space<vmem>>, vector<128x256xf32>
    %cst_130 = arith.constant dense<0.000000e+00> : vector<51x256xf32>
    %159 = tpu.matmul %157, %158, %cst_130 {dimension_numbers = #tpu.dot_dimension_numbers<[1], [0], [0], [1], [0, 0, 1, 1], [], []>} : vector<51x128xf32>, vector<128x256xf32>, vector<51x256xf32> -> vector<51x256xf32>
    %160 = arith.addf %156, %159 : vector<51x256xf32>
    %c19 = arith.constant 19 : index
    %c0_131 = arith.constant 0 : index
    %161 = vector.load %arg14[%c19, %c0_131] : memref<72x128xf32, #tpu.memory_space<vmem>>, vector<51x128xf32>
    %c1664 = arith.constant 1664 : index
    %c0_132 = arith.constant 0 : index
    %162 = vector.load %arg7[%c1664, %c0_132] : memref<2048x256xf32, #tpu.memory_space<vmem>>, vector<128x256xf32>
    %cst_133 = arith.constant dense<0.000000e+00> : vector<51x256xf32>
    %163 = tpu.matmul %161, %162, %cst_133 {dimension_numbers = #tpu.dot_dimension_numbers<[1], [0], [0], [1], [0, 0, 1, 1], [], []>} : vector<51x128xf32>, vector<128x256xf32>, vector<51x256xf32> -> vector<51x256xf32>
    %164 = arith.addf %160, %163 : vector<51x256xf32>
    %c20_134 = arith.constant 20 : index
    %c0_135 = arith.constant 0 : index
    %165 = vector.load %arg14[%c20_134, %c0_135] : memref<72x128xf32, #tpu.memory_space<vmem>>, vector<51x128xf32>
    %c1792 = arith.constant 1792 : index
    %c0_136 = arith.constant 0 : index
    %166 = vector.load %arg7[%c1792, %c0_136] : memref<2048x256xf32, #tpu.memory_space<vmem>>, vector<128x256xf32>
    %cst_137 = arith.constant dense<0.000000e+00> : vector<51x256xf32>
    %167 = tpu.matmul %165, %166, %cst_137 {dimension_numbers = #tpu.dot_dimension_numbers<[1], [0], [0], [1], [0, 0, 1, 1], [], []>} : vector<51x128xf32>, vector<128x256xf32>, vector<51x256xf32> -> vector<51x256xf32>
    %168 = arith.addf %164, %167 : vector<51x256xf32>
    %c21_138 = arith.constant 21 : index
    %c0_139 = arith.constant 0 : index
    %169 = vector.load %arg14[%c21_138, %c0_139] : memref<72x128xf32, #tpu.memory_space<vmem>>, vector<51x128xf32>
    %c1920 = arith.constant 1920 : index
    %c0_140 = arith.constant 0 : index
    %170 = vector.load %arg7[%c1920, %c0_140] : memref<2048x256xf32, #tpu.memory_space<vmem>>, vector<128x256xf32>
    %cst_141 = arith.constant dense<0.000000e+00> : vector<51x256xf32>
    %171 = tpu.matmul %169, %170, %cst_141 {dimension_numbers = #tpu.dot_dimension_numbers<[1], [0], [0], [1], [0, 0, 1, 1], [], []>} : vector<51x128xf32>, vector<128x256xf32>, vector<51x256xf32> -> vector<51x256xf32>
    %172 = arith.addf %168, %171 : vector<51x256xf32>
    %c0_142 = arith.constant 0 : index
    %c0_143 = arith.constant 0 : index
    %173 = vector.load %arg8[%c0_142, %c0_143] : memref<51x1xf32, #tpu.memory_space<vmem>>, vector<51x1xf32>
    %174 = vector.broadcast %173 : vector<51x1xf32> to vector<51x256xf32>
    %175 = arith.mulf %172, %174 : vector<51x256xf32>
    %cst_144 = arith.constant dense<0.000000e+00> : vector<256xf32>
    %176 = vector.multi_reduction <add>, %175, %cst_144 [0] : vector<51x256xf32> to vector<256xf32>
    %177 = vector.shape_cast %176 : vector<256xf32> to vector<1x256xf32>
    %cst_145 = arith.constant 1.250000e-01 : f32
    %178 = vector.broadcast %cst_145 : f32 to vector<1x256xf32>
    %179 = arith.mulf %177, %178 : vector<1x256xf32>
    %180 = vector.broadcast %179 : vector<1x256xf32> to vector<51x256xf32>
    %181 = arith.subf %172, %180 : vector<51x256xf32>
    %182 = arith.mulf %181, %181 : vector<51x256xf32>
    %183 = vector.broadcast %173 : vector<51x1xf32> to vector<51x256xf32>
    %184 = arith.mulf %182, %183 : vector<51x256xf32>
    %cst_146 = arith.constant dense<0.000000e+00> : vector<256xf32>
    %185 = vector.multi_reduction <add>, %184, %cst_146 [0] : vector<51x256xf32> to vector<256xf32>
    %186 = vector.shape_cast %185 : vector<256xf32> to vector<1x256xf32>
    %cst_147 = arith.constant 1.250000e-01 : f32
    %187 = vector.broadcast %cst_147 : f32 to vector<1x256xf32>
    %188 = arith.mulf %186, %187 : vector<1x256xf32>
    %cst_148 = arith.constant 9.99999974E-6 : f32
    %189 = vector.broadcast %cst_148 : f32 to vector<1x256xf32>
    %190 = arith.addf %188, %189 : vector<1x256xf32>
    %191 = math.rsqrt %190 : vector<1x256xf32>
    %192 = vector.broadcast %191 : vector<1x256xf32> to vector<51x256xf32>
    %193 = arith.mulf %181, %192 : vector<51x256xf32>
    %cst_149 = arith.constant 0.000000e+00 : f32
    %194 = vector.broadcast %cst_149 : f32 to vector<51x256xf32>
    %195 = arith.cmpf ogt, %193, %194 : vector<51x256xf32>
    %cst_150 = arith.constant 2.000000e-01 : f32
    %196 = vector.broadcast %cst_150 : f32 to vector<51x256xf32>
    %197 = arith.mulf %196, %193 : vector<51x256xf32>
    %198 = arith.select %195, %193, %197 : vector<51x256xi1>, vector<51x256xf32>
    %c0_151 = arith.constant 0 : index
    %c0_152 = arith.constant 0 : index
    %199 = vector.load %arg9[%c0_151, %c0_152] : memref<32x51xf32, #tpu.memory_space<vmem>>, vector<32x51xf32>
    %cst_153 = arith.constant dense<0.000000e+00> : vector<32x256xf32>
    %200 = tpu.matmul %199, %198, %cst_153 {dimension_numbers = #tpu.dot_dimension_numbers<[1], [0], [0], [1], [0, 0, 1, 1], [], []>} : vector<32x51xf32>, vector<51x256xf32>, vector<32x256xf32> -> vector<32x256xf32>
    %c0_154 = arith.constant 0 : index
    %c0_155 = arith.constant 0 : index
    %201 = vector.load %arg10[%c0_154, %c0_155] : memref<32x256xf32, #tpu.memory_space<vmem>>, vector<32x256xf32>
    %202 = arith.mulf %200, %201 : vector<32x256xf32>
    %cst_156 = arith.constant dense<0.000000e+00> : vector<32xf32>
    %203 = vector.multi_reduction <add>, %202, %cst_156 [1] : vector<32x256xf32> to vector<32xf32>
    %204 = vector.shape_cast %203 : vector<32xf32> to vector<32x1xf32>
    %c0_157 = arith.constant 0 : index
    %c0_158 = arith.constant 0 : index
    %205 = vector.load %arg11[%c0_157, %c0_158] : memref<2x32xf32, #tpu.memory_space<vmem>>, vector<2x32xf32>
    %cst_159 = arith.constant dense<0.000000e+00> : vector<2x1xf32>
    %206 = tpu.matmul %205, %204, %cst_159 {dimension_numbers = #tpu.dot_dimension_numbers<[1], [0], [0], [1], [0, 0, 1, 1], [], []>} : vector<2x32xf32>, vector<32x1xf32>, vector<2x1xf32> -> vector<2x1xf32>
    %c0_160 = arith.constant 0 : index
    %c0_161 = arith.constant 0 : index
    %207 = vector.load %arg12[%c0_160, %c0_161] : memref<2x1xf32, #tpu.memory_space<vmem>>, vector<2x1xf32>
    tpu.vector_store %arg12[%c0_160, %c0_161], %206 {strides = array<i32>} : memref<2x1xf32, #tpu.memory_space<vmem>>, vector<2x1xf32>,
    return
  }
}

</mosaic_0001>

<llo_original>
// kernel: forward.1
$region0: #{forward.1}
  #allocation0 [shape = 'u32[]', space=smem, size = 0x4, offset = 0x4, fixed_abs, tag = 'smem constant byte address 0x4 - core index']
  #allocation1 [shape = 'u32[72,128]{1,0:T(1,128)}', space=vmem, size = 0x9000, scoped, tag = 'internal scratch']
  #allocation2 [shape = 'f32[200,64]{1,0:T(8,128)}', space=vmem, size = 0x19000, scoped, tag = 'scratch operand']
  #allocation3 [shape = 'f32[72,128]{1,0:T(8,128)}', space=vmem, size = 0x9000, scoped, tag = 'scratch operand']
  %s0 = inlined_call_operand.vmem [shape: f32[128,64], index: 0, kind: input, shape index: {}]
  %s1 = inlined_call_operand.vmem [shape: f32[64,64], index: 1, kind: input, shape index: {}]
  %s2 = inlined_call_operand.vmem [shape: f32[1,64], index: 2, kind: input, shape index: {}]
  %s3 = inlined_call_operand.vmem [shape: f32[200,128], index: 3, kind: input, shape index: {}]
  %s4 = inlined_call_operand.vmem [shape: f32[1024,128], index: 4, kind: input, shape index: {}]
  %s5 = inlined_call_operand.vmem [shape: f32[167,1], index: 5, kind: input, shape index: {}]
  %s6 = inlined_call_operand.vmem [shape: f32[72,167], index: 6, kind: input, shape index: {}]
  %s7 = inlined_call_operand.vmem [shape: f32[2048,256], index: 7, kind: input, shape index: {}]
  %s8 = inlined_call_operand.vmem [shape: f32[51,1], index: 8, kind: input, shape index: {}]
  %s9 = inlined_call_operand.vmem [shape: f32[32,51], index: 9, kind: input, shape index: {}]
  %s10 = inlined_call_operand.vmem [shape: f32[32,256], index: 10, kind: input, shape index: {}]
  %s11 = inlined_call_operand.vmem [shape: f32[2,32], index: 11, kind: input, shape index: {}]
  %s12 = inlined_call_operand.vmem [shape: f32[2,1], index: 12, kind: output, shape index: {}]
  %s13 = sld [smem:[#allocation0]]
  $region58: #{forward.1} parent=0
    _
  %s15 = ssub.s32 1, %s13
  %s16 = scalar_select 0, %s15, %s13
  // Predicated region
  $region2: #{forward.1} parent=0 // pred_check
    _
  $region3: #{forward.1} parent=0 // pred_check_branch
    %18 = sbr.rel (0) target = $region5
  $region4: #{forward.1} parent=0 // pred_region
    _
  $region5: #{forward.1} parent=0 // pred_fallthru
    _
  // Predicated region
  $region6: #{forward.1} parent=0 // pred_check
    _
  $region7: #{forward.1} parent=0 // pred_check_branch
    %20 = sbr.rel (0) target = $region9
  $region8: #{forward.1} parent=0 // pred_region
    _
  $region9: #{forward.1} parent=0 // pred_fallthru
    _
  // Predicated region
  $region10: #{forward.1} parent=0 // pred_check
    _
  $region11: #{forward.1} parent=0 // pred_check_branch
    %22 = sbr.rel (0) target = $region13
  $region12: #{forward.1} parent=0 // pred_region
    _
  $region13: #{forward.1} parent=0 // pred_fallthru
    _
  // Predicated region
  $region14: #{forward.1} parent=0 // pred_check
    _
  $region15: #{forward.1} parent=0 // pred_check_branch
    %24 = sbr.rel (0) target = $region17
  $region16: #{forward.1} parent=0 // pred_region
    _
  $region17: #{forward.1} parent=0 // pred_fallthru
    _
  // Predicated region
  $region18: #{forward.1} parent=0 // pred_check
    _
  $region19: #{forward.1} parent=0 // pred_check_branch
    %26 = sbr.rel (0) target = $region21
  $region20: #{forward.1} parent=0 // pred_region
    _
  $region21: #{forward.1} parent=0 // pred_fallthru
    _
  // Predicated region
  $region22: #{forward.1} parent=0 // pred_check
    _
  $region23: #{forward.1} parent=0 // pred_check_branch
    %28 = sbr.rel (0) target = $region25
  $region24: #{forward.1} parent=0 // pred_region
    _
  $region25: #{forward.1} parent=0 // pred_fallthru
    _
  // Predicated region
  $region26: #{forward.1} parent=0 // pred_check
    _
  $region27: #{forward.1} parent=0 // pred_check_branch
    %30 = sbr.rel (0) target = $region29
  $region28: #{forward.1} parent=0 // pred_region
    _
  $region29: #{forward.1} parent=0 // pred_fallthru
    _
  // Predicated region
  $region30: #{forward.1} parent=0 // pred_check
    _
  $region31: #{forward.1} parent=0 // pred_check_branch
    %32 = sbr.rel (0) target = $region33
  $region32: #{forward.1} parent=0 // pred_region
    _
  $region33: #{forward.1} parent=0 // pred_fallthru
    _
  // Predicated region
  $region34: #{forward.1} parent=0 // pred_check
    _
  $region35: #{forward.1} parent=0 // pred_check_branch
    %34 = sbr.rel (0) target = $region37
  $region36: #{forward.1} parent=0 // pred_region
    _
  $region37: #{forward.1} parent=0 // pred_fallthru
    _
  // Predicated region
  $region38: #{forward.1} parent=0 // pred_check
    _
  $region39: #{forward.1} parent=0 // pred_check_branch
    %36 = sbr.rel (0) target = $region41
  $region40: #{forward.1} parent=0 // pred_region
    _
  $region41: #{forward.1} parent=0 // pred_fallthru
    _
  // Predicated region
  $region42: #{forward.1} parent=0 // pred_check
    _
  $region43: #{forward.1} parent=0 // pred_check_branch
    %38 = sbr.rel (0) target = $region45
  $region44: #{forward.1} parent=0 // pred_region
    _
  $region45: #{forward.1} parent=0 // pred_fallthru
    _
  // Predicated region
  $region46: #{forward.1} parent=0 // pred_check
    _
  $region47: #{forward.1} parent=0 // pred_check_branch
    %40 = sbr.rel (0) target = $region49
  $region48: #{forward.1} parent=0 // pred_region
    _
  $region49: #{forward.1} parent=0 // pred_fallthru
    _
  %v41 = vld [vmem:[%s0] sm:$0xff]
  %v42 = vld [vmem:[%s0 + $0x8] sm:$0xff]
  %v43 = vld [vmem:[%s0 + $0x10] sm:$0xff]
  %v44 = vld [vmem:[%s0 + $0x18] sm:$0xff]
  %v45 = vld [vmem:[%s0 + $0x20] sm:$0xff]
  %v46 = vld [vmem:[%s0 + $0x28] sm:$0xff]
  %v47 = vld [vmem:[%s0 + $0x30] sm:$0xff]
  %v48 = vld [vmem:[%s0 + $0x38] sm:$0xff]
  %v49 = vld [vmem:[%s0 + $0x40] sm:$0xff]
  %v50 = vld [vmem:[%s0 + $0x48] sm:$0xff]
  %v51 = vld [vmem:[%s0 + $0x50] sm:$0xff]
  %v52 = vld [vmem:[%s0 + $0x58] sm:$0xff]
  %v53 = vld [vmem:[%s0 + $0x60] sm:$0xff]
  %v54 = vld [vmem:[%s0 + $0x68] sm:$0xff]
  %v55 = vld [vmem:[%s0 + $0x70] sm:$0xff]
  %v56 = vld [vmem:[%s0 + $0x78] sm:$0xff]
  %v57 = vld [vmem:[%s1] sm:$0xff]
  %v58 = vld [vmem:[%s1 + $0x8] sm:$0xff]
  %v59 = vld [vmem:[%s1 + $0x10] sm:$0xff]
  %v60 = vld [vmem:[%s1 + $0x18] sm:$0xff]
  %v61 = vld [vmem:[%s1 + $0x20] sm:$0xff]
  %v62 = vld [vmem:[%s1 + $0x28] sm:$0xff]
  %v63 = vld [vmem:[%s1 + $0x30] sm:$0xff]
  %v64 = vld [vmem:[%s1 + $0x38] sm:$0xff]
  %v65 = vld [vmem:[%s2] sm:$0x1]
  %v67 = vperm.slane %v65, 0
  %vm69 = vcmask 523264
  %v71 = vsel %vm69, %v41, 0
  %v74 = vsel %vm69, %v42, 0
  %v77 = vsel %vm69, %v43, 0
  %v80 = vsel %vm69, %v44, 0
  %v83 = vsel %vm69, %v45, 0
  %v86 = vsel %vm69, %v46, 0
  %v89 = vsel %vm69, %v47, 0
  %v92 = vsel %vm69, %v48, 0
  %v95 = vsel %vm69, %v49, 0
  %v98 = vsel %vm69, %v50, 0
  %v101 = vsel %vm69, %v51, 0
  %v104 = vsel %vm69, %v52, 0
  %v107 = vsel %vm69, %v53, 0
  %v110 = vsel %vm69, %v54, 0
  %v113 = vsel %vm69, %v55, 0
  %v116 = vsel %vm69, %v56, 0
  %118 = vmatpush.msra.mxu0 0.0
  %119 = vmatpush.msra.mxu0 0.0
  %120 = vmatpush.msra.mxu0 0.0
  %121 = vmatpush.msra.mxu0 0.0
  %122 = vmatpush.msra.mxu0 0.0
  %123 = vmatpush.msra.mxu0 0.0
  %124 = vmatpush.msra.mxu0 0.0
  %125 = vmatpush.msra.mxu0 0.0
  %126 = vmatpush.msra.mxu0 %v64
  %127 = vmatpush.msra.mxu0 %v63
  %128 = vmatpush.msra.mxu0 %v62
  %129 = vmatpush.msra.mxu0 %v61
  %130 = vmatpush.msra.mxu0 %v60
  %131 = vmatpush.msra.mxu0 %v59
  %132 = vmatpush.msra.mxu0 %v58
  %133 = vmatpush.msra.mxu0 %v57
  %134 = vmatmul.f32.gmra.mxu0 %v71
  %v135 = vpop.f32.mrf.mxu0
  %v136 = vadd.f32 %v67, %v135
  %137 = vmatmul.f32.gmra.mxu0 %v74
  %v138 = vpop.f32.mrf.mxu0
  %v139 = vadd.f32 %v67, %v138
  %140 = vmatmul.f32.gmra.mxu0 %v77
  %v141 = vpop.f32.mrf.mxu0
  %v142 = vadd.f32 %v67, %v141
  %143 = vmatmul.f32.gmra.mxu0 %v80
  %v144 = vpop.f32.mrf.mxu0
  %v145 = vadd.f32 %v67, %v144
  %146 = vmatmul.f32.gmra.mxu0 %v83
  %v147 = vpop.f32.mrf.mxu0
  %v148 = vadd.f32 %v67, %v147
  %149 = vmatmul.f32.gmra.mxu0 %v86
  %v150 = vpop.f32.mrf.mxu0
  %v151 = vadd.f32 %v67, %v150
  %152 = vmatmul.f32.gmra.mxu0 %v89
  %v153 = vpop.f32.mrf.mxu0
  %v154 = vadd.f32 %v67, %v153
  %155 = vmatmul.f32.gmra.mxu0 %v92
  %v156 = vpop.f32.mrf.mxu0
  %v157 = vadd.f32 %v67, %v156
  %158 = vmatmul.f32.gmra.mxu0 %v95
  %v159 = vpop.f32.mrf.mxu0
  %v160 = vadd.f32 %v67, %v159
  %161 = vmatmul.f32.gmra.mxu0 %v98
  %v162 = vpop.f32.mrf.mxu0
  %v163 = vadd.f32 %v67, %v162
  %164 = vmatmul.f32.gmra.mxu0 %v101
  %v165 = vpop.f32.mrf.mxu0
  %v166 = vadd.f32 %v67, %v165
  %167 = vmatmul.f32.gmra.mxu0 %v104
  %v168 = vpop.f32.mrf.mxu0
  %v169 = vadd.f32 %v67, %v168
  %170 = vmatmul.f32.gmra.mxu0 %v107
  %v171 = vpop.f32.mrf.mxu0
  %v172 = vadd.f32 %v67, %v171
  %173 = vmatmul.f32.gmra.mxu0 %v110
  %v174 = vpop.f32.mrf.mxu0
  %v175 = vadd.f32 %v67, %v174
  %176 = vmatmul.f32.gmra.mxu0 %v113
  %v177 = vpop.f32.mrf.mxu0
  %v178 = vadd.f32 %v67, %v177
  %179 = vmatmul.f32.gmra.mxu0 %v116
  %v180 = vpop.f32.mrf.mxu0
  %v181 = vadd.f32 %v67, %v180
  %182 = vdwg.mxu0
  %vm183 = vcmp.gt.f32.partialorder %v136, 0.0
  %vm184 = vcmp.gt.f32.partialorder %v139, 0.0
  %vm185 = vcmp.gt.f32.partialorder %v142, 0.0
  %vm186 = vcmp.gt.f32.partialorder %v145, 0.0
  %vm187 = vcmp.gt.f32.partialorder %v148, 0.0
  %vm188 = vcmp.gt.f32.partialorder %v151, 0.0
  %vm189 = vcmp.gt.f32.partialorder %v154, 0.0
  %vm190 = vcmp.gt.f32.partialorder %v157, 0.0
  %vm191 = vcmp.gt.f32.partialorder %v160, 0.0
  %vm192 = vcmp.gt.f32.partialorder %v163, 0.0
  %vm193 = vcmp.gt.f32.partialorder %v166, 0.0
  %vm194 = vcmp.gt.f32.partialorder %v169, 0.0
  %vm195 = vcmp.gt.f32.partialorder %v172, 0.0
  %vm196 = vcmp.gt.f32.partialorder %v175, 0.0
  %vm197 = vcmp.gt.f32.partialorder %v178, 0.0
  %vm198 = vcmp.gt.f32.partialorder %v181, 0.0
  %v199 = vmul.f32 %v136, 0.2
  %v200 = vmul.f32 %v139, 0.2
  %v201 = vmul.f32 %v142, 0.2
  %v202 = vmul.f32 %v145, 0.2
  %v203 = vmul.f32 %v148, 0.2
  %v204 = vmul.f32 %v151, 0.2
  %v205 = vmul.f32 %v154, 0.2
  %v206 = vmul.f32 %v157, 0.2
  %v207 = vmul.f32 %v160, 0.2
  %v208 = vmul.f32 %v163, 0.2
  %v209 = vmul.f32 %v166, 0.2
  %v210 = vmul.f32 %v169, 0.2
  %v211 = vmul.f32 %v172, 0.2
  %v212 = vmul.f32 %v175, 0.2
  %v213 = vmul.f32 %v178, 0.2
  %v214 = vmul.f32 %v181, 0.2
  %v215 = vsel %vm183, %v136, %v199
  %v216 = vsel %vm184, %v139, %v200
  %v217 = vsel %vm185, %v142, %v201
  %v218 = vsel %vm186, %v145, %v202
  %v219 = vsel %vm187, %v148, %v203
  %v220 = vsel %vm188, %v151, %v204
  %v221 = vsel %vm189, %v154, %v205
  %v222 = vsel %vm190, %v157, %v206
  %v223 = vsel %vm191, %v160, %v207
  %v224 = vsel %vm192, %v163, %v208
  %v225 = vsel %vm193, %v166, %v209
  %v226 = vsel %vm194, %v169, %v210
  %v227 = vsel %vm195, %v172, %v211
  %v228 = vsel %vm196, %v175, %v212
  %v229 = vsel %vm197, %v178, %v213
  %v230 = vsel %vm198, %v181, %v214
  %v231 = vld [vmem:[%s3] sm:$0xff]
  %v232 = vld [vmem:[%s3 + $0x8] sm:$0xff]
  %v233 = vld [vmem:[%s3 + $0x10] sm:$0xff]
  %v234 = vld [vmem:[%s3 + $0x18] sm:$0xff]
  %v235 = vld [vmem:[%s3 + $0x20] sm:$0xff]
  %v236 = vld [vmem:[%s3 + $0x28] sm:$0xff]
  %v237 = vld [vmem:[%s3 + $0x30] sm:$0xff]
  %v238 = vld [vmem:[%s3 + $0x38] sm:$0xff]
  %v239 = vld [vmem:[%s3 + $0x40] sm:$0xff]
  %v240 = vld [vmem:[%s3 + $0x48] sm:$0xff]
  %v241 = vld [vmem:[%s3 + $0x50] sm:$0xff]
  %v242 = vld [vmem:[%s3 + $0x58] sm:$0xff]
  %v243 = vld [vmem:[%s3 + $0x60] sm:$0xff]
  %v244 = vld [vmem:[%s3 + $0x68] sm:$0xff]
  %v245 = vld [vmem:[%s3 + $0x70] sm:$0xff]
  %v246 = vld [vmem:[%s3 + $0x78] sm:$0xff]
  %v247 = vld [vmem:[%s3 + $0x80] sm:$0xff]
  %v248 = vld [vmem:[%s3 + $0x88] sm:$0xff]
  %v249 = vld [vmem:[%s3 + $0x90] sm:$0xff]
  %v250 = vld [vmem:[%s3 + $0x98] sm:$0xff]
  %v251 = vld [vmem:[%s3 + $0xa0] sm:$0xff]
  %v252 = vld [vmem:[%s3 + $0xa8] sm:$0xff]
  %v253 = vld [vmem:[%s3 + $0xb0] sm:$0xff]
  %v254 = vld [vmem:[%s3 + $0xb8] sm:$0xff]
  %v255 = vld [vmem:[%s3 + $0xc0] sm:$0xff]
  %256 = vmatpush.msra.mxu0 %v230
  %257 = vmatpush.msra.mxu0 %v229
  %258 = vmatpush.msra.mxu0 %v228
  %259 = vmatpush.msra.mxu0 %v227
  %260 = vmatpush.msra.mxu0 %v226
  %261 = vmatpush.msra.mxu0 %v225
  %262 = vmatpush.msra.mxu0 %v224
  %263 = vmatpush.msra.mxu0 %v223
  %264 = vmatpush.msra.mxu0 %v222
  %265 = vmatpush.msra.mxu0 %v221
  %266 = vmatpush.msra.mxu0 %v220
  %267 = vmatpush.msra.mxu0 %v219
  %268 = vmatpush.msra.mxu0 %v218
  %269 = vmatpush.msra.mxu0 %v217
  %270 = vmatpush.msra.mxu0 %v216
  %271 = vmatpush.msra.mxu0 %v215
  %272 = vmatmul.f32.gmra.mxu0 %v231
  %v273 = vpop.f32.mrf.mxu0
  %v274 = vadd.f32 0.0, %v273
  %275 = vmatmul.f32.gmra.mxu0 %v232
  %v276 = vpop.f32.mrf.mxu0
  %v277 = vadd.f32 0.0, %v276
  %278 = vmatmul.f32.gmra.mxu0 %v233
  %v279 = vpop.f32.mrf.mxu0
  %v280 = vadd.f32 0.0, %v279
  %281 = vmatmul.f32.gmra.mxu0 %v234
  %v282 = vpop.f32.mrf.mxu0
  %v283 = vadd.f32 0.0, %v282
  %284 = vmatmul.f32.gmra.mxu0 %v235
  %v285 = vpop.f32.mrf.mxu0
  %v286 = vadd.f32 0.0, %v285
  %287 = vmatmul.f32.gmra.mxu0 %v236
  %v288 = vpop.f32.mrf.mxu0
  %v289 = vadd.f32 0.0, %v288
  %290 = vmatmul.f32.gmra.mxu0 %v237
  %v291 = vpop.f32.mrf.mxu0
  %v292 = vadd.f32 0.0, %v291
  %293 = vmatmul.f32.gmra.mxu0 %v238
  %v294 = vpop.f32.mrf.mxu0
  %v295 = vadd.f32 0.0, %v294
  %296 = vmatmul.f32.gmra.mxu0 %v239
  %v297 = vpop.f32.mrf.mxu0
  %v298 = vadd.f32 0.0, %v297
  %299 = vmatmul.f32.gmra.mxu0 %v240
  %v300 = vpop.f32.mrf.mxu0
  %v301 = vadd.f32 0.0, %v300
  %302 = vmatmul.f32.gmra.mxu0 %v241
  %v303 = vpop.f32.mrf.mxu0
  %v304 = vadd.f32 0.0, %v303
  %305 = vmatmul.f32.gmra.mxu0 %v242
  %v306 = vpop.f32.mrf.mxu0
  %v307 = vadd.f32 0.0, %v306
  %308 = vmatmul.f32.gmra.mxu0 %v243
  %v309 = vpop.f32.mrf.mxu0
  %v310 = vadd.f32 0.0, %v309
  %311 = vmatmul.f32.gmra.mxu0 %v244
  %v312 = vpop.f32.mrf.mxu0
  %v313 = vadd.f32 0.0, %v312
  %314 = vmatmul.f32.gmra.mxu0 %v245
  %v315 = vpop.f32.mrf.mxu0
  %v316 = vadd.f32 0.0, %v315
  %317 = vmatmul.f32.gmra.mxu0 %v246
  %v318 = vpop.f32.mrf.mxu0
  %v319 = vadd.f32 0.0, %v318
  %320 = vmatmul.f32.gmra.mxu0 %v247
  %v321 = vpop.f32.mrf.mxu0
  %v322 = vadd.f32 0.0, %v321
  %323 = vmatmul.f32.gmra.mxu0 %v248
  %v324 = vpop.f32.mrf.mxu0
  %v325 = vadd.f32 0.0, %v324
  %326 = vmatmul.f32.gmra.mxu0 %v249
  %v327 = vpop.f32.mrf.mxu0
  %v328 = vadd.f32 0.0, %v327
  %329 = vmatmul.f32.gmra.mxu0 %v250
  %v330 = vpop.f32.mrf.mxu0
  %v331 = vadd.f32 0.0, %v330
  %332 = vmatmul.f32.gmra.mxu0 %v251
  %v333 = vpop.f32.mrf.mxu0
  %v334 = vadd.f32 0.0, %v333
  %335 = vmatmul.f32.gmra.mxu0 %v252
  %v336 = vpop.f32.mrf.mxu0
  %v337 = vadd.f32 0.0, %v336
  %338 = vmatmul.f32.gmra.mxu0 %v253
  %v339 = vpop.f32.mrf.mxu0
  %v340 = vadd.f32 0.0, %v339
  %341 = vmatmul.f32.gmra.mxu0 %v254
  %v342 = vpop.f32.mrf.mxu0
  %v343 = vadd.f32 0.0, %v342
  %344 = vmatmul.f32.gmra.mxu0 %v255
  %v345 = vpop.f32.mrf.mxu0
  %v346 = vadd.f32 0.0, %v345
  %347 = vdwg.mxu0
  %348 = vst.msk [vmem:[#allocation2] sm:$0xff] %vm69, %v274
  %349 = vst.msk [vmem:[#allocation2 + $0x8] sm:$0xff] %vm69, %v277
  %350 = vst.msk [vmem:[#allocation2 + $0x10] sm:$0xff] %vm69, %v280
  %351 = vst.msk [vmem:[#allocation2 + $0x18] sm:$0xff] %vm69, %v283
  %352 = vst.msk [vmem:[#allocation2 + $0x20] sm:$0xff] %vm69, %v286
  %353 = vst.msk [vmem:[#allocation2 + $0x28] sm:$0xff] %vm69, %v289
  %354 = vst.msk [vmem:[#allocation2 + $0x30] sm:$0xff] %vm69, %v292
  %355 = vst.msk [vmem:[#allocation2 + $0x38] sm:$0xff] %vm69, %v295
  %356 = vst.msk [vmem:[#allocation2 + $0x40] sm:$0xff] %vm69, %v298
  %357 = vst.msk [vmem:[#allocation2 + $0x48] sm:$0xff] %vm69, %v301
  %358 = vst.msk [vmem:[#allocation2 + $0x50] sm:$0xff] %vm69, %v304
  %359 = vst.msk [vmem:[#allocation2 + $0x58] sm:$0xff] %vm69, %v307
  %360 = vst.msk [vmem:[#allocation2 + $0x60] sm:$0xff] %vm69, %v310
  %361 = vst.msk [vmem:[#allocation2 + $0x68] sm:$0xff] %vm69, %v313
  %362 = vst.msk [vmem:[#allocation2 + $0x70] sm:$0xff] %vm69, %v316
  %363 = vst.msk [vmem:[#allocation2 + $0x78] sm:$0xff] %vm69, %v319
  %364 = vst.msk [vmem:[#allocation2 + $0x80] sm:$0xff] %vm69, %v322
  %365 = vst.msk [vmem:[#allocation2 + $0x88] sm:$0xff] %vm69, %v325
  %366 = vst.msk [vmem:[#allocation2 + $0x90] sm:$0xff] %vm69, %v328
  %367 = vst.msk [vmem:[#allocation2 + $0x98] sm:$0xff] %vm69, %v331
  %368 = vst.msk [vmem:[#allocation2 + $0xa0] sm:$0xff] %vm69, %v334
  %369 = vst.msk [vmem:[#allocation2 + $0xa8] sm:$0xff] %vm69, %v337
  %370 = vst.msk [vmem:[#allocation2 + $0xb0] sm:$0xff] %vm69, %v340
  %371 = vst.msk [vmem:[#allocation2 + $0xb8] sm:$0xff] %vm69, %v343
  %372 = vst.msk [vmem:[#allocation2 + $0xc0] sm:$0xff] %vm69, %v346
  %v373 = vld [vmem:[#allocation2] sm:$0xff]
  %v374 = vld [vmem:[#allocation2 + $0x8] sm:$0xff]
  %v375 = vld [vmem:[#allocation2 + $0x10] sm:$0xff]
  %v376 = vld [vmem:[#allocation2 + $0x18] sm:$0xff]
  %v377 = vld [vmem:[#allocation2 + $0x20] sm:$0xff]
  %v378 = vld [vmem:[#allocation2 + $0x28] sm:$0xff]
  %v379 = vld [vmem:[#allocation2 + $0x30] sm:$0xff]
  %v380 = vld [vmem:[#allocation2 + $0x38] sm:$0xff]
  %v381 = vld [vmem:[#allocation2 + $0x40] sm:$0xff]
  %v382 = vld [vmem:[#allocation2 + $0x48] sm:$0xff]
  %v383 = vld [vmem:[#allocation2 + $0x50] sm:$0xff]
  %v384 = vld [vmem:[#allocation2 + $0x58] sm:$0xff]
  %v385 = vld [vmem:[#allocation2 + $0x60] sm:$0xff]
  %v386 = vld [vmem:[#allocation2 + $0x68] sm:$0xff]
  %v387 = vld [vmem:[#allocation2 + $0x70] sm:$0xff]
  %v388 = vld [vmem:[#allocation2 + $0x78] sm:$0xff]
  %v389 = vld [vmem:[#allocation2 + $0x80] sm:$0xff]
  %v390 = vld [vmem:[#allocation2 + $0x88] sm:$0xff]
  %v391 = vld [vmem:[#allocation2 + $0x90] sm:$0xff]
  %v392 = vld [vmem:[#allocation2 + $0x98] sm:$0xff]
  %v393 = vld [vmem:[#allocation2 + $0xa0] sm:$0x7f]
  %v394 = vld [vmem:[%s4] sm:$0xff]
  %v395 = vld [vmem:[%s4 + $0x8] sm:$0xff]
  %v396 = vld [vmem:[%s4 + $0x10] sm:$0xff]
  %v397 = vld [vmem:[%s4 + $0x18] sm:$0xff]
  %v398 = vld [vmem:[%s4 + $0x20] sm:$0xff]
  %v399 = vld [vmem:[%s4 + $0x28] sm:$0xff]
  %v400 = vld [vmem:[%s4 + $0x30] sm:$0xff]
  %v401 = vld [vmem:[%s4 + $0x38] sm:$0xff]
  %v402 = vld [vmem:[#allocation2 + $0x1] sm:$0xff]
  %v403 = vld [vmem:[#allocation2 + $0x9] sm:$0xff]
  %v404 = vld [vmem:[#allocation2 + $0x11] sm:$0xff]
  %v405 = vld [vmem:[#allocation2 + $0x19] sm:$0xff]
  %v406 = vld [vmem:[#allocation2 + $0x21] sm:$0xff]
  %v407 = vld [vmem:[#allocation2 + $0x29] sm:$0xff]
  %v408 = vld [vmem:[#allocation2 + $0x31] sm:$0xff]
  %v409 = vld [vmem:[#allocation2 + $0x39] sm:$0xff]
  %v410 = vld [vmem:[#allocation2 + $0x41] sm:$0xff]
  %v411 = vld [vmem:[#allocation2 + $0x49] sm:$0xff]
  %v412 = vld [vmem:[#allocation2 + $0x51] sm:$0xff]
  %v413 = vld [vmem:[#allocation2 + $0x59] sm:$0xff]
  %v414 = vld [vmem:[#allocation2 + $0x61] sm:$0xff]
  %v415 = vld [vmem:[#allocation2 + $0x69] sm:$0xff]
  %v416 = vld [vmem:[#allocation2 + $0x71] sm:$0xff]
  %v417 = vld [vmem:[#allocation2 + $0x79] sm:$0xff]
  %v418 = vld [vmem:[#allocation2 + $0x81] sm:$0xff]
  %v419 = vld [vmem:[#allocation2 + $0x89] sm:$0xff]
  %v420 = vld [vmem:[#allocation2 + $0x91] sm:$0xff]
  %v421 = vld [vmem:[#allocation2 + $0x99] sm:$0xff]
  %v422 = vld [vmem:[#allocation2 + $0xa1] sm:$0x7f]
  %v423 = vld [vmem:[%s4 + $0x40] sm:$0xff]
  %v424 = vld [vmem:[%s4 + $0x48] sm:$0xff]
  %v425 = vld [vmem:[%s4 + $0x50] sm:$0xff]
  %v426 = vld [vmem:[%s4 + $0x58] sm:$0xff]
  %v427 = vld [vmem:[%s4 + $0x60] sm:$0xff]
  %v428 = vld [vmem:[%s4 + $0x68] sm:$0xff]
  %v429 = vld [vmem:[%s4 + $0x70] sm:$0xff]
  %v430 = vld [vmem:[%s4 + $0x78] sm:$0xff]
  %v432 = vsel %vm69, %v402, 0
  %v435 = vsel %vm69, %v403, 0
  %v438 = vsel %vm69, %v404, 0
  %v441 = vsel %vm69, %v405, 0
  %v444 = vsel %vm69, %v406, 0
  %v447 = vsel %vm69, %v407, 0
  %v450 = vsel %vm69, %v408, 0
  %v453 = vsel %vm69, %v409, 0
  %v456 = vsel %vm69, %v410, 0
  %v459 = vsel %vm69, %v411, 0
  %v462 = vsel %vm69, %v412, 0
  %v465 = vsel %vm69, %v413, 0
  %v468 = vsel %vm69, %v414, 0
  %v471 = vsel %vm69, %v415, 0
  %v474 = vsel %vm69, %v416, 0
  %v477 = vsel %vm69, %v417, 0
  %v480 = vsel %vm69, %v418, 0
  %v483 = vsel %vm69, %v419, 0
  %v486 = vsel %vm69, %v420, 0
  %v489 = vsel %vm69, %v421, 0
  %v492 = vsel %vm69, %v422, 0
  %494 = vmatpush.msra.mxu0 0.0
  %495 = vmatpush.msra.mxu0 0.0
  %496 = vmatpush.msra.mxu0 0.0
  %497 = vmatpush.msra.mxu0 0.0
  %498 = vmatpush.msra.mxu0 0.0
  %499 = vmatpush.msra.mxu0 0.0
  %500 = vmatpush.msra.mxu0 0.0
  %501 = vmatpush.msra.mxu0 0.0
  %502 = vmatpush.msra.mxu0 %v430
  %503 = vmatpush.msra.mxu0 %v429
  %504 = vmatpush.msra.mxu0 %v428
  %505 = vmatpush.msra.mxu0 %v427
  %506 = vmatpush.msra.mxu0 %v426
  %507 = vmatpush.msra.mxu0 %v425
  %508 = vmatpush.msra.mxu0 %v424
  %509 = vmatpush.msra.mxu0 %v423
  %510 = vmatmul.f32.gmra.mxu0 %v432
  %v511 = vpop.f32.mrf.mxu0
  %v512 = vadd.f32 0.0, %v511
  %513 = vmatmul.f32.gmra.mxu0 %v435
  %v514 = vpop.f32.mrf.mxu0
  %v515 = vadd.f32 0.0, %v514
  %516 = vmatmul.f32.gmra.mxu0 %v438
  %v517 = vpop.f32.mrf.mxu0
  %v518 = vadd.f32 0.0, %v517
  %519 = vmatmul.f32.gmra.mxu0 %v441
  %v520 = vpop.f32.mrf.mxu0
  %v521 = vadd.f32 0.0, %v520
  %522 = vmatmul.f32.gmra.mxu0 %v444
  %v523 = vpop.f32.mrf.mxu0
  %v524 = vadd.f32 0.0, %v523
  %525 = vmatmul.f32.gmra.mxu0 %v447
  %v526 = vpop.f32.mrf.mxu0
  %v527 = vadd.f32 0.0, %v526
  %528 = vmatmul.f32.gmra.mxu0 %v450
  %v529 = vpop.f32.mrf.mxu0
  %v530 = vadd.f32 0.0, %v529
  %531 = vmatmul.f32.gmra.mxu0 %v453
  %v532 = vpop.f32.mrf.mxu0
  %v533 = vadd.f32 0.0, %v532
  %534 = vmatmul.f32.gmra.mxu0 %v456
  %v535 = vpop.f32.mrf.mxu0
  %v536 = vadd.f32 0.0, %v535
  %537 = vmatmul.f32.gmra.mxu0 %v459
  %v538 = vpop.f32.mrf.mxu0
  %v539 = vadd.f32 0.0, %v538
  %540 = vmatmul.f32.gmra.mxu0 %v462
  %v541 = vpop.f32.mrf.mxu0
  %v542 = vadd.f32 0.0, %v541
  %543 = vmatmul.f32.gmra.mxu0 %v465
  %v544 = vpop.f32.mrf.mxu0
  %v545 = vadd.f32 0.0, %v544
  %546 = vmatmul.f32.gmra.mxu0 %v468
  %v547 = vpop.f32.mrf.mxu0
  %v548 = vadd.f32 0.0, %v547
  %549 = vmatmul.f32.gmra.mxu0 %v471
  %v550 = vpop.f32.mrf.mxu0
  %v551 = vadd.f32 0.0, %v550
  %552 = vmatmul.f32.gmra.mxu0 %v474
  %v553 = vpop.f32.mrf.mxu0
  %v554 = vadd.f32 0.0, %v553
  %555 = vmatmul.f32.gmra.mxu0 %v477
  %v556 = vpop.f32.mrf.mxu0
  %v557 = vadd.f32 0.0, %v556
  %558 = vmatmul.f32.gmra.mxu0 %v480
  %v559 = vpop.f32.mrf.mxu0
  %v560 = vadd.f32 0.0, %v559
  %561 = vmatmul.f32.gmra.mxu0 %v483
  %v562 = vpop.f32.mrf.mxu0
  %v563 = vadd.f32 0.0, %v562
  %564 = vmatmul.f32.gmra.mxu0 %v486
  %v565 = vpop.f32.mrf.mxu0
  %v566 = vadd.f32 0.0, %v565
  %567 = vmatmul.f32.gmra.mxu0 %v489
  %v568 = vpop.f32.mrf.mxu0
  %v569 = vadd.f32 0.0, %v568
  %570 = vmatmul.f32.gmra.mxu0 %v492
  %v571 = vpop.f32.mrf.mxu0
  %v572 = vadd.f32 0.0, %v571
  %573 = vdwg.mxu0
  %v575 = vsel %vm69, %v373, 0
  %v578 = vsel %vm69, %v374, 0
  %v581 = vsel %vm69, %v375, 0
  %v584 = vsel %vm69, %v376, 0
  %v587 = vsel %vm69, %v377, 0
  %v590 = vsel %vm69, %v378, 0
  %v593 = vsel %vm69, %v379, 0
  %v596 = vsel %vm69, %v380, 0
  %v599 = vsel %vm69, %v381, 0
  %v602 = vsel %vm69, %v382, 0
  %v605 = vsel %vm69, %v383, 0
  %v608 = vsel %vm69, %v384, 0
  %v611 = vsel %vm69, %v385, 0
  %v614 = vsel %vm69, %v386, 0
  %v617 = vsel %vm69, %v387, 0
  %v620 = vsel %vm69, %v388, 0
  %v623 = vsel %vm69, %v389, 0
  %v626 = vsel %vm69, %v390, 0
  %v629 = vsel %vm69, %v391, 0
  %v632 = vsel %vm69, %v392, 0
  %v635 = vsel %vm69, %v393, 0
  %637 = vmatpush.msra.mxu0 0.0
  %638 = vmatpush.msra.mxu0 0.0
  %639 = vmatpush.msra.mxu0 0.0
  %640 = vmatpush.msra.mxu0 0.0
  %641 = vmatpush.msra.mxu0 0.0
  %642 = vmatpush.msra.mxu0 0.0
  %643 = vmatpush.msra.mxu0 0.0
  %644 = vmatpush.msra.mxu0 0.0
  %645 = vmatpush.msra.mxu0 %v401
  %646 = vmatpush.msra.mxu0 %v400
  %647 = vmatpush.msra.mxu0 %v399
  %648 = vmatpush.msra.mxu0 %v398
  %649 = vmatpush.msra.mxu0 %v397
  %650 = vmatpush.msra.mxu0 %v396
  %651 = vmatpush.msra.mxu0 %v395
  %652 = vmatpush.msra.mxu0 %v394
  %653 = vmatmul.f32.gmra.mxu0 %v575
  %v654 = vpop.f32.mrf.mxu0
  %v655 = vadd.f32 %v512, %v654
  %656 = vmatmul.f32.gmra.mxu0 %v578
  %v657 = vpop.f32.mrf.mxu0
  %v658 = vadd.f32 %v515, %v657
  %659 = vmatmul.f32.gmra.mxu0 %v581
  %v660 = vpop.f32.mrf.mxu0
  %v661 = vadd.f32 %v518, %v660
  %662 = vmatmul.f32.gmra.mxu0 %v584
  %v663 = vpop.f32.mrf.mxu0
  %v664 = vadd.f32 %v521, %v663
  %665 = vmatmul.f32.gmra.mxu0 %v587
  %v666 = vpop.f32.mrf.mxu0
  %v667 = vadd.f32 %v524, %v666
  %668 = vmatmul.f32.gmra.mxu0 %v590
  %v669 = vpop.f32.mrf.mxu0
  %v670 = vadd.f32 %v527, %v669
  %671 = vmatmul.f32.gmra.mxu0 %v593
  %v672 = vpop.f32.mrf.mxu0
  %v673 = vadd.f32 %v530, %v672
  %674 = vmatmul.f32.gmra.mxu0 %v596
  %v675 = vpop.f32.mrf.mxu0
  %v676 = vadd.f32 %v533, %v675
  %677 = vmatmul.f32.gmra.mxu0 %v599
  %v678 = vpop.f32.mrf.mxu0
  %v679 = vadd.f32 %v536, %v678
  %680 = vmatmul.f32.gmra.mxu0 %v602
  %v681 = vpop.f32.mrf.mxu0
  %v682 = vadd.f32 %v539, %v681
  %683 = vmatmul.f32.gmra.mxu0 %v605
  %v684 = vpop.f32.mrf.mxu0
  %v685 = vadd.f32 %v542, %v684
  %686 = vmatmul.f32.gmra.mxu0 %v608
  %v687 = vpop.f32.mrf.mxu0
  %v688 = vadd.f32 %v545, %v687
  %689 = vmatmul.f32.gmra.mxu0 %v611
  %v690 = vpop.f32.mrf.mxu0
  %v691 = vadd.f32 %v548, %v690
  %692 = vmatmul.f32.gmra.mxu0 %v614
  %v693 = vpop.f32.mrf.mxu0
  %v694 = vadd.f32 %v551, %v693
  %695 = vmatmul.f32.gmra.mxu0 %v617
  %v696 = vpop.f32.mrf.mxu0
  %v697 = vadd.f32 %v554, %v696
  %698 = vmatmul.f32.gmra.mxu0 %v620
  %v699 = vpop.f32.mrf.mxu0
  %v700 = vadd.f32 %v557, %v699
  %701 = vmatmul.f32.gmra.mxu0 %v623
  %v702 = vpop.f32.mrf.mxu0
  %v703 = vadd.f32 %v560, %v702
  %704 = vmatmul.f32.gmra.mxu0 %v626
  %v705 = vpop.f32.mrf.mxu0
  %v706 = vadd.f32 %v563, %v705
  %707 = vmatmul.f32.gmra.mxu0 %v629
  %v708 = vpop.f32.mrf.mxu0
  %v709 = vadd.f32 %v566, %v708
  %710 = vmatmul.f32.gmra.mxu0 %v632
  %v711 = vpop.f32.mrf.mxu0
  %v712 = vadd.f32 %v569, %v711
  %713 = vmatmul.f32.gmra.mxu0 %v635
  %v714 = vpop.f32.mrf.mxu0
  %v715 = vadd.f32 %v572, %v714
  %716 = vdwg.mxu0
  %v717 = vld [vmem:[#allocation2 + $0x2] sm:$0xff]
  %v718 = vld [vmem:[#allocation2 + $0xa] sm:$0xff]
  %v719 = vld [vmem:[#allocation2 + $0x12] sm:$0xff]
  %v720 = vld [vmem:[#allocation2 + $0x1a] sm:$0xff]
  %v721 = vld [vmem:[#allocation2 + $0x22] sm:$0xff]
  %v722 = vld [vmem:[#allocation2 + $0x2a] sm:$0xff]
  %v723 = vld [vmem:[#allocation2 + $0x32] sm:$0xff]
  %v724 = vld [vmem:[#allocation2 + $0x3a] sm:$0xff]
  %v725 = vld [vmem:[#allocation2 + $0x42] sm:$0xff]
  %v726 = vld [vmem:[#allocation2 + $0x4a] sm:$0xff]
  %v727 = vld [vmem:[#allocation2 + $0x52] sm:$0xff]
  %v728 = vld [vmem:[#allocation2 + $0x5a] sm:$0xff]
  %v729 = vld [vmem:[#allocation2 + $0x62] sm:$0xff]
  %v730 = vld [vmem:[#allocation2 + $0x6a] sm:$0xff]
  %v731 = vld [vmem:[#allocation2 + $0x72] sm:$0xff]
  %v732 = vld [vmem:[#allocation2 + $0x7a] sm:$0xff]
  %v733 = vld [vmem:[#allocation2 + $0x82] sm:$0xff]
  %v734 = vld [vmem:[#allocation2 + $0x8a] sm:$0xff]
  %v735 = vld [vmem:[#allocation2 + $0x92] sm:$0xff]
  %v736 = vld [vmem:[#allocation2 + $0x9a] sm:$0xff]
  %v737 = vld [vmem:[#allocation2 + $0xa2] sm:$0x7f]
  %v738 = vld [vmem:[%s4 + $0x80] sm:$0xff]
  %v739 = vld [vmem:[%s4 + $0x88] sm:$0xff]
  %v740 = vld [vmem:[%s4 + $0x90] sm:$0xff]
  %v741 = vld [vmem:[%s4 + $0x98] sm:$0xff]
  %v742 = vld [vmem:[%s4 + $0xa0] sm:$0xff]
  %v743 = vld [vmem:[%s4 + $0xa8] sm:$0xff]
  %v744 = vld [vmem:[%s4 + $0xb0] sm:$0xff]
  %v745 = vld [vmem:[%s4 + $0xb8] sm:$0xff]
  %v747 = vsel %vm69, %v717, 0
  %v750 = vsel %vm69, %v718, 0
  %v753 = vsel %vm69, %v719, 0
  %v756 = vsel %vm69, %v720, 0
  %v759 = vsel %vm69, %v721, 0
  %v762 = vsel %vm69, %v722, 0
  %v765 = vsel %vm69, %v723, 0
  %v768 = vsel %vm69, %v724, 0
  %v771 = vsel %vm69, %v725, 0
  %v774 = vsel %vm69, %v726, 0
  %v777 = vsel %vm69, %v727, 0
  %v780 = vsel %vm69, %v728, 0
  %v783 = vsel %vm69, %v729, 0
  %v786 = vsel %vm69, %v730, 0
  %v789 = vsel %vm69, %v731, 0
  %v792 = vsel %vm69, %v732, 0
  %v795 = vsel %vm69, %v733, 0
  %v798 = vsel %vm69, %v734, 0
  %v801 = vsel %vm69, %v735, 0
  %v804 = vsel %vm69, %v736, 0
  %v807 = vsel %vm69, %v737, 0
  %809 = vmatpush.msra.mxu0 0.0
  %810 = vmatpush.msra.mxu0 0.0
  %811 = vmatpush.msra.mxu0 0.0
  %812 = vmatpush.msra.mxu0 0.0
  %813 = vmatpush.msra.mxu0 0.0
  %814 = vmatpush.msra.mxu0 0.0
  %815 = vmatpush.msra.mxu0 0.0
  %816 = vmatpush.msra.mxu0 0.0
  %817 = vmatpush.msra.mxu0 %v745
  %818 = vmatpush.msra.mxu0 %v744
  %819 = vmatpush.msra.mxu0 %v743
  %820 = vmatpush.msra.mxu0 %v742
  %821 = vmatpush.msra.mxu0 %v741
  %822 = vmatpush.msra.mxu0 %v740
  %823 = vmatpush.msra.mxu0 %v739
  %824 = vmatpush.msra.mxu0 %v738
  %825 = vmatmul.f32.gmra.mxu0 %v747
  %v826 = vpop.f32.mrf.mxu0
  %v827 = vadd.f32 0.0, %v826
  %828 = vmatmul.f32.gmra.mxu0 %v750
  %v829 = vpop.f32.mrf.mxu0
  %v830 = vadd.f32 0.0, %v829
  %831 = vmatmul.f32.gmra.mxu0 %v753
  %v832 = vpop.f32.mrf.mxu0
  %v833 = vadd.f32 0.0, %v832
  %834 = vmatmul.f32.gmra.mxu0 %v756
  %v835 = vpop.f32.mrf.mxu0
  %v836 = vadd.f32 0.0, %v835
  %837 = vmatmul.f32.gmra.mxu0 %v759
  %v838 = vpop.f32.mrf.mxu0
  %v839 = vadd.f32 0.0, %v838
  %840 = vmatmul.f32.gmra.mxu0 %v762
  %v841 = vpop.f32.mrf.mxu0
  %v842 = vadd.f32 0.0, %v841
  %843 = vmatmul.f32.gmra.mxu0 %v765
  %v844 = vpop.f32.mrf.mxu0
  %v845 = vadd.f32 0.0, %v844
  %846 = vmatmul.f32.gmra.mxu0 %v768
  %v847 = vpop.f32.mrf.mxu0
  %v848 = vadd.f32 0.0, %v847
  %849 = vmatmul.f32.gmra.mxu0 %v771
  %v850 = vpop.f32.mrf.mxu0
  %v851 = vadd.f32 0.0, %v850
  %852 = vmatmul.f32.gmra.mxu0 %v774
  %v853 = vpop.f32.mrf.mxu0
  %v854 = vadd.f32 0.0, %v853
  %855 = vmatmul.f32.gmra.mxu0 %v777
  %v856 = vpop.f32.mrf.mxu0
  %v857 = vadd.f32 0.0, %v856
  %858 = vmatmul.f32.gmra.mxu0 %v780
  %v859 = vpop.f32.mrf.mxu0
  %v860 = vadd.f32 0.0, %v859
  %861 = vmatmul.f32.gmra.mxu0 %v783
  %v862 = vpop.f32.mrf.mxu0
  %v863 = vadd.f32 0.0, %v862
  %864 = vmatmul.f32.gmra.mxu0 %v786
  %v865 = vpop.f32.mrf.mxu0
  %v866 = vadd.f32 0.0, %v865
  %867 = vmatmul.f32.gmra.mxu0 %v789
  %v868 = vpop.f32.mrf.mxu0
  %v869 = vadd.f32 0.0, %v868
  %870 = vmatmul.f32.gmra.mxu0 %v792
  %v871 = vpop.f32.mrf.mxu0
  %v872 = vadd.f32 0.0, %v871
  %873 = vmatmul.f32.gmra.mxu0 %v795
  %v874 = vpop.f32.mrf.mxu0
  %v875 = vadd.f32 0.0, %v874
  %876 = vmatmul.f32.gmra.mxu0 %v798
  %v877 = vpop.f32.mrf.mxu0
  %v878 = vadd.f32 0.0, %v877
  %879 = vmatmul.f32.gmra.mxu0 %v801
  %v880 = vpop.f32.mrf.mxu0
  %v881 = vadd.f32 0.0, %v880
  %882 = vmatmul.f32.gmra.mxu0 %v804
  %v883 = vpop.f32.mrf.mxu0
  %v884 = vadd.f32 0.0, %v883
  %885 = vmatmul.f32.gmra.mxu0 %v807
  %v886 = vpop.f32.mrf.mxu0
  %v887 = vadd.f32 0.0, %v886
  %888 = vdwg.mxu0
  %v889 = vadd.f32 %v655, %v827
  %v890 = vadd.f32 %v658, %v830
  %v891 = vadd.f32 %v661, %v833
  %v892 = vadd.f32 %v664, %v836
  %v893 = vadd.f32 %v667, %v839
  %v894 = vadd.f32 %v670, %v842
  %v895 = vadd.f32 %v673, %v845
  %v896 = vadd.f32 %v676, %v848
  %v897 = vadd.f32 %v679, %v851
  %v898 = vadd.f32 %v682, %v854
  %v899 = vadd.f32 %v685, %v857
  %v900 = vadd.f32 %v688, %v860
  %v901 = vadd.f32 %v691, %v863
  %v902 = vadd.f32 %v694, %v866
  %v903 = vadd.f32 %v697, %v869
  %v904 = vadd.f32 %v700, %v872
  %v905 = vadd.f32 %v703, %v875
  %v906 = vadd.f32 %v706, %v878
  %v907 = vadd.f32 %v709, %v881
  %v908 = vadd.f32 %v712, %v884
  %v909 = vadd.f32 %v715, %v887
  %v910 = vld [vmem:[#allocation2 + $0x3] sm:$0xff]
  %v911 = vld [vmem:[#allocation2 + $0xb] sm:$0xff]
  %v912 = vld [vmem:[#allocation2 + $0x13] sm:$0xff]
  %v913 = vld [vmem:[#allocation2 + $0x1b] sm:$0xff]
  %v914 = vld [vmem:[#allocation2 + $0x23] sm:$0xff]
  %v915 = vld [vmem:[#allocation2 + $0x2b] sm:$0xff]
  %v916 = vld [vmem:[#allocation2 + $0x33] sm:$0xff]
  %v917 = vld [vmem:[#allocation2 + $0x3b] sm:$0xff]
  %v918 = vld [vmem:[#allocation2 + $0x43] sm:$0xff]
  %v919 = vld [vmem:[#allocation2 + $0x4b] sm:$0xff]
  %v920 = vld [vmem:[#allocation2 + $0x53] sm:$0xff]
  %v921 = vld [vmem:[#allocation2 + $0x5b] sm:$0xff]
  %v922 = vld [vmem:[#allocation2 + $0x63] sm:$0xff]
  %v923 = vld [vmem:[#allocation2 + $0x6b] sm:$0xff]
  %v924 = vld [vmem:[#allocation2 + $0x73] sm:$0xff]
  %v925 = vld [vmem:[#allocation2 + $0x7b] sm:$0xff]
  %v926 = vld [vmem:[#allocation2 + $0x83] sm:$0xff]
  %v927 = vld [vmem:[#allocation2 + $0x8b] sm:$0xff]
  %v928 = vld [vmem:[#allocation2 + $0x93] sm:$0xff]
  %v929 = vld [vmem:[#allocation2 + $0x9b] sm:$0xff]
  %v930 = vld [vmem:[#allocation2 + $0xa3] sm:$0x7f]
  %v931 = vld [vmem:[%s4 + $0xc0] sm:$0xff]
  %v932 = vld [vmem:[%s4 + $0xc8] sm:$0xff]
  %v933 = vld [vmem:[%s4 + $0xd0] sm:$0xff]
  %v934 = vld [vmem:[%s4 + $0xd8] sm:$0xff]
  %v935 = vld [vmem:[%s4 + $0xe0] sm:$0xff]
  %v936 = vld [vmem:[%s4 + $0xe8] sm:$0xff]
  %v937 = vld [vmem:[%s4 + $0xf0] sm:$0xff]
  %v938 = vld [vmem:[%s4 + $0xf8] sm:$0xff]
  %v940 = vsel %vm69, %v910, 0
  %v943 = vsel %vm69, %v911, 0
  %v946 = vsel %vm69, %v912, 0
  %v949 = vsel %vm69, %v913, 0
  %v952 = vsel %vm69, %v914, 0
  %v955 = vsel %vm69, %v915, 0
  %v958 = vsel %vm69, %v916, 0
  %v961 = vsel %vm69, %v917, 0
  %v964 = vsel %vm69, %v918, 0
  %v967 = vsel %vm69, %v919, 0
  %v970 = vsel %vm69, %v920, 0
  %v973 = vsel %vm69, %v921, 0
  %v976 = vsel %vm69, %v922, 0
  %v979 = vsel %vm69, %v923, 0
  %v982 = vsel %vm69, %v924, 0
  %v985 = vsel %vm69, %v925, 0
  %v988 = vsel %vm69, %v926, 0
  %v991 = vsel %vm69, %v927, 0
  %v994 = vsel %vm69, %v928, 0
  %v997 = vsel %vm69, %v929, 0
  %v1000 = vsel %vm69, %v930, 0
  %1002 = vmatpush.msra.mxu0 0.0
  %1003 = vmatpush.msra.mxu0 0.0
  %1004 = vmatpush.msra.mxu0 0.0
  %1005 = vmatpush.msra.mxu0 0.0
  %1006 = vmatpush.msra.mxu0 0.0
  %1007 = vmatpush.msra.mxu0 0.0
  %1008 = vmatpush.msra.mxu0 0.0
  %1009 = vmatpush.msra.mxu0 0.0
  %1010 = vmatpush.msra.mxu0 %v938
  %1011 = vmatpush.msra.mxu0 %v937
  %1012 = vmatpush.msra.mxu0 %v936
  %1013 = vmatpush.msra.mxu0 %v935
  %1014 = vmatpush.msra.mxu0 %v934
  %1015 = vmatpush.msra.mxu0 %v933
  %1016 = vmatpush.msra.mxu0 %v932
  %1017 = vmatpush.msra.mxu0 %v931
  %1018 = vmatmul.f32.gmra.mxu0 %v940
  %v1019 = vpop.f32.mrf.mxu0
  %v1020 = vadd.f32 0.0, %v1019
  %1021 = vmatmul.f32.gmra.mxu0 %v943
  %v1022 = vpop.f32.mrf.mxu0
  %v1023 = vadd.f32 0.0, %v1022
  %1024 = vmatmul.f32.gmra.mxu0 %v946
  %v1025 = vpop.f32.mrf.mxu0
  %v1026 = vadd.f32 0.0, %v1025
  %1027 = vmatmul.f32.gmra.mxu0 %v949
  %v1028 = vpop.f32.mrf.mxu0
  %v1029 = vadd.f32 0.0, %v1028
  %1030 = vmatmul.f32.gmra.mxu0 %v952
  %v1031 = vpop.f32.mrf.mxu0
  %v1032 = vadd.f32 0.0, %v1031
  %1033 = vmatmul.f32.gmra.mxu0 %v955
  %v1034 = vpop.f32.mrf.mxu0
  %v1035 = vadd.f32 0.0, %v1034
  %1036 = vmatmul.f32.gmra.mxu0 %v958
  %v1037 = vpop.f32.mrf.mxu0
  %v1038 = vadd.f32 0.0, %v1037
  %1039 = vmatmul.f32.gmra.mxu0 %v961
  %v1040 = vpop.f32.mrf.mxu0
  %v1041 = vadd.f32 0.0, %v1040
  %1042 = vmatmul.f32.gmra.mxu0 %v964
  %v1043 = vpop.f32.mrf.mxu0
  %v1044 = vadd.f32 0.0, %v1043
  %1045 = vmatmul.f32.gmra.mxu0 %v967
  %v1046 = vpop.f32.mrf.mxu0
  %v1047 = vadd.f32 0.0, %v1046
  %1048 = vmatmul.f32.gmra.mxu0 %v970
  %v1049 = vpop.f32.mrf.mxu0
  %v1050 = vadd.f32 0.0, %v1049
  %1051 = vmatmul.f32.gmra.mxu0 %v973
  %v1052 = vpop.f32.mrf.mxu0
  %v1053 = vadd.f32 0.0, %v1052
  %1054 = vmatmul.f32.gmra.mxu0 %v976
  %v1055 = vpop.f32.mrf.mxu0
  %v1056 = vadd.f32 0.0, %v1055
  %1057 = vmatmul.f32.gmra.mxu0 %v979
  %v1058 = vpop.f32.mrf.mxu0
  %v1059 = vadd.f32 0.0, %v1058
  %1060 = vmatmul.f32.gmra.mxu0 %v982
  %v1061 = vpop.f32.mrf.mxu0
  %v1062 = vadd.f32 0.0, %v1061
  %1063 = vmatmul.f32.gmra.mxu0 %v985
  %v1064 = vpop.f32.mrf.mxu0
  %v1065 = vadd.f32 0.0, %v1064
  %1066 = vmatmul.f32.gmra.mxu0 %v988
  %v1067 = vpop.f32.mrf.mxu0
  %v1068 = vadd.f32 0.0, %v1067
  %1069 = vmatmul.f32.gmra.mxu0 %v991
  %v1070 = vpop.f32.mrf.mxu0
  %v1071 = vadd.f32 0.0, %v1070
  %1072 = vmatmul.f32.gmra.mxu0 %v994
  %v1073 = vpop.f32.mrf.mxu0
  %v1074 = vadd.f32 0.0, %v1073
  %1075 = vmatmul.f32.gmra.mxu0 %v997
  %v1076 = vpop.f32.mrf.mxu0
  %v1077 = vadd.f32 0.0, %v1076
  %1078 = vmatmul.f32.gmra.mxu0 %v1000
  %v1079 = vpop.f32.mrf.mxu0
  %v1080 = vadd.f32 0.0, %v1079
  %1081 = vdwg.mxu0
  %v1082 = vadd.f32 %v889, %v1020
  %v1083 = vadd.f32 %v890, %v1023
  %v1084 = vadd.f32 %v891, %v1026
  %v1085 = vadd.f32 %v892, %v1029
  %v1086 = vadd.f32 %v893, %v1032
  %v1087 = vadd.f32 %v894, %v1035
  %v1088 = vadd.f32 %v895, %v1038
  %v1089 = vadd.f32 %v896, %v1041
  %v1090 = vadd.f32 %v897, %v1044
  %v1091 = vadd.f32 %v898, %v1047
  %v1092 = vadd.f32 %v899, %v1050
  %v1093 = vadd.f32 %v900, %v1053
  %v1094 = vadd.f32 %v901, %v1056
  %v1095 = vadd.f32 %v902, %v1059
  %v1096 = vadd.f32 %v903, %v1062
  %v1097 = vadd.f32 %v904, %v1065
  %v1098 = vadd.f32 %v905, %v1068
  %v1099 = vadd.f32 %v906, %v1071
  %v1100 = vadd.f32 %v907, %v1074
  %v1101 = vadd.f32 %v908, %v1077
  %v1102 = vadd.f32 %v909, %v1080
  %v1103 = vld [vmem:[#allocation2 + $0xa] sm:$0xff]
  %v1104 = vld [vmem:[#allocation2 + $0x12] sm:$0xff]
  %v1105 = vld [vmem:[#allocation2 + $0x1a] sm:$0xff]
  %v1106 = vld [vmem:[#allocation2 + $0x22] sm:$0xff]
  %v1107 = vld [vmem:[#allocation2 + $0x2a] sm:$0xff]
  %v1108 = vld [vmem:[#allocation2 + $0x32] sm:$0xff]
  %v1109 = vld [vmem:[#allocation2 + $0x3a] sm:$0xff]
  %v1110 = vld [vmem:[#allocation2 + $0x42] sm:$0xff]
  %v1111 = vld [vmem:[#allocation2 + $0x4a] sm:$0xff]
  %v1112 = vld [vmem:[#allocation2 + $0x52] sm:$0xff]
  %v1113 = vld [vmem:[#allocation2 + $0x5a] sm:$0xff]
  %v1114 = vld [vmem:[#allocation2 + $0x62] sm:$0xff]
  %v1115 = vld [vmem:[#allocation2 + $0x6a] sm:$0xff]
  %v1116 = vld [vmem:[#allocation2 + $0x72] sm:$0xff]
  %v1117 = vld [vmem:[#allocation2 + $0x7a] sm:$0xff]
  %v1118 = vld [vmem:[#allocation2 + $0x82] sm:$0xff]
  %v1119 = vld [vmem:[#allocation2 + $0x8a] sm:$0xff]
  %v1120 = vld [vmem:[#allocation2 + $0x92] sm:$0xff]
  %v1121 = vld [vmem:[#allocation2 + $0x9a] sm:$0xff]
  %v1122 = vld [vmem:[#allocation2 + $0xa2] sm:$0xff]
  %v1123 = vld [vmem:[#allocation2 + $0xaa] sm:$0x7f]
  %v1124 = vld [vmem:[%s4 + $0x100] sm:$0xff]
  %v1125 = vld [vmem:[%s4 + $0x108] sm:$0xff]
  %v1126 = vld [vmem:[%s4 + $0x110] sm:$0xff]
  %v1127 = vld [vmem:[%s4 + $0x118] sm:$0xff]
  %v1128 = vld [vmem:[%s4 + $0x120] sm:$0xff]
  %v1129 = vld [vmem:[%s4 + $0x128] sm:$0xff]
  %v1130 = vld [vmem:[%s4 + $0x130] sm:$0xff]
  %v1131 = vld [vmem:[%s4 + $0x138] sm:$0xff]
  %v1133 = vsel %vm69, %v1103, 0
  %v1136 = vsel %vm69, %v1104, 0
  %v1139 = vsel %vm69, %v1105, 0
  %v1142 = vsel %vm69, %v1106, 0
  %v1145 = vsel %vm69, %v1107, 0
  %v1148 = vsel %vm69, %v1108, 0
  %v1151 = vsel %vm69, %v1109, 0
  %v1154 = vsel %vm69, %v1110, 0
  %v1157 = vsel %vm69, %v1111, 0
  %v1160 = vsel %vm69, %v1112, 0
  %v1163 = vsel %vm69, %v1113, 0
  %v1166 = vsel %vm69, %v1114, 0
  %v1169 = vsel %vm69, %v1115, 0
  %v1172 = vsel %vm69, %v1116, 0
  %v1175 = vsel %vm69, %v1117, 0
  %v1178 = vsel %vm69, %v1118, 0
  %v1181 = vsel %vm69, %v1119, 0
  %v1184 = vsel %vm69, %v1120, 0
  %v1187 = vsel %vm69, %v1121, 0
  %v1190 = vsel %vm69, %v1122, 0
  %v1193 = vsel %vm69, %v1123, 0
  %1195 = vmatpush.msra.mxu0 0.0
  %1196 = vmatpush.msra.mxu0 0.0
  %1197 = vmatpush.msra.mxu0 0.0
  %1198 = vmatpush.msra.mxu0 0.0
  %1199 = vmatpush.msra.mxu0 0.0
  %1200 = vmatpush.msra.mxu0 0.0
  %1201 = vmatpush.msra.mxu0 0.0
  %1202 = vmatpush.msra.mxu0 0.0
  %1203 = vmatpush.msra.mxu0 %v1131
  %1204 = vmatpush.msra.mxu0 %v1130
  %1205 = vmatpush.msra.mxu0 %v1129
  %1206 = vmatpush.msra.mxu0 %v1128
  %1207 = vmatpush.msra.mxu0 %v1127
  %1208 = vmatpush.msra.mxu0 %v1126
  %1209 = vmatpush.msra.mxu0 %v1125
  %1210 = vmatpush.msra.mxu0 %v1124
  %1211 = vmatmul.f32.gmra.mxu0 %v1133
  %v1212 = vpop.f32.mrf.mxu0
  %v1213 = vadd.f32 0.0, %v1212
  %1214 = vmatmul.f32.gmra.mxu0 %v1136
  %v1215 = vpop.f32.mrf.mxu0
  %v1216 = vadd.f32 0.0, %v1215
  %1217 = vmatmul.f32.gmra.mxu0 %v1139
  %v1218 = vpop.f32.mrf.mxu0
  %v1219 = vadd.f32 0.0, %v1218
  %1220 = vmatmul.f32.gmra.mxu0 %v1142
  %v1221 = vpop.f32.mrf.mxu0
  %v1222 = vadd.f32 0.0, %v1221
  %1223 = vmatmul.f32.gmra.mxu0 %v1145
  %v1224 = vpop.f32.mrf.mxu0
  %v1225 = vadd.f32 0.0, %v1224
  %1226 = vmatmul.f32.gmra.mxu0 %v1148
  %v1227 = vpop.f32.mrf.mxu0
  %v1228 = vadd.f32 0.0, %v1227
  %1229 = vmatmul.f32.gmra.mxu0 %v1151
  %v1230 = vpop.f32.mrf.mxu0
  %v1231 = vadd.f32 0.0, %v1230
  %1232 = vmatmul.f32.gmra.mxu0 %v1154
  %v1233 = vpop.f32.mrf.mxu0
  %v1234 = vadd.f32 0.0, %v1233
  %1235 = vmatmul.f32.gmra.mxu0 %v1157
  %v1236 = vpop.f32.mrf.mxu0
  %v1237 = vadd.f32 0.0, %v1236
  %1238 = vmatmul.f32.gmra.mxu0 %v1160
  %v1239 = vpop.f32.mrf.mxu0
  %v1240 = vadd.f32 0.0, %v1239
  %1241 = vmatmul.f32.gmra.mxu0 %v1163
  %v1242 = vpop.f32.mrf.mxu0
  %v1243 = vadd.f32 0.0, %v1242
  %1244 = vmatmul.f32.gmra.mxu0 %v1166
  %v1245 = vpop.f32.mrf.mxu0
  %v1246 = vadd.f32 0.0, %v1245
  %1247 = vmatmul.f32.gmra.mxu0 %v1169
  %v1248 = vpop.f32.mrf.mxu0
  %v1249 = vadd.f32 0.0, %v1248
  %1250 = vmatmul.f32.gmra.mxu0 %v1172
  %v1251 = vpop.f32.mrf.mxu0
  %v1252 = vadd.f32 0.0, %v1251
  %1253 = vmatmul.f32.gmra.mxu0 %v1175
  %v1254 = vpop.f32.mrf.mxu0
  %v1255 = vadd.f32 0.0, %v1254
  %1256 = vmatmul.f32.gmra.mxu0 %v1178
  %v1257 = vpop.f32.mrf.mxu0
  %v1258 = vadd.f32 0.0, %v1257
  %1259 = vmatmul.f32.gmra.mxu0 %v1181
  %v1260 = vpop.f32.mrf.mxu0
  %v1261 = vadd.f32 0.0, %v1260
  %1262 = vmatmul.f32.gmra.mxu0 %v1184
  %v1263 = vpop.f32.mrf.mxu0
  %v1264 = vadd.f32 0.0, %v1263
  %1265 = vmatmul.f32.gmra.mxu0 %v1187
  %v1266 = vpop.f32.mrf.mxu0
  %v1267 = vadd.f32 0.0, %v1266
  %1268 = vmatmul.f32.gmra.mxu0 %v1190
  %v1269 = vpop.f32.mrf.mxu0
  %v1270 = vadd.f32 0.0, %v1269
  %1271 = vmatmul.f32.gmra.mxu0 %v1193
  %v1272 = vpop.f32.mrf.mxu0
  %v1273 = vadd.f32 0.0, %v1272
  %1274 = vdwg.mxu0
  %v1275 = vadd.f32 %v1082, %v1213
  %v1276 = vadd.f32 %v1083, %v1216
  %v1277 = vadd.f32 %v1084, %v1219
  %v1278 = vadd.f32 %v1085, %v1222
  %v1279 = vadd.f32 %v1086, %v1225
  %v1280 = vadd.f32 %v1087, %v1228
  %v1281 = vadd.f32 %v1088, %v1231
  %v1282 = vadd.f32 %v1089, %v1234
  %v1283 = vadd.f32 %v1090, %v1237
  %v1284 = vadd.f32 %v1091, %v1240
  %v1285 = vadd.f32 %v1092, %v1243
  %v1286 = vadd.f32 %v1093, %v1246
  %v1287 = vadd.f32 %v1094, %v1249
  %v1288 = vadd.f32 %v1095, %v1252
  %v1289 = vadd.f32 %v1096, %v1255
  %v1290 = vadd.f32 %v1097, %v1258
  %v1291 = vadd.f32 %v1098, %v1261
  %v1292 = vadd.f32 %v1099, %v1264
  %v1293 = vadd.f32 %v1100, %v1267
  %v1294 = vadd.f32 %v1101, %v1270
  %v1295 = vadd.f32 %v1102, %v1273
  %v1296 = vld [vmem:[#allocation2 + $0xb] sm:$0xff]
  %v1297 = vld [vmem:[#allocation2 + $0x13] sm:$0xff]
  %v1298 = vld [vmem:[#allocation2 + $0x1b] sm:$0xff]
  %v1299 = vld [vmem:[#allocation2 + $0x23] sm:$0xff]
  %v1300 = vld [vmem:[#allocation2 + $0x2b] sm:$0xff]
  %v1301 = vld [vmem:[#allocation2 + $0x33] sm:$0xff]
  %v1302 = vld [vmem:[#allocation2 + $0x3b] sm:$0xff]
  %v1303 = vld [vmem:[#allocation2 + $0x43] sm:$0xff]
  %v1304 = vld [vmem:[#allocation2 + $0x4b] sm:$0xff]
  %v1305 = vld [vmem:[#allocation2 + $0x53] sm:$0xff]
  %v1306 = vld [vmem:[#allocation2 + $0x5b] sm:$0xff]
  %v1307 = vld [vmem:[#allocation2 + $0x63] sm:$0xff]
  %v1308 = vld [vmem:[#allocation2 + $0x6b] sm:$0xff]
  %v1309 = vld [vmem:[#allocation2 + $0x73] sm:$0xff]
  %v1310 = vld [vmem:[#allocation2 + $0x7b] sm:$0xff]
  %v1311 = vld [vmem:[#allocation2 + $0x83] sm:$0xff]
  %v1312 = vld [vmem:[#allocation2 + $0x8b] sm:$0xff]
  %v1313 = vld [vmem:[#allocation2 + $0x93] sm:$0xff]
  %v1314 = vld [vmem:[#allocation2 + $0x9b] sm:$0xff]
  %v1315 = vld [vmem:[#allocation2 + $0xa3] sm:$0xff]
  %v1316 = vld [vmem:[#allocation2 + $0xab] sm:$0x7f]
  %v1317 = vld [vmem:[%s4 + $0x140] sm:$0xff]
  %v1318 = vld [vmem:[%s4 + $0x148] sm:$0xff]
  %v1319 = vld [vmem:[%s4 + $0x150] sm:$0xff]
  %v1320 = vld [vmem:[%s4 + $0x158] sm:$0xff]
  %v1321 = vld [vmem:[%s4 + $0x160] sm:$0xff]
  %v1322 = vld [vmem:[%s4 + $0x168] sm:$0xff]
  %v1323 = vld [vmem:[%s4 + $0x170] sm:$0xff]
  %v1324 = vld [vmem:[%s4 + $0x178] sm:$0xff]
  %v1326 = vsel %vm69, %v1296, 0
  %v1329 = vsel %vm69, %v1297, 0
  %v1332 = vsel %vm69, %v1298, 0
  %v1335 = vsel %vm69, %v1299, 0
  %v1338 = vsel %vm69, %v1300, 0
  %v1341 = vsel %vm69, %v1301, 0
  %v1344 = vsel %vm69, %v1302, 0
  %v1347 = vsel %vm69, %v1303, 0
  %v1350 = vsel %vm69, %v1304, 0
  %v1353 = vsel %vm69, %v1305, 0
  %v1356 = vsel %vm69, %v1306, 0
  %v1359 = vsel %vm69, %v1307, 0
  %v1362 = vsel %vm69, %v1308, 0
  %v1365 = vsel %vm69, %v1309, 0
  %v1368 = vsel %vm69, %v1310, 0
  %v1371 = vsel %vm69, %v1311, 0
  %v1374 = vsel %vm69, %v1312, 0
  %v1377 = vsel %vm69, %v1313, 0
  %v1380 = vsel %vm69, %v1314, 0
  %v1383 = vsel %vm69, %v1315, 0
  %v1386 = vsel %vm69, %v1316, 0
  %1388 = vmatpush.msra.mxu0 0.0
  %1389 = vmatpush.msra.mxu0 0.0
  %1390 = vmatpush.msra.mxu0 0.0
  %1391 = vmatpush.msra.mxu0 0.0
  %1392 = vmatpush.msra.mxu0 0.0
  %1393 = vmatpush.msra.mxu0 0.0
  %1394 = vmatpush.msra.mxu0 0.0
  %1395 = vmatpush.msra.mxu0 0.0
  %1396 = vmatpush.msra.mxu0 %v1324
  %1397 = vmatpush.msra.mxu0 %v1323
  %1398 = vmatpush.msra.mxu0 %v1322
  %1399 = vmatpush.msra.mxu0 %v1321
  %1400 = vmatpush.msra.mxu0 %v1320
  %1401 = vmatpush.msra.mxu0 %v1319
  %1402 = vmatpush.msra.mxu0 %v1318
  %1403 = vmatpush.msra.mxu0 %v1317
  %1404 = vmatmul.f32.gmra.mxu0 %v1326
  %v1405 = vpop.f32.mrf.mxu0
  %v1406 = vadd.f32 0.0, %v1405
  %1407 = vmatmul.f32.gmra.mxu0 %v1329
  %v1408 = vpop.f32.mrf.mxu0
  %v1409 = vadd.f32 0.0, %v1408
  %1410 = vmatmul.f32.gmra.mxu0 %v1332
  %v1411 = vpop.f32.mrf.mxu0
  %v1412 = vadd.f32 0.0, %v1411
  %1413 = vmatmul.f32.gmra.mxu0 %v1335
  %v1414 = vpop.f32.mrf.mxu0
  %v1415 = vadd.f32 0.0, %v1414
  %1416 = vmatmul.f32.gmra.mxu0 %v1338
  %v1417 = vpop.f32.mrf.mxu0
  %v1418 = vadd.f32 0.0, %v1417
  %1419 = vmatmul.f32.gmra.mxu0 %v1341
  %v1420 = vpop.f32.mrf.mxu0
  %v1421 = vadd.f32 0.0, %v1420
  %1422 = vmatmul.f32.gmra.mxu0 %v1344
  %v1423 = vpop.f32.mrf.mxu0
  %v1424 = vadd.f32 0.0, %v1423
  %1425 = vmatmul.f32.gmra.mxu0 %v1347
  %v1426 = vpop.f32.mrf.mxu0
  %v1427 = vadd.f32 0.0, %v1426
  %1428 = vmatmul.f32.gmra.mxu0 %v1350
  %v1429 = vpop.f32.mrf.mxu0
  %v1430 = vadd.f32 0.0, %v1429
  %1431 = vmatmul.f32.gmra.mxu0 %v1353
  %v1432 = vpop.f32.mrf.mxu0
  %v1433 = vadd.f32 0.0, %v1432
  %1434 = vmatmul.f32.gmra.mxu0 %v1356
  %v1435 = vpop.f32.mrf.mxu0
  %v1436 = vadd.f32 0.0, %v1435
  %1437 = vmatmul.f32.gmra.mxu0 %v1359
  %v1438 = vpop.f32.mrf.mxu0
  %v1439 = vadd.f32 0.0, %v1438
  %1440 = vmatmul.f32.gmra.mxu0 %v1362
  %v1441 = vpop.f32.mrf.mxu0
  %v1442 = vadd.f32 0.0, %v1441
  %1443 = vmatmul.f32.gmra.mxu0 %v1365
  %v1444 = vpop.f32.mrf.mxu0
  %v1445 = vadd.f32 0.0, %v1444
  %1446 = vmatmul.f32.gmra.mxu0 %v1368
  %v1447 = vpop.f32.mrf.mxu0
  %v1448 = vadd.f32 0.0, %v1447
  %1449 = vmatmul.f32.gmra.mxu0 %v1371
  %v1450 = vpop.f32.mrf.mxu0
  %v1451 = vadd.f32 0.0, %v1450
  %1452 = vmatmul.f32.gmra.mxu0 %v1374
  %v1453 = vpop.f32.mrf.mxu0
  %v1454 = vadd.f32 0.0, %v1453
  %1455 = vmatmul.f32.gmra.mxu0 %v1377
  %v1456 = vpop.f32.mrf.mxu0
  %v1457 = vadd.f32 0.0, %v1456
  %1458 = vmatmul.f32.gmra.mxu0 %v1380
  %v1459 = vpop.f32.mrf.mxu0
  %v1460 = vadd.f32 0.0, %v1459
  %1461 = vmatmul.f32.gmra.mxu0 %v1383
  %v1462 = vpop.f32.mrf.mxu0
  %v1463 = vadd.f32 0.0, %v1462
  %1464 = vmatmul.f32.gmra.mxu0 %v1386
  %v1465 = vpop.f32.mrf.mxu0
  %v1466 = vadd.f32 0.0, %v1465
  %1467 = vdwg.mxu0
  %v1468 = vadd.f32 %v1275, %v1406
  %v1469 = vadd.f32 %v1276, %v1409
  %v1470 = vadd.f32 %v1277, %v1412
  %v1471 = vadd.f32 %v1278, %v1415
  %v1472 = vadd.f32 %v1279, %v1418
  %v1473 = vadd.f32 %v1280, %v1421
  %v1474 = vadd.f32 %v1281, %v1424
  %v1475 = vadd.f32 %v1282, %v1427
  %v1476 = vadd.f32 %v1283, %v1430
  %v1477 = vadd.f32 %v1284, %v1433
  %v1478 = vadd.f32 %v1285, %v1436
  %v1479 = vadd.f32 %v1286, %v1439
  %v1480 = vadd.f32 %v1287, %v1442
  %v1481 = vadd.f32 %v1288, %v1445
  %v1482 = vadd.f32 %v1289, %v1448
  %v1483 = vadd.f32 %v1290, %v1451
  %v1484 = vadd.f32 %v1291, %v1454
  %v1485 = vadd.f32 %v1292, %v1457
  %v1486 = vadd.f32 %v1293, %v1460
  %v1487 = vadd.f32 %v1294, %v1463
  %v1488 = vadd.f32 %v1295, %v1466
  %v1489 = vld [vmem:[#allocation2 + $0xc] sm:$0xff]
  %v1490 = vld [vmem:[#allocation2 + $0x14] sm:$0xff]
  %v1491 = vld [vmem:[#allocation2 + $0x1c] sm:$0xff]
  %v1492 = vld [vmem:[#allocation2 + $0x24] sm:$0xff]
  %v1493 = vld [vmem:[#allocation2 + $0x2c] sm:$0xff]
  %v1494 = vld [vmem:[#allocation2 + $0x34] sm:$0xff]
  %v1495 = vld [vmem:[#allocation2 + $0x3c] sm:$0xff]
  %v1496 = vld [vmem:[#allocation2 + $0x44] sm:$0xff]
  %v1497 = vld [vmem:[#allocation2 + $0x4c] sm:$0xff]
  %v1498 = vld [vmem:[#allocation2 + $0x54] sm:$0xff]
  %v1499 = vld [vmem:[#allocation2 + $0x5c] sm:$0xff]
  %v1500 = vld [vmem:[#allocation2 + $0x64] sm:$0xff]
  %v1501 = vld [vmem:[#allocation2 + $0x6c] sm:$0xff]
  %v1502 = vld [vmem:[#allocation2 + $0x74] sm:$0xff]
  %v1503 = vld [vmem:[#allocation2 + $0x7c] sm:$0xff]
  %v1504 = vld [vmem:[#allocation2 + $0x84] sm:$0xff]
  %v1505 = vld [vmem:[#allocation2 + $0x8c] sm:$0xff]
  %v1506 = vld [vmem:[#allocation2 + $0x94] sm:$0xff]
  %v1507 = vld [vmem:[#allocation2 + $0x9c] sm:$0xff]
  %v1508 = vld [vmem:[#allocation2 + $0xa4] sm:$0xff]
  %v1509 = vld [vmem:[#allocation2 + $0xac] sm:$0x7f]
  %v1510 = vld [vmem:[%s4 + $0x180] sm:$0xff]
  %v1511 = vld [vmem:[%s4 + $0x188] sm:$0xff]
  %v1512 = vld [vmem:[%s4 + $0x190] sm:$0xff]
  %v1513 = vld [vmem:[%s4 + $0x198] sm:$0xff]
  %v1514 = vld [vmem:[%s4 + $0x1a0] sm:$0xff]
  %v1515 = vld [vmem:[%s4 + $0x1a8] sm:$0xff]
  %v1516 = vld [vmem:[%s4 + $0x1b0] sm:$0xff]
  %v1517 = vld [vmem:[%s4 + $0x1b8] sm:$0xff]
  %v1519 = vsel %vm69, %v1489, 0
  %v1522 = vsel %vm69, %v1490, 0
  %v1525 = vsel %vm69, %v1491, 0
  %v1528 = vsel %vm69, %v1492, 0
  %v1531 = vsel %vm69, %v1493, 0
  %v1534 = vsel %vm69, %v1494, 0
  %v1537 = vsel %vm69, %v1495, 0
  %v1540 = vsel %vm69, %v1496, 0
  %v1543 = vsel %vm69, %v1497, 0
  %v1546 = vsel %vm69, %v1498, 0
  %v1549 = vsel %vm69, %v1499, 0
  %v1552 = vsel %vm69, %v1500, 0
  %v1555 = vsel %vm69, %v1501, 0
  %v1558 = vsel %vm69, %v1502, 0
  %v1561 = vsel %vm69, %v1503, 0
  %v1564 = vsel %vm69, %v1504, 0
  %v1567 = vsel %vm69, %v1505, 0
  %v1570 = vsel %vm69, %v1506, 0
  %v1573 = vsel %vm69, %v1507, 0
  %v1576 = vsel %vm69, %v1508, 0
  %v1579 = vsel %vm69, %v1509, 0
  %1581 = vmatpush.msra.mxu0 0.0
  %1582 = vmatpush.msra.mxu0 0.0
  %1583 = vmatpush.msra.mxu0 0.0
  %1584 = vmatpush.msra.mxu0 0.0
  %1585 = vmatpush.msra.mxu0 0.0
  %1586 = vmatpush.msra.mxu0 0.0
  %1587 = vmatpush.msra.mxu0 0.0
  %1588 = vmatpush.msra.mxu0 0.0
  %1589 = vmatpush.msra.mxu0 %v1517
  %1590 = vmatpush.msra.mxu0 %v1516
  %1591 = vmatpush.msra.mxu0 %v1515
  %1592 = vmatpush.msra.mxu0 %v1514
  %1593 = vmatpush.msra.mxu0 %v1513
  %1594 = vmatpush.msra.mxu0 %v1512
  %1595 = vmatpush.msra.mxu0 %v1511
  %1596 = vmatpush.msra.mxu0 %v1510
  %1597 = vmatmul.f32.gmra.mxu0 %v1519
  %v1598 = vpop.f32.mrf.mxu0
  %v1599 = vadd.f32 0.0, %v1598
  %1600 = vmatmul.f32.gmra.mxu0 %v1522
  %v1601 = vpop.f32.mrf.mxu0
  %v1602 = vadd.f32 0.0, %v1601
  %1603 = vmatmul.f32.gmra.mxu0 %v1525
  %v1604 = vpop.f32.mrf.mxu0
  %v1605 = vadd.f32 0.0, %v1604
  %1606 = vmatmul.f32.gmra.mxu0 %v1528
  %v1607 = vpop.f32.mrf.mxu0
  %v1608 = vadd.f32 0.0, %v1607
  %1609 = vmatmul.f32.gmra.mxu0 %v1531
  %v1610 = vpop.f32.mrf.mxu0
  %v1611 = vadd.f32 0.0, %v1610
  %1612 = vmatmul.f32.gmra.mxu0 %v1534
  %v1613 = vpop.f32.mrf.mxu0
  %v1614 = vadd.f32 0.0, %v1613
  %1615 = vmatmul.f32.gmra.mxu0 %v1537
  %v1616 = vpop.f32.mrf.mxu0
  %v1617 = vadd.f32 0.0, %v1616
  %1618 = vmatmul.f32.gmra.mxu0 %v1540
  %v1619 = vpop.f32.mrf.mxu0
  %v1620 = vadd.f32 0.0, %v1619
  %1621 = vmatmul.f32.gmra.mxu0 %v1543
  %v1622 = vpop.f32.mrf.mxu0
  %v1623 = vadd.f32 0.0, %v1622
  %1624 = vmatmul.f32.gmra.mxu0 %v1546
  %v1625 = vpop.f32.mrf.mxu0
  %v1626 = vadd.f32 0.0, %v1625
  %1627 = vmatmul.f32.gmra.mxu0 %v1549
  %v1628 = vpop.f32.mrf.mxu0
  %v1629 = vadd.f32 0.0, %v1628
  %1630 = vmatmul.f32.gmra.mxu0 %v1552
  %v1631 = vpop.f32.mrf.mxu0
  %v1632 = vadd.f32 0.0, %v1631
  %1633 = vmatmul.f32.gmra.mxu0 %v1555
  %v1634 = vpop.f32.mrf.mxu0
  %v1635 = vadd.f32 0.0, %v1634
  %1636 = vmatmul.f32.gmra.mxu0 %v1558
  %v1637 = vpop.f32.mrf.mxu0
  %v1638 = vadd.f32 0.0, %v1637
  %1639 = vmatmul.f32.gmra.mxu0 %v1561
  %v1640 = vpop.f32.mrf.mxu0
  %v1641 = vadd.f32 0.0, %v1640
  %1642 = vmatmul.f32.gmra.mxu0 %v1564
  %v1643 = vpop.f32.mrf.mxu0
  %v1644 = vadd.f32 0.0, %v1643
  %1645 = vmatmul.f32.gmra.mxu0 %v1567
  %v1646 = vpop.f32.mrf.mxu0
  %v1647 = vadd.f32 0.0, %v1646
  %1648 = vmatmul.f32.gmra.mxu0 %v1570
  %v1649 = vpop.f32.mrf.mxu0
  %v1650 = vadd.f32 0.0, %v1649
  %1651 = vmatmul.f32.gmra.mxu0 %v1573
  %v1652 = vpop.f32.mrf.mxu0
  %v1653 = vadd.f32 0.0, %v1652
  %1654 = vmatmul.f32.gmra.mxu0 %v1576
  %v1655 = vpop.f32.mrf.mxu0
  %v1656 = vadd.f32 0.0, %v1655
  %1657 = vmatmul.f32.gmra.mxu0 %v1579
  %v1658 = vpop.f32.mrf.mxu0
  %v1659 = vadd.f32 0.0, %v1658
  %1660 = vdwg.mxu0
  %v1661 = vadd.f32 %v1468, %v1599
  %v1662 = vadd.f32 %v1469, %v1602
  %v1663 = vadd.f32 %v1470, %v1605
  %v1664 = vadd.f32 %v1471, %v1608
  %v1665 = vadd.f32 %v1472, %v1611
  %v1666 = vadd.f32 %v1473, %v1614
  %v1667 = vadd.f32 %v1474, %v1617
  %v1668 = vadd.f32 %v1475, %v1620
  %v1669 = vadd.f32 %v1476, %v1623
  %v1670 = vadd.f32 %v1477, %v1626
  %v1671 = vadd.f32 %v1478, %v1629
  %v1672 = vadd.f32 %v1479, %v1632
  %v1673 = vadd.f32 %v1480, %v1635
  %v1674 = vadd.f32 %v1481, %v1638
  %v1675 = vadd.f32 %v1482, %v1641
  %v1676 = vadd.f32 %v1483, %v1644
  %v1677 = vadd.f32 %v1484, %v1647
  %v1678 = vadd.f32 %v1485, %v1650
  %v1679 = vadd.f32 %v1486, %v1653
  %v1680 = vadd.f32 %v1487, %v1656
  %v1681 = vadd.f32 %v1488, %v1659
  %v1682 = vld [vmem:[#allocation2 + $0xd] sm:$0xff]
  %v1683 = vld [vmem:[#allocation2 + $0x15] sm:$0xff]
  %v1684 = vld [vmem:[#allocation2 + $0x1d] sm:$0xff]
  %v1685 = vld [vmem:[#allocation2 + $0x25] sm:$0xff]
  %v1686 = vld [vmem:[#allocation2 + $0x2d] sm:$0xff]
  %v1687 = vld [vmem:[#allocation2 + $0x35] sm:$0xff]
  %v1688 = vld [vmem:[#allocation2 + $0x3d] sm:$0xff]
  %v1689 = vld [vmem:[#allocation2 + $0x45] sm:$0xff]
  %v1690 = vld [vmem:[#allocation2 + $0x4d] sm:$0xff]
  %v1691 = vld [vmem:[#allocation2 + $0x55] sm:$0xff]
  %v1692 = vld [vmem:[#allocation2 + $0x5d] sm:$0xff]
  %v1693 = vld [vmem:[#allocation2 + $0x65] sm:$0xff]
  %v1694 = vld [vmem:[#allocation2 + $0x6d] sm:$0xff]
  %v1695 = vld [vmem:[#allocation2 + $0x75] sm:$0xff]
  %v1696 = vld [vmem:[#allocation2 + $0x7d] sm:$0xff]
  %v1697 = vld [vmem:[#allocation2 + $0x85] sm:$0xff]
  %v1698 = vld [vmem:[#allocation2 + $0x8d] sm:$0xff]
  %v1699 = vld [vmem:[#allocation2 + $0x95] sm:$0xff]
  %v1700 = vld [vmem:[#allocation2 + $0x9d] sm:$0xff]
  %v1701 = vld [vmem:[#allocation2 + $0xa5] sm:$0xff]
  %v1702 = vld [vmem:[#allocation2 + $0xad] sm:$0x7f]
  %v1703 = vld [vmem:[%s4 + $0x1c0] sm:$0xff]
  %v1704 = vld [vmem:[%s4 + $0x1c8] sm:$0xff]
  %v1705 = vld [vmem:[%s4 + $0x1d0] sm:$0xff]
  %v1706 = vld [vmem:[%s4 + $0x1d8] sm:$0xff]
  %v1707 = vld [vmem:[%s4 + $0x1e0] sm:$0xff]
  %v1708 = vld [vmem:[%s4 + $0x1e8] sm:$0xff]
  %v1709 = vld [vmem:[%s4 + $0x1f0] sm:$0xff]
  %v1710 = vld [vmem:[%s4 + $0x1f8] sm:$0xff]
  %v1712 = vsel %vm69, %v1682, 0
  %v1715 = vsel %vm69, %v1683, 0
  %v1718 = vsel %vm69, %v1684, 0
  %v1721 = vsel %vm69, %v1685, 0
  %v1724 = vsel %vm69, %v1686, 0
  %v1727 = vsel %vm69, %v1687, 0
  %v1730 = vsel %vm69, %v1688, 0
  %v1733 = vsel %vm69, %v1689, 0
  %v1736 = vsel %vm69, %v1690, 0
  %v1739 = vsel %vm69, %v1691, 0
  %v1742 = vsel %vm69, %v1692, 0
  %v1745 = vsel %vm69, %v1693, 0
  %v1748 = vsel %vm69, %v1694, 0
  %v1751 = vsel %vm69, %v1695, 0
  %v1754 = vsel %vm69, %v1696, 0
  %v1757 = vsel %vm69, %v1697, 0
  %v1760 = vsel %vm69, %v1698, 0
  %v1763 = vsel %vm69, %v1699, 0
  %v1766 = vsel %vm69, %v1700, 0
  %v1769 = vsel %vm69, %v1701, 0
  %v1772 = vsel %vm69, %v1702, 0
  %1774 = vmatpush.msra.mxu0 0.0
  %1775 = vmatpush.msra.mxu0 0.0
  %1776 = vmatpush.msra.mxu0 0.0
  %1777 = vmatpush.msra.mxu0 0.0
  %1778 = vmatpush.msra.mxu0 0.0
  %1779 = vmatpush.msra.mxu0 0.0
  %1780 = vmatpush.msra.mxu0 0.0
  %1781 = vmatpush.msra.mxu0 0.0
  %1782 = vmatpush.msra.mxu0 %v1710
  %1783 = vmatpush.msra.mxu0 %v1709
  %1784 = vmatpush.msra.mxu0 %v1708
  %1785 = vmatpush.msra.mxu0 %v1707
  %1786 = vmatpush.msra.mxu0 %v1706
  %1787 = vmatpush.msra.mxu0 %v1705
  %1788 = vmatpush.msra.mxu0 %v1704
  %1789 = vmatpush.msra.mxu0 %v1703
  %1790 = vmatmul.f32.gmra.mxu0 %v1712
  %v1791 = vpop.f32.mrf.mxu0
  %v1792 = vadd.f32 0.0, %v1791
  %1793 = vmatmul.f32.gmra.mxu0 %v1715
  %v1794 = vpop.f32.mrf.mxu0
  %v1795 = vadd.f32 0.0, %v1794
  %1796 = vmatmul.f32.gmra.mxu0 %v1718
  %v1797 = vpop.f32.mrf.mxu0
  %v1798 = vadd.f32 0.0, %v1797
  %1799 = vmatmul.f32.gmra.mxu0 %v1721
  %v1800 = vpop.f32.mrf.mxu0
  %v1801 = vadd.f32 0.0, %v1800
  %1802 = vmatmul.f32.gmra.mxu0 %v1724
  %v1803 = vpop.f32.mrf.mxu0
  %v1804 = vadd.f32 0.0, %v1803
  %1805 = vmatmul.f32.gmra.mxu0 %v1727
  %v1806 = vpop.f32.mrf.mxu0
  %v1807 = vadd.f32 0.0, %v1806
  %1808 = vmatmul.f32.gmra.mxu0 %v1730
  %v1809 = vpop.f32.mrf.mxu0
  %v1810 = vadd.f32 0.0, %v1809
  %1811 = vmatmul.f32.gmra.mxu0 %v1733
  %v1812 = vpop.f32.mrf.mxu0
  %v1813 = vadd.f32 0.0, %v1812
  %1814 = vmatmul.f32.gmra.mxu0 %v1736
  %v1815 = vpop.f32.mrf.mxu0
  %v1816 = vadd.f32 0.0, %v1815
  %1817 = vmatmul.f32.gmra.mxu0 %v1739
  %v1818 = vpop.f32.mrf.mxu0
  %v1819 = vadd.f32 0.0, %v1818
  %1820 = vmatmul.f32.gmra.mxu0 %v1742
  %v1821 = vpop.f32.mrf.mxu0
  %v1822 = vadd.f32 0.0, %v1821
  %1823 = vmatmul.f32.gmra.mxu0 %v1745
  %v1824 = vpop.f32.mrf.mxu0
  %v1825 = vadd.f32 0.0, %v1824
  %1826 = vmatmul.f32.gmra.mxu0 %v1748
  %v1827 = vpop.f32.mrf.mxu0
  %v1828 = vadd.f32 0.0, %v1827
  %1829 = vmatmul.f32.gmra.mxu0 %v1751
  %v1830 = vpop.f32.mrf.mxu0
  %v1831 = vadd.f32 0.0, %v1830
  %1832 = vmatmul.f32.gmra.mxu0 %v1754
  %v1833 = vpop.f32.mrf.mxu0
  %v1834 = vadd.f32 0.0, %v1833
  %1835 = vmatmul.f32.gmra.mxu0 %v1757
  %v1836 = vpop.f32.mrf.mxu0
  %v1837 = vadd.f32 0.0, %v1836
  %1838 = vmatmul.f32.gmra.mxu0 %v1760
  %v1839 = vpop.f32.mrf.mxu0
  %v1840 = vadd.f32 0.0, %v1839
  %1841 = vmatmul.f32.gmra.mxu0 %v1763
  %v1842 = vpop.f32.mrf.mxu0
  %v1843 = vadd.f32 0.0, %v1842
  %1844 = vmatmul.f32.gmra.mxu0 %v1766
  %v1845 = vpop.f32.mrf.mxu0
  %v1846 = vadd.f32 0.0, %v1845
  %1847 = vmatmul.f32.gmra.mxu0 %v1769
  %v1848 = vpop.f32.mrf.mxu0
  %v1849 = vadd.f32 0.0, %v1848
  %1850 = vmatmul.f32.gmra.mxu0 %v1772
  %v1851 = vpop.f32.mrf.mxu0
  %v1852 = vadd.f32 0.0, %v1851
  %1853 = vdwg.mxu0
  %v1854 = vadd.f32 %v1661, %v1792
  %v1855 = vadd.f32 %v1662, %v1795
  %v1856 = vadd.f32 %v1663, %v1798
  %v1857 = vadd.f32 %v1664, %v1801
  %v1858 = vadd.f32 %v1665, %v1804
  %v1859 = vadd.f32 %v1666, %v1807
  %v1860 = vadd.f32 %v1667, %v1810
  %v1861 = vadd.f32 %v1668, %v1813
  %v1862 = vadd.f32 %v1669, %v1816
  %v1863 = vadd.f32 %v1670, %v1819
  %v1864 = vadd.f32 %v1671, %v1822
  %v1865 = vadd.f32 %v1672, %v1825
  %v1866 = vadd.f32 %v1673, %v1828
  %v1867 = vadd.f32 %v1674, %v1831
  %v1868 = vadd.f32 %v1675, %v1834
  %v1869 = vadd.f32 %v1676, %v1837
  %v1870 = vadd.f32 %v1677, %v1840
  %v1871 = vadd.f32 %v1678, %v1843
  %v1872 = vadd.f32 %v1679, %v1846
  %v1873 = vadd.f32 %v1680, %v1849
  %v1874 = vadd.f32 %v1681, %v1852
  %v1875 = vld [vmem:[#allocation2 + $0x14] sm:$0xff]
  %v1876 = vld [vmem:[#allocation2 + $0x1c] sm:$0xff]
  %v1877 = vld [vmem:[#allocation2 + $0x24] sm:$0xff]
  %v1878 = vld [vmem:[#allocation2 + $0x2c] sm:$0xff]
  %v1879 = vld [vmem:[#allocation2 + $0x34] sm:$0xff]
  %v1880 = vld [vmem:[#allocation2 + $0x3c] sm:$0xff]
  %v1881 = vld [vmem:[#allocation2 + $0x44] sm:$0xff]
  %v1882 = vld [vmem:[#allocation2 + $0x4c] sm:$0xff]
  %v1883 = vld [vmem:[#allocation2 + $0x54] sm:$0xff]
  %v1884 = vld [vmem:[#allocation2 + $0x5c] sm:$0xff]
  %v1885 = vld [vmem:[#allocation2 + $0x64] sm:$0xff]
  %v1886 = vld [vmem:[#allocation2 + $0x6c] sm:$0xff]
  %v1887 = vld [vmem:[#allocation2 + $0x74] sm:$0xff]
  %v1888 = vld [vmem:[#allocation2 + $0x7c] sm:$0xff]
  %v1889 = vld [vmem:[#allocation2 + $0x84] sm:$0xff]
  %v1890 = vld [vmem:[#allocation2 + $0x8c] sm:$0xff]
  %v1891 = vld [vmem:[#allocation2 + $0x94] sm:$0xff]
  %v1892 = vld [vmem:[#allocation2 + $0x9c] sm:$0xff]
  %v1893 = vld [vmem:[#allocation2 + $0xa4] sm:$0xff]
  %v1894 = vld [vmem:[#allocation2 + $0xac] sm:$0xff]
  %v1895 = vld [vmem:[#allocation2 + $0xb4] sm:$0x7f]
  %v1896 = vld [vmem:[%s4 + $0x200] sm:$0xff]
  %v1897 = vld [vmem:[%s4 + $0x208] sm:$0xff]
  %v1898 = vld [vmem:[%s4 + $0x210] sm:$0xff]
  %v1899 = vld [vmem:[%s4 + $0x218] sm:$0xff]
  %v1900 = vld [vmem:[%s4 + $0x220] sm:$0xff]
  %v1901 = vld [vmem:[%s4 + $0x228] sm:$0xff]
  %v1902 = vld [vmem:[%s4 + $0x230] sm:$0xff]
  %v1903 = vld [vmem:[%s4 + $0x238] sm:$0xff]
  %v1905 = vsel %vm69, %v1875, 0
  %v1908 = vsel %vm69, %v1876, 0
  %v1911 = vsel %vm69, %v1877, 0
  %v1914 = vsel %vm69, %v1878, 0
  %v1917 = vsel %vm69, %v1879, 0
  %v1920 = vsel %vm69, %v1880, 0
  %v1923 = vsel %vm69, %v1881, 0
  %v1926 = vsel %vm69, %v1882, 0
  %v1929 = vsel %vm69, %v1883, 0
  %v1932 = vsel %vm69, %v1884, 0
  %v1935 = vsel %vm69, %v1885, 0
  %v1938 = vsel %vm69, %v1886, 0
  %v1941 = vsel %vm69, %v1887, 0
  %v1944 = vsel %vm69, %v1888, 0
  %v1947 = vsel %vm69, %v1889, 0
  %v1950 = vsel %vm69, %v1890, 0
  %v1953 = vsel %vm69, %v1891, 0
  %v1956 = vsel %vm69, %v1892, 0
  %v1959 = vsel %vm69, %v1893, 0
  %v1962 = vsel %vm69, %v1894, 0
  %v1965 = vsel %vm69, %v1895, 0
  %1967 = vmatpush.msra.mxu0 0.0
  %1968 = vmatpush.msra.mxu0 0.0
  %1969 = vmatpush.msra.mxu0 0.0
  %1970 = vmatpush.msra.mxu0 0.0
  %1971 = vmatpush.msra.mxu0 0.0
  %1972 = vmatpush.msra.mxu0 0.0
  %1973 = vmatpush.msra.mxu0 0.0
  %1974 = vmatpush.msra.mxu0 0.0
  %1975 = vmatpush.msra.mxu0 %v1903
  %1976 = vmatpush.msra.mxu0 %v1902
  %1977 = vmatpush.msra.mxu0 %v1901
  %1978 = vmatpush.msra.mxu0 %v1900
  %1979 = vmatpush.msra.mxu0 %v1899
  %1980 = vmatpush.msra.mxu0 %v1898
  %1981 = vmatpush.msra.mxu0 %v1897
  %1982 = vmatpush.msra.mxu0 %v1896
  %1983 = vmatmul.f32.gmra.mxu0 %v1905
  %v1984 = vpop.f32.mrf.mxu0
  %v1985 = vadd.f32 0.0, %v1984
  %1986 = vmatmul.f32.gmra.mxu0 %v1908
  %v1987 = vpop.f32.mrf.mxu0
  %v1988 = vadd.f32 0.0, %v1987
  %1989 = vmatmul.f32.gmra.mxu0 %v1911
  %v1990 = vpop.f32.mrf.mxu0
  %v1991 = vadd.f32 0.0, %v1990
  %1992 = vmatmul.f32.gmra.mxu0 %v1914
  %v1993 = vpop.f32.mrf.mxu0
  %v1994 = vadd.f32 0.0, %v1993
  %1995 = vmatmul.f32.gmra.mxu0 %v1917
  %v1996 = vpop.f32.mrf.mxu0
  %v1997 = vadd.f32 0.0, %v1996
  %1998 = vmatmul.f32.gmra.mxu0 %v1920
  %v1999 = vpop.f32.mrf.mxu0
  %v2000 = vadd.f32 0.0, %v1999
  %2001 = vmatmul.f32.gmra.mxu0 %v1923
  %v2002 = vpop.f32.mrf.mxu0
  %v2003 = vadd.f32 0.0, %v2002
  %2004 = vmatmul.f32.gmra.mxu0 %v1926
  %v2005 = vpop.f32.mrf.mxu0
  %v2006 = vadd.f32 0.0, %v2005
  %2007 = vmatmul.f32.gmra.mxu0 %v1929
  %v2008 = vpop.f32.mrf.mxu0
  %v2009 = vadd.f32 0.0, %v2008
  %2010 = vmatmul.f32.gmra.mxu0 %v1932
  %v2011 = vpop.f32.mrf.mxu0
  %v2012 = vadd.f32 0.0, %v2011
  %2013 = vmatmul.f32.gmra.mxu0 %v1935
  %v2014 = vpop.f32.mrf.mxu0
  %v2015 = vadd.f32 0.0, %v2014
  %2016 = vmatmul.f32.gmra.mxu0 %v1938
  %v2017 = vpop.f32.mrf.mxu0
  %v2018 = vadd.f32 0.0, %v2017
  %2019 = vmatmul.f32.gmra.mxu0 %v1941
  %v2020 = vpop.f32.mrf.mxu0
  %v2021 = vadd.f32 0.0, %v2020
  %2022 = vmatmul.f32.gmra.mxu0 %v1944
  %v2023 = vpop.f32.mrf.mxu0
  %v2024 = vadd.f32 0.0, %v2023
  %2025 = vmatmul.f32.gmra.mxu0 %v1947
  %v2026 = vpop.f32.mrf.mxu0
  %v2027 = vadd.f32 0.0, %v2026
  %2028 = vmatmul.f32.gmra.mxu0 %v1950
  %v2029 = vpop.f32.mrf.mxu0
  %v2030 = vadd.f32 0.0, %v2029
  %2031 = vmatmul.f32.gmra.mxu0 %v1953
  %v2032 = vpop.f32.mrf.mxu0
  %v2033 = vadd.f32 0.0, %v2032
  %2034 = vmatmul.f32.gmra.mxu0 %v1956
  %v2035 = vpop.f32.mrf.mxu0
  %v2036 = vadd.f32 0.0, %v2035
  %2037 = vmatmul.f32.gmra.mxu0 %v1959
  %v2038 = vpop.f32.mrf.mxu0
  %v2039 = vadd.f32 0.0, %v2038
  %2040 = vmatmul.f32.gmra.mxu0 %v1962
  %v2041 = vpop.f32.mrf.mxu0
  %v2042 = vadd.f32 0.0, %v2041
  %2043 = vmatmul.f32.gmra.mxu0 %v1965
  %v2044 = vpop.f32.mrf.mxu0
  %v2045 = vadd.f32 0.0, %v2044
  %2046 = vdwg.mxu0
  %v2047 = vadd.f32 %v1854, %v1985
  %v2048 = vadd.f32 %v1855, %v1988
  %v2049 = vadd.f32 %v1856, %v1991
  %v2050 = vadd.f32 %v1857, %v1994
  %v2051 = vadd.f32 %v1858, %v1997
  %v2052 = vadd.f32 %v1859, %v2000
  %v2053 = vadd.f32 %v1860, %v2003
  %v2054 = vadd.f32 %v1861, %v2006
  %v2055 = vadd.f32 %v1862, %v2009
  %v2056 = vadd.f32 %v1863, %v2012
  %v2057 = vadd.f32 %v1864, %v2015
  %v2058 = vadd.f32 %v1865, %v2018
  %v2059 = vadd.f32 %v1866, %v2021
  %v2060 = vadd.f32 %v1867, %v2024
  %v2061 = vadd.f32 %v1868, %v2027
  %v2062 = vadd.f32 %v1869, %v2030
  %v2063 = vadd.f32 %v1870, %v2033
  %v2064 = vadd.f32 %v1871, %v2036
  %v2065 = vadd.f32 %v1872, %v2039
  %v2066 = vadd.f32 %v1873, %v2042
  %v2067 = vadd.f32 %v1874, %v2045
  %v2068 = vld [vmem:[#allocation2 + $0x15] sm:$0xff]
  %v2069 = vld [vmem:[#allocation2 + $0x1d] sm:$0xff]
  %v2070 = vld [vmem:[#allocation2 + $0x25] sm:$0xff]
  %v2071 = vld [vmem:[#allocation2 + $0x2d] sm:$0xff]
  %v2072 = vld [vmem:[#allocation2 + $0x35] sm:$0xff]
  %v2073 = vld [vmem:[#allocation2 + $0x3d] sm:$0xff]
  %v2074 = vld [vmem:[#allocation2 + $0x45] sm:$0xff]
  %v2075 = vld [vmem:[#allocation2 + $0x4d] sm:$0xff]
  %v2076 = vld [vmem:[#allocation2 + $0x55] sm:$0xff]
  %v2077 = vld [vmem:[#allocation2 + $0x5d] sm:$0xff]
  %v2078 = vld [vmem:[#allocation2 + $0x65] sm:$0xff]
  %v2079 = vld [vmem:[#allocation2 + $0x6d] sm:$0xff]
  %v2080 = vld [vmem:[#allocation2 + $0x75] sm:$0xff]
  %v2081 = vld [vmem:[#allocation2 + $0x7d] sm:$0xff]
  %v2082 = vld [vmem:[#allocation2 + $0x85] sm:$0xff]
  %v2083 = vld [vmem:[#allocation2 + $0x8d] sm:$0xff]
  %v2084 = vld [vmem:[#allocation2 + $0x95] sm:$0xff]
  %v2085 = vld [vmem:[#allocation2 + $0x9d] sm:$0xff]
  %v2086 = vld [vmem:[#allocation2 + $0xa5] sm:$0xff]
  %v2087 = vld [vmem:[#allocation2 + $0xad] sm:$0xff]
  %v2088 = vld [vmem:[#allocation2 + $0xb5] sm:$0x7f]
  %v2089 = vld [vmem:[%s4 + $0x240] sm:$0xff]
  %v2090 = vld [vmem:[%s4 + $0x248] sm:$0xff]
  %v2091 = vld [vmem:[%s4 + $0x250] sm:$0xff]
  %v2092 = vld [vmem:[%s4 + $0x258] sm:$0xff]
  %v2093 = vld [vmem:[%s4 + $0x260] sm:$0xff]
  %v2094 = vld [vmem:[%s4 + $0x268] sm:$0xff]
  %v2095 = vld [vmem:[%s4 + $0x270] sm:$0xff]
  %v2096 = vld [vmem:[%s4 + $0x278] sm:$0xff]
  %v2098 = vsel %vm69, %v2068, 0
  %v2101 = vsel %vm69, %v2069, 0
  %v2104 = vsel %vm69, %v2070, 0
  %v2107 = vsel %vm69, %v2071, 0
  %v2110 = vsel %vm69, %v2072, 0
  %v2113 = vsel %vm69, %v2073, 0
  %v2116 = vsel %vm69, %v2074, 0
  %v2119 = vsel %vm69, %v2075, 0
  %v2122 = vsel %vm69, %v2076, 0
  %v2125 = vsel %vm69, %v2077, 0
  %v2128 = vsel %vm69, %v2078, 0
  %v2131 = vsel %vm69, %v2079, 0
  %v2134 = vsel %vm69, %v2080, 0
  %v2137 = vsel %vm69, %v2081, 0
  %v2140 = vsel %vm69, %v2082, 0
  %v2143 = vsel %vm69, %v2083, 0
  %v2146 = vsel %vm69, %v2084, 0
  %v2149 = vsel %vm69, %v2085, 0
  %v2152 = vsel %vm69, %v2086, 0
  %v2155 = vsel %vm69, %v2087, 0
  %v2158 = vsel %vm69, %v2088, 0
  %2160 = vmatpush.msra.mxu0 0.0
  %2161 = vmatpush.msra.mxu0 0.0
  %2162 = vmatpush.msra.mxu0 0.0
  %2163 = vmatpush.msra.mxu0 0.0
  %2164 = vmatpush.msra.mxu0 0.0
  %2165 = vmatpush.msra.mxu0 0.0
  %2166 = vmatpush.msra.mxu0 0.0
  %2167 = vmatpush.msra.mxu0 0.0
  %2168 = vmatpush.msra.mxu0 %v2096
  %2169 = vmatpush.msra.mxu0 %v2095
  %2170 = vmatpush.msra.mxu0 %v2094
  %2171 = vmatpush.msra.mxu0 %v2093
  %2172 = vmatpush.msra.mxu0 %v2092
  %2173 = vmatpush.msra.mxu0 %v2091
  %2174 = vmatpush.msra.mxu0 %v2090
  %2175 = vmatpush.msra.mxu0 %v2089
  %2176 = vmatmul.f32.gmra.mxu0 %v2098
  %v2177 = vpop.f32.mrf.mxu0
  %v2178 = vadd.f32 0.0, %v2177
  %2179 = vmatmul.f32.gmra.mxu0 %v2101
  %v2180 = vpop.f32.mrf.mxu0
  %v2181 = vadd.f32 0.0, %v2180
  %2182 = vmatmul.f32.gmra.mxu0 %v2104
  %v2183 = vpop.f32.mrf.mxu0
  %v2184 = vadd.f32 0.0, %v2183
  %2185 = vmatmul.f32.gmra.mxu0 %v2107
  %v2186 = vpop.f32.mrf.mxu0
  %v2187 = vadd.f32 0.0, %v2186
  %2188 = vmatmul.f32.gmra.mxu0 %v2110
  %v2189 = vpop.f32.mrf.mxu0
  %v2190 = vadd.f32 0.0, %v2189
  %2191 = vmatmul.f32.gmra.mxu0 %v2113
  %v2192 = vpop.f32.mrf.mxu0
  %v2193 = vadd.f32 0.0, %v2192
  %2194 = vmatmul.f32.gmra.mxu0 %v2116
  %v2195 = vpop.f32.mrf.mxu0
  %v2196 = vadd.f32 0.0, %v2195
  %2197 = vmatmul.f32.gmra.mxu0 %v2119
  %v2198 = vpop.f32.mrf.mxu0
  %v2199 = vadd.f32 0.0, %v2198
  %2200 = vmatmul.f32.gmra.mxu0 %v2122
  %v2201 = vpop.f32.mrf.mxu0
  %v2202 = vadd.f32 0.0, %v2201
  %2203 = vmatmul.f32.gmra.mxu0 %v2125
  %v2204 = vpop.f32.mrf.mxu0
  %v2205 = vadd.f32 0.0, %v2204
  %2206 = vmatmul.f32.gmra.mxu0 %v2128
  %v2207 = vpop.f32.mrf.mxu0
  %v2208 = vadd.f32 0.0, %v2207
  %2209 = vmatmul.f32.gmra.mxu0 %v2131
  %v2210 = vpop.f32.mrf.mxu0
  %v2211 = vadd.f32 0.0, %v2210
  %2212 = vmatmul.f32.gmra.mxu0 %v2134
  %v2213 = vpop.f32.mrf.mxu0
  %v2214 = vadd.f32 0.0, %v2213
  %2215 = vmatmul.f32.gmra.mxu0 %v2137
  %v2216 = vpop.f32.mrf.mxu0
  %v2217 = vadd.f32 0.0, %v2216
  %2218 = vmatmul.f32.gmra.mxu0 %v2140
  %v2219 = vpop.f32.mrf.mxu0
  %v2220 = vadd.f32 0.0, %v2219
  %2221 = vmatmul.f32.gmra.mxu0 %v2143
  %v2222 = vpop.f32.mrf.mxu0
  %v2223 = vadd.f32 0.0, %v2222
  %2224 = vmatmul.f32.gmra.mxu0 %v2146
  %v2225 = vpop.f32.mrf.mxu0
  %v2226 = vadd.f32 0.0, %v2225
  %2227 = vmatmul.f32.gmra.mxu0 %v2149
  %v2228 = vpop.f32.mrf.mxu0
  %v2229 = vadd.f32 0.0, %v2228
  %2230 = vmatmul.f32.gmra.mxu0 %v2152
  %v2231 = vpop.f32.mrf.mxu0
  %v2232 = vadd.f32 0.0, %v2231
  %2233 = vmatmul.f32.gmra.mxu0 %v2155
  %v2234 = vpop.f32.mrf.mxu0
  %v2235 = vadd.f32 0.0, %v2234
  %2236 = vmatmul.f32.gmra.mxu0 %v2158
  %v2237 = vpop.f32.mrf.mxu0
  %v2238 = vadd.f32 0.0, %v2237
  %2239 = vdwg.mxu0
  %v2240 = vadd.f32 %v2047, %v2178
  %v2241 = vadd.f32 %v2048, %v2181
  %v2242 = vadd.f32 %v2049, %v2184
  %v2243 = vadd.f32 %v2050, %v2187
  %v2244 = vadd.f32 %v2051, %v2190
  %v2245 = vadd.f32 %v2052, %v2193
  %v2246 = vadd.f32 %v2053, %v2196
  %v2247 = vadd.f32 %v2054, %v2199
  %v2248 = vadd.f32 %v2055, %v2202
  %v2249 = vadd.f32 %v2056, %v2205
  %v2250 = vadd.f32 %v2057, %v2208
  %v2251 = vadd.f32 %v2058, %v2211
  %v2252 = vadd.f32 %v2059, %v2214
  %v2253 = vadd.f32 %v2060, %v2217
  %v2254 = vadd.f32 %v2061, %v2220
  %v2255 = vadd.f32 %v2062, %v2223
  %v2256 = vadd.f32 %v2063, %v2226
  %v2257 = vadd.f32 %v2064, %v2229
  %v2258 = vadd.f32 %v2065, %v2232
  %v2259 = vadd.f32 %v2066, %v2235
  %v2260 = vadd.f32 %v2067, %v2238
  %v2261 = vld [vmem:[#allocation2 + $0x16] sm:$0xff]
  %v2262 = vld [vmem:[#allocation2 + $0x1e] sm:$0xff]
  %v2263 = vld [vmem:[#allocation2 + $0x26] sm:$0xff]
  %v2264 = vld [vmem:[#allocation2 + $0x2e] sm:$0xff]
  %v2265 = vld [vmem:[#allocation2 + $0x36] sm:$0xff]
  %v2266 = vld [vmem:[#allocation2 + $0x3e] sm:$0xff]
  %v2267 = vld [vmem:[#allocation2 + $0x46] sm:$0xff]
  %v2268 = vld [vmem:[#allocation2 + $0x4e] sm:$0xff]
  %v2269 = vld [vmem:[#allocation2 + $0x56] sm:$0xff]
  %v2270 = vld [vmem:[#allocation2 + $0x5e] sm:$0xff]
  %v2271 = vld [vmem:[#allocation2 + $0x66] sm:$0xff]
  %v2272 = vld [vmem:[#allocation2 + $0x6e] sm:$0xff]
  %v2273 = vld [vmem:[#allocation2 + $0x76] sm:$0xff]
  %v2274 = vld [vmem:[#allocation2 + $0x7e] sm:$0xff]
  %v2275 = vld [vmem:[#allocation2 + $0x86] sm:$0xff]
  %v2276 = vld [vmem:[#allocation2 + $0x8e] sm:$0xff]
  %v2277 = vld [vmem:[#allocation2 + $0x96] sm:$0xff]
  %v2278 = vld [vmem:[#allocation2 + $0x9e] sm:$0xff]
  %v2279 = vld [vmem:[#allocation2 + $0xa6] sm:$0xff]
  %v2280 = vld [vmem:[#allocation2 + $0xae] sm:$0xff]
  %v2281 = vld [vmem:[#allocation2 + $0xb6] sm:$0x7f]
  %v2282 = vld [vmem:[%s4 + $0x280] sm:$0xff]
  %v2283 = vld [vmem:[%s4 + $0x288] sm:$0xff]
  %v2284 = vld [vmem:[%s4 + $0x290] sm:$0xff]
  %v2285 = vld [vmem:[%s4 + $0x298] sm:$0xff]
  %v2286 = vld [vmem:[%s4 + $0x2a0] sm:$0xff]
  %v2287 = vld [vmem:[%s4 + $0x2a8] sm:$0xff]
  %v2288 = vld [vmem:[%s4 + $0x2b0] sm:$0xff]
  %v2289 = vld [vmem:[%s4 + $0x2b8] sm:$0xff]
  %v2291 = vsel %vm69, %v2261, 0
  %v2294 = vsel %vm69, %v2262, 0
  %v2297 = vsel %vm69, %v2263, 0
  %v2300 = vsel %vm69, %v2264, 0
  %v2303 = vsel %vm69, %v2265, 0
  %v2306 = vsel %vm69, %v2266, 0
  %v2309 = vsel %vm69, %v2267, 0
  %v2312 = vsel %vm69, %v2268, 0
  %v2315 = vsel %vm69, %v2269, 0
  %v2318 = vsel %vm69, %v2270, 0
  %v2321 = vsel %vm69, %v2271, 0
  %v2324 = vsel %vm69, %v2272, 0
  %v2327 = vsel %vm69, %v2273, 0
  %v2330 = vsel %vm69, %v2274, 0
  %v2333 = vsel %vm69, %v2275, 0
  %v2336 = vsel %vm69, %v2276, 0
  %v2339 = vsel %vm69, %v2277, 0
  %v2342 = vsel %vm69, %v2278, 0
  %v2345 = vsel %vm69, %v2279, 0
  %v2348 = vsel %vm69, %v2280, 0
  %v2351 = vsel %vm69, %v2281, 0
  %2353 = vmatpush.msra.mxu0 0.0
  %2354 = vmatpush.msra.mxu0 0.0
  %2355 = vmatpush.msra.mxu0 0.0
  %2356 = vmatpush.msra.mxu0 0.0
  %2357 = vmatpush.msra.mxu0 0.0
  %2358 = vmatpush.msra.mxu0 0.0
  %2359 = vmatpush.msra.mxu0 0.0
  %2360 = vmatpush.msra.mxu0 0.0
  %2361 = vmatpush.msra.mxu0 %v2289
  %2362 = vmatpush.msra.mxu0 %v2288
  %2363 = vmatpush.msra.mxu0 %v2287
  %2364 = vmatpush.msra.mxu0 %v2286
  %2365 = vmatpush.msra.mxu0 %v2285
  %2366 = vmatpush.msra.mxu0 %v2284
  %2367 = vmatpush.msra.mxu0 %v2283
  %2368 = vmatpush.msra.mxu0 %v2282
  %2369 = vmatmul.f32.gmra.mxu0 %v2291
  %v2370 = vpop.f32.mrf.mxu0
  %v2371 = vadd.f32 0.0, %v2370
  %2372 = vmatmul.f32.gmra.mxu0 %v2294
  %v2373 = vpop.f32.mrf.mxu0
  %v2374 = vadd.f32 0.0, %v2373
  %2375 = vmatmul.f32.gmra.mxu0 %v2297
  %v2376 = vpop.f32.mrf.mxu0
  %v2377 = vadd.f32 0.0, %v2376
  %2378 = vmatmul.f32.gmra.mxu0 %v2300
  %v2379 = vpop.f32.mrf.mxu0
  %v2380 = vadd.f32 0.0, %v2379
  %2381 = vmatmul.f32.gmra.mxu0 %v2303
  %v2382 = vpop.f32.mrf.mxu0
  %v2383 = vadd.f32 0.0, %v2382
  %2384 = vmatmul.f32.gmra.mxu0 %v2306
  %v2385 = vpop.f32.mrf.mxu0
  %v2386 = vadd.f32 0.0, %v2385
  %2387 = vmatmul.f32.gmra.mxu0 %v2309
  %v2388 = vpop.f32.mrf.mxu0
  %v2389 = vadd.f32 0.0, %v2388
  %2390 = vmatmul.f32.gmra.mxu0 %v2312
  %v2391 = vpop.f32.mrf.mxu0
  %v2392 = vadd.f32 0.0, %v2391
  %2393 = vmatmul.f32.gmra.mxu0 %v2315
  %v2394 = vpop.f32.mrf.mxu0
  %v2395 = vadd.f32 0.0, %v2394
  %2396 = vmatmul.f32.gmra.mxu0 %v2318
  %v2397 = vpop.f32.mrf.mxu0
  %v2398 = vadd.f32 0.0, %v2397
  %2399 = vmatmul.f32.gmra.mxu0 %v2321
  %v2400 = vpop.f32.mrf.mxu0
  %v2401 = vadd.f32 0.0, %v2400
  %2402 = vmatmul.f32.gmra.mxu0 %v2324
  %v2403 = vpop.f32.mrf.mxu0
  %v2404 = vadd.f32 0.0, %v2403
  %2405 = vmatmul.f32.gmra.mxu0 %v2327
  %v2406 = vpop.f32.mrf.mxu0
  %v2407 = vadd.f32 0.0, %v2406
  %2408 = vmatmul.f32.gmra.mxu0 %v2330
  %v2409 = vpop.f32.mrf.mxu0
  %v2410 = vadd.f32 0.0, %v2409
  %2411 = vmatmul.f32.gmra.mxu0 %v2333
  %v2412 = vpop.f32.mrf.mxu0
  %v2413 = vadd.f32 0.0, %v2412
  %2414 = vmatmul.f32.gmra.mxu0 %v2336
  %v2415 = vpop.f32.mrf.mxu0
  %v2416 = vadd.f32 0.0, %v2415
  %2417 = vmatmul.f32.gmra.mxu0 %v2339
  %v2418 = vpop.f32.mrf.mxu0
  %v2419 = vadd.f32 0.0, %v2418
  %2420 = vmatmul.f32.gmra.mxu0 %v2342
  %v2421 = vpop.f32.mrf.mxu0
  %v2422 = vadd.f32 0.0, %v2421
  %2423 = vmatmul.f32.gmra.mxu0 %v2345
  %v2424 = vpop.f32.mrf.mxu0
  %v2425 = vadd.f32 0.0, %v2424
  %2426 = vmatmul.f32.gmra.mxu0 %v2348
  %v2427 = vpop.f32.mrf.mxu0
  %v2428 = vadd.f32 0.0, %v2427
  %2429 = vmatmul.f32.gmra.mxu0 %v2351
  %v2430 = vpop.f32.mrf.mxu0
  %v2431 = vadd.f32 0.0, %v2430
  %2432 = vdwg.mxu0
  %v2433 = vadd.f32 %v2240, %v2371
  %v2434 = vadd.f32 %v2241, %v2374
  %v2435 = vadd.f32 %v2242, %v2377
  %v2436 = vadd.f32 %v2243, %v2380
  %v2437 = vadd.f32 %v2244, %v2383
  %v2438 = vadd.f32 %v2245, %v2386
  %v2439 = vadd.f32 %v2246, %v2389
  %v2440 = vadd.f32 %v2247, %v2392
  %v2441 = vadd.f32 %v2248, %v2395
  %v2442 = vadd.f32 %v2249, %v2398
  %v2443 = vadd.f32 %v2250, %v2401
  %v2444 = vadd.f32 %v2251, %v2404
  %v2445 = vadd.f32 %v2252, %v2407
  %v2446 = vadd.f32 %v2253, %v2410
  %v2447 = vadd.f32 %v2254, %v2413
  %v2448 = vadd.f32 %v2255, %v2416
  %v2449 = vadd.f32 %v2256, %v2419
  %v2450 = vadd.f32 %v2257, %v2422
  %v2451 = vadd.f32 %v2258, %v2425
  %v2452 = vadd.f32 %v2259, %v2428
  %v2453 = vadd.f32 %v2260, %v2431
  %v2454 = vld [vmem:[#allocation2 + $0x17] sm:$0xff]
  %v2455 = vld [vmem:[#allocation2 + $0x1f] sm:$0xff]
  %v2456 = vld [vmem:[#allocation2 + $0x27] sm:$0xff]
  %v2457 = vld [vmem:[#allocation2 + $0x2f] sm:$0xff]
  %v2458 = vld [vmem:[#allocation2 + $0x37] sm:$0xff]
  %v2459 = vld [vmem:[#allocation2 + $0x3f] sm:$0xff]
  %v2460 = vld [vmem:[#allocation2 + $0x47] sm:$0xff]
  %v2461 = vld [vmem:[#allocation2 + $0x4f] sm:$0xff]
  %v2462 = vld [vmem:[#allocation2 + $0x57] sm:$0xff]
  %v2463 = vld [vmem:[#allocation2 + $0x5f] sm:$0xff]
  %v2464 = vld [vmem:[#allocation2 + $0x67] sm:$0xff]
  %v2465 = vld [vmem:[#allocation2 + $0x6f] sm:$0xff]
  %v2466 = vld [vmem:[#allocation2 + $0x77] sm:$0xff]
  %v2467 = vld [vmem:[#allocation2 + $0x7f] sm:$0xff]
  %v2468 = vld [vmem:[#allocation2 + $0x87] sm:$0xff]
  %v2469 = vld [vmem:[#allocation2 + $0x8f] sm:$0xff]
  %v2470 = vld [vmem:[#allocation2 + $0x97] sm:$0xff]
  %v2471 = vld [vmem:[#allocation2 + $0x9f] sm:$0xff]
  %v2472 = vld [vmem:[#allocation2 + $0xa7] sm:$0xff]
  %v2473 = vld [vmem:[#allocation2 + $0xaf] sm:$0xff]
  %v2474 = vld [vmem:[#allocation2 + $0xb7] sm:$0x7f]
  %v2475 = vld [vmem:[%s4 + $0x2c0] sm:$0xff]
  %v2476 = vld [vmem:[%s4 + $0x2c8] sm:$0xff]
  %v2477 = vld [vmem:[%s4 + $0x2d0] sm:$0xff]
  %v2478 = vld [vmem:[%s4 + $0x2d8] sm:$0xff]
  %v2479 = vld [vmem:[%s4 + $0x2e0] sm:$0xff]
  %v2480 = vld [vmem:[%s4 + $0x2e8] sm:$0xff]
  %v2481 = vld [vmem:[%s4 + $0x2f0] sm:$0xff]
  %v2482 = vld [vmem:[%s4 + $0x2f8] sm:$0xff]
  %v2484 = vsel %vm69, %v2454, 0
  %v2487 = vsel %vm69, %v2455, 0
  %v2490 = vsel %vm69, %v2456, 0
  %v2493 = vsel %vm69, %v2457, 0
  %v2496 = vsel %vm69, %v2458, 0
  %v2499 = vsel %vm69, %v2459, 0
  %v2502 = vsel %vm69, %v2460, 0
  %v2505 = vsel %vm69, %v2461, 0
  %v2508 = vsel %vm69, %v2462, 0
  %v2511 = vsel %vm69, %v2463, 0
  %v2514 = vsel %vm69, %v2464, 0
  %v2517 = vsel %vm69, %v2465, 0
  %v2520 = vsel %vm69, %v2466, 0
  %v2523 = vsel %vm69, %v2467, 0
  %v2526 = vsel %vm69, %v2468, 0
  %v2529 = vsel %vm69, %v2469, 0
  %v2532 = vsel %vm69, %v2470, 0
  %v2535 = vsel %vm69, %v2471, 0
  %v2538 = vsel %vm69, %v2472, 0
  %v2541 = vsel %vm69, %v2473, 0
  %v2544 = vsel %vm69, %v2474, 0
  %2546 = vmatpush.msra.mxu0 0.0
  %2547 = vmatpush.msra.mxu0 0.0
  %2548 = vmatpush.msra.mxu0 0.0
  %2549 = vmatpush.msra.mxu0 0.0
  %2550 = vmatpush.msra.mxu0 0.0
  %2551 = vmatpush.msra.mxu0 0.0
  %2552 = vmatpush.msra.mxu0 0.0
  %2553 = vmatpush.msra.mxu0 0.0
  %2554 = vmatpush.msra.mxu0 %v2482
  %2555 = vmatpush.msra.mxu0 %v2481
  %2556 = vmatpush.msra.mxu0 %v2480
  %2557 = vmatpush.msra.mxu0 %v2479
  %2558 = vmatpush.msra.mxu0 %v2478
  %2559 = vmatpush.msra.mxu0 %v2477
  %2560 = vmatpush.msra.mxu0 %v2476
  %2561 = vmatpush.msra.mxu0 %v2475
  %2562 = vmatmul.f32.gmra.mxu0 %v2484
  %v2563 = vpop.f32.mrf.mxu0
  %v2564 = vadd.f32 0.0, %v2563
  %2565 = vmatmul.f32.gmra.mxu0 %v2487
  %v2566 = vpop.f32.mrf.mxu0
  %v2567 = vadd.f32 0.0, %v2566
  %2568 = vmatmul.f32.gmra.mxu0 %v2490
  %v2569 = vpop.f32.mrf.mxu0
  %v2570 = vadd.f32 0.0, %v2569
  %2571 = vmatmul.f32.gmra.mxu0 %v2493
  %v2572 = vpop.f32.mrf.mxu0
  %v2573 = vadd.f32 0.0, %v2572
  %2574 = vmatmul.f32.gmra.mxu0 %v2496
  %v2575 = vpop.f32.mrf.mxu0
  %v2576 = vadd.f32 0.0, %v2575
  %2577 = vmatmul.f32.gmra.mxu0 %v2499
  %v2578 = vpop.f32.mrf.mxu0
  %v2579 = vadd.f32 0.0, %v2578
  %2580 = vmatmul.f32.gmra.mxu0 %v2502
  %v2581 = vpop.f32.mrf.mxu0
  %v2582 = vadd.f32 0.0, %v2581
  %2583 = vmatmul.f32.gmra.mxu0 %v2505
  %v2584 = vpop.f32.mrf.mxu0
  %v2585 = vadd.f32 0.0, %v2584
  %2586 = vmatmul.f32.gmra.mxu0 %v2508
  %v2587 = vpop.f32.mrf.mxu0
  %v2588 = vadd.f32 0.0, %v2587
  %2589 = vmatmul.f32.gmra.mxu0 %v2511
  %v2590 = vpop.f32.mrf.mxu0
  %v2591 = vadd.f32 0.0, %v2590
  %2592 = vmatmul.f32.gmra.mxu0 %v2514
  %v2593 = vpop.f32.mrf.mxu0
  %v2594 = vadd.f32 0.0, %v2593
  %2595 = vmatmul.f32.gmra.mxu0 %v2517
  %v2596 = vpop.f32.mrf.mxu0
  %v2597 = vadd.f32 0.0, %v2596
  %2598 = vmatmul.f32.gmra.mxu0 %v2520
  %v2599 = vpop.f32.mrf.mxu0
  %v2600 = vadd.f32 0.0, %v2599
  %2601 = vmatmul.f32.gmra.mxu0 %v2523
  %v2602 = vpop.f32.mrf.mxu0
  %v2603 = vadd.f32 0.0, %v2602
  %2604 = vmatmul.f32.gmra.mxu0 %v2526
  %v2605 = vpop.f32.mrf.mxu0
  %v2606 = vadd.f32 0.0, %v2605
  %2607 = vmatmul.f32.gmra.mxu0 %v2529
  %v2608 = vpop.f32.mrf.mxu0
  %v2609 = vadd.f32 0.0, %v2608
  %2610 = vmatmul.f32.gmra.mxu0 %v2532
  %v2611 = vpop.f32.mrf.mxu0
  %v2612 = vadd.f32 0.0, %v2611
  %2613 = vmatmul.f32.gmra.mxu0 %v2535
  %v2614 = vpop.f32.mrf.mxu0
  %v2615 = vadd.f32 0.0, %v2614
  %2616 = vmatmul.f32.gmra.mxu0 %v2538
  %v2617 = vpop.f32.mrf.mxu0
  %v2618 = vadd.f32 0.0, %v2617
  %2619 = vmatmul.f32.gmra.mxu0 %v2541
  %v2620 = vpop.f32.mrf.mxu0
  %v2621 = vadd.f32 0.0, %v2620
  %2622 = vmatmul.f32.gmra.mxu0 %v2544
  %v2623 = vpop.f32.mrf.mxu0
  %v2624 = vadd.f32 0.0, %v2623
  %2625 = vdwg.mxu0
  %v2626 = vadd.f32 %v2433, %v2564
  %v2627 = vadd.f32 %v2434, %v2567
  %v2628 = vadd.f32 %v2435, %v2570
  %v2629 = vadd.f32 %v2436, %v2573
  %v2630 = vadd.f32 %v2437, %v2576
  %v2631 = vadd.f32 %v2438, %v2579
  %v2632 = vadd.f32 %v2439, %v2582
  %v2633 = vadd.f32 %v2440, %v2585
  %v2634 = vadd.f32 %v2441, %v2588
  %v2635 = vadd.f32 %v2442, %v2591
  %v2636 = vadd.f32 %v2443, %v2594
  %v2637 = vadd.f32 %v2444, %v2597
  %v2638 = vadd.f32 %v2445, %v2600
  %v2639 = vadd.f32 %v2446, %v2603
  %v2640 = vadd.f32 %v2447, %v2606
  %v2641 = vadd.f32 %v2448, %v2609
  %v2642 = vadd.f32 %v2449, %v2612
  %v2643 = vadd.f32 %v2450, %v2615
  %v2644 = vadd.f32 %v2451, %v2618
  %v2645 = vadd.f32 %v2452, %v2621
  %v2646 = vadd.f32 %v2453, %v2624
  %v2647 = vld [vmem:[#allocation2 + $0x1e] sm:$0xff]
  %v2648 = vld [vmem:[#allocation2 + $0x26] sm:$0xff]
  %v2649 = vld [vmem:[#allocation2 + $0x2e] sm:$0xff]
  %v2650 = vld [vmem:[#allocation2 + $0x36] sm:$0xff]
  %v2651 = vld [vmem:[#allocation2 + $0x3e] sm:$0xff]
  %v2652 = vld [vmem:[#allocation2 + $0x46] sm:$0xff]
  %v2653 = vld [vmem:[#allocation2 + $0x4e] sm:$0xff]
  %v2654 = vld [vmem:[#allocation2 + $0x56] sm:$0xff]
  %v2655 = vld [vmem:[#allocation2 + $0x5e] sm:$0xff]
  %v2656 = vld [vmem:[#allocation2 + $0x66] sm:$0xff]
  %v2657 = vld [vmem:[#allocation2 + $0x6e] sm:$0xff]
  %v2658 = vld [vmem:[#allocation2 + $0x76] sm:$0xff]
  %v2659 = vld [vmem:[#allocation2 + $0x7e] sm:$0xff]
  %v2660 = vld [vmem:[#allocation2 + $0x86] sm:$0xff]
  %v2661 = vld [vmem:[#allocation2 + $0x8e] sm:$0xff]
  %v2662 = vld [vmem:[#allocation2 + $0x96] sm:$0xff]
  %v2663 = vld [vmem:[#allocation2 + $0x9e] sm:$0xff]
  %v2664 = vld [vmem:[#allocation2 + $0xa6] sm:$0xff]
  %v2665 = vld [vmem:[#allocation2 + $0xae] sm:$0xff]
  %v2666 = vld [vmem:[#allocation2 + $0xb6] sm:$0xff]
  %v2667 = vld [vmem:[#allocation2 + $0xbe] sm:$0x7f]
  %v2668 = vld [vmem:[%s4 + $0x300] sm:$0xff]
  %v2669 = vld [vmem:[%s4 + $0x308] sm:$0xff]
  %v2670 = vld [vmem:[%s4 + $0x310] sm:$0xff]
  %v2671 = vld [vmem:[%s4 + $0x318] sm:$0xff]
  %v2672 = vld [vmem:[%s4 + $0x320] sm:$0xff]
  %v2673 = vld [vmem:[%s4 + $0x328] sm:$0xff]
  %v2674 = vld [vmem:[%s4 + $0x330] sm:$0xff]
  %v2675 = vld [vmem:[%s4 + $0x338] sm:$0xff]
  %v2677 = vsel %vm69, %v2647, 0
  %v2680 = vsel %vm69, %v2648, 0
  %v2683 = vsel %vm69, %v2649, 0
  %v2686 = vsel %vm69, %v2650, 0
  %v2689 = vsel %vm69, %v2651, 0
  %v2692 = vsel %vm69, %v2652, 0
  %v2695 = vsel %vm69, %v2653, 0
  %v2698 = vsel %vm69, %v2654, 0
  %v2701 = vsel %vm69, %v2655, 0
  %v2704 = vsel %vm69, %v2656, 0
  %v2707 = vsel %vm69, %v2657, 0
  %v2710 = vsel %vm69, %v2658, 0
  %v2713 = vsel %vm69, %v2659, 0
  %v2716 = vsel %vm69, %v2660, 0
  %v2719 = vsel %vm69, %v2661, 0
  %v2722 = vsel %vm69, %v2662, 0
  %v2725 = vsel %vm69, %v2663, 0
  %v2728 = vsel %vm69, %v2664, 0
  %v2731 = vsel %vm69, %v2665, 0
  %v2734 = vsel %vm69, %v2666, 0
  %v2737 = vsel %vm69, %v2667, 0
  %2739 = vmatpush.msra.mxu0 0.0
  %2740 = vmatpush.msra.mxu0 0.0
  %2741 = vmatpush.msra.mxu0 0.0
  %2742 = vmatpush.msra.mxu0 0.0
  %2743 = vmatpush.msra.mxu0 0.0
  %2744 = vmatpush.msra.mxu0 0.0
  %2745 = vmatpush.msra.mxu0 0.0
  %2746 = vmatpush.msra.mxu0 0.0
  %2747 = vmatpush.msra.mxu0 %v2675
  %2748 = vmatpush.msra.mxu0 %v2674
  %2749 = vmatpush.msra.mxu0 %v2673
  %2750 = vmatpush.msra.mxu0 %v2672
  %2751 = vmatpush.msra.mxu0 %v2671
  %2752 = vmatpush.msra.mxu0 %v2670
  %2753 = vmatpush.msra.mxu0 %v2669
  %2754 = vmatpush.msra.mxu0 %v2668
  %2755 = vmatmul.f32.gmra.mxu0 %v2677
  %v2756 = vpop.f32.mrf.mxu0
  %v2757 = vadd.f32 0.0, %v2756
  %2758 = vmatmul.f32.gmra.mxu0 %v2680
  %v2759 = vpop.f32.mrf.mxu0
  %v2760 = vadd.f32 0.0, %v2759
  %2761 = vmatmul.f32.gmra.mxu0 %v2683
  %v2762 = vpop.f32.mrf.mxu0
  %v2763 = vadd.f32 0.0, %v2762
  %2764 = vmatmul.f32.gmra.mxu0 %v2686
  %v2765 = vpop.f32.mrf.mxu0
  %v2766 = vadd.f32 0.0, %v2765
  %2767 = vmatmul.f32.gmra.mxu0 %v2689
  %v2768 = vpop.f32.mrf.mxu0
  %v2769 = vadd.f32 0.0, %v2768
  %2770 = vmatmul.f32.gmra.mxu0 %v2692
  %v2771 = vpop.f32.mrf.mxu0
  %v2772 = vadd.f32 0.0, %v2771
  %2773 = vmatmul.f32.gmra.mxu0 %v2695
  %v2774 = vpop.f32.mrf.mxu0
  %v2775 = vadd.f32 0.0, %v2774
  %2776 = vmatmul.f32.gmra.mxu0 %v2698
  %v2777 = vpop.f32.mrf.mxu0
  %v2778 = vadd.f32 0.0, %v2777
  %2779 = vmatmul.f32.gmra.mxu0 %v2701
  %v2780 = vpop.f32.mrf.mxu0
  %v2781 = vadd.f32 0.0, %v2780
  %2782 = vmatmul.f32.gmra.mxu0 %v2704
  %v2783 = vpop.f32.mrf.mxu0
  %v2784 = vadd.f32 0.0, %v2783
  %2785 = vmatmul.f32.gmra.mxu0 %v2707
  %v2786 = vpop.f32.mrf.mxu0
  %v2787 = vadd.f32 0.0, %v2786
  %2788 = vmatmul.f32.gmra.mxu0 %v2710
  %v2789 = vpop.f32.mrf.mxu0
  %v2790 = vadd.f32 0.0, %v2789
  %2791 = vmatmul.f32.gmra.mxu0 %v2713
  %v2792 = vpop.f32.mrf.mxu0
  %v2793 = vadd.f32 0.0, %v2792
  %2794 = vmatmul.f32.gmra.mxu0 %v2716
  %v2795 = vpop.f32.mrf.mxu0
  %v2796 = vadd.f32 0.0, %v2795
  %2797 = vmatmul.f32.gmra.mxu0 %v2719
  %v2798 = vpop.f32.mrf.mxu0
  %v2799 = vadd.f32 0.0, %v2798
  %2800 = vmatmul.f32.gmra.mxu0 %v2722
  %v2801 = vpop.f32.mrf.mxu0
  %v2802 = vadd.f32 0.0, %v2801
  %2803 = vmatmul.f32.gmra.mxu0 %v2725
  %v2804 = vpop.f32.mrf.mxu0
  %v2805 = vadd.f32 0.0, %v2804
  %2806 = vmatmul.f32.gmra.mxu0 %v2728
  %v2807 = vpop.f32.mrf.mxu0
  %v2808 = vadd.f32 0.0, %v2807
  %2809 = vmatmul.f32.gmra.mxu0 %v2731
  %v2810 = vpop.f32.mrf.mxu0
  %v2811 = vadd.f32 0.0, %v2810
  %2812 = vmatmul.f32.gmra.mxu0 %v2734
  %v2813 = vpop.f32.mrf.mxu0
  %v2814 = vadd.f32 0.0, %v2813
  %2815 = vmatmul.f32.gmra.mxu0 %v2737
  %v2816 = vpop.f32.mrf.mxu0
  %v2817 = vadd.f32 0.0, %v2816
  %2818 = vdwg.mxu0
  %v2819 = vadd.f32 %v2626, %v2757
  %v2820 = vadd.f32 %v2627, %v2760
  %v2821 = vadd.f32 %v2628, %v2763
  %v2822 = vadd.f32 %v2629, %v2766
  %v2823 = vadd.f32 %v2630, %v2769
  %v2824 = vadd.f32 %v2631, %v2772
  %v2825 = vadd.f32 %v2632, %v2775
  %v2826 = vadd.f32 %v2633, %v2778
  %v2827 = vadd.f32 %v2634, %v2781
  %v2828 = vadd.f32 %v2635, %v2784
  %v2829 = vadd.f32 %v2636, %v2787
  %v2830 = vadd.f32 %v2637, %v2790
  %v2831 = vadd.f32 %v2638, %v2793
  %v2832 = vadd.f32 %v2639, %v2796
  %v2833 = vadd.f32 %v2640, %v2799
  %v2834 = vadd.f32 %v2641, %v2802
  %v2835 = vadd.f32 %v2642, %v2805
  %v2836 = vadd.f32 %v2643, %v2808
  %v2837 = vadd.f32 %v2644, %v2811
  %v2838 = vadd.f32 %v2645, %v2814
  %v2839 = vadd.f32 %v2646, %v2817
  %v2840 = vld [vmem:[#allocation2 + $0x1f] sm:$0xff]
  %v2841 = vld [vmem:[#allocation2 + $0x27] sm:$0xff]
  %v2842 = vld [vmem:[#allocation2 + $0x2f] sm:$0xff]
  %v2843 = vld [vmem:[#allocation2 + $0x37] sm:$0xff]
  %v2844 = vld [vmem:[#allocation2 + $0x3f] sm:$0xff]
  %v2845 = vld [vmem:[#allocation2 + $0x47] sm:$0xff]
  %v2846 = vld [vmem:[#allocation2 + $0x4f] sm:$0xff]
  %v2847 = vld [vmem:[#allocation2 + $0x57] sm:$0xff]
  %v2848 = vld [vmem:[#allocation2 + $0x5f] sm:$0xff]
  %v2849 = vld [vmem:[#allocation2 + $0x67] sm:$0xff]
  %v2850 = vld [vmem:[#allocation2 + $0x6f] sm:$0xff]
  %v2851 = vld [vmem:[#allocation2 + $0x77] sm:$0xff]
  %v2852 = vld [vmem:[#allocation2 + $0x7f] sm:$0xff]
  %v2853 = vld [vmem:[#allocation2 + $0x87] sm:$0xff]
  %v2854 = vld [vmem:[#allocation2 + $0x8f] sm:$0xff]
  %v2855 = vld [vmem:[#allocation2 + $0x97] sm:$0xff]
  %v2856 = vld [vmem:[#allocation2 + $0x9f] sm:$0xff]
  %v2857 = vld [vmem:[#allocation2 + $0xa7] sm:$0xff]
  %v2858 = vld [vmem:[#allocation2 + $0xaf] sm:$0xff]
  %v2859 = vld [vmem:[#allocation2 + $0xb7] sm:$0xff]
  %v2860 = vld [vmem:[#allocation2 + $0xbf] sm:$0x7f]
  %v2861 = vld [vmem:[%s4 + $0x340] sm:$0xff]
  %v2862 = vld [vmem:[%s4 + $0x348] sm:$0xff]
  %v2863 = vld [vmem:[%s4 + $0x350] sm:$0xff]
  %v2864 = vld [vmem:[%s4 + $0x358] sm:$0xff]
  %v2865 = vld [vmem:[%s4 + $0x360] sm:$0xff]
  %v2866 = vld [vmem:[%s4 + $0x368] sm:$0xff]
  %v2867 = vld [vmem:[%s4 + $0x370] sm:$0xff]
  %v2868 = vld [vmem:[%s4 + $0x378] sm:$0xff]
  %v2870 = vsel %vm69, %v2840, 0
  %v2873 = vsel %vm69, %v2841, 0
  %v2876 = vsel %vm69, %v2842, 0
  %v2879 = vsel %vm69, %v2843, 0
  %v2882 = vsel %vm69, %v2844, 0
  %v2885 = vsel %vm69, %v2845, 0
  %v2888 = vsel %vm69, %v2846, 0
  %v2891 = vsel %vm69, %v2847, 0
  %v2894 = vsel %vm69, %v2848, 0
  %v2897 = vsel %vm69, %v2849, 0
  %v2900 = vsel %vm69, %v2850, 0
  %v2903 = vsel %vm69, %v2851, 0
  %v2906 = vsel %vm69, %v2852, 0
  %v2909 = vsel %vm69, %v2853, 0
  %v2912 = vsel %vm69, %v2854, 0
  %v2915 = vsel %vm69, %v2855, 0
  %v2918 = vsel %vm69, %v2856, 0
  %v2921 = vsel %vm69, %v2857, 0
  %v2924 = vsel %vm69, %v2858, 0
  %v2927 = vsel %vm69, %v2859, 0
  %v2930 = vsel %vm69, %v2860, 0
  %2932 = vmatpush.msra.mxu0 0.0
  %2933 = vmatpush.msra.mxu0 0.0
  %2934 = vmatpush.msra.mxu0 0.0
  %2935 = vmatpush.msra.mxu0 0.0
  %2936 = vmatpush.msra.mxu0 0.0
  %2937 = vmatpush.msra.mxu0 0.0
  %2938 = vmatpush.msra.mxu0 0.0
  %2939 = vmatpush.msra.mxu0 0.0
  %2940 = vmatpush.msra.mxu0 %v2868
  %2941 = vmatpush.msra.mxu0 %v2867
  %2942 = vmatpush.msra.mxu0 %v2866
  %2943 = vmatpush.msra.mxu0 %v2865
  %2944 = vmatpush.msra.mxu0 %v2864
  %2945 = vmatpush.msra.mxu0 %v2863
  %2946 = vmatpush.msra.mxu0 %v2862
  %2947 = vmatpush.msra.mxu0 %v2861
  %2948 = vmatmul.f32.gmra.mxu0 %v2870
  %v2949 = vpop.f32.mrf.mxu0
  %v2950 = vadd.f32 0.0, %v2949
  %2951 = vmatmul.f32.gmra.mxu0 %v2873
  %v2952 = vpop.f32.mrf.mxu0
  %v2953 = vadd.f32 0.0, %v2952
  %2954 = vmatmul.f32.gmra.mxu0 %v2876
  %v2955 = vpop.f32.mrf.mxu0
  %v2956 = vadd.f32 0.0, %v2955
  %2957 = vmatmul.f32.gmra.mxu0 %v2879
  %v2958 = vpop.f32.mrf.mxu0
  %v2959 = vadd.f32 0.0, %v2958
  %2960 = vmatmul.f32.gmra.mxu0 %v2882
  %v2961 = vpop.f32.mrf.mxu0
  %v2962 = vadd.f32 0.0, %v2961
  %2963 = vmatmul.f32.gmra.mxu0 %v2885
  %v2964 = vpop.f32.mrf.mxu0
  %v2965 = vadd.f32 0.0, %v2964
  %2966 = vmatmul.f32.gmra.mxu0 %v2888
  %v2967 = vpop.f32.mrf.mxu0
  %v2968 = vadd.f32 0.0, %v2967
  %2969 = vmatmul.f32.gmra.mxu0 %v2891
  %v2970 = vpop.f32.mrf.mxu0
  %v2971 = vadd.f32 0.0, %v2970
  %2972 = vmatmul.f32.gmra.mxu0 %v2894
  %v2973 = vpop.f32.mrf.mxu0
  %v2974 = vadd.f32 0.0, %v2973
  %2975 = vmatmul.f32.gmra.mxu0 %v2897
  %v2976 = vpop.f32.mrf.mxu0
  %v2977 = vadd.f32 0.0, %v2976
  %2978 = vmatmul.f32.gmra.mxu0 %v2900
  %v2979 = vpop.f32.mrf.mxu0
  %v2980 = vadd.f32 0.0, %v2979
  %2981 = vmatmul.f32.gmra.mxu0 %v2903
  %v2982 = vpop.f32.mrf.mxu0
  %v2983 = vadd.f32 0.0, %v2982
  %2984 = vmatmul.f32.gmra.mxu0 %v2906
  %v2985 = vpop.f32.mrf.mxu0
  %v2986 = vadd.f32 0.0, %v2985
  %2987 = vmatmul.f32.gmra.mxu0 %v2909
  %v2988 = vpop.f32.mrf.mxu0
  %v2989 = vadd.f32 0.0, %v2988
  %2990 = vmatmul.f32.gmra.mxu0 %v2912
  %v2991 = vpop.f32.mrf.mxu0
  %v2992 = vadd.f32 0.0, %v2991
  %2993 = vmatmul.f32.gmra.mxu0 %v2915
  %v2994 = vpop.f32.mrf.mxu0
  %v2995 = vadd.f32 0.0, %v2994
  %2996 = vmatmul.f32.gmra.mxu0 %v2918
  %v2997 = vpop.f32.mrf.mxu0
  %v2998 = vadd.f32 0.0, %v2997
  %2999 = vmatmul.f32.gmra.mxu0 %v2921
  %v3000 = vpop.f32.mrf.mxu0
  %v3001 = vadd.f32 0.0, %v3000
  %3002 = vmatmul.f32.gmra.mxu0 %v2924
  %v3003 = vpop.f32.mrf.mxu0
  %v3004 = vadd.f32 0.0, %v3003
  %3005 = vmatmul.f32.gmra.mxu0 %v2927
  %v3006 = vpop.f32.mrf.mxu0
  %v3007 = vadd.f32 0.0, %v3006
  %3008 = vmatmul.f32.gmra.mxu0 %v2930
  %v3009 = vpop.f32.mrf.mxu0
  %v3010 = vadd.f32 0.0, %v3009
  %3011 = vdwg.mxu0
  %v3012 = vadd.f32 %v2819, %v2950
  %v3013 = vadd.f32 %v2820, %v2953
  %v3014 = vadd.f32 %v2821, %v2956
  %v3015 = vadd.f32 %v2822, %v2959
  %v3016 = vadd.f32 %v2823, %v2962
  %v3017 = vadd.f32 %v2824, %v2965
  %v3018 = vadd.f32 %v2825, %v2968
  %v3019 = vadd.f32 %v2826, %v2971
  %v3020 = vadd.f32 %v2827, %v2974
  %v3021 = vadd.f32 %v2828, %v2977
  %v3022 = vadd.f32 %v2829, %v2980
  %v3023 = vadd.f32 %v2830, %v2983
  %v3024 = vadd.f32 %v2831, %v2986
  %v3025 = vadd.f32 %v2832, %v2989
  %v3026 = vadd.f32 %v2833, %v2992
  %v3027 = vadd.f32 %v2834, %v2995
  %v3028 = vadd.f32 %v2835, %v2998
  %v3029 = vadd.f32 %v2836, %v3001
  %v3030 = vadd.f32 %v2837, %v3004
  %v3031 = vadd.f32 %v2838, %v3007
  %v3032 = vadd.f32 %v2839, %v3010
  %v3033 = vld [vmem:[#allocation2 + $0x20] sm:$0xff]
  %v3034 = vld [vmem:[#allocation2 + $0x28] sm:$0xff]
  %v3035 = vld [vmem:[#allocation2 + $0x30] sm:$0xff]
  %v3036 = vld [vmem:[#allocation2 + $0x38] sm:$0xff]
  %v3037 = vld [vmem:[#allocation2 + $0x40] sm:$0xff]
  %v3038 = vld [vmem:[#allocation2 + $0x48] sm:$0xff]
  %v3039 = vld [vmem:[#allocation2 + $0x50] sm:$0xff]
  %v3040 = vld [vmem:[#allocation2 + $0x58] sm:$0xff]
  %v3041 = vld [vmem:[#allocation2 + $0x60] sm:$0xff]
  %v3042 = vld [vmem:[#allocation2 + $0x68] sm:$0xff]
  %v3043 = vld [vmem:[#allocation2 + $0x70] sm:$0xff]
  %v3044 = vld [vmem:[#allocation2 + $0x78] sm:$0xff]
  %v3045 = vld [vmem:[#allocation2 + $0x80] sm:$0xff]
  %v3046 = vld [vmem:[#allocation2 + $0x88] sm:$0xff]
  %v3047 = vld [vmem:[#allocation2 + $0x90] sm:$0xff]
  %v3048 = vld [vmem:[#allocation2 + $0x98] sm:$0xff]
  %v3049 = vld [vmem:[#allocation2 + $0xa0] sm:$0xff]
  %v3050 = vld [vmem:[#allocation2 + $0xa8] sm:$0xff]
  %v3051 = vld [vmem:[#allocation2 + $0xb0] sm:$0xff]
  %v3052 = vld [vmem:[#allocation2 + $0xb8] sm:$0xff]
  %v3053 = vld [vmem:[#allocation2 + $0xc0] sm:$0x7f]
  %v3054 = vld [vmem:[%s4 + $0x380] sm:$0xff]
  %v3055 = vld [vmem:[%s4 + $0x388] sm:$0xff]
  %v3056 = vld [vmem:[%s4 + $0x390] sm:$0xff]
  %v3057 = vld [vmem:[%s4 + $0x398] sm:$0xff]
  %v3058 = vld [vmem:[%s4 + $0x3a0] sm:$0xff]
  %v3059 = vld [vmem:[%s4 + $0x3a8] sm:$0xff]
  %v3060 = vld [vmem:[%s4 + $0x3b0] sm:$0xff]
  %v3061 = vld [vmem:[%s4 + $0x3b8] sm:$0xff]
  %v3063 = vsel %vm69, %v3033, 0
  %v3066 = vsel %vm69, %v3034, 0
  %v3069 = vsel %vm69, %v3035, 0
  %v3072 = vsel %vm69, %v3036, 0
  %v3075 = vsel %vm69, %v3037, 0
  %v3078 = vsel %vm69, %v3038, 0
  %v3081 = vsel %vm69, %v3039, 0
  %v3084 = vsel %vm69, %v3040, 0
  %v3087 = vsel %vm69, %v3041, 0
  %v3090 = vsel %vm69, %v3042, 0
  %v3093 = vsel %vm69, %v3043, 0
  %v3096 = vsel %vm69, %v3044, 0
  %v3099 = vsel %vm69, %v3045, 0
  %v3102 = vsel %vm69, %v3046, 0
  %v3105 = vsel %vm69, %v3047, 0
  %v3108 = vsel %vm69, %v3048, 0
  %v3111 = vsel %vm69, %v3049, 0
  %v3114 = vsel %vm69, %v3050, 0
  %v3117 = vsel %vm69, %v3051, 0
  %v3120 = vsel %vm69, %v3052, 0
  %v3123 = vsel %vm69, %v3053, 0
  %3125 = vmatpush.msra.mxu0 0.0
  %3126 = vmatpush.msra.mxu0 0.0
  %3127 = vmatpush.msra.mxu0 0.0
  %3128 = vmatpush.msra.mxu0 0.0
  %3129 = vmatpush.msra.mxu0 0.0
  %3130 = vmatpush.msra.mxu0 0.0
  %3131 = vmatpush.msra.mxu0 0.0
  %3132 = vmatpush.msra.mxu0 0.0
  %3133 = vmatpush.msra.mxu0 %v3061
  %3134 = vmatpush.msra.mxu0 %v3060
  %3135 = vmatpush.msra.mxu0 %v3059
  %3136 = vmatpush.msra.mxu0 %v3058
  %3137 = vmatpush.msra.mxu0 %v3057
  %3138 = vmatpush.msra.mxu0 %v3056
  %3139 = vmatpush.msra.mxu0 %v3055
  %3140 = vmatpush.msra.mxu0 %v3054
  %3141 = vmatmul.f32.gmra.mxu0 %v3063
  %v3142 = vpop.f32.mrf.mxu0
  %v3143 = vadd.f32 0.0, %v3142
  %3144 = vmatmul.f32.gmra.mxu0 %v3066
  %v3145 = vpop.f32.mrf.mxu0
  %v3146 = vadd.f32 0.0, %v3145
  %3147 = vmatmul.f32.gmra.mxu0 %v3069
  %v3148 = vpop.f32.mrf.mxu0
  %v3149 = vadd.f32 0.0, %v3148
  %3150 = vmatmul.f32.gmra.mxu0 %v3072
  %v3151 = vpop.f32.mrf.mxu0
  %v3152 = vadd.f32 0.0, %v3151
  %3153 = vmatmul.f32.gmra.mxu0 %v3075
  %v3154 = vpop.f32.mrf.mxu0
  %v3155 = vadd.f32 0.0, %v3154
  %3156 = vmatmul.f32.gmra.mxu0 %v3078
  %v3157 = vpop.f32.mrf.mxu0
  %v3158 = vadd.f32 0.0, %v3157
  %3159 = vmatmul.f32.gmra.mxu0 %v3081
  %v3160 = vpop.f32.mrf.mxu0
  %v3161 = vadd.f32 0.0, %v3160
  %3162 = vmatmul.f32.gmra.mxu0 %v3084
  %v3163 = vpop.f32.mrf.mxu0
  %v3164 = vadd.f32 0.0, %v3163
  %3165 = vmatmul.f32.gmra.mxu0 %v3087
  %v3166 = vpop.f32.mrf.mxu0
  %v3167 = vadd.f32 0.0, %v3166
  %3168 = vmatmul.f32.gmra.mxu0 %v3090
  %v3169 = vpop.f32.mrf.mxu0
  %v3170 = vadd.f32 0.0, %v3169
  %3171 = vmatmul.f32.gmra.mxu0 %v3093
  %v3172 = vpop.f32.mrf.mxu0
  %v3173 = vadd.f32 0.0, %v3172
  %3174 = vmatmul.f32.gmra.mxu0 %v3096
  %v3175 = vpop.f32.mrf.mxu0
  %v3176 = vadd.f32 0.0, %v3175
  %3177 = vmatmul.f32.gmra.mxu0 %v3099
  %v3178 = vpop.f32.mrf.mxu0
  %v3179 = vadd.f32 0.0, %v3178
  %3180 = vmatmul.f32.gmra.mxu0 %v3102
  %v3181 = vpop.f32.mrf.mxu0
  %v3182 = vadd.f32 0.0, %v3181
  %3183 = vmatmul.f32.gmra.mxu0 %v3105
  %v3184 = vpop.f32.mrf.mxu0
  %v3185 = vadd.f32 0.0, %v3184
  %3186 = vmatmul.f32.gmra.mxu0 %v3108
  %v3187 = vpop.f32.mrf.mxu0
  %v3188 = vadd.f32 0.0, %v3187
  %3189 = vmatmul.f32.gmra.mxu0 %v3111
  %v3190 = vpop.f32.mrf.mxu0
  %v3191 = vadd.f32 0.0, %v3190
  %3192 = vmatmul.f32.gmra.mxu0 %v3114
  %v3193 = vpop.f32.mrf.mxu0
  %v3194 = vadd.f32 0.0, %v3193
  %3195 = vmatmul.f32.gmra.mxu0 %v3117
  %v3196 = vpop.f32.mrf.mxu0
  %v3197 = vadd.f32 0.0, %v3196
  %3198 = vmatmul.f32.gmra.mxu0 %v3120
  %v3199 = vpop.f32.mrf.mxu0
  %v3200 = vadd.f32 0.0, %v3199
  %3201 = vmatmul.f32.gmra.mxu0 %v3123
  %v3202 = vpop.f32.mrf.mxu0
  %v3203 = vadd.f32 0.0, %v3202
  %3204 = vdwg.mxu0
  %v3205 = vadd.f32 %v3012, %v3143
  %v3206 = vadd.f32 %v3013, %v3146
  %v3207 = vadd.f32 %v3014, %v3149
  %v3208 = vadd.f32 %v3015, %v3152
  %v3209 = vadd.f32 %v3016, %v3155
  %v3210 = vadd.f32 %v3017, %v3158
  %v3211 = vadd.f32 %v3018, %v3161
  %v3212 = vadd.f32 %v3019, %v3164
  %v3213 = vadd.f32 %v3020, %v3167
  %v3214 = vadd.f32 %v3021, %v3170
  %v3215 = vadd.f32 %v3022, %v3173
  %v3216 = vadd.f32 %v3023, %v3176
  %v3217 = vadd.f32 %v3024, %v3179
  %v3218 = vadd.f32 %v3025, %v3182
  %v3219 = vadd.f32 %v3026, %v3185
  %v3220 = vadd.f32 %v3027, %v3188
  %v3221 = vadd.f32 %v3028, %v3191
  %v3222 = vadd.f32 %v3029, %v3194
  %v3223 = vadd.f32 %v3030, %v3197
  %v3224 = vadd.f32 %v3031, %v3200
  %v3225 = vadd.f32 %v3032, %v3203
  %v3226 = vld [vmem:[#allocation2 + $0x21] sm:$0xff]
  %v3227 = vld [vmem:[#allocation2 + $0x29] sm:$0xff]
  %v3228 = vld [vmem:[#allocation2 + $0x31] sm:$0xff]
  %v3229 = vld [vmem:[#allocation2 + $0x39] sm:$0xff]
  %v3230 = vld [vmem:[#allocation2 + $0x41] sm:$0xff]
  %v3231 = vld [vmem:[#allocation2 + $0x49] sm:$0xff]
  %v3232 = vld [vmem:[#allocation2 + $0x51] sm:$0xff]
  %v3233 = vld [vmem:[#allocation2 + $0x59] sm:$0xff]
  %v3234 = vld [vmem:[#allocation2 + $0x61] sm:$0xff]
  %v3235 = vld [vmem:[#allocation2 + $0x69] sm:$0xff]
  %v3236 = vld [vmem:[#allocation2 + $0x71] sm:$0xff]
  %v3237 = vld [vmem:[#allocation2 + $0x79] sm:$0xff]
  %v3238 = vld [vmem:[#allocation2 + $0x81] sm:$0xff]
  %v3239 = vld [vmem:[#allocation2 + $0x89] sm:$0xff]
  %v3240 = vld [vmem:[#allocation2 + $0x91] sm:$0xff]
  %v3241 = vld [vmem:[#allocation2 + $0x99] sm:$0xff]
  %v3242 = vld [vmem:[#allocation2 + $0xa1] sm:$0xff]
  %v3243 = vld [vmem:[#allocation2 + $0xa9] sm:$0xff]
  %v3244 = vld [vmem:[#allocation2 + $0xb1] sm:$0xff]
  %v3245 = vld [vmem:[#allocation2 + $0xb9] sm:$0xff]
  %v3246 = vld [vmem:[#allocation2 + $0xc1] sm:$0x7f]
  %v3247 = vld [vmem:[%s4 + $0x3c0] sm:$0xff]
  %v3248 = vld [vmem:[%s4 + $0x3c8] sm:$0xff]
  %v3249 = vld [vmem:[%s4 + $0x3d0] sm:$0xff]
  %v3250 = vld [vmem:[%s4 + $0x3d8] sm:$0xff]
  %v3251 = vld [vmem:[%s4 + $0x3e0] sm:$0xff]
  %v3252 = vld [vmem:[%s4 + $0x3e8] sm:$0xff]
  %v3253 = vld [vmem:[%s4 + $0x3f0] sm:$0xff]
  %v3254 = vld [vmem:[%s4 + $0x3f8] sm:$0xff]
  %v3256 = vsel %vm69, %v3226, 0
  %v3259 = vsel %vm69, %v3227, 0
  %v3262 = vsel %vm69, %v3228, 0
  %v3265 = vsel %vm69, %v3229, 0
  %v3268 = vsel %vm69, %v3230, 0
  %v3271 = vsel %vm69, %v3231, 0
  %v3274 = vsel %vm69, %v3232, 0
  %v3277 = vsel %vm69, %v3233, 0
  %v3280 = vsel %vm69, %v3234, 0
  %v3283 = vsel %vm69, %v3235, 0
  %v3286 = vsel %vm69, %v3236, 0
  %v3289 = vsel %vm69, %v3237, 0
  %v3292 = vsel %vm69, %v3238, 0
  %v3295 = vsel %vm69, %v3239, 0
  %v3298 = vsel %vm69, %v3240, 0
  %v3301 = vsel %vm69, %v3241, 0
  %v3304 = vsel %vm69, %v3242, 0
  %v3307 = vsel %vm69, %v3243, 0
  %v3310 = vsel %vm69, %v3244, 0
  %v3313 = vsel %vm69, %v3245, 0
  %v3316 = vsel %vm69, %v3246, 0
  %3318 = vmatpush.msra.mxu0 0.0
  %3319 = vmatpush.msra.mxu0 0.0
  %3320 = vmatpush.msra.mxu0 0.0
  %3321 = vmatpush.msra.mxu0 0.0
  %3322 = vmatpush.msra.mxu0 0.0
  %3323 = vmatpush.msra.mxu0 0.0
  %3324 = vmatpush.msra.mxu0 0.0
  %3325 = vmatpush.msra.mxu0 0.0
  %3326 = vmatpush.msra.mxu0 %v3254
  %3327 = vmatpush.msra.mxu0 %v3253
  %3328 = vmatpush.msra.mxu0 %v3252
  %3329 = vmatpush.msra.mxu0 %v3251
  %3330 = vmatpush.msra.mxu0 %v3250
  %3331 = vmatpush.msra.mxu0 %v3249
  %3332 = vmatpush.msra.mxu0 %v3248
  %3333 = vmatpush.msra.mxu0 %v3247
  %3334 = vmatmul.f32.gmra.mxu0 %v3256
  %v3335 = vpop.f32.mrf.mxu0
  %v3336 = vadd.f32 0.0, %v3335
  %3337 = vmatmul.f32.gmra.mxu0 %v3259
  %v3338 = vpop.f32.mrf.mxu0
  %v3339 = vadd.f32 0.0, %v3338
  %3340 = vmatmul.f32.gmra.mxu0 %v3262
  %v3341 = vpop.f32.mrf.mxu0
  %v3342 = vadd.f32 0.0, %v3341
  %3343 = vmatmul.f32.gmra.mxu0 %v3265
  %v3344 = vpop.f32.mrf.mxu0
  %v3345 = vadd.f32 0.0, %v3344
  %3346 = vmatmul.f32.gmra.mxu0 %v3268
  %v3347 = vpop.f32.mrf.mxu0
  %v3348 = vadd.f32 0.0, %v3347
  %3349 = vmatmul.f32.gmra.mxu0 %v3271
  %v3350 = vpop.f32.mrf.mxu0
  %v3351 = vadd.f32 0.0, %v3350
  %3352 = vmatmul.f32.gmra.mxu0 %v3274
  %v3353 = vpop.f32.mrf.mxu0
  %v3354 = vadd.f32 0.0, %v3353
  %3355 = vmatmul.f32.gmra.mxu0 %v3277
  %v3356 = vpop.f32.mrf.mxu0
  %v3357 = vadd.f32 0.0, %v3356
  %3358 = vmatmul.f32.gmra.mxu0 %v3280
  %v3359 = vpop.f32.mrf.mxu0
  %v3360 = vadd.f32 0.0, %v3359
  %3361 = vmatmul.f32.gmra.mxu0 %v3283
  %v3362 = vpop.f32.mrf.mxu0
  %v3363 = vadd.f32 0.0, %v3362
  %3364 = vmatmul.f32.gmra.mxu0 %v3286
  %v3365 = vpop.f32.mrf.mxu0
  %v3366 = vadd.f32 0.0, %v3365
  %3367 = vmatmul.f32.gmra.mxu0 %v3289
  %v3368 = vpop.f32.mrf.mxu0
  %v3369 = vadd.f32 0.0, %v3368
  %3370 = vmatmul.f32.gmra.mxu0 %v3292
  %v3371 = vpop.f32.mrf.mxu0
  %v3372 = vadd.f32 0.0, %v3371
  %3373 = vmatmul.f32.gmra.mxu0 %v3295
  %v3374 = vpop.f32.mrf.mxu0
  %v3375 = vadd.f32 0.0, %v3374
  %3376 = vmatmul.f32.gmra.mxu0 %v3298
  %v3377 = vpop.f32.mrf.mxu0
  %v3378 = vadd.f32 0.0, %v3377
  %3379 = vmatmul.f32.gmra.mxu0 %v3301
  %v3380 = vpop.f32.mrf.mxu0
  %v3381 = vadd.f32 0.0, %v3380
  %3382 = vmatmul.f32.gmra.mxu0 %v3304
  %v3383 = vpop.f32.mrf.mxu0
  %v3384 = vadd.f32 0.0, %v3383
  %3385 = vmatmul.f32.gmra.mxu0 %v3307
  %v3386 = vpop.f32.mrf.mxu0
  %v3387 = vadd.f32 0.0, %v3386
  %3388 = vmatmul.f32.gmra.mxu0 %v3310
  %v3389 = vpop.f32.mrf.mxu0
  %v3390 = vadd.f32 0.0, %v3389
  %3391 = vmatmul.f32.gmra.mxu0 %v3313
  %v3392 = vpop.f32.mrf.mxu0
  %v3393 = vadd.f32 0.0, %v3392
  %3394 = vmatmul.f32.gmra.mxu0 %v3316
  %v3395 = vpop.f32.mrf.mxu0
  %v3396 = vadd.f32 0.0, %v3395
  %3397 = vdwg.mxu0
  %v3398 = vadd.f32 %v3205, %v3336
  %v3399 = vadd.f32 %v3206, %v3339
  %v3400 = vadd.f32 %v3207, %v3342
  %v3401 = vadd.f32 %v3208, %v3345
  %v3402 = vadd.f32 %v3209, %v3348
  %v3403 = vadd.f32 %v3210, %v3351
  %v3404 = vadd.f32 %v3211, %v3354
  %v3405 = vadd.f32 %v3212, %v3357
  %v3406 = vadd.f32 %v3213, %v3360
  %v3407 = vadd.f32 %v3214, %v3363
  %v3408 = vadd.f32 %v3215, %v3366
  %v3409 = vadd.f32 %v3216, %v3369
  %v3410 = vadd.f32 %v3217, %v3372
  %v3411 = vadd.f32 %v3218, %v3375
  %v3412 = vadd.f32 %v3219, %v3378
  %v3413 = vadd.f32 %v3220, %v3381
  %v3414 = vadd.f32 %v3221, %v3384
  %v3415 = vadd.f32 %v3222, %v3387
  %v3416 = vadd.f32 %v3223, %v3390
  %v3417 = vadd.f32 %v3224, %v3393
  %v3418 = vadd.f32 %v3225, %v3396
  %v3419 = vld [vmem:[%s5] sm:$0xff]
  %v3420 = vld [vmem:[%s5 + $0x8] sm:$0xff]
  %v3421 = vld [vmem:[%s5 + $0x10] sm:$0xff]
  %v3422 = vld [vmem:[%s5 + $0x18] sm:$0xff]
  %v3423 = vld [vmem:[%s5 + $0x20] sm:$0xff]
  %v3424 = vld [vmem:[%s5 + $0x28] sm:$0xff]
  %v3425 = vld [vmem:[%s5 + $0x30] sm:$0xff]
  %v3426 = vld [vmem:[%s5 + $0x38] sm:$0xff]
  %v3427 = vld [vmem:[%s5 + $0x40] sm:$0xff]
  %v3428 = vld [vmem:[%s5 + $0x48] sm:$0xff]
  %v3429 = vld [vmem:[%s5 + $0x50] sm:$0xff]
  %v3430 = vld [vmem:[%s5 + $0x58] sm:$0xff]
  %v3431 = vld [vmem:[%s5 + $0x60] sm:$0xff]
  %v3432 = vld [vmem:[%s5 + $0x68] sm:$0xff]
  %v3433 = vld [vmem:[%s5 + $0x70] sm:$0xff]
  %v3434 = vld [vmem:[%s5 + $0x78] sm:$0xff]
  %v3435 = vld [vmem:[%s5 + $0x80] sm:$0xff]
  %v3436 = vld [vmem:[%s5 + $0x88] sm:$0xff]
  %v3437 = vld [vmem:[%s5 + $0x90] sm:$0xff]
  %v3438 = vld [vmem:[%s5 + $0x98] sm:$0xff]
  %v3439 = vld [vmem:[%s5 + $0xa0] sm:$0x7f]
  %3441 = vset.pattern.permute.xlu0 0
  %3442 = vperm.xlu0 %3441, %v3419
  %v3443 = vpop.permute.xlu0 %3442
  %3446 = vset.pattern.permute.xlu0 0
  %3447 = vperm.xlu0 %3446, %v3420
  %v3448 = vpop.permute.xlu0 %3447
  %3451 = vset.pattern.permute.xlu0 0
  %3452 = vperm.xlu0 %3451, %v3421
  %v3453 = vpop.permute.xlu0 %3452
  %3456 = vset.pattern.permute.xlu0 0
  %3457 = vperm.xlu0 %3456, %v3422
  %v3458 = vpop.permute.xlu0 %3457
  %3461 = vset.pattern.permute.xlu0 0
  %3462 = vperm.xlu0 %3461, %v3423
  %v3463 = vpop.permute.xlu0 %3462
  %3466 = vset.pattern.permute.xlu0 0
  %3467 = vperm.xlu0 %3466, %v3424
  %v3468 = vpop.permute.xlu0 %3467
  %3471 = vset.pattern.permute.xlu0 0
  %3472 = vperm.xlu0 %3471, %v3425
  %v3473 = vpop.permute.xlu0 %3472
  %3476 = vset.pattern.permute.xlu0 0
  %3477 = vperm.xlu0 %3476, %v3426
  %v3478 = vpop.permute.xlu0 %3477
  %3481 = vset.pattern.permute.xlu0 0
  %3482 = vperm.xlu0 %3481, %v3427
  %v3483 = vpop.permute.xlu0 %3482
  %3486 = vset.pattern.permute.xlu0 0
  %3487 = vperm.xlu0 %3486, %v3428
  %v3488 = vpop.permute.xlu0 %3487
  %3491 = vset.pattern.permute.xlu0 0
  %3492 = vperm.xlu0 %3491, %v3429
  %v3493 = vpop.permute.xlu0 %3492
  %3496 = vset.pattern.permute.xlu0 0
  %3497 = vperm.xlu0 %3496, %v3430
  %v3498 = vpop.permute.xlu0 %3497
  %3501 = vset.pattern.permute.xlu0 0
  %3502 = vperm.xlu0 %3501, %v3431
  %v3503 = vpop.permute.xlu0 %3502
  %3506 = vset.pattern.permute.xlu0 0
  %3507 = vperm.xlu0 %3506, %v3432
  %v3508 = vpop.permute.xlu0 %3507
  %3511 = vset.pattern.permute.xlu0 0
  %3512 = vperm.xlu0 %3511, %v3433
  %v3513 = vpop.permute.xlu0 %3512
  %3516 = vset.pattern.permute.xlu0 0
  %3517 = vperm.xlu0 %3516, %v3434
  %v3518 = vpop.permute.xlu0 %3517
  %3521 = vset.pattern.permute.xlu0 0
  %3522 = vperm.xlu0 %3521, %v3435
  %v3523 = vpop.permute.xlu0 %3522
  %3526 = vset.pattern.permute.xlu0 0
  %3527 = vperm.xlu0 %3526, %v3436
  %v3528 = vpop.permute.xlu0 %3527
  %3531 = vset.pattern.permute.xlu0 0
  %3532 = vperm.xlu0 %3531, %v3437
  %v3533 = vpop.permute.xlu0 %3532
  %3536 = vset.pattern.permute.xlu0 0
  %3537 = vperm.xlu0 %3536, %v3438
  %v3538 = vpop.permute.xlu0 %3537
  %3541 = vset.pattern.permute.xlu0 0
  %3542 = vperm.xlu0 %3541, %v3439
  %v3543 = vpop.permute.xlu0 %3542
  %v3545 = vmul.f32 %v3398, %v3443
  %v3546 = vmul.f32 %v3399, %v3448
  %v3547 = vmul.f32 %v3400, %v3453
  %v3548 = vmul.f32 %v3401, %v3458
  %v3549 = vmul.f32 %v3402, %v3463
  %v3550 = vmul.f32 %v3403, %v3468
  %v3551 = vmul.f32 %v3404, %v3473
  %v3552 = vmul.f32 %v3405, %v3478
  %v3553 = vmul.f32 %v3406, %v3483
  %v3554 = vmul.f32 %v3407, %v3488
  %v3555 = vmul.f32 %v3408, %v3493
  %v3556 = vmul.f32 %v3409, %v3498
  %v3557 = vmul.f32 %v3410, %v3503
  %v3558 = vmul.f32 %v3411, %v3508
  %v3559 = vmul.f32 %v3412, %v3513
  %v3560 = vmul.f32 %v3413, %v3518
  %v3561 = vmul.f32 %v3414, %v3523
  %v3562 = vmul.f32 %v3415, %v3528
  %v3563 = vmul.f32 %v3416, %v3533
  %v3564 = vmul.f32 %v3417, %v3538
  %v3565 = vmul.f32 %v3418, %v3543
  %v3566 = vadd.f32 %v3545, %v3546
  %v3567 = vadd.f32 %v3566, %v3547
  %v3568 = vadd.f32 %v3567, %v3548
  %v3569 = vadd.f32 %v3568, %v3549
  %v3570 = vadd.f32 %v3569, %v3550
  %v3571 = vadd.f32 %v3570, %v3551
  %v3572 = vadd.f32 %v3571, %v3552
  %v3573 = vadd.f32 %v3572, %v3553
  %v3574 = vadd.f32 %v3573, %v3554
  %v3575 = vadd.f32 %v3574, %v3555
  %v3576 = vadd.f32 %v3575, %v3556
  %v3577 = vadd.f32 %v3576, %v3557
  %v3578 = vadd.f32 %v3577, %v3558
  %v3579 = vadd.f32 %v3578, %v3559
  %v3580 = vadd.f32 %v3579, %v3560
  %v3581 = vadd.f32 %v3580, %v3561
  %v3582 = vadd.f32 %v3581, %v3562
  %v3583 = vadd.f32 %v3582, %v3563
  %v3584 = vadd.f32 %v3583, %v3564
  %vm3585 = vcmask 1046528
  %v3586 = vsel %vm3585, %v3565, 0.0
  %v3587 = vadd.f32 %v3584, %v3586
  %v3588 = vrot.slane %v3587, 4
  %v3589 = vadd.f32 %v3587, %v3588
  %v3590 = vrot.slane %v3589, 2
  %v3591 = vadd.f32 %v3589, %v3590
  %v3592 = vrot.slane %v3591, 1
  %v3593 = vadd.f32 %v3591, %v3592
  %v3594 = vmul.f32 %v3593, 0.03125
  %v3595 = vsub.f32 %v3398, %v3594
  %v3596 = vsub.f32 %v3399, %v3594
  %v3597 = vsub.f32 %v3400, %v3594
  %v3598 = vsub.f32 %v3401, %v3594
  %v3599 = vsub.f32 %v3402, %v3594
  %v3600 = vsub.f32 %v3403, %v3594
  %v3601 = vsub.f32 %v3404, %v3594
  %v3602 = vsub.f32 %v3405, %v3594
  %v3603 = vsub.f32 %v3406, %v3594
  %v3604 = vsub.f32 %v3407, %v3594
  %v3605 = vsub.f32 %v3408, %v3594
  %v3606 = vsub.f32 %v3409, %v3594
  %v3607 = vsub.f32 %v3410, %v3594
  %v3608 = vsub.f32 %v3411, %v3594
  %v3609 = vsub.f32 %v3412, %v3594
  %v3610 = vsub.f32 %v3413, %v3594
  %v3611 = vsub.f32 %v3414, %v3594
  %v3612 = vsub.f32 %v3415, %v3594
  %v3613 = vsub.f32 %v3416, %v3594
  %v3614 = vsub.f32 %v3417, %v3594
  %v3615 = vsub.f32 %v3418, %v3594
  %v3616 = vmul.f32 %v3595, %v3595
  %v3617 = vmul.f32 %v3596, %v3596
  %v3618 = vmul.f32 %v3597, %v3597
  %v3619 = vmul.f32 %v3598, %v3598
  %v3620 = vmul.f32 %v3599, %v3599
  %v3621 = vmul.f32 %v3600, %v3600
  %v3622 = vmul.f32 %v3601, %v3601
  %v3623 = vmul.f32 %v3602, %v3602
  %v3624 = vmul.f32 %v3603, %v3603
  %v3625 = vmul.f32 %v3604, %v3604
  %v3626 = vmul.f32 %v3605, %v3605
  %v3627 = vmul.f32 %v3606, %v3606
  %v3628 = vmul.f32 %v3607, %v3607
  %v3629 = vmul.f32 %v3608, %v3608
  %v3630 = vmul.f32 %v3609, %v3609
  %v3631 = vmul.f32 %v3610, %v3610
  %v3632 = vmul.f32 %v3611, %v3611
  %v3633 = vmul.f32 %v3612, %v3612
  %v3634 = vmul.f32 %v3613, %v3613
  %v3635 = vmul.f32 %v3614, %v3614
  %v3636 = vmul.f32 %v3615, %v3615
  %v3637 = vmul.f32 %v3616, %v3443
  %v3638 = vmul.f32 %v3617, %v3448
  %v3639 = vmul.f32 %v3618, %v3453
  %v3640 = vmul.f32 %v3619, %v3458
  %v3641 = vmul.f32 %v3620, %v3463
  %v3642 = vmul.f32 %v3621, %v3468
  %v3643 = vmul.f32 %v3622, %v3473
  %v3644 = vmul.f32 %v3623, %v3478
  %v3645 = vmul.f32 %v3624, %v3483
  %v3646 = vmul.f32 %v3625, %v3488
  %v3647 = vmul.f32 %v3626, %v3493
  %v3648 = vmul.f32 %v3627, %v3498
  %v3649 = vmul.f32 %v3628, %v3503
  %v3650 = vmul.f32 %v3629, %v3508
  %v3651 = vmul.f32 %v3630, %v3513
  %v3652 = vmul.f32 %v3631, %v3518
  %v3653 = vmul.f32 %v3632, %v3523
  %v3654 = vmul.f32 %v3633, %v3528
  %v3655 = vmul.f32 %v3634, %v3533
  %v3656 = vmul.f32 %v3635, %v3538
  %v3657 = vmul.f32 %v3636, %v3543
  %v3658 = vadd.f32 %v3637, %v3638
  %v3659 = vadd.f32 %v3658, %v3639
  %v3660 = vadd.f32 %v3659, %v3640
  %v3661 = vadd.f32 %v3660, %v3641
  %v3662 = vadd.f32 %v3661, %v3642
  %v3663 = vadd.f32 %v3662, %v3643
  %v3664 = vadd.f32 %v3663, %v3644
  %v3665 = vadd.f32 %v3664, %v3645
  %v3666 = vadd.f32 %v3665, %v3646
  %v3667 = vadd.f32 %v3666, %v3647
  %v3668 = vadd.f32 %v3667, %v3648
  %v3669 = vadd.f32 %v3668, %v3649
  %v3670 = vadd.f32 %v3669, %v3650
  %v3671 = vadd.f32 %v3670, %v3651
  %v3672 = vadd.f32 %v3671, %v3652
  %v3673 = vadd.f32 %v3672, %v3653
  %v3674 = vadd.f32 %v3673, %v3654
  %v3675 = vadd.f32 %v3674, %v3655
  %v3676 = vadd.f32 %v3675, %v3656
  %v3677 = vsel %vm3585, %v3657, 0.0
  %v3678 = vadd.f32 %v3676, %v3677
  %v3679 = vrot.slane %v3678, 4
  %v3680 = vadd.f32 %v3678, %v3679
  %v3681 = vrot.slane %v3680, 2
  %v3682 = vadd.f32 %v3680, %v3681
  %v3683 = vrot.slane %v3682, 1
  %v3684 = vadd.f32 %v3682, %v3683
  %v3685 = vmul.f32 %v3684, 0.03125
  %v3686 = vadd.f32 %v3685, 1e-05
  %v3687 = vrsqrt.pop %v3686
  %v3688 = vmul.f32 %v3687, %v3686
  %v3689 = vmul.f32 %v3688, %v3687
  %v3690 = vmul.f32 0.5, %v3689
  %v3691 = vsub.f32 1.5, %v3690
  %v3692 = vmul.f32 %v3687, %v3691
  %vm3693 = vweird.f32 %v3686
  %vm3694 = vweird.f32 %v3687
  %vm3695 = vmor %vm3693, %vm3694
  %v3696 = vsel %vm3695, %v3687, %v3692
  %v3697 = vmul.f32 %v3595, %v3696
  %v3698 = vmul.f32 %v3596, %v3696
  %v3699 = vmul.f32 %v3597, %v3696
  %v3700 = vmul.f32 %v3598, %v3696
  %v3701 = vmul.f32 %v3599, %v3696
  %v3702 = vmul.f32 %v3600, %v3696
  %v3703 = vmul.f32 %v3601, %v3696
  %v3704 = vmul.f32 %v3602, %v3696
  %v3705 = vmul.f32 %v3603, %v3696
  %v3706 = vmul.f32 %v3604, %v3696
  %v3707 = vmul.f32 %v3605, %v3696
  %v3708 = vmul.f32 %v3606, %v3696
  %v3709 = vmul.f32 %v3607, %v3696
  %v3710 = vmul.f32 %v3608, %v3696
  %v3711 = vmul.f32 %v3609, %v3696
  %v3712 = vmul.f32 %v3610, %v3696
  %v3713 = vmul.f32 %v3611, %v3696
  %v3714 = vmul.f32 %v3612, %v3696
  %v3715 = vmul.f32 %v3613, %v3696
  %v3716 = vmul.f32 %v3614, %v3696
  %v3717 = vmul.f32 %v3615, %v3696
  %vm3718 = vcmp.gt.f32.partialorder %v3697, 0.0
  %vm3719 = vcmp.gt.f32.partialorder %v3698, 0.0
  %vm3720 = vcmp.gt.f32.partialorder %v3699, 0.0
  %vm3721 = vcmp.gt.f32.partialorder %v3700, 0.0
  %vm3722 = vcmp.gt.f32.partialorder %v3701, 0.0
  %vm3723 = vcmp.gt.f32.partialorder %v3702, 0.0
  %vm3724 = vcmp.gt.f32.partialorder %v3703, 0.0
  %vm3725 = vcmp.gt.f32.partialorder %v3704, 0.0
  %vm3726 = vcmp.gt.f32.partialorder %v3705, 0.0
  %vm3727 = vcmp.gt.f32.partialorder %v3706, 0.0
  %vm3728 = vcmp.gt.f32.partialorder %v3707, 0.0
  %vm3729 = vcmp.gt.f32.partialorder %v3708, 0.0
  %vm3730 = vcmp.gt.f32.partialorder %v3709, 0.0
  %vm3731 = vcmp.gt.f32.partialorder %v3710, 0.0
  %vm3732 = vcmp.gt.f32.partialorder %v3711, 0.0
  %vm3733 = vcmp.gt.f32.partialorder %v3712, 0.0
  %vm3734 = vcmp.gt.f32.partialorder %v3713, 0.0
  %vm3735 = vcmp.gt.f32.partialorder %v3714, 0.0
  %vm3736 = vcmp.gt.f32.partialorder %v3715, 0.0
  %vm3737 = vcmp.gt.f32.partialorder %v3716, 0.0
  %vm3738 = vcmp.gt.f32.partialorder %v3717, 0.0
  %v3739 = vmul.f32 %v3697, 0.2
  %v3740 = vmul.f32 %v3698, 0.2
  %v3741 = vmul.f32 %v3699, 0.2
  %v3742 = vmul.f32 %v3700, 0.2
  %v3743 = vmul.f32 %v3701, 0.2
  %v3744 = vmul.f32 %v3702, 0.2
  %v3745 = vmul.f32 %v3703, 0.2
  %v3746 = vmul.f32 %v3704, 0.2
  %v3747 = vmul.f32 %v3705, 0.2
  %v3748 = vmul.f32 %v3706, 0.2
  %v3749 = vmul.f32 %v3707, 0.2
  %v3750 = vmul.f32 %v3708, 0.2
  %v3751 = vmul.f32 %v3709, 0.2
  %v3752 = vmul.f32 %v3710, 0.2
  %v3753 = vmul.f32 %v3711, 0.2
  %v3754 = vmul.f32 %v3712, 0.2
  %v3755 = vmul.f32 %v3713, 0.2
  %v3756 = vmul.f32 %v3714, 0.2
  %v3757 = vmul.f32 %v3715, 0.2
  %v3758 = vmul.f32 %v3716, 0.2
  %v3759 = vmul.f32 %v3717, 0.2
  %v3760 = vsel %vm3718, %v3697, %v3739
  %v3761 = vsel %vm3719, %v3698, %v3740
  %v3762 = vsel %vm3720, %v3699, %v3741
  %v3763 = vsel %vm3721, %v3700, %v3742
  %v3764 = vsel %vm3722, %v3701, %v3743
  %v3765 = vsel %vm3723, %v3702, %v3744
  %v3766 = vsel %vm3724, %v3703, %v3745
  %v3767 = vsel %vm3725, %v3704, %v3746
  %v3768 = vsel %vm3726, %v3705, %v3747
  %v3769 = vsel %vm3727, %v3706, %v3748
  %v3770 = vsel %vm3728, %v3707, %v3749
  %v3771 = vsel %vm3729, %v3708, %v3750
  %v3772 = vsel %vm3730, %v3709, %v3751
  %v3773 = vsel %vm3731, %v3710, %v3752
  %v3774 = vsel %vm3732, %v3711, %v3753
  %v3775 = vsel %vm3733, %v3712, %v3754
  %v3776 = vsel %vm3734, %v3713, %v3755
  %v3777 = vsel %vm3735, %v3714, %v3756
  %v3778 = vsel %vm3736, %v3715, %v3757
  %v3779 = vsel %vm3737, %v3716, %v3758
  %v3780 = vsel %vm3738, %v3717, %v3759
  %v3781 = vld [vmem:[%s6] sm:$0xff]
  %v3782 = vld [vmem:[%s6 + $0x8] sm:$0xff]
  %v3783 = vld [vmem:[%s6 + $0x10] sm:$0xff]
  %v3784 = vld [vmem:[%s6 + $0x18] sm:$0xff]
  %v3785 = vld [vmem:[%s6 + $0x20] sm:$0xff]
  %v3786 = vld [vmem:[%s6 + $0x28] sm:$0xff]
  %v3787 = vld [vmem:[%s6 + $0x30] sm:$0xff]
  %v3788 = vld [vmem:[%s6 + $0x38] sm:$0xff]
  %v3789 = vld [vmem:[%s6 + $0x40] sm:$0xff]
  %v3790 = vld [vmem:[%s6 + $0x48] sm:$0xff]
  %v3791 = vld [vmem:[%s6 + $0x50] sm:$0xff]
  %v3792 = vld [vmem:[%s6 + $0x58] sm:$0xff]
  %v3793 = vld [vmem:[%s6 + $0x60] sm:$0xff]
  %v3794 = vld [vmem:[%s6 + $0x68] sm:$0xff]
  %v3795 = vld [vmem:[%s6 + $0x70] sm:$0xff]
  %v3796 = vld [vmem:[%s6 + $0x78] sm:$0xff]
  %v3797 = vld [vmem:[%s6 + $0x80] sm:$0xff]
  %v3798 = vld [vmem:[%s6 + $0x88] sm:$0xff]
  %vm3799 = vcmask 318464
  %v3801 = vsel %vm3799, %v3782, 0
  %v3804 = vsel %vm3799, %v3784, 0
  %v3807 = vsel %vm3799, %v3786, 0
  %v3810 = vsel %vm3799, %v3788, 0
  %v3813 = vsel %vm3799, %v3790, 0
  %v3816 = vsel %vm3799, %v3792, 0
  %v3819 = vsel %vm3799, %v3794, 0
  %v3822 = vsel %vm3799, %v3796, 0
  %v3825 = vsel %vm3799, %v3798, 0
  %v3828 = vsel %vm3585, %v3780, 0
  %3830 = vmatpush.msra.mxu0 %v3775
  %3831 = vmatpush.msra.mxu0 %v3774
  %3832 = vmatpush.msra.mxu0 %v3773
  %3833 = vmatpush.msra.mxu0 %v3772
  %3834 = vmatpush.msra.mxu0 %v3771
  %3835 = vmatpush.msra.mxu0 %v3770
  %3836 = vmatpush.msra.mxu0 %v3769
  %3837 = vmatpush.msra.mxu0 %v3768
  %3838 = vmatpush.msra.mxu0 %v3767
  %3839 = vmatpush.msra.mxu0 %v3766
  %3840 = vmatpush.msra.mxu0 %v3765
  %3841 = vmatpush.msra.mxu0 %v3764
  %3842 = vmatpush.msra.mxu0 %v3763
  %3843 = vmatpush.msra.mxu0 %v3762
  %3844 = vmatpush.msra.mxu0 %v3761
  %3845 = vmatpush.msra.mxu0 %v3760
  %3846 = vmatmul.f32.gmra.mxu0 %v3781
  %v3847 = vpop.f32.mrf.mxu0
  %v3848 = vadd.f32 0.0, %v3847
  %3849 = vmatmul.f32.gmra.mxu0 %v3783
  %v3850 = vpop.f32.mrf.mxu0
  %v3851 = vadd.f32 0.0, %v3850
  %3852 = vmatmul.f32.gmra.mxu0 %v3785
  %v3853 = vpop.f32.mrf.mxu0
  %v3854 = vadd.f32 0.0, %v3853
  %3855 = vmatmul.f32.gmra.mxu0 %v3787
  %v3856 = vpop.f32.mrf.mxu0
  %v3857 = vadd.f32 0.0, %v3856
  %3858 = vmatmul.f32.gmra.mxu0 %v3789
  %v3859 = vpop.f32.mrf.mxu0
  %v3860 = vadd.f32 0.0, %v3859
  %3861 = vmatmul.f32.gmra.mxu0 %v3791
  %v3862 = vpop.f32.mrf.mxu0
  %v3863 = vadd.f32 0.0, %v3862
  %3864 = vmatmul.f32.gmra.mxu0 %v3793
  %v3865 = vpop.f32.mrf.mxu0
  %v3866 = vadd.f32 0.0, %v3865
  %3867 = vmatmul.f32.gmra.mxu0 %v3795
  %v3868 = vpop.f32.mrf.mxu0
  %v3869 = vadd.f32 0.0, %v3868
  %3870 = vmatmul.f32.gmra.mxu0 %v3797
  %v3871 = vpop.f32.mrf.mxu0
  %v3872 = vadd.f32 0.0, %v3871
  %3873 = vdwg.mxu0
  %3874 = vmatpush.msra.mxu0 0.0
  %3875 = vmatpush.msra.mxu0 0.0
  %3876 = vmatpush.msra.mxu0 0.0
  %3877 = vmatpush.msra.mxu0 0.0
  %3878 = vmatpush.msra.mxu0 0.0
  %3879 = vmatpush.msra.mxu0 0.0
  %3880 = vmatpush.msra.mxu0 0.0
  %3881 = vmatpush.msra.mxu0 0.0
  %3882 = vmatpush.msra.mxu0 0.0
  %3883 = vmatpush.msra.mxu0 0.0
  %3884 = vmatpush.msra.mxu0 0.0
  %3885 = vmatpush.msra.mxu0 %v3828
  %3886 = vmatpush.msra.mxu0 %v3779
  %3887 = vmatpush.msra.mxu0 %v3778
  %3888 = vmatpush.msra.mxu0 %v3777
  %3889 = vmatpush.msra.mxu0 %v3776
  %3890 = vmatmul.f32.gmra.mxu0 %v3801
  %v3891 = vpop.f32.mrf.mxu0
  %v3892 = vadd.f32 %v3848, %v3891
  %3893 = vmatmul.f32.gmra.mxu0 %v3804
  %v3894 = vpop.f32.mrf.mxu0
  %v3895 = vadd.f32 %v3851, %v3894
  %3896 = vmatmul.f32.gmra.mxu0 %v3807
  %v3897 = vpop.f32.mrf.mxu0
  %v3898 = vadd.f32 %v3854, %v3897
  %3899 = vmatmul.f32.gmra.mxu0 %v3810
  %v3900 = vpop.f32.mrf.mxu0
  %v3901 = vadd.f32 %v3857, %v3900
  %3902 = vmatmul.f32.gmra.mxu0 %v3813
  %v3903 = vpop.f32.mrf.mxu0
  %v3904 = vadd.f32 %v3860, %v3903
  %3905 = vmatmul.f32.gmra.mxu0 %v3816
  %v3906 = vpop.f32.mrf.mxu0
  %v3907 = vadd.f32 %v3863, %v3906
  %3908 = vmatmul.f32.gmra.mxu0 %v3819
  %v3909 = vpop.f32.mrf.mxu0
  %v3910 = vadd.f32 %v3866, %v3909
  %3911 = vmatmul.f32.gmra.mxu0 %v3822
  %v3912 = vpop.f32.mrf.mxu0
  %v3913 = vadd.f32 %v3869, %v3912
  %3914 = vmatmul.f32.gmra.mxu0 %v3825
  %v3915 = vpop.f32.mrf.mxu0
  %v3916 = vadd.f32 %v3872, %v3915
  %3917 = vdwg.mxu0
  %3918 = vst [vmem:[#allocation3] sm:$0xff] %v3892
  %3919 = vst [vmem:[#allocation3 + $0x8] sm:$0xff] %v3895
  %3920 = vst [vmem:[#allocation3 + $0x10] sm:$0xff] %v3898
  %3921 = vst [vmem:[#allocation3 + $0x18] sm:$0xff] %v3901
  %3922 = vst [vmem:[#allocation3 + $0x20] sm:$0xff] %v3904
  %3923 = vst [vmem:[#allocation3 + $0x28] sm:$0xff] %v3907
  %3924 = vst [vmem:[#allocation3 + $0x30] sm:$0xff] %v3910
  %3925 = vst [vmem:[#allocation3 + $0x38] sm:$0xff] %v3913
  %3926 = vst [vmem:[#allocation3 + $0x40] sm:$0xff] %v3916
  %v3927 = vld [vmem:[#allocation3] sm:$0xff]
  %v3928 = vld [vmem:[#allocation3 + $0x8] sm:$0xff]
  %v3929 = vld [vmem:[#allocation3 + $0x10] sm:$0xff]
  %v3930 = vld [vmem:[#allocation3 + $0x18] sm:$0xff]
  %v3931 = vld [vmem:[#allocation3 + $0x20] sm:$0xff]
  %v3932 = vld [vmem:[#allocation3 + $0x28] sm:$0xff]
  %v3933 = vld [vmem:[#allocation3 + $0x30] sm:$0x7]
  %v3934 = vld [vmem:[%s7] sm:$0xff]
  %v3935 = vld [vmem:[%s7 + $0x8] sm:$0xff]
  %v3936 = vld [vmem:[%s7 + $0x10] sm:$0xff]
  %v3937 = vld [vmem:[%s7 + $0x18] sm:$0xff]
  %v3938 = vld [vmem:[%s7 + $0x20] sm:$0xff]
  %v3939 = vld [vmem:[%s7 + $0x28] sm:$0xff]
  %v3940 = vld [vmem:[%s7 + $0x30] sm:$0xff]
  %v3941 = vld [vmem:[%s7 + $0x38] sm:$0xff]
  %v3942 = vld [vmem:[%s7 + $0x40] sm:$0xff]
  %v3943 = vld [vmem:[%s7 + $0x48] sm:$0xff]
  %v3944 = vld [vmem:[%s7 + $0x50] sm:$0xff]
  %v3945 = vld [vmem:[%s7 + $0x58] sm:$0xff]
  %v3946 = vld [vmem:[%s7 + $0x60] sm:$0xff]
  %v3947 = vld [vmem:[%s7 + $0x68] sm:$0xff]
  %v3948 = vld [vmem:[%s7 + $0x70] sm:$0xff]
  %v3949 = vld [vmem:[%s7 + $0x78] sm:$0xff]
  %v3950 = vld [vmem:[%s7 + $0x80] sm:$0xff]
  %v3951 = vld [vmem:[%s7 + $0x88] sm:$0xff]
  %v3952 = vld [vmem:[%s7 + $0x90] sm:$0xff]
  %v3953 = vld [vmem:[%s7 + $0x98] sm:$0xff]
  %v3954 = vld [vmem:[%s7 + $0xa0] sm:$0xff]
  %v3955 = vld [vmem:[%s7 + $0xa8] sm:$0xff]
  %v3956 = vld [vmem:[%s7 + $0xb0] sm:$0xff]
  %v3957 = vld [vmem:[%s7 + $0xb8] sm:$0xff]
  %v3958 = vld [vmem:[%s7 + $0xc0] sm:$0xff]
  %v3959 = vld [vmem:[%s7 + $0xc8] sm:$0xff]
  %v3960 = vld [vmem:[%s7 + $0xd0] sm:$0xff]
  %v3961 = vld [vmem:[%s7 + $0xd8] sm:$0xff]
  %v3962 = vld [vmem:[%s7 + $0xe0] sm:$0xff]
  %v3963 = vld [vmem:[%s7 + $0xe8] sm:$0xff]
  %v3964 = vld [vmem:[%s7 + $0xf0] sm:$0xff]
  %v3965 = vld [vmem:[%s7 + $0xf8] sm:$0xff]
  %v3966 = vld [vmem:[#allocation3 + $0x1] sm:$0xff]
  %v3967 = vld [vmem:[#allocation3 + $0x9] sm:$0xff]
  %v3968 = vld [vmem:[#allocation3 + $0x11] sm:$0xff]
  %v3969 = vld [vmem:[#allocation3 + $0x19] sm:$0xff]
  %v3970 = vld [vmem:[#allocation3 + $0x21] sm:$0xff]
  %v3971 = vld [vmem:[#allocation3 + $0x29] sm:$0xff]
  %v3972 = vld [vmem:[#allocation3 + $0x31] sm:$0x7]
  %v3973 = vld [vmem:[%s7 + $0x100] sm:$0xff]
  %v3974 = vld [vmem:[%s7 + $0x108] sm:$0xff]
  %v3975 = vld [vmem:[%s7 + $0x110] sm:$0xff]
  %v3976 = vld [vmem:[%s7 + $0x118] sm:$0xff]
  %v3977 = vld [vmem:[%s7 + $0x120] sm:$0xff]
  %v3978 = vld [vmem:[%s7 + $0x128] sm:$0xff]
  %v3979 = vld [vmem:[%s7 + $0x130] sm:$0xff]
  %v3980 = vld [vmem:[%s7 + $0x138] sm:$0xff]
  %v3981 = vld [vmem:[%s7 + $0x140] sm:$0xff]
  %v3982 = vld [vmem:[%s7 + $0x148] sm:$0xff]
  %v3983 = vld [vmem:[%s7 + $0x150] sm:$0xff]
  %v3984 = vld [vmem:[%s7 + $0x158] sm:$0xff]
  %v3985 = vld [vmem:[%s7 + $0x160] sm:$0xff]
  %v3986 = vld [vmem:[%s7 + $0x168] sm:$0xff]
  %v3987 = vld [vmem:[%s7 + $0x170] sm:$0xff]
  %v3988 = vld [vmem:[%s7 + $0x178] sm:$0xff]
  %v3989 = vld [vmem:[%s7 + $0x180] sm:$0xff]
  %v3990 = vld [vmem:[%s7 + $0x188] sm:$0xff]
  %v3991 = vld [vmem:[%s7 + $0x190] sm:$0xff]
  %v3992 = vld [vmem:[%s7 + $0x198] sm:$0xff]
  %v3993 = vld [vmem:[%s7 + $0x1a0] sm:$0xff]
  %v3994 = vld [vmem:[%s7 + $0x1a8] sm:$0xff]
  %v3995 = vld [vmem:[%s7 + $0x1b0] sm:$0xff]
  %v3996 = vld [vmem:[%s7 + $0x1b8] sm:$0xff]
  %v3997 = vld [vmem:[%s7 + $0x1c0] sm:$0xff]
  %v3998 = vld [vmem:[%s7 + $0x1c8] sm:$0xff]
  %v3999 = vld [vmem:[%s7 + $0x1d0] sm:$0xff]
  %v4000 = vld [vmem:[%s7 + $0x1d8] sm:$0xff]
  %v4001 = vld [vmem:[%s7 + $0x1e0] sm:$0xff]
  %v4002 = vld [vmem:[%s7 + $0x1e8] sm:$0xff]
  %v4003 = vld [vmem:[%s7 + $0x1f0] sm:$0xff]
  %v4004 = vld [vmem:[%s7 + $0x1f8] sm:$0xff]
  %4005 = vmatpush.msra.mxu0 %v4003
  %4006 = vmatpush.msra.mxu0 %v4001
  %4007 = vmatpush.msra.mxu0 %v3999
  %4008 = vmatpush.msra.mxu0 %v3997
  %4009 = vmatpush.msra.mxu0 %v3995
  %4010 = vmatpush.msra.mxu0 %v3993
  %4011 = vmatpush.msra.mxu0 %v3991
  %4012 = vmatpush.msra.mxu0 %v3989
  %4013 = vmatpush.msra.mxu0 %v3987
  %4014 = vmatpush.msra.mxu0 %v3985
  %4015 = vmatpush.msra.mxu0 %v3983
  %4016 = vmatpush.msra.mxu0 %v3981
  %4017 = vmatpush.msra.mxu0 %v3979
  %4018 = vmatpush.msra.mxu0 %v3977
  %4019 = vmatpush.msra.mxu0 %v3975
  %4020 = vmatpush.msra.mxu0 %v3973
  %4021 = vmatmul.f32.gmra.mxu0 %v3966
  %v4022 = vpop.f32.mrf.mxu0
  %v4023 = vadd.f32 0.0, %v4022
  %4024 = vmatmul.f32.gmra.mxu0 %v3967
  %v4025 = vpop.f32.mrf.mxu0
  %v4026 = vadd.f32 0.0, %v4025
  %4027 = vmatmul.f32.gmra.mxu0 %v3968
  %v4028 = vpop.f32.mrf.mxu0
  %v4029 = vadd.f32 0.0, %v4028
  %4030 = vmatmul.f32.gmra.mxu0 %v3969
  %v4031 = vpop.f32.mrf.mxu0
  %v4032 = vadd.f32 0.0, %v4031
  %4033 = vmatmul.f32.gmra.mxu0 %v3970
  %v4034 = vpop.f32.mrf.mxu0
  %v4035 = vadd.f32 0.0, %v4034
  %4036 = vmatmul.f32.gmra.mxu0 %v3971
  %v4037 = vpop.f32.mrf.mxu0
  %v4038 = vadd.f32 0.0, %v4037
  %4039 = vmatmul.f32.gmra.mxu0 %v3972
  %v4040 = vpop.f32.mrf.mxu0
  %v4041 = vadd.f32 0.0, %v4040
  %4042 = vdwg.mxu0
  %4043 = vmatpush.msra.mxu0 %v4004
  %4044 = vmatpush.msra.mxu0 %v4002
  %4045 = vmatpush.msra.mxu0 %v4000
  %4046 = vmatpush.msra.mxu0 %v3998
  %4047 = vmatpush.msra.mxu0 %v3996
  %4048 = vmatpush.msra.mxu0 %v3994
  %4049 = vmatpush.msra.mxu0 %v3992
  %4050 = vmatpush.msra.mxu0 %v3990
  %4051 = vmatpush.msra.mxu0 %v3988
  %4052 = vmatpush.msra.mxu0 %v3986
  %4053 = vmatpush.msra.mxu0 %v3984
  %4054 = vmatpush.msra.mxu0 %v3982
  %4055 = vmatpush.msra.mxu0 %v3980
  %4056 = vmatpush.msra.mxu0 %v3978
  %4057 = vmatpush.msra.mxu0 %v3976
  %4058 = vmatpush.msra.mxu0 %v3974
  %4059 = vmatmul.f32.gmra.mxu0 %v3966
  %v4060 = vpop.f32.mrf.mxu0
  %v4061 = vadd.f32 0.0, %v4060
  %4062 = vmatmul.f32.gmra.mxu0 %v3967
  %v4063 = vpop.f32.mrf.mxu0
  %v4064 = vadd.f32 0.0, %v4063
  %4065 = vmatmul.f32.gmra.mxu0 %v3968
  %v4066 = vpop.f32.mrf.mxu0
  %v4067 = vadd.f32 0.0, %v4066
  %4068 = vmatmul.f32.gmra.mxu0 %v3969
  %v4069 = vpop.f32.mrf.mxu0
  %v4070 = vadd.f32 0.0, %v4069
  %4071 = vmatmul.f32.gmra.mxu0 %v3970
  %v4072 = vpop.f32.mrf.mxu0
  %v4073 = vadd.f32 0.0, %v4072
  %4074 = vmatmul.f32.gmra.mxu0 %v3971
  %v4075 = vpop.f32.mrf.mxu0
  %v4076 = vadd.f32 0.0, %v4075
  %4077 = vmatmul.f32.gmra.mxu0 %v3972
  %v4078 = vpop.f32.mrf.mxu0
  %v4079 = vadd.f32 0.0, %v4078
  %4080 = vdwg.mxu0
  %4081 = vmatpush.msra.mxu0 %v3964
  %4082 = vmatpush.msra.mxu0 %v3962
  %4083 = vmatpush.msra.mxu0 %v3960
  %4084 = vmatpush.msra.mxu0 %v3958
  %4085 = vmatpush.msra.mxu0 %v3956
  %4086 = vmatpush.msra.mxu0 %v3954
  %4087 = vmatpush.msra.mxu0 %v3952
  %4088 = vmatpush.msra.mxu0 %v3950
  %4089 = vmatpush.msra.mxu0 %v3948
  %4090 = vmatpush.msra.mxu0 %v3946
  %4091 = vmatpush.msra.mxu0 %v3944
  %4092 = vmatpush.msra.mxu0 %v3942
  %4093 = vmatpush.msra.mxu0 %v3940
  %4094 = vmatpush.msra.mxu0 %v3938
  %4095 = vmatpush.msra.mxu0 %v3936
  %4096 = vmatpush.msra.mxu0 %v3934
  %4097 = vmatmul.f32.gmra.mxu0 %v3927
  %v4098 = vpop.f32.mrf.mxu0
  %v4099 = vadd.f32 %v4023, %v4098
  %4100 = vmatmul.f32.gmra.mxu0 %v3928
  %v4101 = vpop.f32.mrf.mxu0
  %v4102 = vadd.f32 %v4026, %v4101
  %4103 = vmatmul.f32.gmra.mxu0 %v3929
  %v4104 = vpop.f32.mrf.mxu0
  %v4105 = vadd.f32 %v4029, %v4104
  %4106 = vmatmul.f32.gmra.mxu0 %v3930
  %v4107 = vpop.f32.mrf.mxu0
  %v4108 = vadd.f32 %v4032, %v4107
  %4109 = vmatmul.f32.gmra.mxu0 %v3931
  %v4110 = vpop.f32.mrf.mxu0
  %v4111 = vadd.f32 %v4035, %v4110
  %4112 = vmatmul.f32.gmra.mxu0 %v3932
  %v4113 = vpop.f32.mrf.mxu0
  %v4114 = vadd.f32 %v4038, %v4113
  %4115 = vmatmul.f32.gmra.mxu0 %v3933
  %v4116 = vpop.f32.mrf.mxu0
  %v4117 = vadd.f32 %v4041, %v4116
  %4118 = vdwg.mxu0
  %4119 = vmatpush.msra.mxu0 %v3965
  %4120 = vmatpush.msra.mxu0 %v3963
  %4121 = vmatpush.msra.mxu0 %v3961
  %4122 = vmatpush.msra.mxu0 %v3959
  %4123 = vmatpush.msra.mxu0 %v3957
  %4124 = vmatpush.msra.mxu0 %v3955
  %4125 = vmatpush.msra.mxu0 %v3953
  %4126 = vmatpush.msra.mxu0 %v3951
  %4127 = vmatpush.msra.mxu0 %v3949
  %4128 = vmatpush.msra.mxu0 %v3947
  %4129 = vmatpush.msra.mxu0 %v3945
  %4130 = vmatpush.msra.mxu0 %v3943
  %4131 = vmatpush.msra.mxu0 %v3941
  %4132 = vmatpush.msra.mxu0 %v3939
  %4133 = vmatpush.msra.mxu0 %v3937
  %4134 = vmatpush.msra.mxu0 %v3935
  %4135 = vmatmul.f32.gmra.mxu0 %v3927
  %v4136 = vpop.f32.mrf.mxu0
  %v4137 = vadd.f32 %v4061, %v4136
  %4138 = vmatmul.f32.gmra.mxu0 %v3928
  %v4139 = vpop.f32.mrf.mxu0
  %v4140 = vadd.f32 %v4064, %v4139
  %4141 = vmatmul.f32.gmra.mxu0 %v3929
  %v4142 = vpop.f32.mrf.mxu0
  %v4143 = vadd.f32 %v4067, %v4142
  %4144 = vmatmul.f32.gmra.mxu0 %v3930
  %v4145 = vpop.f32.mrf.mxu0
  %v4146 = vadd.f32 %v4070, %v4145
  %4147 = vmatmul.f32.gmra.mxu0 %v3931
  %v4148 = vpop.f32.mrf.mxu0
  %v4149 = vadd.f32 %v4073, %v4148
  %4150 = vmatmul.f32.gmra.mxu0 %v3932
  %v4151 = vpop.f32.mrf.mxu0
  %v4152 = vadd.f32 %v4076, %v4151
  %4153 = vmatmul.f32.gmra.mxu0 %v3933
  %v4154 = vpop.f32.mrf.mxu0
  %v4155 = vadd.f32 %v4079, %v4154
  %4156 = vdwg.mxu0
  %v4157 = vld [vmem:[#allocation3 + $0x2] sm:$0xff]
  %v4158 = vld [vmem:[#allocation3 + $0xa] sm:$0xff]
  %v4159 = vld [vmem:[#allocation3 + $0x12] sm:$0xff]
  %v4160 = vld [vmem:[#allocation3 + $0x1a] sm:$0xff]
  %v4161 = vld [vmem:[#allocation3 + $0x22] sm:$0xff]
  %v4162 = vld [vmem:[#allocation3 + $0x2a] sm:$0xff]
  %v4163 = vld [vmem:[#allocation3 + $0x32] sm:$0x7]
  %v4164 = vld [vmem:[%s7 + $0x200] sm:$0xff]
  %v4165 = vld [vmem:[%s7 + $0x208] sm:$0xff]
  %v4166 = vld [vmem:[%s7 + $0x210] sm:$0xff]
  %v4167 = vld [vmem:[%s7 + $0x218] sm:$0xff]
  %v4168 = vld [vmem:[%s7 + $0x220] sm:$0xff]
  %v4169 = vld [vmem:[%s7 + $0x228] sm:$0xff]
  %v4170 = vld [vmem:[%s7 + $0x230] sm:$0xff]
  %v4171 = vld [vmem:[%s7 + $0x238] sm:$0xff]
  %v4172 = vld [vmem:[%s7 + $0x240] sm:$0xff]
  %v4173 = vld [vmem:[%s7 + $0x248] sm:$0xff]
  %v4174 = vld [vmem:[%s7 + $0x250] sm:$0xff]
  %v4175 = vld [vmem:[%s7 + $0x258] sm:$0xff]
  %v4176 = vld [vmem:[%s7 + $0x260] sm:$0xff]
  %v4177 = vld [vmem:[%s7 + $0x268] sm:$0xff]
  %v4178 = vld [vmem:[%s7 + $0x270] sm:$0xff]
  %v4179 = vld [vmem:[%s7 + $0x278] sm:$0xff]
  %v4180 = vld [vmem:[%s7 + $0x280] sm:$0xff]
  %v4181 = vld [vmem:[%s7 + $0x288] sm:$0xff]
  %v4182 = vld [vmem:[%s7 + $0x290] sm:$0xff]
  %v4183 = vld [vmem:[%s7 + $0x298] sm:$0xff]
  %v4184 = vld [vmem:[%s7 + $0x2a0] sm:$0xff]
  %v4185 = vld [vmem:[%s7 + $0x2a8] sm:$0xff]
  %v4186 = vld [vmem:[%s7 + $0x2b0] sm:$0xff]
  %v4187 = vld [vmem:[%s7 + $0x2b8] sm:$0xff]
  %v4188 = vld [vmem:[%s7 + $0x2c0] sm:$0xff]
  %v4189 = vld [vmem:[%s7 + $0x2c8] sm:$0xff]
  %v4190 = vld [vmem:[%s7 + $0x2d0] sm:$0xff]
  %v4191 = vld [vmem:[%s7 + $0x2d8] sm:$0xff]
  %v4192 = vld [vmem:[%s7 + $0x2e0] sm:$0xff]
  %v4193 = vld [vmem:[%s7 + $0x2e8] sm:$0xff]
  %v4194 = vld [vmem:[%s7 + $0x2f0] sm:$0xff]
  %v4195 = vld [vmem:[%s7 + $0x2f8] sm:$0xff]
  %4196 = vmatpush.msra.mxu0 %v4194
  %4197 = vmatpush.msra.mxu0 %v4192
  %4198 = vmatpush.msra.mxu0 %v4190
  %4199 = vmatpush.msra.mxu0 %v4188
  %4200 = vmatpush.msra.mxu0 %v4186
  %4201 = vmatpush.msra.mxu0 %v4184
  %4202 = vmatpush.msra.mxu0 %v4182
  %4203 = vmatpush.msra.mxu0 %v4180
  %4204 = vmatpush.msra.mxu0 %v4178
  %4205 = vmatpush.msra.mxu0 %v4176
  %4206 = vmatpush.msra.mxu0 %v4174
  %4207 = vmatpush.msra.mxu0 %v4172
  %4208 = vmatpush.msra.mxu0 %v4170
  %4209 = vmatpush.msra.mxu0 %v4168
  %4210 = vmatpush.msra.mxu0 %v4166
  %4211 = vmatpush.msra.mxu0 %v4164
  %4212 = vmatmul.f32.gmra.mxu0 %v4157
  %v4213 = vpop.f32.mrf.mxu0
  %v4214 = vadd.f32 0.0, %v4213
  %4215 = vmatmul.f32.gmra.mxu0 %v4158
  %v4216 = vpop.f32.mrf.mxu0
  %v4217 = vadd.f32 0.0, %v4216
  %4218 = vmatmul.f32.gmra.mxu0 %v4159
  %v4219 = vpop.f32.mrf.mxu0
  %v4220 = vadd.f32 0.0, %v4219
  %4221 = vmatmul.f32.gmra.mxu0 %v4160
  %v4222 = vpop.f32.mrf.mxu0
  %v4223 = vadd.f32 0.0, %v4222
  %4224 = vmatmul.f32.gmra.mxu0 %v4161
  %v4225 = vpop.f32.mrf.mxu0
  %v4226 = vadd.f32 0.0, %v4225
  %4227 = vmatmul.f32.gmra.mxu0 %v4162
  %v4228 = vpop.f32.mrf.mxu0
  %v4229 = vadd.f32 0.0, %v4228
  %4230 = vmatmul.f32.gmra.mxu0 %v4163
  %v4231 = vpop.f32.mrf.mxu0
  %v4232 = vadd.f32 0.0, %v4231
  %4233 = vdwg.mxu0
  %4234 = vmatpush.msra.mxu0 %v4195
  %4235 = vmatpush.msra.mxu0 %v4193
  %4236 = vmatpush.msra.mxu0 %v4191
  %4237 = vmatpush.msra.mxu0 %v4189
  %4238 = vmatpush.msra.mxu0 %v4187
  %4239 = vmatpush.msra.mxu0 %v4185
  %4240 = vmatpush.msra.mxu0 %v4183
  %4241 = vmatpush.msra.mxu0 %v4181
  %4242 = vmatpush.msra.mxu0 %v4179
  %4243 = vmatpush.msra.mxu0 %v4177
  %4244 = vmatpush.msra.mxu0 %v4175
  %4245 = vmatpush.msra.mxu0 %v4173
  %4246 = vmatpush.msra.mxu0 %v4171
  %4247 = vmatpush.msra.mxu0 %v4169
  %4248 = vmatpush.msra.mxu0 %v4167
  %4249 = vmatpush.msra.mxu0 %v4165
  %4250 = vmatmul.f32.gmra.mxu0 %v4157
  %v4251 = vpop.f32.mrf.mxu0
  %v4252 = vadd.f32 0.0, %v4251
  %4253 = vmatmul.f32.gmra.mxu0 %v4158
  %v4254 = vpop.f32.mrf.mxu0
  %v4255 = vadd.f32 0.0, %v4254
  %4256 = vmatmul.f32.gmra.mxu0 %v4159
  %v4257 = vpop.f32.mrf.mxu0
  %v4258 = vadd.f32 0.0, %v4257
  %4259 = vmatmul.f32.gmra.mxu0 %v4160
  %v4260 = vpop.f32.mrf.mxu0
  %v4261 = vadd.f32 0.0, %v4260
  %4262 = vmatmul.f32.gmra.mxu0 %v4161
  %v4263 = vpop.f32.mrf.mxu0
  %v4264 = vadd.f32 0.0, %v4263
  %4265 = vmatmul.f32.gmra.mxu0 %v4162
  %v4266 = vpop.f32.mrf.mxu0
  %v4267 = vadd.f32 0.0, %v4266
  %4268 = vmatmul.f32.gmra.mxu0 %v4163
  %v4269 = vpop.f32.mrf.mxu0
  %v4270 = vadd.f32 0.0, %v4269
  %4271 = vdwg.mxu0
  %v4272 = vadd.f32 %v4099, %v4214
  %v4273 = vadd.f32 %v4137, %v4252
  %v4274 = vadd.f32 %v4102, %v4217
  %v4275 = vadd.f32 %v4140, %v4255
  %v4276 = vadd.f32 %v4105, %v4220
  %v4277 = vadd.f32 %v4143, %v4258
  %v4278 = vadd.f32 %v4108, %v4223
  %v4279 = vadd.f32 %v4146, %v4261
  %v4280 = vadd.f32 %v4111, %v4226
  %v4281 = vadd.f32 %v4149, %v4264
  %v4282 = vadd.f32 %v4114, %v4229
  %v4283 = vadd.f32 %v4152, %v4267
  %v4284 = vadd.f32 %v4117, %v4232
  %v4285 = vadd.f32 %v4155, %v4270
  %v4286 = vld [vmem:[#allocation3 + $0x3] sm:$0xff]
  %v4287 = vld [vmem:[#allocation3 + $0xb] sm:$0xff]
  %v4288 = vld [vmem:[#allocation3 + $0x13] sm:$0xff]
  %v4289 = vld [vmem:[#allocation3 + $0x1b] sm:$0xff]
  %v4290 = vld [vmem:[#allocation3 + $0x23] sm:$0xff]
  %v4291 = vld [vmem:[#allocation3 + $0x2b] sm:$0xff]
  %v4292 = vld [vmem:[#allocation3 + $0x33] sm:$0x7]
  %v4293 = vld [vmem:[%s7 + $0x300] sm:$0xff]
  %v4294 = vld [vmem:[%s7 + $0x308] sm:$0xff]
  %v4295 = vld [vmem:[%s7 + $0x310] sm:$0xff]
  %v4296 = vld [vmem:[%s7 + $0x318] sm:$0xff]
  %v4297 = vld [vmem:[%s7 + $0x320] sm:$0xff]
  %v4298 = vld [vmem:[%s7 + $0x328] sm:$0xff]
  %v4299 = vld [vmem:[%s7 + $0x330] sm:$0xff]
  %v4300 = vld [vmem:[%s7 + $0x338] sm:$0xff]
  %v4301 = vld [vmem:[%s7 + $0x340] sm:$0xff]
  %v4302 = vld [vmem:[%s7 + $0x348] sm:$0xff]
  %v4303 = vld [vmem:[%s7 + $0x350] sm:$0xff]
  %v4304 = vld [vmem:[%s7 + $0x358] sm:$0xff]
  %v4305 = vld [vmem:[%s7 + $0x360] sm:$0xff]
  %v4306 = vld [vmem:[%s7 + $0x368] sm:$0xff]
  %v4307 = vld [vmem:[%s7 + $0x370] sm:$0xff]
  %v4308 = vld [vmem:[%s7 + $0x378] sm:$0xff]
  %v4309 = vld [vmem:[%s7 + $0x380] sm:$0xff]
  %v4310 = vld [vmem:[%s7 + $0x388] sm:$0xff]
  %v4311 = vld [vmem:[%s7 + $0x390] sm:$0xff]
  %v4312 = vld [vmem:[%s7 + $0x398] sm:$0xff]
  %v4313 = vld [vmem:[%s7 + $0x3a0] sm:$0xff]
  %v4314 = vld [vmem:[%s7 + $0x3a8] sm:$0xff]
  %v4315 = vld [vmem:[%s7 + $0x3b0] sm:$0xff]
  %v4316 = vld [vmem:[%s7 + $0x3b8] sm:$0xff]
  %v4317 = vld [vmem:[%s7 + $0x3c0] sm:$0xff]
  %v4318 = vld [vmem:[%s7 + $0x3c8] sm:$0xff]
  %v4319 = vld [vmem:[%s7 + $0x3d0] sm:$0xff]
  %v4320 = vld [vmem:[%s7 + $0x3d8] sm:$0xff]
  %v4321 = vld [vmem:[%s7 + $0x3e0] sm:$0xff]
  %v4322 = vld [vmem:[%s7 + $0x3e8] sm:$0xff]
  %v4323 = vld [vmem:[%s7 + $0x3f0] sm:$0xff]
  %v4324 = vld [vmem:[%s7 + $0x3f8] sm:$0xff]
  %4325 = vmatpush.msra.mxu0 %v4323
  %4326 = vmatpush.msra.mxu0 %v4321
  %4327 = vmatpush.msra.mxu0 %v4319
  %4328 = vmatpush.msra.mxu0 %v4317
  %4329 = vmatpush.msra.mxu0 %v4315
  %4330 = vmatpush.msra.mxu0 %v4313
  %4331 = vmatpush.msra.mxu0 %v4311
  %4332 = vmatpush.msra.mxu0 %v4309
  %4333 = vmatpush.msra.mxu0 %v4307
  %4334 = vmatpush.msra.mxu0 %v4305
  %4335 = vmatpush.msra.mxu0 %v4303
  %4336 = vmatpush.msra.mxu0 %v4301
  %4337 = vmatpush.msra.mxu0 %v4299
  %4338 = vmatpush.msra.mxu0 %v4297
  %4339 = vmatpush.msra.mxu0 %v4295
  %4340 = vmatpush.msra.mxu0 %v4293
  %4341 = vmatmul.f32.gmra.mxu0 %v4286
  %v4342 = vpop.f32.mrf.mxu0
  %v4343 = vadd.f32 0.0, %v4342
  %4344 = vmatmul.f32.gmra.mxu0 %v4287
  %v4345 = vpop.f32.mrf.mxu0
  %v4346 = vadd.f32 0.0, %v4345
  %4347 = vmatmul.f32.gmra.mxu0 %v4288
  %v4348 = vpop.f32.mrf.mxu0
  %v4349 = vadd.f32 0.0, %v4348
  %4350 = vmatmul.f32.gmra.mxu0 %v4289
  %v4351 = vpop.f32.mrf.mxu0
  %v4352 = vadd.f32 0.0, %v4351
  %4353 = vmatmul.f32.gmra.mxu0 %v4290
  %v4354 = vpop.f32.mrf.mxu0
  %v4355 = vadd.f32 0.0, %v4354
  %4356 = vmatmul.f32.gmra.mxu0 %v4291
  %v4357 = vpop.f32.mrf.mxu0
  %v4358 = vadd.f32 0.0, %v4357
  %4359 = vmatmul.f32.gmra.mxu0 %v4292
  %v4360 = vpop.f32.mrf.mxu0
  %v4361 = vadd.f32 0.0, %v4360
  %4362 = vdwg.mxu0
  %4363 = vmatpush.msra.mxu0 %v4324
  %4364 = vmatpush.msra.mxu0 %v4322
  %4365 = vmatpush.msra.mxu0 %v4320
  %4366 = vmatpush.msra.mxu0 %v4318
  %4367 = vmatpush.msra.mxu0 %v4316
  %4368 = vmatpush.msra.mxu0 %v4314
  %4369 = vmatpush.msra.mxu0 %v4312
  %4370 = vmatpush.msra.mxu0 %v4310
  %4371 = vmatpush.msra.mxu0 %v4308
  %4372 = vmatpush.msra.mxu0 %v4306
  %4373 = vmatpush.msra.mxu0 %v4304
  %4374 = vmatpush.msra.mxu0 %v4302
  %4375 = vmatpush.msra.mxu0 %v4300
  %4376 = vmatpush.msra.mxu0 %v4298
  %4377 = vmatpush.msra.mxu0 %v4296
  %4378 = vmatpush.msra.mxu0 %v4294
  %4379 = vmatmul.f32.gmra.mxu0 %v4286
  %v4380 = vpop.f32.mrf.mxu0
  %v4381 = vadd.f32 0.0, %v4380
  %4382 = vmatmul.f32.gmra.mxu0 %v4287
  %v4383 = vpop.f32.mrf.mxu0
  %v4384 = vadd.f32 0.0, %v4383
  %4385 = vmatmul.f32.gmra.mxu0 %v4288
  %v4386 = vpop.f32.mrf.mxu0
  %v4387 = vadd.f32 0.0, %v4386
  %4388 = vmatmul.f32.gmra.mxu0 %v4289
  %v4389 = vpop.f32.mrf.mxu0
  %v4390 = vadd.f32 0.0, %v4389
  %4391 = vmatmul.f32.gmra.mxu0 %v4290
  %v4392 = vpop.f32.mrf.mxu0
  %v4393 = vadd.f32 0.0, %v4392
  %4394 = vmatmul.f32.gmra.mxu0 %v4291
  %v4395 = vpop.f32.mrf.mxu0
  %v4396 = vadd.f32 0.0, %v4395
  %4397 = vmatmul.f32.gmra.mxu0 %v4292
  %v4398 = vpop.f32.mrf.mxu0
  %v4399 = vadd.f32 0.0, %v4398
  %4400 = vdwg.mxu0
  %v4401 = vadd.f32 %v4272, %v4343
  %v4402 = vadd.f32 %v4273, %v4381
  %v4403 = vadd.f32 %v4274, %v4346
  %v4404 = vadd.f32 %v4275, %v4384
  %v4405 = vadd.f32 %v4276, %v4349
  %v4406 = vadd.f32 %v4277, %v4387
  %v4407 = vadd.f32 %v4278, %v4352
  %v4408 = vadd.f32 %v4279, %v4390
  %v4409 = vadd.f32 %v4280, %v4355
  %v4410 = vadd.f32 %v4281, %v4393
  %v4411 = vadd.f32 %v4282, %v4358
  %v4412 = vadd.f32 %v4283, %v4396
  %v4413 = vadd.f32 %v4284, %v4361
  %v4414 = vadd.f32 %v4285, %v4399
  %v4415 = vld [vmem:[#allocation3 + $0x6] sm:$0xff]
  %v4416 = vld [vmem:[#allocation3 + $0xe] sm:$0xff]
  %v4417 = vld [vmem:[#allocation3 + $0x16] sm:$0xff]
  %v4418 = vld [vmem:[#allocation3 + $0x1e] sm:$0xff]
  %v4419 = vld [vmem:[#allocation3 + $0x26] sm:$0xff]
  %v4420 = vld [vmem:[#allocation3 + $0x2e] sm:$0xff]
  %v4421 = vld [vmem:[#allocation3 + $0x36] sm:$0x7]
  %v4422 = vld [vmem:[%s7 + $0x400] sm:$0xff]
  %v4423 = vld [vmem:[%s7 + $0x408] sm:$0xff]
  %v4424 = vld [vmem:[%s7 + $0x410] sm:$0xff]
  %v4425 = vld [vmem:[%s7 + $0x418] sm:$0xff]
  %v4426 = vld [vmem:[%s7 + $0x420] sm:$0xff]
  %v4427 = vld [vmem:[%s7 + $0x428] sm:$0xff]
  %v4428 = vld [vmem:[%s7 + $0x430] sm:$0xff]
  %v4429 = vld [vmem:[%s7 + $0x438] sm:$0xff]
  %v4430 = vld [vmem:[%s7 + $0x440] sm:$0xff]
  %v4431 = vld [vmem:[%s7 + $0x448] sm:$0xff]
  %v4432 = vld [vmem:[%s7 + $0x450] sm:$0xff]
  %v4433 = vld [vmem:[%s7 + $0x458] sm:$0xff]
  %v4434 = vld [vmem:[%s7 + $0x460] sm:$0xff]
  %v4435 = vld [vmem:[%s7 + $0x468] sm:$0xff]
  %v4436 = vld [vmem:[%s7 + $0x470] sm:$0xff]
  %v4437 = vld [vmem:[%s7 + $0x478] sm:$0xff]
  %v4438 = vld [vmem:[%s7 + $0x480] sm:$0xff]
  %v4439 = vld [vmem:[%s7 + $0x488] sm:$0xff]
  %v4440 = vld [vmem:[%s7 + $0x490] sm:$0xff]
  %v4441 = vld [vmem:[%s7 + $0x498] sm:$0xff]
  %v4442 = vld [vmem:[%s7 + $0x4a0] sm:$0xff]
  %v4443 = vld [vmem:[%s7 + $0x4a8] sm:$0xff]
  %v4444 = vld [vmem:[%s7 + $0x4b0] sm:$0xff]
  %v4445 = vld [vmem:[%s7 + $0x4b8] sm:$0xff]
  %v4446 = vld [vmem:[%s7 + $0x4c0] sm:$0xff]
  %v4447 = vld [vmem:[%s7 + $0x4c8] sm:$0xff]
  %v4448 = vld [vmem:[%s7 + $0x4d0] sm:$0xff]
  %v4449 = vld [vmem:[%s7 + $0x4d8] sm:$0xff]
  %v4450 = vld [vmem:[%s7 + $0x4e0] sm:$0xff]
  %v4451 = vld [vmem:[%s7 + $0x4e8] sm:$0xff]
  %v4452 = vld [vmem:[%s7 + $0x4f0] sm:$0xff]
  %v4453 = vld [vmem:[%s7 + $0x4f8] sm:$0xff]
  %4454 = vmatpush.msra.mxu0 %v4452
  %4455 = vmatpush.msra.mxu0 %v4450
  %4456 = vmatpush.msra.mxu0 %v4448
  %4457 = vmatpush.msra.mxu0 %v4446
  %4458 = vmatpush.msra.mxu0 %v4444
  %4459 = vmatpush.msra.mxu0 %v4442
  %4460 = vmatpush.msra.mxu0 %v4440
  %4461 = vmatpush.msra.mxu0 %v4438
  %4462 = vmatpush.msra.mxu0 %v4436
  %4463 = vmatpush.msra.mxu0 %v4434
  %4464 = vmatpush.msra.mxu0 %v4432
  %4465 = vmatpush.msra.mxu0 %v4430
  %4466 = vmatpush.msra.mxu0 %v4428
  %4467 = vmatpush.msra.mxu0 %v4426
  %4468 = vmatpush.msra.mxu0 %v4424
  %4469 = vmatpush.msra.mxu0 %v4422
  %4470 = vmatmul.f32.gmra.mxu0 %v4415
  %v4471 = vpop.f32.mrf.mxu0
  %v4472 = vadd.f32 0.0, %v4471
  %4473 = vmatmul.f32.gmra.mxu0 %v4416
  %v4474 = vpop.f32.mrf.mxu0
  %v4475 = vadd.f32 0.0, %v4474
  %4476 = vmatmul.f32.gmra.mxu0 %v4417
  %v4477 = vpop.f32.mrf.mxu0
  %v4478 = vadd.f32 0.0, %v4477
  %4479 = vmatmul.f32.gmra.mxu0 %v4418
  %v4480 = vpop.f32.mrf.mxu0
  %v4481 = vadd.f32 0.0, %v4480
  %4482 = vmatmul.f32.gmra.mxu0 %v4419
  %v4483 = vpop.f32.mrf.mxu0
  %v4484 = vadd.f32 0.0, %v4483
  %4485 = vmatmul.f32.gmra.mxu0 %v4420
  %v4486 = vpop.f32.mrf.mxu0
  %v4487 = vadd.f32 0.0, %v4486
  %4488 = vmatmul.f32.gmra.mxu0 %v4421
  %v4489 = vpop.f32.mrf.mxu0
  %v4490 = vadd.f32 0.0, %v4489
  %4491 = vdwg.mxu0
  %4492 = vmatpush.msra.mxu0 %v4453
  %4493 = vmatpush.msra.mxu0 %v4451
  %4494 = vmatpush.msra.mxu0 %v4449
  %4495 = vmatpush.msra.mxu0 %v4447
  %4496 = vmatpush.msra.mxu0 %v4445
  %4497 = vmatpush.msra.mxu0 %v4443
  %4498 = vmatpush.msra.mxu0 %v4441
  %4499 = vmatpush.msra.mxu0 %v4439
  %4500 = vmatpush.msra.mxu0 %v4437
  %4501 = vmatpush.msra.mxu0 %v4435
  %4502 = vmatpush.msra.mxu0 %v4433
  %4503 = vmatpush.msra.mxu0 %v4431
  %4504 = vmatpush.msra.mxu0 %v4429
  %4505 = vmatpush.msra.mxu0 %v4427
  %4506 = vmatpush.msra.mxu0 %v4425
  %4507 = vmatpush.msra.mxu0 %v4423
  %4508 = vmatmul.f32.gmra.mxu0 %v4415
  %v4509 = vpop.f32.mrf.mxu0
  %v4510 = vadd.f32 0.0, %v4509
  %4511 = vmatmul.f32.gmra.mxu0 %v4416
  %v4512 = vpop.f32.mrf.mxu0
  %v4513 = vadd.f32 0.0, %v4512
  %4514 = vmatmul.f32.gmra.mxu0 %v4417
  %v4515 = vpop.f32.mrf.mxu0
  %v4516 = vadd.f32 0.0, %v4515
  %4517 = vmatmul.f32.gmra.mxu0 %v4418
  %v4518 = vpop.f32.mrf.mxu0
  %v4519 = vadd.f32 0.0, %v4518
  %4520 = vmatmul.f32.gmra.mxu0 %v4419
  %v4521 = vpop.f32.mrf.mxu0
  %v4522 = vadd.f32 0.0, %v4521
  %4523 = vmatmul.f32.gmra.mxu0 %v4420
  %v4524 = vpop.f32.mrf.mxu0
  %v4525 = vadd.f32 0.0, %v4524
  %4526 = vmatmul.f32.gmra.mxu0 %v4421
  %v4527 = vpop.f32.mrf.mxu0
  %v4528 = vadd.f32 0.0, %v4527
  %4529 = vdwg.mxu0
  %v4530 = vadd.f32 %v4401, %v4472
  %v4531 = vadd.f32 %v4402, %v4510
  %v4532 = vadd.f32 %v4403, %v4475
  %v4533 = vadd.f32 %v4404, %v4513
  %v4534 = vadd.f32 %v4405, %v4478
  %v4535 = vadd.f32 %v4406, %v4516
  %v4536 = vadd.f32 %v4407, %v4481
  %v4537 = vadd.f32 %v4408, %v4519
  %v4538 = vadd.f32 %v4409, %v4484
  %v4539 = vadd.f32 %v4410, %v4522
  %v4540 = vadd.f32 %v4411, %v4487
  %v4541 = vadd.f32 %v4412, %v4525
  %v4542 = vadd.f32 %v4413, %v4490
  %v4543 = vadd.f32 %v4414, %v4528
  %v4544 = vld [vmem:[#allocation3 + $0x7] sm:$0xff]
  %v4545 = vld [vmem:[#allocation3 + $0xf] sm:$0xff]
  %v4546 = vld [vmem:[#allocation3 + $0x17] sm:$0xff]
  %v4547 = vld [vmem:[#allocation3 + $0x1f] sm:$0xff]
  %v4548 = vld [vmem:[#allocation3 + $0x27] sm:$0xff]
  %v4549 = vld [vmem:[#allocation3 + $0x2f] sm:$0xff]
  %v4550 = vld [vmem:[#allocation3 + $0x37] sm:$0x7]
  %v4551 = vld [vmem:[%s7 + $0x500] sm:$0xff]
  %v4552 = vld [vmem:[%s7 + $0x508] sm:$0xff]
  %v4553 = vld [vmem:[%s7 + $0x510] sm:$0xff]
  %v4554 = vld [vmem:[%s7 + $0x518] sm:$0xff]
  %v4555 = vld [vmem:[%s7 + $0x520] sm:$0xff]
  %v4556 = vld [vmem:[%s7 + $0x528] sm:$0xff]
  %v4557 = vld [vmem:[%s7 + $0x530] sm:$0xff]
  %v4558 = vld [vmem:[%s7 + $0x538] sm:$0xff]
  %v4559 = vld [vmem:[%s7 + $0x540] sm:$0xff]
  %v4560 = vld [vmem:[%s7 + $0x548] sm:$0xff]
  %v4561 = vld [vmem:[%s7 + $0x550] sm:$0xff]
  %v4562 = vld [vmem:[%s7 + $0x558] sm:$0xff]
  %v4563 = vld [vmem:[%s7 + $0x560] sm:$0xff]
  %v4564 = vld [vmem:[%s7 + $0x568] sm:$0xff]
  %v4565 = vld [vmem:[%s7 + $0x570] sm:$0xff]
  %v4566 = vld [vmem:[%s7 + $0x578] sm:$0xff]
  %v4567 = vld [vmem:[%s7 + $0x580] sm:$0xff]
  %v4568 = vld [vmem:[%s7 + $0x588] sm:$0xff]
  %v4569 = vld [vmem:[%s7 + $0x590] sm:$0xff]
  %v4570 = vld [vmem:[%s7 + $0x598] sm:$0xff]
  %v4571 = vld [vmem:[%s7 + $0x5a0] sm:$0xff]
  %v4572 = vld [vmem:[%s7 + $0x5a8] sm:$0xff]
  %v4573 = vld [vmem:[%s7 + $0x5b0] sm:$0xff]
  %v4574 = vld [vmem:[%s7 + $0x5b8] sm:$0xff]
  %v4575 = vld [vmem:[%s7 + $0x5c0] sm:$0xff]
  %v4576 = vld [vmem:[%s7 + $0x5c8] sm:$0xff]
  %v4577 = vld [vmem:[%s7 + $0x5d0] sm:$0xff]
  %v4578 = vld [vmem:[%s7 + $0x5d8] sm:$0xff]
  %v4579 = vld [vmem:[%s7 + $0x5e0] sm:$0xff]
  %v4580 = vld [vmem:[%s7 + $0x5e8] sm:$0xff]
  %v4581 = vld [vmem:[%s7 + $0x5f0] sm:$0xff]
  %v4582 = vld [vmem:[%s7 + $0x5f8] sm:$0xff]
  %4583 = vmatpush.msra.mxu0 %v4581
  %4584 = vmatpush.msra.mxu0 %v4579
  %4585 = vmatpush.msra.mxu0 %v4577
  %4586 = vmatpush.msra.mxu0 %v4575
  %4587 = vmatpush.msra.mxu0 %v4573
  %4588 = vmatpush.msra.mxu0 %v4571
  %4589 = vmatpush.msra.mxu0 %v4569
  %4590 = vmatpush.msra.mxu0 %v4567
  %4591 = vmatpush.msra.mxu0 %v4565
  %4592 = vmatpush.msra.mxu0 %v4563
  %4593 = vmatpush.msra.mxu0 %v4561
  %4594 = vmatpush.msra.mxu0 %v4559
  %4595 = vmatpush.msra.mxu0 %v4557
  %4596 = vmatpush.msra.mxu0 %v4555
  %4597 = vmatpush.msra.mxu0 %v4553
  %4598 = vmatpush.msra.mxu0 %v4551
  %4599 = vmatmul.f32.gmra.mxu0 %v4544
  %v4600 = vpop.f32.mrf.mxu0
  %v4601 = vadd.f32 0.0, %v4600
  %4602 = vmatmul.f32.gmra.mxu0 %v4545
  %v4603 = vpop.f32.mrf.mxu0
  %v4604 = vadd.f32 0.0, %v4603
  %4605 = vmatmul.f32.gmra.mxu0 %v4546
  %v4606 = vpop.f32.mrf.mxu0
  %v4607 = vadd.f32 0.0, %v4606
  %4608 = vmatmul.f32.gmra.mxu0 %v4547
  %v4609 = vpop.f32.mrf.mxu0
  %v4610 = vadd.f32 0.0, %v4609
  %4611 = vmatmul.f32.gmra.mxu0 %v4548
  %v4612 = vpop.f32.mrf.mxu0
  %v4613 = vadd.f32 0.0, %v4612
  %4614 = vmatmul.f32.gmra.mxu0 %v4549
  %v4615 = vpop.f32.mrf.mxu0
  %v4616 = vadd.f32 0.0, %v4615
  %4617 = vmatmul.f32.gmra.mxu0 %v4550
  %v4618 = vpop.f32.mrf.mxu0
  %v4619 = vadd.f32 0.0, %v4618
  %4620 = vdwg.mxu0
  %4621 = vmatpush.msra.mxu0 %v4582
  %4622 = vmatpush.msra.mxu0 %v4580
  %4623 = vmatpush.msra.mxu0 %v4578
  %4624 = vmatpush.msra.mxu0 %v4576
  %4625 = vmatpush.msra.mxu0 %v4574
  %4626 = vmatpush.msra.mxu0 %v4572
  %4627 = vmatpush.msra.mxu0 %v4570
  %4628 = vmatpush.msra.mxu0 %v4568
  %4629 = vmatpush.msra.mxu0 %v4566
  %4630 = vmatpush.msra.mxu0 %v4564
  %4631 = vmatpush.msra.mxu0 %v4562
  %4632 = vmatpush.msra.mxu0 %v4560
  %4633 = vmatpush.msra.mxu0 %v4558
  %4634 = vmatpush.msra.mxu0 %v4556
  %4635 = vmatpush.msra.mxu0 %v4554
  %4636 = vmatpush.msra.mxu0 %v4552
  %4637 = vmatmul.f32.gmra.mxu0 %v4544
  %v4638 = vpop.f32.mrf.mxu0
  %v4639 = vadd.f32 0.0, %v4638
  %4640 = vmatmul.f32.gmra.mxu0 %v4545
  %v4641 = vpop.f32.mrf.mxu0
  %v4642 = vadd.f32 0.0, %v4641
  %4643 = vmatmul.f32.gmra.mxu0 %v4546
  %v4644 = vpop.f32.mrf.mxu0
  %v4645 = vadd.f32 0.0, %v4644
  %4646 = vmatmul.f32.gmra.mxu0 %v4547
  %v4647 = vpop.f32.mrf.mxu0
  %v4648 = vadd.f32 0.0, %v4647
  %4649 = vmatmul.f32.gmra.mxu0 %v4548
  %v4650 = vpop.f32.mrf.mxu0
  %v4651 = vadd.f32 0.0, %v4650
  %4652 = vmatmul.f32.gmra.mxu0 %v4549
  %v4653 = vpop.f32.mrf.mxu0
  %v4654 = vadd.f32 0.0, %v4653
  %4655 = vmatmul.f32.gmra.mxu0 %v4550
  %v4656 = vpop.f32.mrf.mxu0
  %v4657 = vadd.f32 0.0, %v4656
  %4658 = vdwg.mxu0
  %v4659 = vadd.f32 %v4530, %v4601
  %v4660 = vadd.f32 %v4531, %v4639
  %v4661 = vadd.f32 %v4532, %v4604
  %v4662 = vadd.f32 %v4533, %v4642
  %v4663 = vadd.f32 %v4534, %v4607
  %v4664 = vadd.f32 %v4535, %v4645
  %v4665 = vadd.f32 %v4536, %v4610
  %v4666 = vadd.f32 %v4537, %v4648
  %v4667 = vadd.f32 %v4538, %v4613
  %v4668 = vadd.f32 %v4539, %v4651
  %v4669 = vadd.f32 %v4540, %v4616
  %v4670 = vadd.f32 %v4541, %v4654
  %v4671 = vadd.f32 %v4542, %v4619
  %v4672 = vadd.f32 %v4543, %v4657
  %v4673 = vld [vmem:[#allocation3 + $0x8] sm:$0xff]
  %v4674 = vld [vmem:[#allocation3 + $0x10] sm:$0xff]
  %v4675 = vld [vmem:[#allocation3 + $0x18] sm:$0xff]
  %v4676 = vld [vmem:[#allocation3 + $0x20] sm:$0xff]
  %v4677 = vld [vmem:[#allocation3 + $0x28] sm:$0xff]
  %v4678 = vld [vmem:[#allocation3 + $0x30] sm:$0xff]
  %v4679 = vld [vmem:[#allocation3 + $0x38] sm:$0x7]
  %v4680 = vld [vmem:[%s7 + $0x600] sm:$0xff]
  %v4681 = vld [vmem:[%s7 + $0x608] sm:$0xff]
  %v4682 = vld [vmem:[%s7 + $0x610] sm:$0xff]
  %v4683 = vld [vmem:[%s7 + $0x618] sm:$0xff]
  %v4684 = vld [vmem:[%s7 + $0x620] sm:$0xff]
  %v4685 = vld [vmem:[%s7 + $0x628] sm:$0xff]
  %v4686 = vld [vmem:[%s7 + $0x630] sm:$0xff]
  %v4687 = vld [vmem:[%s7 + $0x638] sm:$0xff]
  %v4688 = vld [vmem:[%s7 + $0x640] sm:$0xff]
  %v4689 = vld [vmem:[%s7 + $0x648] sm:$0xff]
  %v4690 = vld [vmem:[%s7 + $0x650] sm:$0xff]
  %v4691 = vld [vmem:[%s7 + $0x658] sm:$0xff]
  %v4692 = vld [vmem:[%s7 + $0x660] sm:$0xff]
  %v4693 = vld [vmem:[%s7 + $0x668] sm:$0xff]
  %v4694 = vld [vmem:[%s7 + $0x670] sm:$0xff]
  %v4695 = vld [vmem:[%s7 + $0x678] sm:$0xff]
  %v4696 = vld [vmem:[%s7 + $0x680] sm:$0xff]
  %v4697 = vld [vmem:[%s7 + $0x688] sm:$0xff]
  %v4698 = vld [vmem:[%s7 + $0x690] sm:$0xff]
  %v4699 = vld [vmem:[%s7 + $0x698] sm:$0xff]
  %v4700 = vld [vmem:[%s7 + $0x6a0] sm:$0xff]
  %v4701 = vld [vmem:[%s7 + $0x6a8] sm:$0xff]
  %v4702 = vld [vmem:[%s7 + $0x6b0] sm:$0xff]
  %v4703 = vld [vmem:[%s7 + $0x6b8] sm:$0xff]
  %v4704 = vld [vmem:[%s7 + $0x6c0] sm:$0xff]
  %v4705 = vld [vmem:[%s7 + $0x6c8] sm:$0xff]
  %v4706 = vld [vmem:[%s7 + $0x6d0] sm:$0xff]
  %v4707 = vld [vmem:[%s7 + $0x6d8] sm:$0xff]
  %v4708 = vld [vmem:[%s7 + $0x6e0] sm:$0xff]
  %v4709 = vld [vmem:[%s7 + $0x6e8] sm:$0xff]
  %v4710 = vld [vmem:[%s7 + $0x6f0] sm:$0xff]
  %v4711 = vld [vmem:[%s7 + $0x6f8] sm:$0xff]
  %4712 = vmatpush.msra.mxu0 %v4710
  %4713 = vmatpush.msra.mxu0 %v4708
  %4714 = vmatpush.msra.mxu0 %v4706
  %4715 = vmatpush.msra.mxu0 %v4704
  %4716 = vmatpush.msra.mxu0 %v4702
  %4717 = vmatpush.msra.mxu0 %v4700
  %4718 = vmatpush.msra.mxu0 %v4698
  %4719 = vmatpush.msra.mxu0 %v4696
  %4720 = vmatpush.msra.mxu0 %v4694
  %4721 = vmatpush.msra.mxu0 %v4692
  %4722 = vmatpush.msra.mxu0 %v4690
  %4723 = vmatpush.msra.mxu0 %v4688
  %4724 = vmatpush.msra.mxu0 %v4686
  %4725 = vmatpush.msra.mxu0 %v4684
  %4726 = vmatpush.msra.mxu0 %v4682
  %4727 = vmatpush.msra.mxu0 %v4680
  %4728 = vmatmul.f32.gmra.mxu0 %v4673
  %v4729 = vpop.f32.mrf.mxu0
  %v4730 = vadd.f32 0.0, %v4729
  %4731 = vmatmul.f32.gmra.mxu0 %v4674
  %v4732 = vpop.f32.mrf.mxu0
  %v4733 = vadd.f32 0.0, %v4732
  %4734 = vmatmul.f32.gmra.mxu0 %v4675
  %v4735 = vpop.f32.mrf.mxu0
  %v4736 = vadd.f32 0.0, %v4735
  %4737 = vmatmul.f32.gmra.mxu0 %v4676
  %v4738 = vpop.f32.mrf.mxu0
  %v4739 = vadd.f32 0.0, %v4738
  %4740 = vmatmul.f32.gmra.mxu0 %v4677
  %v4741 = vpop.f32.mrf.mxu0
  %v4742 = vadd.f32 0.0, %v4741
  %4743 = vmatmul.f32.gmra.mxu0 %v4678
  %v4744 = vpop.f32.mrf.mxu0
  %v4745 = vadd.f32 0.0, %v4744
  %4746 = vmatmul.f32.gmra.mxu0 %v4679
  %v4747 = vpop.f32.mrf.mxu0
  %v4748 = vadd.f32 0.0, %v4747
  %4749 = vdwg.mxu0
  %4750 = vmatpush.msra.mxu0 %v4711
  %4751 = vmatpush.msra.mxu0 %v4709
  %4752 = vmatpush.msra.mxu0 %v4707
  %4753 = vmatpush.msra.mxu0 %v4705
  %4754 = vmatpush.msra.mxu0 %v4703
  %4755 = vmatpush.msra.mxu0 %v4701
  %4756 = vmatpush.msra.mxu0 %v4699
  %4757 = vmatpush.msra.mxu0 %v4697
  %4758 = vmatpush.msra.mxu0 %v4695
  %4759 = vmatpush.msra.mxu0 %v4693
  %4760 = vmatpush.msra.mxu0 %v4691
  %4761 = vmatpush.msra.mxu0 %v4689
  %4762 = vmatpush.msra.mxu0 %v4687
  %4763 = vmatpush.msra.mxu0 %v4685
  %4764 = vmatpush.msra.mxu0 %v4683
  %4765 = vmatpush.msra.mxu0 %v4681
  %4766 = vmatmul.f32.gmra.mxu0 %v4673
  %v4767 = vpop.f32.mrf.mxu0
  %v4768 = vadd.f32 0.0, %v4767
  %4769 = vmatmul.f32.gmra.mxu0 %v4674
  %v4770 = vpop.f32.mrf.mxu0
  %v4771 = vadd.f32 0.0, %v4770
  %4772 = vmatmul.f32.gmra.mxu0 %v4675
  %v4773 = vpop.f32.mrf.mxu0
  %v4774 = vadd.f32 0.0, %v4773
  %4775 = vmatmul.f32.gmra.mxu0 %v4676
  %v4776 = vpop.f32.mrf.mxu0
  %v4777 = vadd.f32 0.0, %v4776
  %4778 = vmatmul.f32.gmra.mxu0 %v4677
  %v4779 = vpop.f32.mrf.mxu0
  %v4780 = vadd.f32 0.0, %v4779
  %4781 = vmatmul.f32.gmra.mxu0 %v4678
  %v4782 = vpop.f32.mrf.mxu0
  %v4783 = vadd.f32 0.0, %v4782
  %4784 = vmatmul.f32.gmra.mxu0 %v4679
  %v4785 = vpop.f32.mrf.mxu0
  %v4786 = vadd.f32 0.0, %v4785
  %4787 = vdwg.mxu0
  %v4788 = vadd.f32 %v4659, %v4730
  %v4789 = vadd.f32 %v4660, %v4768
  %v4790 = vadd.f32 %v4661, %v4733
  %v4791 = vadd.f32 %v4662, %v4771
  %v4792 = vadd.f32 %v4663, %v4736
  %v4793 = vadd.f32 %v4664, %v4774
  %v4794 = vadd.f32 %v4665, %v4739
  %v4795 = vadd.f32 %v4666, %v4777
  %v4796 = vadd.f32 %v4667, %v4742
  %v4797 = vadd.f32 %v4668, %v4780
  %v4798 = vadd.f32 %v4669, %v4745
  %v4799 = vadd.f32 %v4670, %v4783
  %v4800 = vadd.f32 %v4671, %v4748
  %v4801 = vadd.f32 %v4672, %v4786
  %v4802 = vld [vmem:[#allocation3 + $0x9] sm:$0xff]
  %v4803 = vld [vmem:[#allocation3 + $0x11] sm:$0xff]
  %v4804 = vld [vmem:[#allocation3 + $0x19] sm:$0xff]
  %v4805 = vld [vmem:[#allocation3 + $0x21] sm:$0xff]
  %v4806 = vld [vmem:[#allocation3 + $0x29] sm:$0xff]
  %v4807 = vld [vmem:[#allocation3 + $0x31] sm:$0xff]
  %v4808 = vld [vmem:[#allocation3 + $0x39] sm:$0x7]
  %v4809 = vld [vmem:[%s7 + $0x700] sm:$0xff]
  %v4810 = vld [vmem:[%s7 + $0x708] sm:$0xff]
  %v4811 = vld [vmem:[%s7 + $0x710] sm:$0xff]
  %v4812 = vld [vmem:[%s7 + $0x718] sm:$0xff]
  %v4813 = vld [vmem:[%s7 + $0x720] sm:$0xff]
  %v4814 = vld [vmem:[%s7 + $0x728] sm:$0xff]
  %v4815 = vld [vmem:[%s7 + $0x730] sm:$0xff]
  %v4816 = vld [vmem:[%s7 + $0x738] sm:$0xff]
  %v4817 = vld [vmem:[%s7 + $0x740] sm:$0xff]
  %v4818 = vld [vmem:[%s7 + $0x748] sm:$0xff]
  %v4819 = vld [vmem:[%s7 + $0x750] sm:$0xff]
  %v4820 = vld [vmem:[%s7 + $0x758] sm:$0xff]
  %v4821 = vld [vmem:[%s7 + $0x760] sm:$0xff]
  %v4822 = vld [vmem:[%s7 + $0x768] sm:$0xff]
  %v4823 = vld [vmem:[%s7 + $0x770] sm:$0xff]
  %v4824 = vld [vmem:[%s7 + $0x778] sm:$0xff]
  %v4825 = vld [vmem:[%s7 + $0x780] sm:$0xff]
  %v4826 = vld [vmem:[%s7 + $0x788] sm:$0xff]
  %v4827 = vld [vmem:[%s7 + $0x790] sm:$0xff]
  %v4828 = vld [vmem:[%s7 + $0x798] sm:$0xff]
  %v4829 = vld [vmem:[%s7 + $0x7a0] sm:$0xff]
  %v4830 = vld [vmem:[%s7 + $0x7a8] sm:$0xff]
  %v4831 = vld [vmem:[%s7 + $0x7b0] sm:$0xff]
  %v4832 = vld [vmem:[%s7 + $0x7b8] sm:$0xff]
  %v4833 = vld [vmem:[%s7 + $0x7c0] sm:$0xff]
  %v4834 = vld [vmem:[%s7 + $0x7c8] sm:$0xff]
  %v4835 = vld [vmem:[%s7 + $0x7d0] sm:$0xff]
  %v4836 = vld [vmem:[%s7 + $0x7d8] sm:$0xff]
  %v4837 = vld [vmem:[%s7 + $0x7e0] sm:$0xff]
  %v4838 = vld [vmem:[%s7 + $0x7e8] sm:$0xff]
  %v4839 = vld [vmem:[%s7 + $0x7f0] sm:$0xff]
  %v4840 = vld [vmem:[%s7 + $0x7f8] sm:$0xff]
  %4841 = vmatpush.msra.mxu0 %v4839
  %4842 = vmatpush.msra.mxu0 %v4837
  %4843 = vmatpush.msra.mxu0 %v4835
  %4844 = vmatpush.msra.mxu0 %v4833
  %4845 = vmatpush.msra.mxu0 %v4831
  %4846 = vmatpush.msra.mxu0 %v4829
  %4847 = vmatpush.msra.mxu0 %v4827
  %4848 = vmatpush.msra.mxu0 %v4825
  %4849 = vmatpush.msra.mxu0 %v4823
  %4850 = vmatpush.msra.mxu0 %v4821
  %4851 = vmatpush.msra.mxu0 %v4819
  %4852 = vmatpush.msra.mxu0 %v4817
  %4853 = vmatpush.msra.mxu0 %v4815
  %4854 = vmatpush.msra.mxu0 %v4813
  %4855 = vmatpush.msra.mxu0 %v4811
  %4856 = vmatpush.msra.mxu0 %v4809
  %4857 = vmatmul.f32.gmra.mxu0 %v4802
  %v4858 = vpop.f32.mrf.mxu0
  %v4859 = vadd.f32 0.0, %v4858
  %4860 = vmatmul.f32.gmra.mxu0 %v4803
  %v4861 = vpop.f32.mrf.mxu0
  %v4862 = vadd.f32 0.0, %v4861
  %4863 = vmatmul.f32.gmra.mxu0 %v4804
  %v4864 = vpop.f32.mrf.mxu0
  %v4865 = vadd.f32 0.0, %v4864
  %4866 = vmatmul.f32.gmra.mxu0 %v4805
  %v4867 = vpop.f32.mrf.mxu0
  %v4868 = vadd.f32 0.0, %v4867
  %4869 = vmatmul.f32.gmra.mxu0 %v4806
  %v4870 = vpop.f32.mrf.mxu0
  %v4871 = vadd.f32 0.0, %v4870
  %4872 = vmatmul.f32.gmra.mxu0 %v4807
  %v4873 = vpop.f32.mrf.mxu0
  %v4874 = vadd.f32 0.0, %v4873
  %4875 = vmatmul.f32.gmra.mxu0 %v4808
  %v4876 = vpop.f32.mrf.mxu0
  %v4877 = vadd.f32 0.0, %v4876
  %4878 = vdwg.mxu0
  %4879 = vmatpush.msra.mxu0 %v4840
  %4880 = vmatpush.msra.mxu0 %v4838
  %4881 = vmatpush.msra.mxu0 %v4836
  %4882 = vmatpush.msra.mxu0 %v4834
  %4883 = vmatpush.msra.mxu0 %v4832
  %4884 = vmatpush.msra.mxu0 %v4830
  %4885 = vmatpush.msra.mxu0 %v4828
  %4886 = vmatpush.msra.mxu0 %v4826
  %4887 = vmatpush.msra.mxu0 %v4824
  %4888 = vmatpush.msra.mxu0 %v4822
  %4889 = vmatpush.msra.mxu0 %v4820
  %4890 = vmatpush.msra.mxu0 %v4818
  %4891 = vmatpush.msra.mxu0 %v4816
  %4892 = vmatpush.msra.mxu0 %v4814
  %4893 = vmatpush.msra.mxu0 %v4812
  %4894 = vmatpush.msra.mxu0 %v4810
  %4895 = vmatmul.f32.gmra.mxu0 %v4802
  %v4896 = vpop.f32.mrf.mxu0
  %v4897 = vadd.f32 0.0, %v4896
  %4898 = vmatmul.f32.gmra.mxu0 %v4803
  %v4899 = vpop.f32.mrf.mxu0
  %v4900 = vadd.f32 0.0, %v4899
  %4901 = vmatmul.f32.gmra.mxu0 %v4804
  %v4902 = vpop.f32.mrf.mxu0
  %v4903 = vadd.f32 0.0, %v4902
  %4904 = vmatmul.f32.gmra.mxu0 %v4805
  %v4905 = vpop.f32.mrf.mxu0
  %v4906 = vadd.f32 0.0, %v4905
  %4907 = vmatmul.f32.gmra.mxu0 %v4806
  %v4908 = vpop.f32.mrf.mxu0
  %v4909 = vadd.f32 0.0, %v4908
  %4910 = vmatmul.f32.gmra.mxu0 %v4807
  %v4911 = vpop.f32.mrf.mxu0
  %v4912 = vadd.f32 0.0, %v4911
  %4913 = vmatmul.f32.gmra.mxu0 %v4808
  %v4914 = vpop.f32.mrf.mxu0
  %v4915 = vadd.f32 0.0, %v4914
  %4916 = vdwg.mxu0
  %v4917 = vadd.f32 %v4788, %v4859
  %v4918 = vadd.f32 %v4789, %v4897
  %v4919 = vadd.f32 %v4790, %v4862
  %v4920 = vadd.f32 %v4791, %v4900
  %v4921 = vadd.f32 %v4792, %v4865
  %v4922 = vadd.f32 %v4793, %v4903
  %v4923 = vadd.f32 %v4794, %v4868
  %v4924 = vadd.f32 %v4795, %v4906
  %v4925 = vadd.f32 %v4796, %v4871
  %v4926 = vadd.f32 %v4797, %v4909
  %v4927 = vadd.f32 %v4798, %v4874
  %v4928 = vadd.f32 %v4799, %v4912
  %v4929 = vadd.f32 %v4800, %v4877
  %v4930 = vadd.f32 %v4801, %v4915
  %v4931 = vld [vmem:[#allocation3 + $0xc] sm:$0xff]
  %v4932 = vld [vmem:[#allocation3 + $0x14] sm:$0xff]
  %v4933 = vld [vmem:[#allocation3 + $0x1c] sm:$0xff]
  %v4934 = vld [vmem:[#allocation3 + $0x24] sm:$0xff]
  %v4935 = vld [vmem:[#allocation3 + $0x2c] sm:$0xff]
  %v4936 = vld [vmem:[#allocation3 + $0x34] sm:$0xff]
  %v4937 = vld [vmem:[#allocation3 + $0x3c] sm:$0x7]
  %v4938 = vld [vmem:[%s7 + $0x800] sm:$0xff]
  %v4939 = vld [vmem:[%s7 + $0x808] sm:$0xff]
  %v4940 = vld [vmem:[%s7 + $0x810] sm:$0xff]
  %v4941 = vld [vmem:[%s7 + $0x818] sm:$0xff]
  %v4942 = vld [vmem:[%s7 + $0x820] sm:$0xff]
  %v4943 = vld [vmem:[%s7 + $0x828] sm:$0xff]
  %v4944 = vld [vmem:[%s7 + $0x830] sm:$0xff]
  %v4945 = vld [vmem:[%s7 + $0x838] sm:$0xff]
  %v4946 = vld [vmem:[%s7 + $0x840] sm:$0xff]
  %v4947 = vld [vmem:[%s7 + $0x848] sm:$0xff]
  %v4948 = vld [vmem:[%s7 + $0x850] sm:$0xff]
  %v4949 = vld [vmem:[%s7 + $0x858] sm:$0xff]
  %v4950 = vld [vmem:[%s7 + $0x860] sm:$0xff]
  %v4951 = vld [vmem:[%s7 + $0x868] sm:$0xff]
  %v4952 = vld [vmem:[%s7 + $0x870] sm:$0xff]
  %v4953 = vld [vmem:[%s7 + $0x878] sm:$0xff]
  %v4954 = vld [vmem:[%s7 + $0x880] sm:$0xff]
  %v4955 = vld [vmem:[%s7 + $0x888] sm:$0xff]
  %v4956 = vld [vmem:[%s7 + $0x890] sm:$0xff]
  %v4957 = vld [vmem:[%s7 + $0x898] sm:$0xff]
  %v4958 = vld [vmem:[%s7 + $0x8a0] sm:$0xff]
  %v4959 = vld [vmem:[%s7 + $0x8a8] sm:$0xff]
  %v4960 = vld [vmem:[%s7 + $0x8b0] sm:$0xff]
  %v4961 = vld [vmem:[%s7 + $0x8b8] sm:$0xff]
  %v4962 = vld [vmem:[%s7 + $0x8c0] sm:$0xff]
  %v4963 = vld [vmem:[%s7 + $0x8c8] sm:$0xff]
  %v4964 = vld [vmem:[%s7 + $0x8d0] sm:$0xff]
  %v4965 = vld [vmem:[%s7 + $0x8d8] sm:$0xff]
  %v4966 = vld [vmem:[%s7 + $0x8e0] sm:$0xff]
  %v4967 = vld [vmem:[%s7 + $0x8e8] sm:$0xff]
  %v4968 = vld [vmem:[%s7 + $0x8f0] sm:$0xff]
  %v4969 = vld [vmem:[%s7 + $0x8f8] sm:$0xff]
  %4970 = vmatpush.msra.mxu0 %v4968
  %4971 = vmatpush.msra.mxu0 %v4966
  %4972 = vmatpush.msra.mxu0 %v4964
  %4973 = vmatpush.msra.mxu0 %v4962
  %4974 = vmatpush.msra.mxu0 %v4960
  %4975 = vmatpush.msra.mxu0 %v4958
  %4976 = vmatpush.msra.mxu0 %v4956
  %4977 = vmatpush.msra.mxu0 %v4954
  %4978 = vmatpush.msra.mxu0 %v4952
  %4979 = vmatpush.msra.mxu0 %v4950
  %4980 = vmatpush.msra.mxu0 %v4948
  %4981 = vmatpush.msra.mxu0 %v4946
  %4982 = vmatpush.msra.mxu0 %v4944
  %4983 = vmatpush.msra.mxu0 %v4942
  %4984 = vmatpush.msra.mxu0 %v4940
  %4985 = vmatpush.msra.mxu0 %v4938
  %4986 = vmatmul.f32.gmra.mxu0 %v4931
  %v4987 = vpop.f32.mrf.mxu0
  %v4988 = vadd.f32 0.0, %v4987
  %4989 = vmatmul.f32.gmra.mxu0 %v4932
  %v4990 = vpop.f32.mrf.mxu0
  %v4991 = vadd.f32 0.0, %v4990
  %4992 = vmatmul.f32.gmra.mxu0 %v4933
  %v4993 = vpop.f32.mrf.mxu0
  %v4994 = vadd.f32 0.0, %v4993
  %4995 = vmatmul.f32.gmra.mxu0 %v4934
  %v4996 = vpop.f32.mrf.mxu0
  %v4997 = vadd.f32 0.0, %v4996
  %4998 = vmatmul.f32.gmra.mxu0 %v4935
  %v4999 = vpop.f32.mrf.mxu0
  %v5000 = vadd.f32 0.0, %v4999
  %5001 = vmatmul.f32.gmra.mxu0 %v4936
  %v5002 = vpop.f32.mrf.mxu0
  %v5003 = vadd.f32 0.0, %v5002
  %5004 = vmatmul.f32.gmra.mxu0 %v4937
  %v5005 = vpop.f32.mrf.mxu0
  %v5006 = vadd.f32 0.0, %v5005
  %5007 = vdwg.mxu0
  %5008 = vmatpush.msra.mxu0 %v4969
  %5009 = vmatpush.msra.mxu0 %v4967
  %5010 = vmatpush.msra.mxu0 %v4965
  %5011 = vmatpush.msra.mxu0 %v4963
  %5012 = vmatpush.msra.mxu0 %v4961
  %5013 = vmatpush.msra.mxu0 %v4959
  %5014 = vmatpush.msra.mxu0 %v4957
  %5015 = vmatpush.msra.mxu0 %v4955
  %5016 = vmatpush.msra.mxu0 %v4953
  %5017 = vmatpush.msra.mxu0 %v4951
  %5018 = vmatpush.msra.mxu0 %v4949
  %5019 = vmatpush.msra.mxu0 %v4947
  %5020 = vmatpush.msra.mxu0 %v4945
  %5021 = vmatpush.msra.mxu0 %v4943
  %5022 = vmatpush.msra.mxu0 %v4941
  %5023 = vmatpush.msra.mxu0 %v4939
  %5024 = vmatmul.f32.gmra.mxu0 %v4931
  %v5025 = vpop.f32.mrf.mxu0
  %v5026 = vadd.f32 0.0, %v5025
  %5027 = vmatmul.f32.gmra.mxu0 %v4932
  %v5028 = vpop.f32.mrf.mxu0
  %v5029 = vadd.f32 0.0, %v5028
  %5030 = vmatmul.f32.gmra.mxu0 %v4933
  %v5031 = vpop.f32.mrf.mxu0
  %v5032 = vadd.f32 0.0, %v5031
  %5033 = vmatmul.f32.gmra.mxu0 %v4934
  %v5034 = vpop.f32.mrf.mxu0
  %v5035 = vadd.f32 0.0, %v5034
  %5036 = vmatmul.f32.gmra.mxu0 %v4935
  %v5037 = vpop.f32.mrf.mxu0
  %v5038 = vadd.f32 0.0, %v5037
  %5039 = vmatmul.f32.gmra.mxu0 %v4936
  %v5040 = vpop.f32.mrf.mxu0
  %v5041 = vadd.f32 0.0, %v5040
  %5042 = vmatmul.f32.gmra.mxu0 %v4937
  %v5043 = vpop.f32.mrf.mxu0
  %v5044 = vadd.f32 0.0, %v5043
  %5045 = vdwg.mxu0
  %v5046 = vadd.f32 %v4917, %v4988
  %v5047 = vadd.f32 %v4918, %v5026
  %v5048 = vadd.f32 %v4919, %v4991
  %v5049 = vadd.f32 %v4920, %v5029
  %v5050 = vadd.f32 %v4921, %v4994
  %v5051 = vadd.f32 %v4922, %v5032
  %v5052 = vadd.f32 %v4923, %v4997
  %v5053 = vadd.f32 %v4924, %v5035
  %v5054 = vadd.f32 %v4925, %v5000
  %v5055 = vadd.f32 %v4926, %v5038
  %v5056 = vadd.f32 %v4927, %v5003
  %v5057 = vadd.f32 %v4928, %v5041
  %v5058 = vadd.f32 %v4929, %v5006
  %v5059 = vadd.f32 %v4930, %v5044
  %v5060 = vld [vmem:[#allocation3 + $0xd] sm:$0xff]
  %v5061 = vld [vmem:[#allocation3 + $0x15] sm:$0xff]
  %v5062 = vld [vmem:[#allocation3 + $0x1d] sm:$0xff]
  %v5063 = vld [vmem:[#allocation3 + $0x25] sm:$0xff]
  %v5064 = vld [vmem:[#allocation3 + $0x2d] sm:$0xff]
  %v5065 = vld [vmem:[#allocation3 + $0x35] sm:$0xff]
  %v5066 = vld [vmem:[#allocation3 + $0x3d] sm:$0x7]
  %v5067 = vld [vmem:[%s7 + $0x900] sm:$0xff]
  %v5068 = vld [vmem:[%s7 + $0x908] sm:$0xff]
  %v5069 = vld [vmem:[%s7 + $0x910] sm:$0xff]
  %v5070 = vld [vmem:[%s7 + $0x918] sm:$0xff]
  %v5071 = vld [vmem:[%s7 + $0x920] sm:$0xff]
  %v5072 = vld [vmem:[%s7 + $0x928] sm:$0xff]
  %v5073 = vld [vmem:[%s7 + $0x930] sm:$0xff]
  %v5074 = vld [vmem:[%s7 + $0x938] sm:$0xff]
  %v5075 = vld [vmem:[%s7 + $0x940] sm:$0xff]
  %v5076 = vld [vmem:[%s7 + $0x948] sm:$0xff]
  %v5077 = vld [vmem:[%s7 + $0x950] sm:$0xff]
  %v5078 = vld [vmem:[%s7 + $0x958] sm:$0xff]
  %v5079 = vld [vmem:[%s7 + $0x960] sm:$0xff]
  %v5080 = vld [vmem:[%s7 + $0x968] sm:$0xff]
  %v5081 = vld [vmem:[%s7 + $0x970] sm:$0xff]
  %v5082 = vld [vmem:[%s7 + $0x978] sm:$0xff]
  %v5083 = vld [vmem:[%s7 + $0x980] sm:$0xff]
  %v5084 = vld [vmem:[%s7 + $0x988] sm:$0xff]
  %v5085 = vld [vmem:[%s7 + $0x990] sm:$0xff]
  %v5086 = vld [vmem:[%s7 + $0x998] sm:$0xff]
  %v5087 = vld [vmem:[%s7 + $0x9a0] sm:$0xff]
  %v5088 = vld [vmem:[%s7 + $0x9a8] sm:$0xff]
  %v5089 = vld [vmem:[%s7 + $0x9b0] sm:$0xff]
  %v5090 = vld [vmem:[%s7 + $0x9b8] sm:$0xff]
  %v5091 = vld [vmem:[%s7 + $0x9c0] sm:$0xff]
  %v5092 = vld [vmem:[%s7 + $0x9c8] sm:$0xff]
  %v5093 = vld [vmem:[%s7 + $0x9d0] sm:$0xff]
  %v5094 = vld [vmem:[%s7 + $0x9d8] sm:$0xff]
  %v5095 = vld [vmem:[%s7 + $0x9e0] sm:$0xff]
  %v5096 = vld [vmem:[%s7 + $0x9e8] sm:$0xff]
  %v5097 = vld [vmem:[%s7 + $0x9f0] sm:$0xff]
  %v5098 = vld [vmem:[%s7 + $0x9f8] sm:$0xff]
  %5099 = vmatpush.msra.mxu0 %v5097
  %5100 = vmatpush.msra.mxu0 %v5095
  %5101 = vmatpush.msra.mxu0 %v5093
  %5102 = vmatpush.msra.mxu0 %v5091
  %5103 = vmatpush.msra.mxu0 %v5089
  %5104 = vmatpush.msra.mxu0 %v5087
  %5105 = vmatpush.msra.mxu0 %v5085
  %5106 = vmatpush.msra.mxu0 %v5083
  %5107 = vmatpush.msra.mxu0 %v5081
  %5108 = vmatpush.msra.mxu0 %v5079
  %5109 = vmatpush.msra.mxu0 %v5077
  %5110 = vmatpush.msra.mxu0 %v5075
  %5111 = vmatpush.msra.mxu0 %v5073
  %5112 = vmatpush.msra.mxu0 %v5071
  %5113 = vmatpush.msra.mxu0 %v5069
  %5114 = vmatpush.msra.mxu0 %v5067
  %5115 = vmatmul.f32.gmra.mxu0 %v5060
  %v5116 = vpop.f32.mrf.mxu0
  %v5117 = vadd.f32 0.0, %v5116
  %5118 = vmatmul.f32.gmra.mxu0 %v5061
  %v5119 = vpop.f32.mrf.mxu0
  %v5120 = vadd.f32 0.0, %v5119
  %5121 = vmatmul.f32.gmra.mxu0 %v5062
  %v5122 = vpop.f32.mrf.mxu0
  %v5123 = vadd.f32 0.0, %v5122
  %5124 = vmatmul.f32.gmra.mxu0 %v5063
  %v5125 = vpop.f32.mrf.mxu0
  %v5126 = vadd.f32 0.0, %v5125
  %5127 = vmatmul.f32.gmra.mxu0 %v5064
  %v5128 = vpop.f32.mrf.mxu0
  %v5129 = vadd.f32 0.0, %v5128
  %5130 = vmatmul.f32.gmra.mxu0 %v5065
  %v5131 = vpop.f32.mrf.mxu0
  %v5132 = vadd.f32 0.0, %v5131
  %5133 = vmatmul.f32.gmra.mxu0 %v5066
  %v5134 = vpop.f32.mrf.mxu0
  %v5135 = vadd.f32 0.0, %v5134
  %5136 = vdwg.mxu0
  %5137 = vmatpush.msra.mxu0 %v5098
  %5138 = vmatpush.msra.mxu0 %v5096
  %5139 = vmatpush.msra.mxu0 %v5094
  %5140 = vmatpush.msra.mxu0 %v5092
  %5141 = vmatpush.msra.mxu0 %v5090
  %5142 = vmatpush.msra.mxu0 %v5088
  %5143 = vmatpush.msra.mxu0 %v5086
  %5144 = vmatpush.msra.mxu0 %v5084
  %5145 = vmatpush.msra.mxu0 %v5082
  %5146 = vmatpush.msra.mxu0 %v5080
  %5147 = vmatpush.msra.mxu0 %v5078
  %5148 = vmatpush.msra.mxu0 %v5076
  %5149 = vmatpush.msra.mxu0 %v5074
  %5150 = vmatpush.msra.mxu0 %v5072
  %5151 = vmatpush.msra.mxu0 %v5070
  %5152 = vmatpush.msra.mxu0 %v5068
  %5153 = vmatmul.f32.gmra.mxu0 %v5060
  %v5154 = vpop.f32.mrf.mxu0
  %v5155 = vadd.f32 0.0, %v5154
  %5156 = vmatmul.f32.gmra.mxu0 %v5061
  %v5157 = vpop.f32.mrf.mxu0
  %v5158 = vadd.f32 0.0, %v5157
  %5159 = vmatmul.f32.gmra.mxu0 %v5062
  %v5160 = vpop.f32.mrf.mxu0
  %v5161 = vadd.f32 0.0, %v5160
  %5162 = vmatmul.f32.gmra.mxu0 %v5063
  %v5163 = vpop.f32.mrf.mxu0
  %v5164 = vadd.f32 0.0, %v5163
  %5165 = vmatmul.f32.gmra.mxu0 %v5064
  %v5166 = vpop.f32.mrf.mxu0
  %v5167 = vadd.f32 0.0, %v5166
  %5168 = vmatmul.f32.gmra.mxu0 %v5065
  %v5169 = vpop.f32.mrf.mxu0
  %v5170 = vadd.f32 0.0, %v5169
  %5171 = vmatmul.f32.gmra.mxu0 %v5066
  %v5172 = vpop.f32.mrf.mxu0
  %v5173 = vadd.f32 0.0, %v5172
  %5174 = vdwg.mxu0
  %v5175 = vadd.f32 %v5046, %v5117
  %v5176 = vadd.f32 %v5047, %v5155
  %v5177 = vadd.f32 %v5048, %v5120
  %v5178 = vadd.f32 %v5049, %v5158
  %v5179 = vadd.f32 %v5050, %v5123
  %v5180 = vadd.f32 %v5051, %v5161
  %v5181 = vadd.f32 %v5052, %v5126
  %v5182 = vadd.f32 %v5053, %v5164
  %v5183 = vadd.f32 %v5054, %v5129
  %v5184 = vadd.f32 %v5055, %v5167
  %v5185 = vadd.f32 %v5056, %v5132
  %v5186 = vadd.f32 %v5057, %v5170
  %v5187 = vadd.f32 %v5058, %v5135
  %v5188 = vadd.f32 %v5059, %v5173
  %v5189 = vld [vmem:[#allocation3 + $0xe] sm:$0xff]
  %v5190 = vld [vmem:[#allocation3 + $0x16] sm:$0xff]
  %v5191 = vld [vmem:[#allocation3 + $0x1e] sm:$0xff]
  %v5192 = vld [vmem:[#allocation3 + $0x26] sm:$0xff]
  %v5193 = vld [vmem:[#allocation3 + $0x2e] sm:$0xff]
  %v5194 = vld [vmem:[#allocation3 + $0x36] sm:$0xff]
  %v5195 = vld [vmem:[#allocation3 + $0x3e] sm:$0x7]
  %v5196 = vld [vmem:[%s7 + $0xa00] sm:$0xff]
  %v5197 = vld [vmem:[%s7 + $0xa08] sm:$0xff]
  %v5198 = vld [vmem:[%s7 + $0xa10] sm:$0xff]
  %v5199 = vld [vmem:[%s7 + $0xa18] sm:$0xff]
  %v5200 = vld [vmem:[%s7 + $0xa20] sm:$0xff]
  %v5201 = vld [vmem:[%s7 + $0xa28] sm:$0xff]
  %v5202 = vld [vmem:[%s7 + $0xa30] sm:$0xff]
  %v5203 = vld [vmem:[%s7 + $0xa38] sm:$0xff]
  %v5204 = vld [vmem:[%s7 + $0xa40] sm:$0xff]
  %v5205 = vld [vmem:[%s7 + $0xa48] sm:$0xff]
  %v5206 = vld [vmem:[%s7 + $0xa50] sm:$0xff]
  %v5207 = vld [vmem:[%s7 + $0xa58] sm:$0xff]
  %v5208 = vld [vmem:[%s7 + $0xa60] sm:$0xff]
  %v5209 = vld [vmem:[%s7 + $0xa68] sm:$0xff]
  %v5210 = vld [vmem:[%s7 + $0xa70] sm:$0xff]
  %v5211 = vld [vmem:[%s7 + $0xa78] sm:$0xff]
  %v5212 = vld [vmem:[%s7 + $0xa80] sm:$0xff]
  %v5213 = vld [vmem:[%s7 + $0xa88] sm:$0xff]
  %v5214 = vld [vmem:[%s7 + $0xa90] sm:$0xff]
  %v5215 = vld [vmem:[%s7 + $0xa98] sm:$0xff]
  %v5216 = vld [vmem:[%s7 + $0xaa0] sm:$0xff]
  %v5217 = vld [vmem:[%s7 + $0xaa8] sm:$0xff]
  %v5218 = vld [vmem:[%s7 + $0xab0] sm:$0xff]
  %v5219 = vld [vmem:[%s7 + $0xab8] sm:$0xff]
  %v5220 = vld [vmem:[%s7 + $0xac0] sm:$0xff]
  %v5221 = vld [vmem:[%s7 + $0xac8] sm:$0xff]
  %v5222 = vld [vmem:[%s7 + $0xad0] sm:$0xff]
  %v5223 = vld [vmem:[%s7 + $0xad8] sm:$0xff]
  %v5224 = vld [vmem:[%s7 + $0xae0] sm:$0xff]
  %v5225 = vld [vmem:[%s7 + $0xae8] sm:$0xff]
  %v5226 = vld [vmem:[%s7 + $0xaf0] sm:$0xff]
  %v5227 = vld [vmem:[%s7 + $0xaf8] sm:$0xff]
  %5228 = vmatpush.msra.mxu0 %v5226
  %5229 = vmatpush.msra.mxu0 %v5224
  %5230 = vmatpush.msra.mxu0 %v5222
  %5231 = vmatpush.msra.mxu0 %v5220
  %5232 = vmatpush.msra.mxu0 %v5218
  %5233 = vmatpush.msra.mxu0 %v5216
  %5234 = vmatpush.msra.mxu0 %v5214
  %5235 = vmatpush.msra.mxu0 %v5212
  %5236 = vmatpush.msra.mxu0 %v5210
  %5237 = vmatpush.msra.mxu0 %v5208
  %5238 = vmatpush.msra.mxu0 %v5206
  %5239 = vmatpush.msra.mxu0 %v5204
  %5240 = vmatpush.msra.mxu0 %v5202
  %5241 = vmatpush.msra.mxu0 %v5200
  %5242 = vmatpush.msra.mxu0 %v5198
  %5243 = vmatpush.msra.mxu0 %v5196
  %5244 = vmatmul.f32.gmra.mxu0 %v5189
  %v5245 = vpop.f32.mrf.mxu0
  %v5246 = vadd.f32 0.0, %v5245
  %5247 = vmatmul.f32.gmra.mxu0 %v5190
  %v5248 = vpop.f32.mrf.mxu0
  %v5249 = vadd.f32 0.0, %v5248
  %5250 = vmatmul.f32.gmra.mxu0 %v5191
  %v5251 = vpop.f32.mrf.mxu0
  %v5252 = vadd.f32 0.0, %v5251
  %5253 = vmatmul.f32.gmra.mxu0 %v5192
  %v5254 = vpop.f32.mrf.mxu0
  %v5255 = vadd.f32 0.0, %v5254
  %5256 = vmatmul.f32.gmra.mxu0 %v5193
  %v5257 = vpop.f32.mrf.mxu0
  %v5258 = vadd.f32 0.0, %v5257
  %5259 = vmatmul.f32.gmra.mxu0 %v5194
  %v5260 = vpop.f32.mrf.mxu0
  %v5261 = vadd.f32 0.0, %v5260
  %5262 = vmatmul.f32.gmra.mxu0 %v5195
  %v5263 = vpop.f32.mrf.mxu0
  %v5264 = vadd.f32 0.0, %v5263
  %5265 = vdwg.mxu0
  %5266 = vmatpush.msra.mxu0 %v5227
  %5267 = vmatpush.msra.mxu0 %v5225
  %5268 = vmatpush.msra.mxu0 %v5223
  %5269 = vmatpush.msra.mxu0 %v5221
  %5270 = vmatpush.msra.mxu0 %v5219
  %5271 = vmatpush.msra.mxu0 %v5217
  %5272 = vmatpush.msra.mxu0 %v5215
  %5273 = vmatpush.msra.mxu0 %v5213
  %5274 = vmatpush.msra.mxu0 %v5211
  %5275 = vmatpush.msra.mxu0 %v5209
  %5276 = vmatpush.msra.mxu0 %v5207
  %5277 = vmatpush.msra.mxu0 %v5205
  %5278 = vmatpush.msra.mxu0 %v5203
  %5279 = vmatpush.msra.mxu0 %v5201
  %5280 = vmatpush.msra.mxu0 %v5199
  %5281 = vmatpush.msra.mxu0 %v5197
  %5282 = vmatmul.f32.gmra.mxu0 %v5189
  %v5283 = vpop.f32.mrf.mxu0
  %v5284 = vadd.f32 0.0, %v5283
  %5285 = vmatmul.f32.gmra.mxu0 %v5190
  %v5286 = vpop.f32.mrf.mxu0
  %v5287 = vadd.f32 0.0, %v5286
  %5288 = vmatmul.f32.gmra.mxu0 %v5191
  %v5289 = vpop.f32.mrf.mxu0
  %v5290 = vadd.f32 0.0, %v5289
  %5291 = vmatmul.f32.gmra.mxu0 %v5192
  %v5292 = vpop.f32.mrf.mxu0
  %v5293 = vadd.f32 0.0, %v5292
  %5294 = vmatmul.f32.gmra.mxu0 %v5193
  %v5295 = vpop.f32.mrf.mxu0
  %v5296 = vadd.f32 0.0, %v5295
  %5297 = vmatmul.f32.gmra.mxu0 %v5194
  %v5298 = vpop.f32.mrf.mxu0
  %v5299 = vadd.f32 0.0, %v5298
  %5300 = vmatmul.f32.gmra.mxu0 %v5195
  %v5301 = vpop.f32.mrf.mxu0
  %v5302 = vadd.f32 0.0, %v5301
  %5303 = vdwg.mxu0
  %v5304 = vadd.f32 %v5175, %v5246
  %v5305 = vadd.f32 %v5176, %v5284
  %v5306 = vadd.f32 %v5177, %v5249
  %v5307 = vadd.f32 %v5178, %v5287
  %v5308 = vadd.f32 %v5179, %v5252
  %v5309 = vadd.f32 %v5180, %v5290
  %v5310 = vadd.f32 %v5181, %v5255
  %v5311 = vadd.f32 %v5182, %v5293
  %v5312 = vadd.f32 %v5183, %v5258
  %v5313 = vadd.f32 %v5184, %v5296
  %v5314 = vadd.f32 %v5185, %v5261
  %v5315 = vadd.f32 %v5186, %v5299
  %v5316 = vadd.f32 %v5187, %v5264
  %v5317 = vadd.f32 %v5188, %v5302
  %v5318 = vld [vmem:[#allocation3 + $0xf] sm:$0xff]
  %v5319 = vld [vmem:[#allocation3 + $0x17] sm:$0xff]
  %v5320 = vld [vmem:[#allocation3 + $0x1f] sm:$0xff]
  %v5321 = vld [vmem:[#allocation3 + $0x27] sm:$0xff]
  %v5322 = vld [vmem:[#allocation3 + $0x2f] sm:$0xff]
  %v5323 = vld [vmem:[#allocation3 + $0x37] sm:$0xff]
  %v5324 = vld [vmem:[#allocation3 + $0x3f] sm:$0x7]
  %v5325 = vld [vmem:[%s7 + $0xb00] sm:$0xff]
  %v5326 = vld [vmem:[%s7 + $0xb08] sm:$0xff]
  %v5327 = vld [vmem:[%s7 + $0xb10] sm:$0xff]
  %v5328 = vld [vmem:[%s7 + $0xb18] sm:$0xff]
  %v5329 = vld [vmem:[%s7 + $0xb20] sm:$0xff]
  %v5330 = vld [vmem:[%s7 + $0xb28] sm:$0xff]
  %v5331 = vld [vmem:[%s7 + $0xb30] sm:$0xff]
  %v5332 = vld [vmem:[%s7 + $0xb38] sm:$0xff]
  %v5333 = vld [vmem:[%s7 + $0xb40] sm:$0xff]
  %v5334 = vld [vmem:[%s7 + $0xb48] sm:$0xff]
  %v5335 = vld [vmem:[%s7 + $0xb50] sm:$0xff]
  %v5336 = vld [vmem:[%s7 + $0xb58] sm:$0xff]
  %v5337 = vld [vmem:[%s7 + $0xb60] sm:$0xff]
  %v5338 = vld [vmem:[%s7 + $0xb68] sm:$0xff]
  %v5339 = vld [vmem:[%s7 + $0xb70] sm:$0xff]
  %v5340 = vld [vmem:[%s7 + $0xb78] sm:$0xff]
  %v5341 = vld [vmem:[%s7 + $0xb80] sm:$0xff]
  %v5342 = vld [vmem:[%s7 + $0xb88] sm:$0xff]
  %v5343 = vld [vmem:[%s7 + $0xb90] sm:$0xff]
  %v5344 = vld [vmem:[%s7 + $0xb98] sm:$0xff]
  %v5345 = vld [vmem:[%s7 + $0xba0] sm:$0xff]
  %v5346 = vld [vmem:[%s7 + $0xba8] sm:$0xff]
  %v5347 = vld [vmem:[%s7 + $0xbb0] sm:$0xff]
  %v5348 = vld [vmem:[%s7 + $0xbb8] sm:$0xff]
  %v5349 = vld [vmem:[%s7 + $0xbc0] sm:$0xff]
  %v5350 = vld [vmem:[%s7 + $0xbc8] sm:$0xff]
  %v5351 = vld [vmem:[%s7 + $0xbd0] sm:$0xff]
  %v5352 = vld [vmem:[%s7 + $0xbd8] sm:$0xff]
  %v5353 = vld [vmem:[%s7 + $0xbe0] sm:$0xff]
  %v5354 = vld [vmem:[%s7 + $0xbe8] sm:$0xff]
  %v5355 = vld [vmem:[%s7 + $0xbf0] sm:$0xff]
  %v5356 = vld [vmem:[%s7 + $0xbf8] sm:$0xff]
  %5357 = vmatpush.msra.mxu0 %v5355
  %5358 = vmatpush.msra.mxu0 %v5353
  %5359 = vmatpush.msra.mxu0 %v5351
  %5360 = vmatpush.msra.mxu0 %v5349
  %5361 = vmatpush.msra.mxu0 %v5347
  %5362 = vmatpush.msra.mxu0 %v5345
  %5363 = vmatpush.msra.mxu0 %v5343
  %5364 = vmatpush.msra.mxu0 %v5341
  %5365 = vmatpush.msra.mxu0 %v5339
  %5366 = vmatpush.msra.mxu0 %v5337
  %5367 = vmatpush.msra.mxu0 %v5335
  %5368 = vmatpush.msra.mxu0 %v5333
  %5369 = vmatpush.msra.mxu0 %v5331
  %5370 = vmatpush.msra.mxu0 %v5329
  %5371 = vmatpush.msra.mxu0 %v5327
  %5372 = vmatpush.msra.mxu0 %v5325
  %5373 = vmatmul.f32.gmra.mxu0 %v5318
  %v5374 = vpop.f32.mrf.mxu0
  %v5375 = vadd.f32 0.0, %v5374
  %5376 = vmatmul.f32.gmra.mxu0 %v5319
  %v5377 = vpop.f32.mrf.mxu0
  %v5378 = vadd.f32 0.0, %v5377
  %5379 = vmatmul.f32.gmra.mxu0 %v5320
  %v5380 = vpop.f32.mrf.mxu0
  %v5381 = vadd.f32 0.0, %v5380
  %5382 = vmatmul.f32.gmra.mxu0 %v5321
  %v5383 = vpop.f32.mrf.mxu0
  %v5384 = vadd.f32 0.0, %v5383
  %5385 = vmatmul.f32.gmra.mxu0 %v5322
  %v5386 = vpop.f32.mrf.mxu0
  %v5387 = vadd.f32 0.0, %v5386
  %5388 = vmatmul.f32.gmra.mxu0 %v5323
  %v5389 = vpop.f32.mrf.mxu0
  %v5390 = vadd.f32 0.0, %v5389
  %5391 = vmatmul.f32.gmra.mxu0 %v5324
  %v5392 = vpop.f32.mrf.mxu0
  %v5393 = vadd.f32 0.0, %v5392
  %5394 = vdwg.mxu0
  %5395 = vmatpush.msra.mxu0 %v5356
  %5396 = vmatpush.msra.mxu0 %v5354
  %5397 = vmatpush.msra.mxu0 %v5352
  %5398 = vmatpush.msra.mxu0 %v5350
  %5399 = vmatpush.msra.mxu0 %v5348
  %5400 = vmatpush.msra.mxu0 %v5346
  %5401 = vmatpush.msra.mxu0 %v5344
  %5402 = vmatpush.msra.mxu0 %v5342
  %5403 = vmatpush.msra.mxu0 %v5340
  %5404 = vmatpush.msra.mxu0 %v5338
  %5405 = vmatpush.msra.mxu0 %v5336
  %5406 = vmatpush.msra.mxu0 %v5334
  %5407 = vmatpush.msra.mxu0 %v5332
  %5408 = vmatpush.msra.mxu0 %v5330
  %5409 = vmatpush.msra.mxu0 %v5328
  %5410 = vmatpush.msra.mxu0 %v5326
  %5411 = vmatmul.f32.gmra.mxu0 %v5318
  %v5412 = vpop.f32.mrf.mxu0
  %v5413 = vadd.f32 0.0, %v5412
  %5414 = vmatmul.f32.gmra.mxu0 %v5319
  %v5415 = vpop.f32.mrf.mxu0
  %v5416 = vadd.f32 0.0, %v5415
  %5417 = vmatmul.f32.gmra.mxu0 %v5320
  %v5418 = vpop.f32.mrf.mxu0
  %v5419 = vadd.f32 0.0, %v5418
  %5420 = vmatmul.f32.gmra.mxu0 %v5321
  %v5421 = vpop.f32.mrf.mxu0
  %v5422 = vadd.f32 0.0, %v5421
  %5423 = vmatmul.f32.gmra.mxu0 %v5322
  %v5424 = vpop.f32.mrf.mxu0
  %v5425 = vadd.f32 0.0, %v5424
  %5426 = vmatmul.f32.gmra.mxu0 %v5323
  %v5427 = vpop.f32.mrf.mxu0
  %v5428 = vadd.f32 0.0, %v5427
  %5429 = vmatmul.f32.gmra.mxu0 %v5324
  %v5430 = vpop.f32.mrf.mxu0
  %v5431 = vadd.f32 0.0, %v5430
  %5432 = vdwg.mxu0
  %v5433 = vadd.f32 %v5304, %v5375
  %v5434 = vadd.f32 %v5305, %v5413
  %v5435 = vadd.f32 %v5306, %v5378
  %v5436 = vadd.f32 %v5307, %v5416
  %v5437 = vadd.f32 %v5308, %v5381
  %v5438 = vadd.f32 %v5309, %v5419
  %v5439 = vadd.f32 %v5310, %v5384
  %v5440 = vadd.f32 %v5311, %v5422
  %v5441 = vadd.f32 %v5312, %v5387
  %v5442 = vadd.f32 %v5313, %v5425
  %v5443 = vadd.f32 %v5314, %v5390
  %v5444 = vadd.f32 %v5315, %v5428
  %v5445 = vadd.f32 %v5316, %v5393
  %v5446 = vadd.f32 %v5317, %v5431
  %v5447 = vld [vmem:[#allocation3 + $0x12] sm:$0xff]
  %v5448 = vld [vmem:[#allocation3 + $0x1a] sm:$0xff]
  %v5449 = vld [vmem:[#allocation3 + $0x22] sm:$0xff]
  %v5450 = vld [vmem:[#allocation3 + $0x2a] sm:$0xff]
  %v5451 = vld [vmem:[#allocation3 + $0x32] sm:$0xff]
  %v5452 = vld [vmem:[#allocation3 + $0x3a] sm:$0xff]
  %v5453 = vld [vmem:[#allocation3 + $0x42] sm:$0x7]
  %v5454 = vld [vmem:[%s7 + $0xc00] sm:$0xff]
  %v5455 = vld [vmem:[%s7 + $0xc08] sm:$0xff]
  %v5456 = vld [vmem:[%s7 + $0xc10] sm:$0xff]
  %v5457 = vld [vmem:[%s7 + $0xc18] sm:$0xff]
  %v5458 = vld [vmem:[%s7 + $0xc20] sm:$0xff]
  %v5459 = vld [vmem:[%s7 + $0xc28] sm:$0xff]
  %v5460 = vld [vmem:[%s7 + $0xc30] sm:$0xff]
  %v5461 = vld [vmem:[%s7 + $0xc38] sm:$0xff]
  %v5462 = vld [vmem:[%s7 + $0xc40] sm:$0xff]
  %v5463 = vld [vmem:[%s7 + $0xc48] sm:$0xff]
  %v5464 = vld [vmem:[%s7 + $0xc50] sm:$0xff]
  %v5465 = vld [vmem:[%s7 + $0xc58] sm:$0xff]
  %v5466 = vld [vmem:[%s7 + $0xc60] sm:$0xff]
  %v5467 = vld [vmem:[%s7 + $0xc68] sm:$0xff]
  %v5468 = vld [vmem:[%s7 + $0xc70] sm:$0xff]
  %v5469 = vld [vmem:[%s7 + $0xc78] sm:$0xff]
  %v5470 = vld [vmem:[%s7 + $0xc80] sm:$0xff]
  %v5471 = vld [vmem:[%s7 + $0xc88] sm:$0xff]
  %v5472 = vld [vmem:[%s7 + $0xc90] sm:$0xff]
  %v5473 = vld [vmem:[%s7 + $0xc98] sm:$0xff]
  %v5474 = vld [vmem:[%s7 + $0xca0] sm:$0xff]
  %v5475 = vld [vmem:[%s7 + $0xca8] sm:$0xff]
  %v5476 = vld [vmem:[%s7 + $0xcb0] sm:$0xff]
  %v5477 = vld [vmem:[%s7 + $0xcb8] sm:$0xff]
  %v5478 = vld [vmem:[%s7 + $0xcc0] sm:$0xff]
  %v5479 = vld [vmem:[%s7 + $0xcc8] sm:$0xff]
  %v5480 = vld [vmem:[%s7 + $0xcd0] sm:$0xff]
  %v5481 = vld [vmem:[%s7 + $0xcd8] sm:$0xff]
  %v5482 = vld [vmem:[%s7 + $0xce0] sm:$0xff]
  %v5483 = vld [vmem:[%s7 + $0xce8] sm:$0xff]
  %v5484 = vld [vmem:[%s7 + $0xcf0] sm:$0xff]
  %v5485 = vld [vmem:[%s7 + $0xcf8] sm:$0xff]
  %5486 = vmatpush.msra.mxu0 %v5484
  %5487 = vmatpush.msra.mxu0 %v5482
  %5488 = vmatpush.msra.mxu0 %v5480
  %5489 = vmatpush.msra.mxu0 %v5478
  %5490 = vmatpush.msra.mxu0 %v5476
  %5491 = vmatpush.msra.mxu0 %v5474
  %5492 = vmatpush.msra.mxu0 %v5472
  %5493 = vmatpush.msra.mxu0 %v5470
  %5494 = vmatpush.msra.mxu0 %v5468
  %5495 = vmatpush.msra.mxu0 %v5466
  %5496 = vmatpush.msra.mxu0 %v5464
  %5497 = vmatpush.msra.mxu0 %v5462
  %5498 = vmatpush.msra.mxu0 %v5460
  %5499 = vmatpush.msra.mxu0 %v5458
  %5500 = vmatpush.msra.mxu0 %v5456
  %5501 = vmatpush.msra.mxu0 %v5454
  %5502 = vmatmul.f32.gmra.mxu0 %v5447
  %v5503 = vpop.f32.mrf.mxu0
  %v5504 = vadd.f32 0.0, %v5503
  %5505 = vmatmul.f32.gmra.mxu0 %v5448
  %v5506 = vpop.f32.mrf.mxu0
  %v5507 = vadd.f32 0.0, %v5506
  %5508 = vmatmul.f32.gmra.mxu0 %v5449
  %v5509 = vpop.f32.mrf.mxu0
  %v5510 = vadd.f32 0.0, %v5509
  %5511 = vmatmul.f32.gmra.mxu0 %v5450
  %v5512 = vpop.f32.mrf.mxu0
  %v5513 = vadd.f32 0.0, %v5512
  %5514 = vmatmul.f32.gmra.mxu0 %v5451
  %v5515 = vpop.f32.mrf.mxu0
  %v5516 = vadd.f32 0.0, %v5515
  %5517 = vmatmul.f32.gmra.mxu0 %v5452
  %v5518 = vpop.f32.mrf.mxu0
  %v5519 = vadd.f32 0.0, %v5518
  %5520 = vmatmul.f32.gmra.mxu0 %v5453
  %v5521 = vpop.f32.mrf.mxu0
  %v5522 = vadd.f32 0.0, %v5521
  %5523 = vdwg.mxu0
  %5524 = vmatpush.msra.mxu0 %v5485
  %5525 = vmatpush.msra.mxu0 %v5483
  %5526 = vmatpush.msra.mxu0 %v5481
  %5527 = vmatpush.msra.mxu0 %v5479
  %5528 = vmatpush.msra.mxu0 %v5477
  %5529 = vmatpush.msra.mxu0 %v5475
  %5530 = vmatpush.msra.mxu0 %v5473
  %5531 = vmatpush.msra.mxu0 %v5471
  %5532 = vmatpush.msra.mxu0 %v5469
  %5533 = vmatpush.msra.mxu0 %v5467
  %5534 = vmatpush.msra.mxu0 %v5465
  %5535 = vmatpush.msra.mxu0 %v5463
  %5536 = vmatpush.msra.mxu0 %v5461
  %5537 = vmatpush.msra.mxu0 %v5459
  %5538 = vmatpush.msra.mxu0 %v5457
  %5539 = vmatpush.msra.mxu0 %v5455
  %5540 = vmatmul.f32.gmra.mxu0 %v5447
  %v5541 = vpop.f32.mrf.mxu0
  %v5542 = vadd.f32 0.0, %v5541
  %5543 = vmatmul.f32.gmra.mxu0 %v5448
  %v5544 = vpop.f32.mrf.mxu0
  %v5545 = vadd.f32 0.0, %v5544
  %5546 = vmatmul.f32.gmra.mxu0 %v5449
  %v5547 = vpop.f32.mrf.mxu0
  %v5548 = vadd.f32 0.0, %v5547
  %5549 = vmatmul.f32.gmra.mxu0 %v5450
  %v5550 = vpop.f32.mrf.mxu0
  %v5551 = vadd.f32 0.0, %v5550
  %5552 = vmatmul.f32.gmra.mxu0 %v5451
  %v5553 = vpop.f32.mrf.mxu0
  %v5554 = vadd.f32 0.0, %v5553
  %5555 = vmatmul.f32.gmra.mxu0 %v5452
  %v5556 = vpop.f32.mrf.mxu0
  %v5557 = vadd.f32 0.0, %v5556
  %5558 = vmatmul.f32.gmra.mxu0 %v5453
  %v5559 = vpop.f32.mrf.mxu0
  %v5560 = vadd.f32 0.0, %v5559
  %5561 = vdwg.mxu0
  %v5562 = vadd.f32 %v5433, %v5504
  %v5563 = vadd.f32 %v5434, %v5542
  %v5564 = vadd.f32 %v5435, %v5507
  %v5565 = vadd.f32 %v5436, %v5545
  %v5566 = vadd.f32 %v5437, %v5510
  %v5567 = vadd.f32 %v5438, %v5548
  %v5568 = vadd.f32 %v5439, %v5513
  %v5569 = vadd.f32 %v5440, %v5551
  %v5570 = vadd.f32 %v5441, %v5516
  %v5571 = vadd.f32 %v5442, %v5554
  %v5572 = vadd.f32 %v5443, %v5519
  %v5573 = vadd.f32 %v5444, %v5557
  %v5574 = vadd.f32 %v5445, %v5522
  %v5575 = vadd.f32 %v5446, %v5560
  %v5576 = vld [vmem:[#allocation3 + $0x13] sm:$0xff]
  %v5577 = vld [vmem:[#allocation3 + $0x1b] sm:$0xff]
  %v5578 = vld [vmem:[#allocation3 + $0x23] sm:$0xff]
  %v5579 = vld [vmem:[#allocation3 + $0x2b] sm:$0xff]
  %v5580 = vld [vmem:[#allocation3 + $0x33] sm:$0xff]
  %v5581 = vld [vmem:[#allocation3 + $0x3b] sm:$0xff]
  %v5582 = vld [vmem:[#allocation3 + $0x43] sm:$0x7]
  %v5583 = vld [vmem:[%s7 + $0xd00] sm:$0xff]
  %v5584 = vld [vmem:[%s7 + $0xd08] sm:$0xff]
  %v5585 = vld [vmem:[%s7 + $0xd10] sm:$0xff]
  %v5586 = vld [vmem:[%s7 + $0xd18] sm:$0xff]
  %v5587 = vld [vmem:[%s7 + $0xd20] sm:$0xff]
  %v5588 = vld [vmem:[%s7 + $0xd28] sm:$0xff]
  %v5589 = vld [vmem:[%s7 + $0xd30] sm:$0xff]
  %v5590 = vld [vmem:[%s7 + $0xd38] sm:$0xff]
  %v5591 = vld [vmem:[%s7 + $0xd40] sm:$0xff]
  %v5592 = vld [vmem:[%s7 + $0xd48] sm:$0xff]
  %v5593 = vld [vmem:[%s7 + $0xd50] sm:$0xff]
  %v5594 = vld [vmem:[%s7 + $0xd58] sm:$0xff]
  %v5595 = vld [vmem:[%s7 + $0xd60] sm:$0xff]
  %v5596 = vld [vmem:[%s7 + $0xd68] sm:$0xff]
  %v5597 = vld [vmem:[%s7 + $0xd70] sm:$0xff]
  %v5598 = vld [vmem:[%s7 + $0xd78] sm:$0xff]
  %v5599 = vld [vmem:[%s7 + $0xd80] sm:$0xff]
  %v5600 = vld [vmem:[%s7 + $0xd88] sm:$0xff]
  %v5601 = vld [vmem:[%s7 + $0xd90] sm:$0xff]
  %v5602 = vld [vmem:[%s7 + $0xd98] sm:$0xff]
  %v5603 = vld [vmem:[%s7 + $0xda0] sm:$0xff]
  %v5604 = vld [vmem:[%s7 + $0xda8] sm:$0xff]
  %v5605 = vld [vmem:[%s7 + $0xdb0] sm:$0xff]
  %v5606 = vld [vmem:[%s7 + $0xdb8] sm:$0xff]
  %v5607 = vld [vmem:[%s7 + $0xdc0] sm:$0xff]
  %v5608 = vld [vmem:[%s7 + $0xdc8] sm:$0xff]
  %v5609 = vld [vmem:[%s7 + $0xdd0] sm:$0xff]
  %v5610 = vld [vmem:[%s7 + $0xdd8] sm:$0xff]
  %v5611 = vld [vmem:[%s7 + $0xde0] sm:$0xff]
  %v5612 = vld [vmem:[%s7 + $0xde8] sm:$0xff]
  %v5613 = vld [vmem:[%s7 + $0xdf0] sm:$0xff]
  %v5614 = vld [vmem:[%s7 + $0xdf8] sm:$0xff]
  %5615 = vmatpush.msra.mxu0 %v5613
  %5616 = vmatpush.msra.mxu0 %v5611
  %5617 = vmatpush.msra.mxu0 %v5609
  %5618 = vmatpush.msra.mxu0 %v5607
  %5619 = vmatpush.msra.mxu0 %v5605
  %5620 = vmatpush.msra.mxu0 %v5603
  %5621 = vmatpush.msra.mxu0 %v5601
  %5622 = vmatpush.msra.mxu0 %v5599
  %5623 = vmatpush.msra.mxu0 %v5597
  %5624 = vmatpush.msra.mxu0 %v5595
  %5625 = vmatpush.msra.mxu0 %v5593
  %5626 = vmatpush.msra.mxu0 %v5591
  %5627 = vmatpush.msra.mxu0 %v5589
  %5628 = vmatpush.msra.mxu0 %v5587
  %5629 = vmatpush.msra.mxu0 %v5585
  %5630 = vmatpush.msra.mxu0 %v5583
  %5631 = vmatmul.f32.gmra.mxu0 %v5576
  %v5632 = vpop.f32.mrf.mxu0
  %v5633 = vadd.f32 0.0, %v5632
  %5634 = vmatmul.f32.gmra.mxu0 %v5577
  %v5635 = vpop.f32.mrf.mxu0
  %v5636 = vadd.f32 0.0, %v5635
  %5637 = vmatmul.f32.gmra.mxu0 %v5578
  %v5638 = vpop.f32.mrf.mxu0
  %v5639 = vadd.f32 0.0, %v5638
  %5640 = vmatmul.f32.gmra.mxu0 %v5579
  %v5641 = vpop.f32.mrf.mxu0
  %v5642 = vadd.f32 0.0, %v5641
  %5643 = vmatmul.f32.gmra.mxu0 %v5580
  %v5644 = vpop.f32.mrf.mxu0
  %v5645 = vadd.f32 0.0, %v5644
  %5646 = vmatmul.f32.gmra.mxu0 %v5581
  %v5647 = vpop.f32.mrf.mxu0
  %v5648 = vadd.f32 0.0, %v5647
  %5649 = vmatmul.f32.gmra.mxu0 %v5582
  %v5650 = vpop.f32.mrf.mxu0
  %v5651 = vadd.f32 0.0, %v5650
  %5652 = vdwg.mxu0
  %5653 = vmatpush.msra.mxu0 %v5614
  %5654 = vmatpush.msra.mxu0 %v5612
  %5655 = vmatpush.msra.mxu0 %v5610
  %5656 = vmatpush.msra.mxu0 %v5608
  %5657 = vmatpush.msra.mxu0 %v5606
  %5658 = vmatpush.msra.mxu0 %v5604
  %5659 = vmatpush.msra.mxu0 %v5602
  %5660 = vmatpush.msra.mxu0 %v5600
  %5661 = vmatpush.msra.mxu0 %v5598
  %5662 = vmatpush.msra.mxu0 %v5596
  %5663 = vmatpush.msra.mxu0 %v5594
  %5664 = vmatpush.msra.mxu0 %v5592
  %5665 = vmatpush.msra.mxu0 %v5590
  %5666 = vmatpush.msra.mxu0 %v5588
  %5667 = vmatpush.msra.mxu0 %v5586
  %5668 = vmatpush.msra.mxu0 %v5584
  %5669 = vmatmul.f32.gmra.mxu0 %v5576
  %v5670 = vpop.f32.mrf.mxu0
  %v5671 = vadd.f32 0.0, %v5670
  %5672 = vmatmul.f32.gmra.mxu0 %v5577
  %v5673 = vpop.f32.mrf.mxu0
  %v5674 = vadd.f32 0.0, %v5673
  %5675 = vmatmul.f32.gmra.mxu0 %v5578
  %v5676 = vpop.f32.mrf.mxu0
  %v5677 = vadd.f32 0.0, %v5676
  %5678 = vmatmul.f32.gmra.mxu0 %v5579
  %v5679 = vpop.f32.mrf.mxu0
  %v5680 = vadd.f32 0.0, %v5679
  %5681 = vmatmul.f32.gmra.mxu0 %v5580
  %v5682 = vpop.f32.mrf.mxu0
  %v5683 = vadd.f32 0.0, %v5682
  %5684 = vmatmul.f32.gmra.mxu0 %v5581
  %v5685 = vpop.f32.mrf.mxu0
  %v5686 = vadd.f32 0.0, %v5685
  %5687 = vmatmul.f32.gmra.mxu0 %v5582
  %v5688 = vpop.f32.mrf.mxu0
  %v5689 = vadd.f32 0.0, %v5688
  %5690 = vdwg.mxu0
  %v5691 = vadd.f32 %v5562, %v5633
  %v5692 = vadd.f32 %v5563, %v5671
  %v5693 = vadd.f32 %v5564, %v5636
  %v5694 = vadd.f32 %v5565, %v5674
  %v5695 = vadd.f32 %v5566, %v5639
  %v5696 = vadd.f32 %v5567, %v5677
  %v5697 = vadd.f32 %v5568, %v5642
  %v5698 = vadd.f32 %v5569, %v5680
  %v5699 = vadd.f32 %v5570, %v5645
  %v5700 = vadd.f32 %v5571, %v5683
  %v5701 = vadd.f32 %v5572, %v5648
  %v5702 = vadd.f32 %v5573, %v5686
  %v5703 = vadd.f32 %v5574, %v5651
  %v5704 = vadd.f32 %v5575, %v5689
  %v5705 = vld [vmem:[#allocation3 + $0x14] sm:$0xff]
  %v5706 = vld [vmem:[#allocation3 + $0x1c] sm:$0xff]
  %v5707 = vld [vmem:[#allocation3 + $0x24] sm:$0xff]
  %v5708 = vld [vmem:[#allocation3 + $0x2c] sm:$0xff]
  %v5709 = vld [vmem:[#allocation3 + $0x34] sm:$0xff]
  %v5710 = vld [vmem:[#allocation3 + $0x3c] sm:$0xff]
  %v5711 = vld [vmem:[#allocation3 + $0x44] sm:$0x7]
  %v5712 = vld [vmem:[%s7 + $0xe00] sm:$0xff]
  %v5713 = vld [vmem:[%s7 + $0xe08] sm:$0xff]
  %v5714 = vld [vmem:[%s7 + $0xe10] sm:$0xff]
  %v5715 = vld [vmem:[%s7 + $0xe18] sm:$0xff]
  %v5716 = vld [vmem:[%s7 + $0xe20] sm:$0xff]
  %v5717 = vld [vmem:[%s7 + $0xe28] sm:$0xff]
  %v5718 = vld [vmem:[%s7 + $0xe30] sm:$0xff]
  %v5719 = vld [vmem:[%s7 + $0xe38] sm:$0xff]
  %v5720 = vld [vmem:[%s7 + $0xe40] sm:$0xff]
  %v5721 = vld [vmem:[%s7 + $0xe48] sm:$0xff]
  %v5722 = vld [vmem:[%s7 + $0xe50] sm:$0xff]
  %v5723 = vld [vmem:[%s7 + $0xe58] sm:$0xff]
  %v5724 = vld [vmem:[%s7 + $0xe60] sm:$0xff]
  %v5725 = vld [vmem:[%s7 + $0xe68] sm:$0xff]
  %v5726 = vld [vmem:[%s7 + $0xe70] sm:$0xff]
  %v5727 = vld [vmem:[%s7 + $0xe78] sm:$0xff]
  %v5728 = vld [vmem:[%s7 + $0xe80] sm:$0xff]
  %v5729 = vld [vmem:[%s7 + $0xe88] sm:$0xff]
  %v5730 = vld [vmem:[%s7 + $0xe90] sm:$0xff]
  %v5731 = vld [vmem:[%s7 + $0xe98] sm:$0xff]
  %v5732 = vld [vmem:[%s7 + $0xea0] sm:$0xff]
  %v5733 = vld [vmem:[%s7 + $0xea8] sm:$0xff]
  %v5734 = vld [vmem:[%s7 + $0xeb0] sm:$0xff]
  %v5735 = vld [vmem:[%s7 + $0xeb8] sm:$0xff]
  %v5736 = vld [vmem:[%s7 + $0xec0] sm:$0xff]
  %v5737 = vld [vmem:[%s7 + $0xec8] sm:$0xff]
  %v5738 = vld [vmem:[%s7 + $0xed0] sm:$0xff]
  %v5739 = vld [vmem:[%s7 + $0xed8] sm:$0xff]
  %v5740 = vld [vmem:[%s7 + $0xee0] sm:$0xff]
  %v5741 = vld [vmem:[%s7 + $0xee8] sm:$0xff]
  %v5742 = vld [vmem:[%s7 + $0xef0] sm:$0xff]
  %v5743 = vld [vmem:[%s7 + $0xef8] sm:$0xff]
  %5744 = vmatpush.msra.mxu0 %v5742
  %5745 = vmatpush.msra.mxu0 %v5740
  %5746 = vmatpush.msra.mxu0 %v5738
  %5747 = vmatpush.msra.mxu0 %v5736
  %5748 = vmatpush.msra.mxu0 %v5734
  %5749 = vmatpush.msra.mxu0 %v5732
  %5750 = vmatpush.msra.mxu0 %v5730
  %5751 = vmatpush.msra.mxu0 %v5728
  %5752 = vmatpush.msra.mxu0 %v5726
  %5753 = vmatpush.msra.mxu0 %v5724
  %5754 = vmatpush.msra.mxu0 %v5722
  %5755 = vmatpush.msra.mxu0 %v5720
  %5756 = vmatpush.msra.mxu0 %v5718
  %5757 = vmatpush.msra.mxu0 %v5716
  %5758 = vmatpush.msra.mxu0 %v5714
  %5759 = vmatpush.msra.mxu0 %v5712
  %5760 = vmatmul.f32.gmra.mxu0 %v5705
  %v5761 = vpop.f32.mrf.mxu0
  %v5762 = vadd.f32 0.0, %v5761
  %5763 = vmatmul.f32.gmra.mxu0 %v5706
  %v5764 = vpop.f32.mrf.mxu0
  %v5765 = vadd.f32 0.0, %v5764
  %5766 = vmatmul.f32.gmra.mxu0 %v5707
  %v5767 = vpop.f32.mrf.mxu0
  %v5768 = vadd.f32 0.0, %v5767
  %5769 = vmatmul.f32.gmra.mxu0 %v5708
  %v5770 = vpop.f32.mrf.mxu0
  %v5771 = vadd.f32 0.0, %v5770
  %5772 = vmatmul.f32.gmra.mxu0 %v5709
  %v5773 = vpop.f32.mrf.mxu0
  %v5774 = vadd.f32 0.0, %v5773
  %5775 = vmatmul.f32.gmra.mxu0 %v5710
  %v5776 = vpop.f32.mrf.mxu0
  %v5777 = vadd.f32 0.0, %v5776
  %5778 = vmatmul.f32.gmra.mxu0 %v5711
  %v5779 = vpop.f32.mrf.mxu0
  %v5780 = vadd.f32 0.0, %v5779
  %5781 = vdwg.mxu0
  %5782 = vmatpush.msra.mxu0 %v5743
  %5783 = vmatpush.msra.mxu0 %v5741
  %5784 = vmatpush.msra.mxu0 %v5739
  %5785 = vmatpush.msra.mxu0 %v5737
  %5786 = vmatpush.msra.mxu0 %v5735
  %5787 = vmatpush.msra.mxu0 %v5733
  %5788 = vmatpush.msra.mxu0 %v5731
  %5789 = vmatpush.msra.mxu0 %v5729
  %5790 = vmatpush.msra.mxu0 %v5727
  %5791 = vmatpush.msra.mxu0 %v5725
  %5792 = vmatpush.msra.mxu0 %v5723
  %5793 = vmatpush.msra.mxu0 %v5721
  %5794 = vmatpush.msra.mxu0 %v5719
  %5795 = vmatpush.msra.mxu0 %v5717
  %5796 = vmatpush.msra.mxu0 %v5715
  %5797 = vmatpush.msra.mxu0 %v5713
  %5798 = vmatmul.f32.gmra.mxu0 %v5705
  %v5799 = vpop.f32.mrf.mxu0
  %v5800 = vadd.f32 0.0, %v5799
  %5801 = vmatmul.f32.gmra.mxu0 %v5706
  %v5802 = vpop.f32.mrf.mxu0
  %v5803 = vadd.f32 0.0, %v5802
  %5804 = vmatmul.f32.gmra.mxu0 %v5707
  %v5805 = vpop.f32.mrf.mxu0
  %v5806 = vadd.f32 0.0, %v5805
  %5807 = vmatmul.f32.gmra.mxu0 %v5708
  %v5808 = vpop.f32.mrf.mxu0
  %v5809 = vadd.f32 0.0, %v5808
  %5810 = vmatmul.f32.gmra.mxu0 %v5709
  %v5811 = vpop.f32.mrf.mxu0
  %v5812 = vadd.f32 0.0, %v5811
  %5813 = vmatmul.f32.gmra.mxu0 %v5710
  %v5814 = vpop.f32.mrf.mxu0
  %v5815 = vadd.f32 0.0, %v5814
  %5816 = vmatmul.f32.gmra.mxu0 %v5711
  %v5817 = vpop.f32.mrf.mxu0
  %v5818 = vadd.f32 0.0, %v5817
  %5819 = vdwg.mxu0
  %v5820 = vadd.f32 %v5691, %v5762
  %v5821 = vadd.f32 %v5692, %v5800
  %v5822 = vadd.f32 %v5693, %v5765
  %v5823 = vadd.f32 %v5694, %v5803
  %v5824 = vadd.f32 %v5695, %v5768
  %v5825 = vadd.f32 %v5696, %v5806
  %v5826 = vadd.f32 %v5697, %v5771
  %v5827 = vadd.f32 %v5698, %v5809
  %v5828 = vadd.f32 %v5699, %v5774
  %v5829 = vadd.f32 %v5700, %v5812
  %v5830 = vadd.f32 %v5701, %v5777
  %v5831 = vadd.f32 %v5702, %v5815
  %v5832 = vadd.f32 %v5703, %v5780
  %v5833 = vadd.f32 %v5704, %v5818
  %v5834 = vld [vmem:[#allocation3 + $0x15] sm:$0xff]
  %v5835 = vld [vmem:[#allocation3 + $0x1d] sm:$0xff]
  %v5836 = vld [vmem:[#allocation3 + $0x25] sm:$0xff]
  %v5837 = vld [vmem:[#allocation3 + $0x2d] sm:$0xff]
  %v5838 = vld [vmem:[#allocation3 + $0x35] sm:$0xff]
  %v5839 = vld [vmem:[#allocation3 + $0x3d] sm:$0xff]
  %v5840 = vld [vmem:[#allocation3 + $0x45] sm:$0x7]
  %v5841 = vld [vmem:[%s7 + $0xf00] sm:$0xff]
  %v5842 = vld [vmem:[%s7 + $0xf08] sm:$0xff]
  %v5843 = vld [vmem:[%s7 + $0xf10] sm:$0xff]
  %v5844 = vld [vmem:[%s7 + $0xf18] sm:$0xff]
  %v5845 = vld [vmem:[%s7 + $0xf20] sm:$0xff]
  %v5846 = vld [vmem:[%s7 + $0xf28] sm:$0xff]
  %v5847 = vld [vmem:[%s7 + $0xf30] sm:$0xff]
  %v5848 = vld [vmem:[%s7 + $0xf38] sm:$0xff]
  %v5849 = vld [vmem:[%s7 + $0xf40] sm:$0xff]
  %v5850 = vld [vmem:[%s7 + $0xf48] sm:$0xff]
  %v5851 = vld [vmem:[%s7 + $0xf50] sm:$0xff]
  %v5852 = vld [vmem:[%s7 + $0xf58] sm:$0xff]
  %v5853 = vld [vmem:[%s7 + $0xf60] sm:$0xff]
  %v5854 = vld [vmem:[%s7 + $0xf68] sm:$0xff]
  %v5855 = vld [vmem:[%s7 + $0xf70] sm:$0xff]
  %v5856 = vld [vmem:[%s7 + $0xf78] sm:$0xff]
  %v5857 = vld [vmem:[%s7 + $0xf80] sm:$0xff]
  %v5858 = vld [vmem:[%s7 + $0xf88] sm:$0xff]
  %v5859 = vld [vmem:[%s7 + $0xf90] sm:$0xff]
  %v5860 = vld [vmem:[%s7 + $0xf98] sm:$0xff]
  %v5861 = vld [vmem:[%s7 + $0xfa0] sm:$0xff]
  %v5862 = vld [vmem:[%s7 + $0xfa8] sm:$0xff]
  %v5863 = vld [vmem:[%s7 + $0xfb0] sm:$0xff]
  %v5864 = vld [vmem:[%s7 + $0xfb8] sm:$0xff]
  %v5865 = vld [vmem:[%s7 + $0xfc0] sm:$0xff]
  %v5866 = vld [vmem:[%s7 + $0xfc8] sm:$0xff]
  %v5867 = vld [vmem:[%s7 + $0xfd0] sm:$0xff]
  %v5868 = vld [vmem:[%s7 + $0xfd8] sm:$0xff]
  %v5869 = vld [vmem:[%s7 + $0xfe0] sm:$0xff]
  %v5870 = vld [vmem:[%s7 + $0xfe8] sm:$0xff]
  %v5871 = vld [vmem:[%s7 + $0xff0] sm:$0xff]
  %v5872 = vld [vmem:[%s7 + $0xff8] sm:$0xff]
  %5873 = vmatpush.msra.mxu0 %v5871
  %5874 = vmatpush.msra.mxu0 %v5869
  %5875 = vmatpush.msra.mxu0 %v5867
  %5876 = vmatpush.msra.mxu0 %v5865
  %5877 = vmatpush.msra.mxu0 %v5863
  %5878 = vmatpush.msra.mxu0 %v5861
  %5879 = vmatpush.msra.mxu0 %v5859
  %5880 = vmatpush.msra.mxu0 %v5857
  %5881 = vmatpush.msra.mxu0 %v5855
  %5882 = vmatpush.msra.mxu0 %v5853
  %5883 = vmatpush.msra.mxu0 %v5851
  %5884 = vmatpush.msra.mxu0 %v5849
  %5885 = vmatpush.msra.mxu0 %v5847
  %5886 = vmatpush.msra.mxu0 %v5845
  %5887 = vmatpush.msra.mxu0 %v5843
  %5888 = vmatpush.msra.mxu0 %v5841
  %5889 = vmatmul.f32.gmra.mxu0 %v5834
  %v5890 = vpop.f32.mrf.mxu0
  %v5891 = vadd.f32 0.0, %v5890
  %5892 = vmatmul.f32.gmra.mxu0 %v5835
  %v5893 = vpop.f32.mrf.mxu0
  %v5894 = vadd.f32 0.0, %v5893
  %5895 = vmatmul.f32.gmra.mxu0 %v5836
  %v5896 = vpop.f32.mrf.mxu0
  %v5897 = vadd.f32 0.0, %v5896
  %5898 = vmatmul.f32.gmra.mxu0 %v5837
  %v5899 = vpop.f32.mrf.mxu0
  %v5900 = vadd.f32 0.0, %v5899
  %5901 = vmatmul.f32.gmra.mxu0 %v5838
  %v5902 = vpop.f32.mrf.mxu0
  %v5903 = vadd.f32 0.0, %v5902
  %5904 = vmatmul.f32.gmra.mxu0 %v5839
  %v5905 = vpop.f32.mrf.mxu0
  %v5906 = vadd.f32 0.0, %v5905
  %5907 = vmatmul.f32.gmra.mxu0 %v5840
  %v5908 = vpop.f32.mrf.mxu0
  %v5909 = vadd.f32 0.0, %v5908
  %5910 = vdwg.mxu0
  %5911 = vmatpush.msra.mxu0 %v5872
  %5912 = vmatpush.msra.mxu0 %v5870
  %5913 = vmatpush.msra.mxu0 %v5868
  %5914 = vmatpush.msra.mxu0 %v5866
  %5915 = vmatpush.msra.mxu0 %v5864
  %5916 = vmatpush.msra.mxu0 %v5862
  %5917 = vmatpush.msra.mxu0 %v5860
  %5918 = vmatpush.msra.mxu0 %v5858
  %5919 = vmatpush.msra.mxu0 %v5856
  %5920 = vmatpush.msra.mxu0 %v5854
  %5921 = vmatpush.msra.mxu0 %v5852
  %5922 = vmatpush.msra.mxu0 %v5850
  %5923 = vmatpush.msra.mxu0 %v5848
  %5924 = vmatpush.msra.mxu0 %v5846
  %5925 = vmatpush.msra.mxu0 %v5844
  %5926 = vmatpush.msra.mxu0 %v5842
  %5927 = vmatmul.f32.gmra.mxu0 %v5834
  %v5928 = vpop.f32.mrf.mxu0
  %v5929 = vadd.f32 0.0, %v5928
  %5930 = vmatmul.f32.gmra.mxu0 %v5835
  %v5931 = vpop.f32.mrf.mxu0
  %v5932 = vadd.f32 0.0, %v5931
  %5933 = vmatmul.f32.gmra.mxu0 %v5836
  %v5934 = vpop.f32.mrf.mxu0
  %v5935 = vadd.f32 0.0, %v5934
  %5936 = vmatmul.f32.gmra.mxu0 %v5837
  %v5937 = vpop.f32.mrf.mxu0
  %v5938 = vadd.f32 0.0, %v5937
  %5939 = vmatmul.f32.gmra.mxu0 %v5838
  %v5940 = vpop.f32.mrf.mxu0
  %v5941 = vadd.f32 0.0, %v5940
  %5942 = vmatmul.f32.gmra.mxu0 %v5839
  %v5943 = vpop.f32.mrf.mxu0
  %v5944 = vadd.f32 0.0, %v5943
  %5945 = vmatmul.f32.gmra.mxu0 %v5840
  %v5946 = vpop.f32.mrf.mxu0
  %v5947 = vadd.f32 0.0, %v5946
  %5948 = vdwg.mxu0
  %v5949 = vadd.f32 %v5820, %v5891
  %v5950 = vadd.f32 %v5821, %v5929
  %v5951 = vadd.f32 %v5822, %v5894
  %v5952 = vadd.f32 %v5823, %v5932
  %v5953 = vadd.f32 %v5824, %v5897
  %v5954 = vadd.f32 %v5825, %v5935
  %v5955 = vadd.f32 %v5826, %v5900
  %v5956 = vadd.f32 %v5827, %v5938
  %v5957 = vadd.f32 %v5828, %v5903
  %v5958 = vadd.f32 %v5829, %v5941
  %v5959 = vadd.f32 %v5830, %v5906
  %v5960 = vadd.f32 %v5831, %v5944
  %v5961 = vadd.f32 %v5832, %v5909
  %v5962 = vadd.f32 %v5833, %v5947
  %v5963 = vld [vmem:[%s8] sm:$0xff]
  %v5964 = vld [vmem:[%s8 + $0x8] sm:$0xff]
  %v5965 = vld [vmem:[%s8 + $0x10] sm:$0xff]
  %v5966 = vld [vmem:[%s8 + $0x18] sm:$0xff]
  %v5967 = vld [vmem:[%s8 + $0x20] sm:$0xff]
  %v5968 = vld [vmem:[%s8 + $0x28] sm:$0xff]
  %v5969 = vld [vmem:[%s8 + $0x30] sm:$0x7]
  %5971 = vset.pattern.permute.xlu0 0
  %5972 = vperm.xlu0 %5971, %v5963
  %v5973 = vpop.permute.xlu0 %5972
  %5976 = vset.pattern.permute.xlu0 0
  %5977 = vperm.xlu0 %5976, %v5964
  %v5978 = vpop.permute.xlu0 %5977
  %5981 = vset.pattern.permute.xlu0 0
  %5982 = vperm.xlu0 %5981, %v5965
  %v5983 = vpop.permute.xlu0 %5982
  %5986 = vset.pattern.permute.xlu0 0
  %5987 = vperm.xlu0 %5986, %v5966
  %v5988 = vpop.permute.xlu0 %5987
  %5991 = vset.pattern.permute.xlu0 0
  %5992 = vperm.xlu0 %5991, %v5967
  %v5993 = vpop.permute.xlu0 %5992
  %5996 = vset.pattern.permute.xlu0 0
  %5997 = vperm.xlu0 %5996, %v5968
  %v5998 = vpop.permute.xlu0 %5997
  %6001 = vset.pattern.permute.xlu0 0
  %6002 = vperm.xlu0 %6001, %v5969
  %v6003 = vpop.permute.xlu0 %6002
  %v6005 = vmul.f32 %v5949, %v5973
  %v6006 = vmul.f32 %v5950, %v5973
  %v6007 = vmul.f32 %v5951, %v5978
  %v6008 = vmul.f32 %v5952, %v5978
  %v6009 = vmul.f32 %v5953, %v5983
  %v6010 = vmul.f32 %v5954, %v5983
  %v6011 = vmul.f32 %v5955, %v5988
  %v6012 = vmul.f32 %v5956, %v5988
  %v6013 = vmul.f32 %v5957, %v5993
  %v6014 = vmul.f32 %v5958, %v5993
  %v6015 = vmul.f32 %v5959, %v5998
  %v6016 = vmul.f32 %v5960, %v5998
  %v6017 = vmul.f32 %v5961, %v6003
  %v6018 = vmul.f32 %v5962, %v6003
  %v6019 = vadd.f32 %v6005, %v6007
  %v6020 = vadd.f32 %v6019, %v6009
  %v6021 = vadd.f32 %v6020, %v6011
  %v6022 = vadd.f32 %v6021, %v6013
  %v6023 = vadd.f32 %v6022, %v6015
  %vm6024 = vcmask 1042432
  %v6025 = vsel %vm6024, %v6017, 0.0
  %v6026 = vadd.f32 %v6023, %v6025
  %v6027 = vrot.slane %v6026, 4
  %v6028 = vadd.f32 %v6026, %v6027
  %v6029 = vrot.slane %v6028, 2
  %v6030 = vadd.f32 %v6028, %v6029
  %v6031 = vrot.slane %v6030, 1
  %v6032 = vadd.f32 %v6030, %v6031
  %v6033 = vadd.f32 %v6006, %v6008
  %v6034 = vadd.f32 %v6033, %v6010
  %v6035 = vadd.f32 %v6034, %v6012
  %v6036 = vadd.f32 %v6035, %v6014
  %v6037 = vadd.f32 %v6036, %v6016
  %v6038 = vsel %vm6024, %v6018, 0.0
  %v6039 = vadd.f32 %v6037, %v6038
  %v6040 = vrot.slane %v6039, 4
  %v6041 = vadd.f32 %v6039, %v6040
  %v6042 = vrot.slane %v6041, 2
  %v6043 = vadd.f32 %v6041, %v6042
  %v6044 = vrot.slane %v6043, 1
  %v6045 = vadd.f32 %v6043, %v6044
  %v6046 = vmul.f32 %v6032, 0.125
  %v6047 = vmul.f32 %v6045, 0.125
  %v6048 = vsub.f32 %v5949, %v6046
  %v6049 = vsub.f32 %v5950, %v6047
  %v6050 = vsub.f32 %v5951, %v6046
  %v6051 = vsub.f32 %v5952, %v6047
  %v6052 = vsub.f32 %v5953, %v6046
  %v6053 = vsub.f32 %v5954, %v6047
  %v6054 = vsub.f32 %v5955, %v6046
  %v6055 = vsub.f32 %v5956, %v6047
  %v6056 = vsub.f32 %v5957, %v6046
  %v6057 = vsub.f32 %v5958, %v6047
  %v6058 = vsub.f32 %v5959, %v6046
  %v6059 = vsub.f32 %v5960, %v6047
  %v6060 = vsub.f32 %v5961, %v6046
  %v6061 = vsub.f32 %v5962, %v6047
  %v6062 = vmul.f32 %v6048, %v6048
  %v6063 = vmul.f32 %v6049, %v6049
  %v6064 = vmul.f32 %v6050, %v6050
  %v6065 = vmul.f32 %v6051, %v6051
  %v6066 = vmul.f32 %v6052, %v6052
  %v6067 = vmul.f32 %v6053, %v6053
  %v6068 = vmul.f32 %v6054, %v6054
  %v6069 = vmul.f32 %v6055, %v6055
  %v6070 = vmul.f32 %v6056, %v6056
  %v6071 = vmul.f32 %v6057, %v6057
  %v6072 = vmul.f32 %v6058, %v6058
  %v6073 = vmul.f32 %v6059, %v6059
  %v6074 = vmul.f32 %v6060, %v6060
  %v6075 = vmul.f32 %v6061, %v6061
  %v6076 = vmul.f32 %v6062, %v5973
  %v6077 = vmul.f32 %v6063, %v5973
  %v6078 = vmul.f32 %v6064, %v5978
  %v6079 = vmul.f32 %v6065, %v5978
  %v6080 = vmul.f32 %v6066, %v5983
  %v6081 = vmul.f32 %v6067, %v5983
  %v6082 = vmul.f32 %v6068, %v5988
  %v6083 = vmul.f32 %v6069, %v5988
  %v6084 = vmul.f32 %v6070, %v5993
  %v6085 = vmul.f32 %v6071, %v5993
  %v6086 = vmul.f32 %v6072, %v5998
  %v6087 = vmul.f32 %v6073, %v5998
  %v6088 = vmul.f32 %v6074, %v6003
  %v6089 = vmul.f32 %v6075, %v6003
  %v6090 = vadd.f32 %v6076, %v6078
  %v6091 = vadd.f32 %v6090, %v6080
  %v6092 = vadd.f32 %v6091, %v6082
  %v6093 = vadd.f32 %v6092, %v6084
  %v6094 = vadd.f32 %v6093, %v6086
  %v6095 = vsel %vm6024, %v6088, 0.0
  %v6096 = vadd.f32 %v6094, %v6095
  %v6097 = vrot.slane %v6096, 4
  %v6098 = vadd.f32 %v6096, %v6097
  %v6099 = vrot.slane %v6098, 2
  %v6100 = vadd.f32 %v6098, %v6099
  %v6101 = vrot.slane %v6100, 1
  %v6102 = vadd.f32 %v6100, %v6101
  %v6103 = vadd.f32 %v6077, %v6079
  %v6104 = vadd.f32 %v6103, %v6081
  %v6105 = vadd.f32 %v6104, %v6083
  %v6106 = vadd.f32 %v6105, %v6085
  %v6107 = vadd.f32 %v6106, %v6087
  %v6108 = vsel %vm6024, %v6089, 0.0
  %v6109 = vadd.f32 %v6107, %v6108
  %v6110 = vrot.slane %v6109, 4
  %v6111 = vadd.f32 %v6109, %v6110
  %v6112 = vrot.slane %v6111, 2
  %v6113 = vadd.f32 %v6111, %v6112
  %v6114 = vrot.slane %v6113, 1
  %v6115 = vadd.f32 %v6113, %v6114
  %v6116 = vmul.f32 %v6102, 0.125
  %v6117 = vmul.f32 %v6115, 0.125
  %v6118 = vadd.f32 %v6116, 1e-05
  %v6119 = vadd.f32 %v6117, 1e-05
  %v6120 = vrsqrt.pop %v6118
  %v6121 = vmul.f32 %v6120, %v6118
  %v6122 = vmul.f32 %v6121, %v6120
  %v6123 = vmul.f32 0.5, %v6122
  %v6124 = vsub.f32 1.5, %v6123
  %v6125 = vmul.f32 %v6120, %v6124
  %vm6126 = vweird.f32 %v6118
  %vm6127 = vweird.f32 %v6120
  %vm6128 = vmor %vm6126, %vm6127
  %v6129 = vsel %vm6128, %v6120, %v6125
  %v6130 = vrsqrt.pop %v6119
  %v6131 = vmul.f32 %v6130, %v6119
  %v6132 = vmul.f32 %v6131, %v6130
  %v6133 = vmul.f32 0.5, %v6132
  %v6134 = vsub.f32 1.5, %v6133
  %v6135 = vmul.f32 %v6130, %v6134
  %vm6136 = vweird.f32 %v6119
  %vm6137 = vweird.f32 %v6130
  %vm6138 = vmor %vm6136, %vm6137
  %v6139 = vsel %vm6138, %v6130, %v6135
  %v6140 = vmul.f32 %v6048, %v6129
  %v6141 = vmul.f32 %v6049, %v6139
  %v6142 = vmul.f32 %v6050, %v6129
  %v6143 = vmul.f32 %v6051, %v6139
  %v6144 = vmul.f32 %v6052, %v6129
  %v6145 = vmul.f32 %v6053, %v6139
  %v6146 = vmul.f32 %v6054, %v6129
  %v6147 = vmul.f32 %v6055, %v6139
  %v6148 = vmul.f32 %v6056, %v6129
  %v6149 = vmul.f32 %v6057, %v6139
  %v6150 = vmul.f32 %v6058, %v6129
  %v6151 = vmul.f32 %v6059, %v6139
  %v6152 = vmul.f32 %v6060, %v6129
  %v6153 = vmul.f32 %v6061, %v6139
  %vm6154 = vcmp.gt.f32.partialorder %v6140, 0.0
  %vm6155 = vcmp.gt.f32.partialorder %v6141, 0.0
  %vm6156 = vcmp.gt.f32.partialorder %v6142, 0.0
  %vm6157 = vcmp.gt.f32.partialorder %v6143, 0.0
  %vm6158 = vcmp.gt.f32.partialorder %v6144, 0.0
  %vm6159 = vcmp.gt.f32.partialorder %v6145, 0.0
  %vm6160 = vcmp.gt.f32.partialorder %v6146, 0.0
  %vm6161 = vcmp.gt.f32.partialorder %v6147, 0.0
  %vm6162 = vcmp.gt.f32.partialorder %v6148, 0.0
  %vm6163 = vcmp.gt.f32.partialorder %v6149, 0.0
  %vm6164 = vcmp.gt.f32.partialorder %v6150, 0.0
  %vm6165 = vcmp.gt.f32.partialorder %v6151, 0.0
  %vm6166 = vcmp.gt.f32.partialorder %v6152, 0.0
  %vm6167 = vcmp.gt.f32.partialorder %v6153, 0.0
  %v6168 = vmul.f32 %v6140, 0.2
  %v6169 = vmul.f32 %v6141, 0.2
  %v6170 = vmul.f32 %v6142, 0.2
  %v6171 = vmul.f32 %v6143, 0.2
  %v6172 = vmul.f32 %v6144, 0.2
  %v6173 = vmul.f32 %v6145, 0.2
  %v6174 = vmul.f32 %v6146, 0.2
  %v6175 = vmul.f32 %v6147, 0.2
  %v6176 = vmul.f32 %v6148, 0.2
  %v6177 = vmul.f32 %v6149, 0.2
  %v6178 = vmul.f32 %v6150, 0.2
  %v6179 = vmul.f32 %v6151, 0.2
  %v6180 = vmul.f32 %v6152, 0.2
  %v6181 = vmul.f32 %v6153, 0.2
  %v6182 = vsel %vm6154, %v6140, %v6168
  %v6183 = vsel %vm6155, %v6141, %v6169
  %v6184 = vsel %vm6156, %v6142, %v6170
  %v6185 = vsel %vm6157, %v6143, %v6171
  %v6186 = vsel %vm6158, %v6144, %v6172
  %v6187 = vsel %vm6159, %v6145, %v6173
  %v6188 = vsel %vm6160, %v6146, %v6174
  %v6189 = vsel %vm6161, %v6147, %v6175
  %v6190 = vsel %vm6162, %v6148, %v6176
  %v6191 = vsel %vm6163, %v6149, %v6177
  %v6192 = vsel %vm6164, %v6150, %v6178
  %v6193 = vsel %vm6165, %v6151, %v6179
  %v6194 = vsel %vm6166, %v6152, %v6180
  %v6195 = vsel %vm6167, %v6153, %v6181
  %v6196 = vld [vmem:[%s9] sm:$0xff]
  %v6197 = vld [vmem:[%s9 + $0x8] sm:$0xff]
  %v6198 = vld [vmem:[%s9 + $0x10] sm:$0xff]
  %v6199 = vld [vmem:[%s9 + $0x18] sm:$0xff]
  %vm6200 = vcmask 416768
  %v6202 = vsel %vm6200, %v6196, 0
  %v6205 = vsel %vm6200, %v6197, 0
  %v6208 = vsel %vm6200, %v6198, 0
  %v6211 = vsel %vm6200, %v6199, 0
  %v6214 = vsel %vm6024, %v6194, 0
  %v6217 = vsel %vm6024, %v6195, 0
  %6219 = vmatpush.msra.mxu0 0.0
  %6220 = vmatpush.msra.mxu0 0.0
  %6221 = vmatpush.msra.mxu0 0.0
  %6222 = vmatpush.msra.mxu0 0.0
  %6223 = vmatpush.msra.mxu0 0.0
  %6224 = vmatpush.msra.mxu0 0.0
  %6225 = vmatpush.msra.mxu0 0.0
  %6226 = vmatpush.msra.mxu0 0.0
  %6227 = vmatpush.msra.mxu0 0.0
  %6228 = vmatpush.msra.mxu0 %v6214
  %6229 = vmatpush.msra.mxu0 %v6192
  %6230 = vmatpush.msra.mxu0 %v6190
  %6231 = vmatpush.msra.mxu0 %v6188
  %6232 = vmatpush.msra.mxu0 %v6186
  %6233 = vmatpush.msra.mxu0 %v6184
  %6234 = vmatpush.msra.mxu0 %v6182
  %6235 = vmatmul.f32.gmra.mxu0 %v6202
  %v6236 = vpop.f32.mrf.mxu0
  %v6237 = vadd.f32 0.0, %v6236
  %6238 = vmatmul.f32.gmra.mxu0 %v6205
  %v6239 = vpop.f32.mrf.mxu0
  %v6240 = vadd.f32 0.0, %v6239
  %6241 = vmatmul.f32.gmra.mxu0 %v6208
  %v6242 = vpop.f32.mrf.mxu0
  %v6243 = vadd.f32 0.0, %v6242
  %6244 = vmatmul.f32.gmra.mxu0 %v6211
  %v6245 = vpop.f32.mrf.mxu0
  %v6246 = vadd.f32 0.0, %v6245
  %6247 = vdwg.mxu0
  %6248 = vmatpush.msra.mxu0 0.0
  %6249 = vmatpush.msra.mxu0 0.0
  %6250 = vmatpush.msra.mxu0 0.0
  %6251 = vmatpush.msra.mxu0 0.0
  %6252 = vmatpush.msra.mxu0 0.0
  %6253 = vmatpush.msra.mxu0 0.0
  %6254 = vmatpush.msra.mxu0 0.0
  %6255 = vmatpush.msra.mxu0 0.0
  %6256 = vmatpush.msra.mxu0 0.0
  %6257 = vmatpush.msra.mxu0 %v6217
  %6258 = vmatpush.msra.mxu0 %v6193
  %6259 = vmatpush.msra.mxu0 %v6191
  %6260 = vmatpush.msra.mxu0 %v6189
  %6261 = vmatpush.msra.mxu0 %v6187
  %6262 = vmatpush.msra.mxu0 %v6185
  %6263 = vmatpush.msra.mxu0 %v6183
  %6264 = vmatmul.f32.gmra.mxu0 %v6202
  %v6265 = vpop.f32.mrf.mxu0
  %v6266 = vadd.f32 0.0, %v6265
  %6267 = vmatmul.f32.gmra.mxu0 %v6205
  %v6268 = vpop.f32.mrf.mxu0
  %v6269 = vadd.f32 0.0, %v6268
  %6270 = vmatmul.f32.gmra.mxu0 %v6208
  %v6271 = vpop.f32.mrf.mxu0
  %v6272 = vadd.f32 0.0, %v6271
  %6273 = vmatmul.f32.gmra.mxu0 %v6211
  %v6274 = vpop.f32.mrf.mxu0
  %v6275 = vadd.f32 0.0, %v6274
  %6276 = vdwg.mxu0
  %v6277 = vld [vmem:[%s10] sm:$0xff]
  %v6278 = vld [vmem:[%s10 + $0x8] sm:$0xff]
  %v6279 = vld [vmem:[%s10 + $0x10] sm:$0xff]
  %v6280 = vld [vmem:[%s10 + $0x18] sm:$0xff]
  %v6281 = vld [vmem:[%s10 + $0x20] sm:$0xff]
  %v6282 = vld [vmem:[%s10 + $0x28] sm:$0xff]
  %v6283 = vld [vmem:[%s10 + $0x30] sm:$0xff]
  %v6284 = vld [vmem:[%s10 + $0x38] sm:$0xff]
  %v6285 = vmul.f32 %v6237, %v6277
  %v6286 = vmul.f32 %v6266, %v6278
  %v6287 = vmul.f32 %v6240, %v6279
  %v6288 = vmul.f32 %v6269, %v6280
  %v6289 = vmul.f32 %v6243, %v6281
  %v6290 = vmul.f32 %v6272, %v6282
  %v6291 = vmul.f32 %v6246, %v6283
  %v6292 = vmul.f32 %v6275, %v6284
  %v6293 = vadd.f32 %v6285, %v6286
  %6294 = vadd.xlane.f32.xlu0 %v6293
  %v6295 = vpop.xlane.xlu0 %6294
  %v6296 = vadd.f32 %v6287, %v6288
  %6297 = vadd.xlane.f32.xlu0 %v6296
  %v6298 = vpop.xlane.xlu0 %6297
  %v6299 = vadd.f32 %v6289, %v6290
  %6300 = vadd.xlane.f32.xlu0 %v6299
  %v6301 = vpop.xlane.xlu0 %6300
  %v6302 = vadd.f32 %v6291, %v6292
  %6303 = vadd.xlane.f32.xlu0 %v6302
  %v6304 = vpop.xlane.xlu0 %6303
  %v6305 = vld [vmem:[%s11] sm:$0x3]
  %vm6306 = vcmask 261120
  %v6308 = vsel %vm6306, %v6305, 0
  %6310 = vmatpush.msra.mxu0 0.0
  %6311 = vmatpush.msra.mxu0 0.0
  %6312 = vmatpush.msra.mxu0 0.0
  %6313 = vmatpush.msra.mxu0 0.0
  %6314 = vmatpush.msra.mxu0 0.0
  %6315 = vmatpush.msra.mxu0 0.0
  %6316 = vmatpush.msra.mxu0 0.0
  %6317 = vmatpush.msra.mxu0 0.0
  %6318 = vmatpush.msra.mxu0 0.0
  %6319 = vmatpush.msra.mxu0 0.0
  %6320 = vmatpush.msra.mxu0 0.0
  %6321 = vmatpush.msra.mxu0 0.0
  %6322 = vmatpush.msra.mxu0 %v6304
  %6323 = vmatpush.msra.mxu0 %v6301
  %6324 = vmatpush.msra.mxu0 %v6298
  %6325 = vmatpush.msra.mxu0 %v6295
  %6326 = vmatmul.f32.gmra.mxu0 %v6308
  %v6327 = vpop.f32.mrf.mxu0
  %v6328 = vadd.f32 0.0, %v6327
  %6329 = vdwg.mxu0
  %vm6330 = vcmask 1024
  %6331 = vst.msk [vmem:[%s12] sm:$0x3] %vm6330, %v6328
  // Predicated region
  $region50: #{forward.1} parent=0 // pred_check
    _
  $region51: #{forward.1} parent=0 // pred_check_branch
    %6333 = sbr.rel (0) target = $region53
  $region52: #{forward.1} parent=0 // pred_region
    _
  $region53: #{forward.1} parent=0 // pred_fallthru
    _
  // Predicated region
  $region54: #{forward.1} parent=0 // pred_check
    _
  $region55: #{forward.1} parent=0 // pred_check_branch
    %6335 = sbr.rel (0) target = $region57
  $region56: #{forward.1} parent=0 // pred_region
    _
  $region57: #{forward.1} parent=0 // pred_fallthru
    _

</llo_original>
